<compile_context>
chip_gen: v5e
topology: v5e:2x2
jax: 0.10.0
libtpu: 0.0.40
codegen_flags: <defaults>
</compile_context>

<pallas_src>
import functools

import jax
import jax.numpy as jnp
from jax.experimental import pallas as pl
from jax.experimental.pallas import tpu as pltpu


# ---------------------------------------------------------------------------
# Pallas kernels
# ---------------------------------------------------------------------------
def _conv4x4_s2_kernel(xs_ref, w_ref, b_ref, o_ref, *, oh, ow, mm_dtype):
    """One image: 4x4 / stride-2 / pad-1 conv + bias + LeakyReLU(0.2).

    xs_ref : (oh+1, ow+1, 4*Cin)  space-to-depth(2) of the zero-padded input,
                                  lane packing (row-parity, col-parity, cin).
    w_ref  : (4, 4*Cin, Cout)     quadrant-packed weights (see _pack_conv_weight).
    b_ref  : (1, Cout)
    o_ref  : (oh*ow, Cout)
    """
    k4 = w_ref.shape[1]
    cout = w_ref.shape[2]
    acc = jnp.zeros((oh * ow, cout), jnp.float32)
    for qi in range(4):                          # 4 kernel-tap quadrants (unrolled)
        di, dj = qi // 2, qi % 2
        q = xs_ref[pl.ds(di, oh), pl.ds(dj, ow), :]          # (oh, ow, 4*Cin)
        q = q.reshape(oh * ow, k4).astype(mm_dtype)
        acc = acc + jnp.dot(q, w_ref[qi], preferred_element_type=jnp.float32)
    acc = acc + b_ref[...]
    acc = jnp.where(acc >= 0.0, acc, 0.2 * acc)              # LeakyReLU(0.2), f32
    o_ref[...] = acc.astype(o_ref.dtype)


def _conv4x4_s2_fc_kernel(xs_ref, w_ref, b_ref, wf_ref, bf_ref, o_ref,
                          *, oh, ow, mm_dtype):
    """conv3 + flatten + Linear(256*8*8 -> 1) + Sigmoid, one image per step.

    wf_ref : (oh*ow, Cout)  FC weight, rows pre-permuted to (h, w, c) order.
    bf_ref : (1, 1)
    o_ref  : (1, 1)
    """
    k4 = w_ref.shape[1]
    cout = w_ref.shape[2]
    acc = jnp.zeros((oh * ow, cout), jnp.float32)
    for qi in range(4):
        di, dj = qi // 2, qi % 2
        q = xs_ref[pl.ds(di, oh), pl.ds(dj, ow), :]
        q = q.reshape(oh * ow, k4).astype(mm_dtype)
        acc = acc + jnp.dot(q, w_ref[qi], preferred_element_type=jnp.float32)
    acc = acc + b_ref[...]
    acc = jnp.where(acc >= 0.0, acc, 0.2 * acc)
    # fc1 as a lane-dense multiply-reduce (VPU/XLU), not a (16384, 1) matmul.
    prod = acc * wf_ref[...]                                 # (oh*ow, Cout) f32
    r = jnp.sum(prod, axis=1, keepdims=True)                 # (oh*ow, 1)
    r = jnp.sum(r, axis=0, keepdims=True)                    # (1, 1)
    logit = r + bf_ref[...]
    o_ref[...] = pl.reciprocal(1.0 + jnp.exp(-logit), approx=True)   # sigmoid


# ---------------------------------------------------------------------------
# pallas_call wrappers
# ---------------------------------------------------------------------------
def _conv_layer(xs, wq, b, *, out_dtype):
    """xs: (B, OH+1, OW+1, 4*Cin) -> (B, OH*OW, Cout)."""
    B, hs, ws, k4 = xs.shape
    oh, ow = hs - 1, ws - 1
    cout = wq.shape[-1]
    kernel = functools.partial(_conv4x4_s2_kernel, oh=oh, ow=ow, mm_dtype=wq.dtype)
    return pl.pallas_call(
        kernel,
        out_shape=jax.ShapeDtypeStruct((B, oh * ow, cout), out_dtype),
        grid_spec=pltpu.PrefetchScalarGridSpec(
            num_scalar_prefetch=0,
            grid=(B,),
            in_specs=[
                pl.BlockSpec((None, hs, ws, k4), lambda n: (n, 0, 0, 0)),
                pl.BlockSpec((4, k4, cout), lambda n: (0, 0, 0)),
                pl.BlockSpec((1, cout), lambda n: (0, 0)),
            ],
            out_specs=pl.BlockSpec((None, oh * ow, cout), lambda n: (n, 0, 0)),
        ),
        compiler_params=pltpu.CompilerParams(dimension_semantics=("parallel",)),
    )(xs, wq, b)


def _conv_fc_layer(xs, wq, b, wf, bf):
    """conv3 + fc1 + sigmoid.  xs: (B, 9, 9, 512) -> (B, 1, 1) float32."""
    B, hs, ws, k4 = xs.shape
    oh, ow = hs - 1, ws - 1
    cout = wq.shape[-1]
    kernel = functools.partial(_conv4x4_s2_fc_kernel, oh=oh, ow=ow,
                               mm_dtype=wq.dtype)
    return pl.pallas_call(
        kernel,
        out_shape=jax.ShapeDtypeStruct((B, 1, 1), jnp.float32),
        grid_spec=pltpu.PrefetchScalarGridSpec(
            num_scalar_prefetch=0,
            grid=(B,),
            in_specs=[
                pl.BlockSpec((None, hs, ws, k4), lambda n: (n, 0, 0, 0)),
                pl.BlockSpec((4, k4, cout), lambda n: (0, 0, 0)),
                pl.BlockSpec((1, cout), lambda n: (0, 0)),
                pl.BlockSpec((oh * ow, cout), lambda n: (0, 0)),
                pl.BlockSpec((1, 1), lambda n: (0, 0)),
            ],
            out_specs=pl.BlockSpec((None, 1, 1), lambda n: (n, 0, 0)),
        ),
        compiler_params=pltpu.CompilerParams(dimension_semantics=("parallel",)),
    )(xs, wq, b, wf, bf)


# ---------------------------------------------------------------------------
# Layout glue (tiny XLA ops on sub-MB tensors)
# ---------------------------------------------------------------------------
def _s2d_pad(x_nhwc):
    """(B, H, W, C) -> (B, H/2+1, W/2+1, 4*C).

    out[b, r, s, u*2C + t*C + c] = x_pad[b, 2r+u, 2s+t, c], x_pad = 1-ring zero pad.
    """
    B, H, W, C = x_nhwc.shape
    xp = jnp.pad(x_nhwc, ((0, 0), (1, 1), (1, 1), (0, 0)))
    xp = xp.reshape(B, (H + 2) // 2, 2, (W + 2) // 2, 2, C)      # [b, r, u, s, t, c]
    xp = xp.transpose(0, 1, 3, 2, 4, 5)                          # [b, r, s, u, t, c]
    return xp.reshape(B, (H + 2) // 2, (W + 2) // 2, 4 * C)


def _pack_conv_weight(w_hwio, dtype):
    """(4, 4, Cin, Cout) -> (4, 4*Cin, Cout) quadrant-packed for the kernel.

    Quadrant qi = 2*(kh//2) + (kw//2); row index = (kh%2)*2*Cin + (kw%2)*Cin + cin.
    """
    _, _, cin, cout = w_hwio.shape
    w = w_hwio.reshape(2, 2, 2, 2, cin, cout)    # [kh//2, kh%2, kw//2, kw%2, c, o]
    w = w.transpose(0, 2, 1, 3, 4, 5)            # [kh//2, kw//2, kh%2, kw%2, c, o]
    return w.reshape(4, 4 * cin, cout).astype(dtype)


# ---------------------------------------------------------------------------
# Parameters
# ---------------------------------------------------------------------------
def init_native_params(key):
    """Deterministic synthetic params in PyTorch-equivalent layouts."""
    ks = jax.random.split(key, 8)

    def winit(k, shape, fan_in):
        return jax.random.normal(k, shape, jnp.float32) * (1.0 / jnp.sqrt(fan_in))

    return {
        "Wn1": winit(ks[0], (4, 4, 3, 64), 4 * 4 * 3),        # HWIO
        "b1": winit(ks[1], (64,), 4 * 4 * 3),
        "Wn2": winit(ks[2], (4, 4, 64, 128), 4 * 4 * 64),
        "b2": winit(ks[3], (128,), 4 * 4 * 64),
        "Wn3": winit(ks[4], (4, 4, 128, 256), 4 * 4 * 128),
        "b3": winit(ks[5], (256,), 4 * 4 * 128),
        "Wfc": winit(ks[6], (1, 256 * 8 * 8), 256 * 8 * 8),   # torch order (c, h, w)
        "bfc": winit(ks[7], (1,), 256 * 8 * 8),
    }


def prepare_params(native):
    """Permute / pack weights once at init into kernel-ready layouts."""
    # FC weight: torch flatten order is (c, h, w); reorder rows to (h, w, c)
    # so conv3's NHWC activations feed it directly (no runtime transpose).
    wf = native["Wfc"].reshape(256, 8, 8).transpose(1, 2, 0).reshape(64, 256)
    return {
        "w1q": _pack_conv_weight(native["Wn1"], jnp.bfloat16),
        "b1": native["b1"].reshape(1, -1).astype(jnp.float32),
        "w2q": _pack_conv_weight(native["Wn2"], jnp.bfloat16),
        "b2": native["b2"].reshape(1, -1).astype(jnp.float32),
        "w3q": _pack_conv_weight(native["Wn3"], jnp.bfloat16),
        "b3": native["b3"].reshape(1, -1).astype(jnp.float32),
        "wf": wf.astype(jnp.float32),
        "bf": native["bfc"].reshape(1, 1).astype(jnp.float32),
    }


# ---------------------------------------------------------------------------
# Forward pass
# ---------------------------------------------------------------------------
@jax.jit
def discriminator_forward(x_nchw, params):
    B = x_nchw.shape[0]
    x = jnp.transpose(x_nchw, (0, 2, 3, 1)).astype(jnp.bfloat16)   # NHWC, bf16

    # conv1: (B,64,64,3) -> (B,32,32,64)
    xs = _s2d_pad(x)                                               # (B,33,33,12)
    y1 = _conv_layer(xs, params["w1q"], params["b1"], out_dtype=jnp.bfloat16)

    # conv2: -> (B,16,16,128)
    xs = _s2d_pad(y1.reshape(B, 32, 32, 64))                       # (B,17,17,256)
    y2 = _conv_layer(xs, params["w2q"], params["b2"], out_dtype=jnp.float32)

    # conv3 + fc1 + sigmoid (fused): -> (B, 1)
    xs = _s2d_pad(y2.reshape(B, 16, 16, 128))                      # (B,9,9,512) f32
    out = _conv_fc_layer(xs, params["w3q"], params["b3"],
                         params["wf"], params["bf"])               # (B,1,1)
    return out.reshape(B, 1)


def reference_forward(x_nchw, native):
    """Pure-JAX f32 reference with PyTorch semantics (for the self-check)."""
    x = jnp.transpose(x_nchw, (0, 2, 3, 1))
    for wn, b in ((native["Wn1"], native["b1"]),
                  (native["Wn2"], native["b2"]),
                  (native["Wn3"], native["b3"])):
        x = jax.lax.conv_general_dilated(
            x, wn, window_strides=(2, 2), padding=((1, 1), (1, 1)),
            dimension_numbers=("NHWC", "HWIO", "NHWC"))
        x = x + b
        x = jnp.where(x >= 0.0, x, 0.2 * x)
    B = x.shape[0]
    feat = jnp.transpose(x, (0, 3, 1, 2)).reshape(B, -1)   # torch view (C, H, W)
    logit = feat @ native["Wfc"].T + native["bfc"]
    return jax.nn.sigmoid(logit)


if __name__ == "__main__":
    key = jax.random.PRNGKey(0)
    k_x, k_p = jax.random.split(key)
    # Spatial size 64 is dictated by the module (64 -> 32 -> 16 -> 8, fc expects 256*8*8).
    x = jax.random.normal(k_x, (2, 3, 64, 64), jnp.float32)
    native = init_native_params(k_p)
    params = prepare_params(native)

    out = discriminator_forward(x, params)
    out = jax.block_until_ready(out)

    assert out.shape == (2, 1), out.shape
    assert out.dtype == jnp.float32
    assert bool(jnp.all((out >= 0.0) & (out <= 1.0)))

    ref = reference_forward(x, native)
    assert bool(jnp.all(jnp.abs(out - ref) < 0.05)), (out, ref)

    print("KERNEL_OK")
</pallas_src>

<mosaic_0001>
module attributes {stable_mosaic.version = 11 : i64} {
  func.func @_conv4x4_s2_kernel(%arg0: i32, %arg1: memref<1x33x33x12xbf16, #tpu.memory_space<vmem>>, %arg2: memref<4x12x64xbf16, #tpu.memory_space<vmem>>, %arg3: memref<1x64xf32, #tpu.memory_space<vmem>>, %arg4: memref<1x1024x64xbf16, #tpu.memory_space<vmem>>) attributes {dimension_semantics = [#tpu.dimension_semantics<parallel>], iteration_bounds = array<i64: 2>, scalar_prefetch = 0 : i64, scratch_operands = 0 : i64, tpu.core_type = #tpu.core_type<tc>, window_params = [{transform_indices = @transform_0, window_bounds = array<i64: 1, 33, 33, 12>}, {pipeline_mode = #tpu.pipeline_mode<synchronous>, transform_indices = @transform_1, window_bounds = array<i64: 4, 12, 64>}, {pipeline_mode = #tpu.pipeline_mode<synchronous>, transform_indices = @transform_2, window_bounds = array<i64: 1, 64>}, {transform_indices = @transform_3, window_bounds = array<i64: 1, 1024, 64>}]} {
    %cst = arith.constant 0.000000e+00 : f32
    %0 = vector.broadcast %cst : f32 to vector<1024x64xf32>
    %c0 = arith.constant 0 : index
    %c0_0 = arith.constant 0 : index
    %c0_1 = arith.constant 0 : index
    %c0_2 = arith.constant 0 : index
    %1 = vector.load %arg1[%c0, %c0_0, %c0_1, %c0_2] : memref<1x33x33x12xbf16, #tpu.memory_space<vmem>>, vector<1x32x32x12xbf16>
    %2 = vector.shape_cast %1 : vector<1x32x32x12xbf16> to vector<32x32x12xbf16>
    %3 = vector.shape_cast %2 : vector<32x32x12xbf16> to vector<1024x12xbf16>
    %c0_3 = arith.constant 0 : index
    %c0_4 = arith.constant 0 : index
    %c0_5 = arith.constant 0 : index
    %4 = vector.load %arg2[%c0_3, %c0_4, %c0_5] : memref<4x12x64xbf16, #tpu.memory_space<vmem>>, vector<1x12x64xbf16>
    %5 = vector.shape_cast %4 : vector<1x12x64xbf16> to vector<12x64xbf16>
    %cst_6 = arith.constant dense<0.000000e+00> : vector<1024x64xf32>
    %6 = tpu.matmul %3, %5, %cst_6 {dimension_numbers = #tpu.dot_dimension_numbers<[1], [0], [0], [1], [0, 0, 1, 1], [], []>} : vector<1024x12xbf16>, vector<12x64xbf16>, vector<1024x64xf32> -> vector<1024x64xf32>
    %7 = arith.addf %0, %6 : vector<1024x64xf32>
    %c0_7 = arith.constant 0 : index
    %c0_8 = arith.constant 0 : index
    %c1 = arith.constant 1 : index
    %c0_9 = arith.constant 0 : index
    %8 = vector.load %arg1[%c0_7, %c0_8, %c1, %c0_9] : memref<1x33x33x12xbf16, #tpu.memory_space<vmem>>, vector<1x32x32x12xbf16>
    %9 = vector.shape_cast %8 : vector<1x32x32x12xbf16> to vector<32x32x12xbf16>
    %10 = vector.shape_cast %9 : vector<32x32x12xbf16> to vector<1024x12xbf16>
    %c1_10 = arith.constant 1 : index
    %c0_11 = arith.constant 0 : index
    %c0_12 = arith.constant 0 : index
    %11 = vector.load %arg2[%c1_10, %c0_11, %c0_12] : memref<4x12x64xbf16, #tpu.memory_space<vmem>>, vector<1x12x64xbf16>
    %12 = vector.shape_cast %11 : vector<1x12x64xbf16> to vector<12x64xbf16>
    %cst_13 = arith.constant dense<0.000000e+00> : vector<1024x64xf32>
    %13 = tpu.matmul %10, %12, %cst_13 {dimension_numbers = #tpu.dot_dimension_numbers<[1], [0], [0], [1], [0, 0, 1, 1], [], []>} : vector<1024x12xbf16>, vector<12x64xbf16>, vector<1024x64xf32> -> vector<1024x64xf32>
    %14 = arith.addf %7, %13 : vector<1024x64xf32>
    %c0_14 = arith.constant 0 : index
    %c1_15 = arith.constant 1 : index
    %c0_16 = arith.constant 0 : index
    %c0_17 = arith.constant 0 : index
    %15 = vector.load %arg1[%c0_14, %c1_15, %c0_16, %c0_17] : memref<1x33x33x12xbf16, #tpu.memory_space<vmem>>, vector<1x32x32x12xbf16>
    %16 = vector.shape_cast %15 : vector<1x32x32x12xbf16> to vector<32x32x12xbf16>
    %17 = vector.shape_cast %16 : vector<32x32x12xbf16> to vector<1024x12xbf16>
    %c2 = arith.constant 2 : index
    %c0_18 = arith.constant 0 : index
    %c0_19 = arith.constant 0 : index
    %18 = vector.load %arg2[%c2, %c0_18, %c0_19] : memref<4x12x64xbf16, #tpu.memory_space<vmem>>, vector<1x12x64xbf16>
    %19 = vector.shape_cast %18 : vector<1x12x64xbf16> to vector<12x64xbf16>
    %cst_20 = arith.constant dense<0.000000e+00> : vector<1024x64xf32>
    %20 = tpu.matmul %17, %19, %cst_20 {dimension_numbers = #tpu.dot_dimension_numbers<[1], [0], [0], [1], [0, 0, 1, 1], [], []>} : vector<1024x12xbf16>, vector<12x64xbf16>, vector<1024x64xf32> -> vector<1024x64xf32>
    %21 = arith.addf %14, %20 : vector<1024x64xf32>
    %c0_21 = arith.constant 0 : index
    %c1_22 = arith.constant 1 : index
    %c1_23 = arith.constant 1 : index
    %c0_24 = arith.constant 0 : index
    %22 = vector.load %arg1[%c0_21, %c1_22, %c1_23, %c0_24] : memref<1x33x33x12xbf16, #tpu.memory_space<vmem>>, vector<1x32x32x12xbf16>
    %23 = vector.shape_cast %22 : vector<1x32x32x12xbf16> to vector<32x32x12xbf16>
    %24 = vector.shape_cast %23 : vector<32x32x12xbf16> to vector<1024x12xbf16>
    %c3 = arith.constant 3 : index
    %c0_25 = arith.constant 0 : index
    %c0_26 = arith.constant 0 : index
    %25 = vector.load %arg2[%c3, %c0_25, %c0_26] : memref<4x12x64xbf16, #tpu.memory_space<vmem>>, vector<1x12x64xbf16>
    %26 = vector.shape_cast %25 : vector<1x12x64xbf16> to vector<12x64xbf16>
    %cst_27 = arith.constant dense<0.000000e+00> : vector<1024x64xf32>
    %27 = tpu.matmul %24, %26, %cst_27 {dimension_numbers = #tpu.dot_dimension_numbers<[1], [0], [0], [1], [0, 0, 1, 1], [], []>} : vector<1024x12xbf16>, vector<12x64xbf16>, vector<1024x64xf32> -> vector<1024x64xf32>
    %28 = arith.addf %21, %27 : vector<1024x64xf32>
    %c0_28 = arith.constant 0 : index
    %c0_29 = arith.constant 0 : index
    %29 = vector.load %arg3[%c0_28, %c0_29] : memref<1x64xf32, #tpu.memory_space<vmem>>, vector<1x64xf32>
    %30 = vector.broadcast %29 : vector<1x64xf32> to vector<1024x64xf32>
    %31 = arith.addf %28, %30 : vector<1024x64xf32>
    %cst_30 = arith.constant 0.000000e+00 : f32
    %32 = vector.broadcast %cst_30 : f32 to vector<1024x64xf32>
    %33 = arith.cmpf oge, %31, %32 : vector<1024x64xf32>
    %cst_31 = arith.constant 2.000000e-01 : f32
    %34 = vector.broadcast %cst_31 : f32 to vector<1024x64xf32>
    %35 = arith.mulf %34, %31 : vector<1024x64xf32>
    %36 = arith.select %33, %31, %35 : vector<1024x64xi1>, vector<1024x64xf32>
    %37 = arith.truncf %36 : vector<1024x64xf32> to vector<1024x64xbf16>
    %c0_32 = arith.constant 0 : index
    %c0_33 = arith.constant 0 : index
    %c0_34 = arith.constant 0 : index
    %38 = vector.load %arg4[%c0_32, %c0_33, %c0_34] : memref<1x1024x64xbf16, #tpu.memory_space<vmem>>, vector<1x1024x64xbf16>
    %39 = vector.shape_cast %38 : vector<1x1024x64xbf16> to vector<1024x64xbf16>
    %40 = vector.shape_cast %37 : vector<1024x64xbf16> to vector<1x1024x64xbf16>
    tpu.vector_store %arg4[%c0_32, %c0_33, %c0_34], %40 {strides = array<i32>} : memref<1x1024x64xbf16, #tpu.memory_space<vmem>>, vector<1x1024x64xbf16>,
    return
  }
  func.func @transform_0(%arg0: i32) -> (i32, i32, i32, i32) {
    %c0_i32 = arith.constant 0 : i32
    %c0_i32_0 = arith.constant 0 : i32
    %c0_i32_1 = arith.constant 0 : i32
    %c0_i32_2 = arith.constant 0 : i32
    return %arg0, %c0_i32, %c0_i32_0, %c0_i32_1 : i32, i32, i32, i32
  }
  func.func @transform_1(%arg0: i32) -> (i32, i32, i32) {
    %c0_i32 = arith.constant 0 : i32
    %c0_i32_0 = arith.constant 0 : i32
    %c0_i32_1 = arith.constant 0 : i32
    %c0_i32_2 = arith.constant 0 : i32
    return %c0_i32, %c0_i32_0, %c0_i32_1 : i32, i32, i32
  }
  func.func @transform_2(%arg0: i32) -> (i32, i32) {
    %c0_i32 = arith.constant 0 : i32
    %c0_i32_0 = arith.constant 0 : i32
    %c0_i32_1 = arith.constant 0 : i32
    return %c0_i32, %c0_i32_0 : i32, i32
  }
  func.func @transform_3(%arg0: i32) -> (i32, i32, i32) {
    %c0_i32 = arith.constant 0 : i32
    %c0_i32_0 = arith.constant 0 : i32
    %c0_i32_1 = arith.constant 0 : i32
    return %arg0, %c0_i32, %c0_i32_0 : i32, i32, i32
  }
}

module attributes {stable_mosaic.version = 11 : i64} {
  func.func @_conv4x4_s2_kernel(%arg0: i32, %arg1: memref<1x17x17x256xbf16, #tpu.memory_space<vmem>>, %arg2: memref<4x256x128xbf16, #tpu.memory_space<vmem>>, %arg3: memref<1x128xf32, #tpu.memory_space<vmem>>, %arg4: memref<1x256x128xf32, #tpu.memory_space<vmem>>) attributes {dimension_semantics = [#tpu.dimension_semantics<parallel>], iteration_bounds = array<i64: 2>, scalar_prefetch = 0 : i64, scratch_operands = 0 : i64, tpu.core_type = #tpu.core_type<tc>, window_params = [{transform_indices = @transform_0, window_bounds = array<i64: 1, 17, 17, 256>}, {pipeline_mode = #tpu.pipeline_mode<synchronous>, transform_indices = @transform_1, window_bounds = array<i64: 4, 256, 128>}, {pipeline_mode = #tpu.pipeline_mode<synchronous>, transform_indices = @transform_2, window_bounds = array<i64: 1, 128>}, {transform_indices = @transform_3, window_bounds = array<i64: 1, 256, 128>}]} {
    %cst = arith.constant 0.000000e+00 : f32
    %0 = vector.broadcast %cst : f32 to vector<256x128xf32>
    %c0 = arith.constant 0 : index
    %c0_0 = arith.constant 0 : index
    %c0_1 = arith.constant 0 : index
    %c0_2 = arith.constant 0 : index
    %1 = vector.load %arg1[%c0, %c0_0, %c0_1, %c0_2] : memref<1x17x17x256xbf16, #tpu.memory_space<vmem>>, vector<1x16x16x256xbf16>
    %2 = vector.shape_cast %1 : vector<1x16x16x256xbf16> to vector<16x16x256xbf16>
    %3 = vector.shape_cast %2 : vector<16x16x256xbf16> to vector<256x256xbf16>
    %c0_3 = arith.constant 0 : index
    %c0_4 = arith.constant 0 : index
    %c0_5 = arith.constant 0 : index
    %4 = vector.load %arg2[%c0_3, %c0_4, %c0_5] : memref<4x256x128xbf16, #tpu.memory_space<vmem>>, vector<1x256x128xbf16>
    %5 = vector.shape_cast %4 : vector<1x256x128xbf16> to vector<256x128xbf16>
    %cst_6 = arith.constant dense<0.000000e+00> : vector<256x128xf32>
    %6 = tpu.matmul %3, %5, %cst_6 {dimension_numbers = #tpu.dot_dimension_numbers<[1], [0], [0], [1], [0, 0, 1, 1], [], []>} : vector<256x256xbf16>, vector<256x128xbf16>, vector<256x128xf32> -> vector<256x128xf32>
    %7 = arith.addf %0, %6 : vector<256x128xf32>
    %c0_7 = arith.constant 0 : index
    %c0_8 = arith.constant 0 : index
    %c1 = arith.constant 1 : index
    %c0_9 = arith.constant 0 : index
    %8 = vector.load %arg1[%c0_7, %c0_8, %c1, %c0_9] : memref<1x17x17x256xbf16, #tpu.memory_space<vmem>>, vector<1x16x16x256xbf16>
    %9 = vector.shape_cast %8 : vector<1x16x16x256xbf16> to vector<16x16x256xbf16>
    %10 = vector.shape_cast %9 : vector<16x16x256xbf16> to vector<256x256xbf16>
    %c1_10 = arith.constant 1 : index
    %c0_11 = arith.constant 0 : index
    %c0_12 = arith.constant 0 : index
    %11 = vector.load %arg2[%c1_10, %c0_11, %c0_12] : memref<4x256x128xbf16, #tpu.memory_space<vmem>>, vector<1x256x128xbf16>
    %12 = vector.shape_cast %11 : vector<1x256x128xbf16> to vector<256x128xbf16>
    %cst_13 = arith.constant dense<0.000000e+00> : vector<256x128xf32>
    %13 = tpu.matmul %10, %12, %cst_13 {dimension_numbers = #tpu.dot_dimension_numbers<[1], [0], [0], [1], [0, 0, 1, 1], [], []>} : vector<256x256xbf16>, vector<256x128xbf16>, vector<256x128xf32> -> vector<256x128xf32>
    %14 = arith.addf %7, %13 : vector<256x128xf32>
    %c0_14 = arith.constant 0 : index
    %c1_15 = arith.constant 1 : index
    %c0_16 = arith.constant 0 : index
    %c0_17 = arith.constant 0 : index
    %15 = vector.load %arg1[%c0_14, %c1_15, %c0_16, %c0_17] : memref<1x17x17x256xbf16, #tpu.memory_space<vmem>>, vector<1x16x16x256xbf16>
    %16 = vector.shape_cast %15 : vector<1x16x16x256xbf16> to vector<16x16x256xbf16>
    %17 = vector.shape_cast %16 : vector<16x16x256xbf16> to vector<256x256xbf16>
    %c2 = arith.constant 2 : index
    %c0_18 = arith.constant 0 : index
    %c0_19 = arith.constant 0 : index
    %18 = vector.load %arg2[%c2, %c0_18, %c0_19] : memref<4x256x128xbf16, #tpu.memory_space<vmem>>, vector<1x256x128xbf16>
    %19 = vector.shape_cast %18 : vector<1x256x128xbf16> to vector<256x128xbf16>
    %cst_20 = arith.constant dense<0.000000e+00> : vector<256x128xf32>
    %20 = tpu.matmul %17, %19, %cst_20 {dimension_numbers = #tpu.dot_dimension_numbers<[1], [0], [0], [1], [0, 0, 1, 1], [], []>} : vector<256x256xbf16>, vector<256x128xbf16>, vector<256x128xf32> -> vector<256x128xf32>
    %21 = arith.addf %14, %20 : vector<256x128xf32>
    %c0_21 = arith.constant 0 : index
    %c1_22 = arith.constant 1 : index
    %c1_23 = arith.constant 1 : index
    %c0_24 = arith.constant 0 : index
    %22 = vector.load %arg1[%c0_21, %c1_22, %c1_23, %c0_24] : memref<1x17x17x256xbf16, #tpu.memory_space<vmem>>, vector<1x16x16x256xbf16>
    %23 = vector.shape_cast %22 : vector<1x16x16x256xbf16> to vector<16x16x256xbf16>
    %24 = vector.shape_cast %23 : vector<16x16x256xbf16> to vector<256x256xbf16>
    %c3 = arith.constant 3 : index
    %c0_25 = arith.constant 0 : index
    %c0_26 = arith.constant 0 : index
    %25 = vector.load %arg2[%c3, %c0_25, %c0_26] : memref<4x256x128xbf16, #tpu.memory_space<vmem>>, vector<1x256x128xbf16>
    %26 = vector.shape_cast %25 : vector<1x256x128xbf16> to vector<256x128xbf16>
    %cst_27 = arith.constant dense<0.000000e+00> : vector<256x128xf32>
    %27 = tpu.matmul %24, %26, %cst_27 {dimension_numbers = #tpu.dot_dimension_numbers<[1], [0], [0], [1], [0, 0, 1, 1], [], []>} : vector<256x256xbf16>, vector<256x128xbf16>, vector<256x128xf32> -> vector<256x128xf32>
    %28 = arith.addf %21, %27 : vector<256x128xf32>
    %c0_28 = arith.constant 0 : index
    %c0_29 = arith.constant 0 : index
    %29 = vector.load %arg3[%c0_28, %c0_29] : memref<1x128xf32, #tpu.memory_space<vmem>>, vector<1x128xf32>
    %30 = vector.broadcast %29 : vector<1x128xf32> to vector<256x128xf32>
    %31 = arith.addf %28, %30 : vector<256x128xf32>
    %cst_30 = arith.constant 0.000000e+00 : f32
    %32 = vector.broadcast %cst_30 : f32 to vector<256x128xf32>
    %33 = arith.cmpf oge, %31, %32 : vector<256x128xf32>
    %cst_31 = arith.constant 2.000000e-01 : f32
    %34 = vector.broadcast %cst_31 : f32 to vector<256x128xf32>
    %35 = arith.mulf %34, %31 : vector<256x128xf32>
    %36 = arith.select %33, %31, %35 : vector<256x128xi1>, vector<256x128xf32>
    %c0_32 = arith.constant 0 : index
    %c0_33 = arith.constant 0 : index
    %c0_34 = arith.constant 0 : index
    %37 = vector.load %arg4[%c0_32, %c0_33, %c0_34] : memref<1x256x128xf32, #tpu.memory_space<vmem>>, vector<1x256x128xf32>
    %38 = vector.shape_cast %37 : vector<1x256x128xf32> to vector<256x128xf32>
    %39 = vector.shape_cast %36 : vector<256x128xf32> to vector<1x256x128xf32>
    tpu.vector_store %arg4[%c0_32, %c0_33, %c0_34], %39 {strides = array<i32>} : memref<1x256x128xf32, #tpu.memory_space<vmem>>, vector<1x256x128xf32>,
    return
  }
  func.func @transform_0(%arg0: i32) -> (i32, i32, i32, i32) {
    %c0_i32 = arith.constant 0 : i32
    %c0_i32_0 = arith.constant 0 : i32
    %c0_i32_1 = arith.constant 0 : i32
    %c0_i32_2 = arith.constant 0 : i32
    return %arg0, %c0_i32, %c0_i32_0, %c0_i32_1 : i32, i32, i32, i32
  }
  func.func @transform_1(%arg0: i32) -> (i32, i32, i32) {
    %c0_i32 = arith.constant 0 : i32
    %c0_i32_0 = arith.constant 0 : i32
    %c0_i32_1 = arith.constant 0 : i32
    %c0_i32_2 = arith.constant 0 : i32
    return %c0_i32, %c0_i32_0, %c0_i32_1 : i32, i32, i32
  }
  func.func @transform_2(%arg0: i32) -> (i32, i32) {
    %c0_i32 = arith.constant 0 : i32
    %c0_i32_0 = arith.constant 0 : i32
    %c0_i32_1 = arith.constant 0 : i32
    return %c0_i32, %c0_i32_0 : i32, i32
  }
  func.func @transform_3(%arg0: i32) -> (i32, i32, i32) {
    %c0_i32 = arith.constant 0 : i32
    %c0_i32_0 = arith.constant 0 : i32
    %c0_i32_1 = arith.constant 0 : i32
    return %arg0, %c0_i32, %c0_i32_0 : i32, i32, i32
  }
}

module attributes {stable_mosaic.version = 11 : i64} {
  func.func @_conv4x4_s2_fc_kernel(%arg0: i32, %arg1: memref<1x9x9x512xf32, #tpu.memory_space<vmem>>, %arg2: memref<4x512x256xbf16, #tpu.memory_space<vmem>>, %arg3: memref<1x256xf32, #tpu.memory_space<vmem>>, %arg4: memref<64x256xf32, #tpu.memory_space<vmem>>, %arg5: memref<1x1xf32, #tpu.memory_space<vmem>>, %arg6: memref<1x1x1xf32, #tpu.memory_space<vmem>>) attributes {dimension_semantics = [#tpu.dimension_semantics<parallel>], iteration_bounds = array<i64: 2>, scalar_prefetch = 0 : i64, scratch_operands = 0 : i64, tpu.core_type = #tpu.core_type<tc>, window_params = [{transform_indices = @transform_0, window_bounds = array<i64: 1, 9, 9, 512>}, {pipeline_mode = #tpu.pipeline_mode<synchronous>, transform_indices = @transform_1, window_bounds = array<i64: 4, 512, 256>}, {pipeline_mode = #tpu.pipeline_mode<synchronous>, transform_indices = @transform_2, window_bounds = array<i64: 1, 256>}, {pipeline_mode = #tpu.pipeline_mode<synchronous>, transform_indices = @transform_3, window_bounds = array<i64: 64, 256>}, {pipeline_mode = #tpu.pipeline_mode<synchronous>, transform_indices = @transform_4, window_bounds = array<i64: 1, 1>}, {transform_indices = @transform_5, window_bounds = array<i64: 1, 1, 1>}]} {
    %cst = arith.constant 0.000000e+00 : f32
    %0 = vector.broadcast %cst : f32 to vector<64x256xf32>
    %c0 = arith.constant 0 : index
    %c0_0 = arith.constant 0 : index
    %c0_1 = arith.constant 0 : index
    %c0_2 = arith.constant 0 : index
    %1 = vector.load %arg1[%c0, %c0_0, %c0_1, %c0_2] : memref<1x9x9x512xf32, #tpu.memory_space<vmem>>, vector<1x8x8x512xf32>
    %2 = vector.shape_cast %1 : vector<1x8x8x512xf32> to vector<8x8x512xf32>
    %3 = vector.shape_cast %2 : vector<8x8x512xf32> to vector<64x512xf32>
    %4 = arith.truncf %3 : vector<64x512xf32> to vector<64x512xbf16>
    %c0_3 = arith.constant 0 : index
    %c0_4 = arith.constant 0 : index
    %c0_5 = arith.constant 0 : index
    %5 = vector.load %arg2[%c0_3, %c0_4, %c0_5] : memref<4x512x256xbf16, #tpu.memory_space<vmem>>, vector<1x512x256xbf16>
    %6 = vector.shape_cast %5 : vector<1x512x256xbf16> to vector<512x256xbf16>
    %cst_6 = arith.constant dense<0.000000e+00> : vector<64x256xf32>
    %7 = tpu.matmul %4, %6, %cst_6 {dimension_numbers = #tpu.dot_dimension_numbers<[1], [0], [0], [1], [0, 0, 1, 1], [], []>} : vector<64x512xbf16>, vector<512x256xbf16>, vector<64x256xf32> -> vector<64x256xf32>
    %8 = arith.addf %0, %7 : vector<64x256xf32>
    %c0_7 = arith.constant 0 : index
    %c0_8 = arith.constant 0 : index
    %c1 = arith.constant 1 : index
    %c0_9 = arith.constant 0 : index
    %9 = vector.load %arg1[%c0_7, %c0_8, %c1, %c0_9] : memref<1x9x9x512xf32, #tpu.memory_space<vmem>>, vector<1x8x8x512xf32>
    %10 = vector.shape_cast %9 : vector<1x8x8x512xf32> to vector<8x8x512xf32>
    %11 = vector.shape_cast %10 : vector<8x8x512xf32> to vector<64x512xf32>
    %12 = arith.truncf %11 : vector<64x512xf32> to vector<64x512xbf16>
    %c1_10 = arith.constant 1 : index
    %c0_11 = arith.constant 0 : index
    %c0_12 = arith.constant 0 : index
    %13 = vector.load %arg2[%c1_10, %c0_11, %c0_12] : memref<4x512x256xbf16, #tpu.memory_space<vmem>>, vector<1x512x256xbf16>
    %14 = vector.shape_cast %13 : vector<1x512x256xbf16> to vector<512x256xbf16>
    %cst_13 = arith.constant dense<0.000000e+00> : vector<64x256xf32>
    %15 = tpu.matmul %12, %14, %cst_13 {dimension_numbers = #tpu.dot_dimension_numbers<[1], [0], [0], [1], [0, 0, 1, 1], [], []>} : vector<64x512xbf16>, vector<512x256xbf16>, vector<64x256xf32> -> vector<64x256xf32>
    %16 = arith.addf %8, %15 : vector<64x256xf32>
    %c0_14 = arith.constant 0 : index
    %c1_15 = arith.constant 1 : index
    %c0_16 = arith.constant 0 : index
    %c0_17 = arith.constant 0 : index
    %17 = vector.load %arg1[%c0_14, %c1_15, %c0_16, %c0_17] : memref<1x9x9x512xf32, #tpu.memory_space<vmem>>, vector<1x8x8x512xf32>
    %18 = vector.shape_cast %17 : vector<1x8x8x512xf32> to vector<8x8x512xf32>
    %19 = vector.shape_cast %18 : vector<8x8x512xf32> to vector<64x512xf32>
    %20 = arith.truncf %19 : vector<64x512xf32> to vector<64x512xbf16>
    %c2 = arith.constant 2 : index
    %c0_18 = arith.constant 0 : index
    %c0_19 = arith.constant 0 : index
    %21 = vector.load %arg2[%c2, %c0_18, %c0_19] : memref<4x512x256xbf16, #tpu.memory_space<vmem>>, vector<1x512x256xbf16>
    %22 = vector.shape_cast %21 : vector<1x512x256xbf16> to vector<512x256xbf16>
    %cst_20 = arith.constant dense<0.000000e+00> : vector<64x256xf32>
    %23 = tpu.matmul %20, %22, %cst_20 {dimension_numbers = #tpu.dot_dimension_numbers<[1], [0], [0], [1], [0, 0, 1, 1], [], []>} : vector<64x512xbf16>, vector<512x256xbf16>, vector<64x256xf32> -> vector<64x256xf32>
    %24 = arith.addf %16, %23 : vector<64x256xf32>
    %c0_21 = arith.constant 0 : index
    %c1_22 = arith.constant 1 : index
    %c1_23 = arith.constant 1 : index
    %c0_24 = arith.constant 0 : index
    %25 = vector.load %arg1[%c0_21, %c1_22, %c1_23, %c0_24] : memref<1x9x9x512xf32, #tpu.memory_space<vmem>>, vector<1x8x8x512xf32>
    %26 = vector.shape_cast %25 : vector<1x8x8x512xf32> to vector<8x8x512xf32>
    %27 = vector.shape_cast %26 : vector<8x8x512xf32> to vector<64x512xf32>
    %28 = arith.truncf %27 : vector<64x512xf32> to vector<64x512xbf16>
    %c3 = arith.constant 3 : index
    %c0_25 = arith.constant 0 : index
    %c0_26 = arith.constant 0 : index
    %29 = vector.load %arg2[%c3, %c0_25, %c0_26] : memref<4x512x256xbf16, #tpu.memory_space<vmem>>, vector<1x512x256xbf16>
    %30 = vector.shape_cast %29 : vector<1x512x256xbf16> to vector<512x256xbf16>
    %cst_27 = arith.constant dense<0.000000e+00> : vector<64x256xf32>
    %31 = tpu.matmul %28, %30, %cst_27 {dimension_numbers = #tpu.dot_dimension_numbers<[1], [0], [0], [1], [0, 0, 1, 1], [], []>} : vector<64x512xbf16>, vector<512x256xbf16>, vector<64x256xf32> -> vector<64x256xf32>
    %32 = arith.addf %24, %31 : vector<64x256xf32>
    %c0_28 = arith.constant 0 : index
    %c0_29 = arith.constant 0 : index
    %33 = vector.load %arg3[%c0_28, %c0_29] : memref<1x256xf32, #tpu.memory_space<vmem>>, vector<1x256xf32>
    %34 = vector.broadcast %33 : vector<1x256xf32> to vector<64x256xf32>
    %35 = arith.addf %32, %34 : vector<64x256xf32>
    %cst_30 = arith.constant 0.000000e+00 : f32
    %36 = vector.broadcast %cst_30 : f32 to vector<64x256xf32>
    %37 = arith.cmpf oge, %35, %36 : vector<64x256xf32>
    %cst_31 = arith.constant 2.000000e-01 : f32
    %38 = vector.broadcast %cst_31 : f32 to vector<64x256xf32>
    %39 = arith.mulf %38, %35 : vector<64x256xf32>
    %40 = arith.select %37, %35, %39 : vector<64x256xi1>, vector<64x256xf32>
    %c0_32 = arith.constant 0 : index
    %c0_33 = arith.constant 0 : index
    %41 = vector.load %arg4[%c0_32, %c0_33] : memref<64x256xf32, #tpu.memory_space<vmem>>, vector<64x256xf32>
    %42 = arith.mulf %40, %41 : vector<64x256xf32>
    %cst_34 = arith.constant dense<0.000000e+00> : vector<64xf32>
    %43 = vector.multi_reduction <add>, %42, %cst_34 [1] : vector<64x256xf32> to vector<64xf32>
    %44 = vector.shape_cast %43 : vector<64xf32> to vector<64x1xf32>
    %cst_35 = arith.constant dense<0.000000e+00> : vector<1xf32>
    %45 = vector.multi_reduction <add>, %44, %cst_35 [0] : vector<64x1xf32> to vector<1xf32>
    %46 = vector.shape_cast %45 : vector<1xf32> to vector<1x1xf32>
    %c0_36 = arith.constant 0 : index
    %c0_37 = arith.constant 0 : index
    %47 = vector.load %arg5[%c0_36, %c0_37] : memref<1x1xf32, #tpu.memory_space<vmem>>, vector<1x1xf32>
    %48 = arith.addf %46, %47 : vector<1x1xf32>
    %cst_38 = arith.constant 0.000000e+00 : f32
    %49 = vector.broadcast %cst_38 : f32 to vector<1x1xf32>
    %50 = arith.subf %49, %48 : vector<1x1xf32>
    %51 = math.exp %50 : vector<1x1xf32>
    %cst_39 = arith.constant 1.000000e+00 : f32
    %52 = vector.broadcast %cst_39 : f32 to vector<1x1xf32>
    %53 = arith.addf %52, %51 : vector<1x1xf32>
    %54 = tpu.reciprocal %53 {approx = true} : vector<1x1xf32> -> vector<1x1xf32>
    %c0_40 = arith.constant 0 : index
    %c0_41 = arith.constant 0 : index
    %c0_42 = arith.constant 0 : index
    %55 = vector.load %arg6[%c0_40, %c0_41, %c0_42] : memref<1x1x1xf32, #tpu.memory_space<vmem>>, vector<1x1x1xf32>
    %56 = vector.shape_cast %55 : vector<1x1x1xf32> to vector<1x1xf32>
    %57 = vector.shape_cast %54 : vector<1x1xf32> to vector<1x1x1xf32>
    tpu.vector_store %arg6[%c0_40, %c0_41, %c0_42], %57 {strides = array<i32>} : memref<1x1x1xf32, #tpu.memory_space<vmem>>, vector<1x1x1xf32>,
    return
  }
  func.func @transform_0(%arg0: i32) -> (i32, i32, i32, i32) {
    %c0_i32 = arith.constant 0 : i32
    %c0_i32_0 = arith.constant 0 : i32
    %c0_i32_1 = arith.constant 0 : i32
    %c0_i32_2 = arith.constant 0 : i32
    return %arg0, %c0_i32, %c0_i32_0, %c0_i32_1 : i32, i32, i32, i32
  }
  func.func @transform_1(%arg0: i32) -> (i32, i32, i32) {
    %c0_i32 = arith.constant 0 : i32
    %c0_i32_0 = arith.constant 0 : i32
    %c0_i32_1 = arith.constant 0 : i32
    %c0_i32_2 = arith.constant 0 : i32
    return %c0_i32, %c0_i32_0, %c0_i32_1 : i32, i32, i32
  }
  func.func @transform_2(%arg0: i32) -> (i32, i32) {
    %c0_i32 = arith.constant 0 : i32
    %c0_i32_0 = arith.constant 0 : i32
    %c0_i32_1 = arith.constant 0 : i32
    return %c0_i32, %c0_i32_0 : i32, i32
  }
  func.func @transform_3(%arg0: i32) -> (i32, i32) {
    %c0_i32 = arith.constant 0 : i32
    %c0_i32_0 = arith.constant 0 : i32
    %c0_i32_1 = arith.constant 0 : i32
    return %c0_i32, %c0_i32_0 : i32, i32
  }
  func.func @transform_4(%arg0: i32) -> (i32, i32) {
    %c0_i32 = arith.constant 0 : i32
    %c0_i32_0 = arith.constant 0 : i32
    %c0_i32_1 = arith.constant 0 : i32
    return %c0_i32, %c0_i32_0 : i32, i32
  }
  func.func @transform_5(%arg0: i32) -> (i32, i32, i32) {
    %c0_i32 = arith.constant 0 : i32
    %c0_i32_0 = arith.constant 0 : i32
    %c0_i32_1 = arith.constant 0 : i32
    return %arg0, %c0_i32, %c0_i32_0 : i32, i32, i32
  }
}

</mosaic_0001>

<llo_original>
// kernel: discriminator_forward.3
$region0: #{discriminator_forward.3}
  #allocation0 [shape = 'u32[]', space=smem, size = 0x4, offset = 0x4, fixed_abs, tag = 'smem constant byte address 0x4 - core index']
  #allocation1 [shape = 'u32[72,128]{1,0:T(1,128)}', space=vmem, size = 0x9000, scoped, tag = 'internal scratch']
  %s0 = inlined_call_operand.vmem [shape: bf16[2,33,33,12], index: 0, kind: input, shape index: {}]
  %s1 = inlined_call_operand.vmem [shape: bf16[4,12,64], index: 1, kind: input, shape index: {}]
  %s2 = inlined_call_operand.vmem [shape: f32[1,64], index: 2, kind: input, shape index: {}]
  %s3 = inlined_call_operand.vmem [shape: bf16[2,1024,64], index: 3, kind: output, shape index: {}]
  %s4 = sld [smem:[#allocation0]]
  $region45: #{discriminator_forward.3} parent=0
    _
  %s6 = ssub.s32 1, %s4
  %s7 = scalar_select 0, %s6, %s4
  loop: start=0, step=1, limit=4
  $region2: #{discriminator_forward.3} parent=0 // loop_pre_header
    _
  $region3: #{discriminator_forward.3} parent=0 // loop_header
    %s9 = sphi 0, %s13
    %p10 = scmp.ge.s32.totalorder %s9, 4
    %s19 = sphi 0, %s21
    %s22 = sphi 0, %s19
    %s23 = sphi 0, %s22
    %s39 = sphi 0, %s23
    %s43 = sphi 0, %s43
    %s45 = sphi 0, %s43
    %s46 = sphi 0, %s45
    %s60 = sphi 0, %s46
    %s64 = sphi 0, %s64
    %s66 = sphi 0, %s64
    %s67 = sphi 0, %s66
    %s81 = sphi 0, %s67
    %s87 = sphi 0, %s89
    %s90 = sphi 0, %s87
    %s91 = sphi 0, %s90
    %s107 = sphi 0, %s91
  $region4: #{discriminator_forward.3} parent=0 // loop_header_branch
    %12 = sbr.rel (%p10) target = $region8
  $region5: #{discriminator_forward.3} parent=0 // loop_body
    %s14 = ssub.s32 %s9, 1
    %s15 = ssub.s32 %s9, 2
    %s16 = sadd.s32 %s9, 1
    %s17 = ssub.s32 %s9, %s16
    %p18 = scmp.eq.s32.totalorder %s17, 0
    %s20 = sadd.s32 %s19, 1
    %s21 = scalar_select %p18, %s19, %s20
    %p24 = pneg %p18
    %p25 = scmp.eq.s32.totalorder %s9, 1
    %p26 = por %p24, %p25
    %p27 = scmp.ne.s32.totalorder %s19, %s22
    %p28 = scmp.eq.s32.totalorder %s9, 0
    %p29 = por %p27, %p28
    %p30 = scmp.ne.s32.totalorder %s19, %s22
    %p31 = scmp.eq.s32.totalorder %s14, 1
    %p32 = por %p30, %p31
    %p33 = scmp.ne.s32.totalorder %s22, %s23
    %p34 = scmp.eq.s32.totalorder %s14, 0
    %p35 = por %p33, %p34
    %p36 = scmp.ne.s32.totalorder %s22, %s23
    %p37 = scmp.eq.s32.totalorder %s15, 1
    %p38 = por %p36, %p37
    %p40 = scmp.ne.s32.totalorder %s23, %s39
    %p41 = scmp.eq.s32.totalorder %s15, 0
    %p42 = por %p40, %p41
    %s44 = sadd.s32 %s43, 1
    %p47 = scmp.eq.s32.totalorder %s9, 1
    %p48 = scmp.ne.s32.totalorder %s43, %s45
    %p49 = scmp.eq.s32.totalorder %s9, 0
    %p50 = por %p48, %p49
    %p51 = scmp.ne.s32.totalorder %s43, %s45
    %p52 = scmp.eq.s32.totalorder %s14, 1
    %p53 = por %p51, %p52
    %p54 = scmp.ne.s32.totalorder %s45, %s46
    %p55 = scmp.eq.s32.totalorder %s14, 0
    %p56 = por %p54, %p55
    %p57 = scmp.ne.s32.totalorder %s45, %s46
    %p58 = scmp.eq.s32.totalorder %s15, 1
    %p59 = por %p57, %p58
    %p61 = scmp.ne.s32.totalorder %s46, %s60
    %p62 = scmp.eq.s32.totalorder %s15, 0
    %p63 = por %p61, %p62
    %s65 = sadd.s32 %s64, 1
    %p68 = scmp.eq.s32.totalorder %s9, 1
    %p69 = scmp.ne.s32.totalorder %s64, %s66
    %p70 = scmp.eq.s32.totalorder %s9, 0
    %p71 = por %p69, %p70
    %p72 = scmp.ne.s32.totalorder %s64, %s66
    %p73 = scmp.eq.s32.totalorder %s14, 1
    %p74 = por %p72, %p73
    %p75 = scmp.ne.s32.totalorder %s66, %s67
    %p76 = scmp.eq.s32.totalorder %s14, 0
    %p77 = por %p75, %p76
    %p78 = scmp.ne.s32.totalorder %s66, %s67
    %p79 = scmp.eq.s32.totalorder %s15, 1
    %p80 = por %p78, %p79
    %p82 = scmp.ne.s32.totalorder %s67, %s81
    %p83 = scmp.eq.s32.totalorder %s15, 0
    %p84 = por %p82, %p83
    %s85 = ssub.s32 %s9, %s16
    %p86 = scmp.eq.s32.totalorder %s85, 0
    %s88 = sadd.s32 %s87, 1
    %s89 = scalar_select %p86, %s87, %s88
    %p92 = pneg %p86
    %p93 = scmp.eq.s32.totalorder %s9, 1
    %p94 = por %p92, %p93
    %p95 = scmp.ne.s32.totalorder %s87, %s90
    %p96 = scmp.eq.s32.totalorder %s9, 0
    %p97 = por %p95, %p96
    %p98 = scmp.ne.s32.totalorder %s87, %s90
    %p99 = scmp.eq.s32.totalorder %s14, 1
    %p100 = por %p98, %p99
    %p101 = scmp.ne.s32.totalorder %s90, %s91
    %p102 = scmp.eq.s32.totalorder %s14, 0
    %p103 = por %p101, %p102
    %p104 = scmp.ne.s32.totalorder %s90, %s91
    %p105 = scmp.eq.s32.totalorder %s15, 1
    %p106 = por %p104, %p105
    %p108 = scmp.ne.s32.totalorder %s91, %s107
    %p109 = scmp.eq.s32.totalorder %s15, 0
    %p110 = por %p108, %p109
    %p111 = scmp.le.s32.totalorder 1, %s9
    %p112 = scmp.lt.s32.totalorder %s9, 3
    %p113 = pnand %p111, %p112
    %p114 = pneg %p113
    // Predicated region
    $region9: #{discriminator_forward.3} parent=5 // pred_check
      _
    $region10: #{discriminator_forward.3} parent=5 // pred_check_branch
      %116 = sbr.rel (%p113) target = $region12
    $region11: #{discriminator_forward.3} parent=5 // pred_region
      %s117 = ssub.s32 %s9, 1
      // Predicated region
      $region13: #{discriminator_forward.3} parent=11 // pred_check
        %p118 = pneg %p56
      $region14: #{discriminator_forward.3} parent=11 // pred_check_branch
        %120 = sbr.rel (%p118) target = $region16
      $region15: #{discriminator_forward.3} parent=11 // pred_region
        _
      $region16: #{discriminator_forward.3} parent=11 // pred_fallthru
        _
      // Predicated region
      $region17: #{discriminator_forward.3} parent=11 // pred_check
        %p121 = pneg %p77
      $region18: #{discriminator_forward.3} parent=11 // pred_check_branch
        %123 = sbr.rel (%p121) target = $region20
      $region19: #{discriminator_forward.3} parent=11 // pred_region
        _
      $region20: #{discriminator_forward.3} parent=11 // pred_fallthru
        _
    $region12: #{discriminator_forward.3} parent=5 // pred_fallthru
      _
    %p124 = scmp.lt.s32.totalorder %s9, 2
    // Predicated region
    $region21: #{discriminator_forward.3} parent=5 // pred_check
      %p125 = pneg %p124
    $region22: #{discriminator_forward.3} parent=5 // pred_check_branch
      %127 = sbr.rel (%p125) target = $region24
    $region23: #{discriminator_forward.3} parent=5 // pred_region
      // Predicated region
      $region25: #{discriminator_forward.3} parent=23 // pred_check
        %p128 = pneg %p29
      $region26: #{discriminator_forward.3} parent=23 // pred_check_branch
        %130 = sbr.rel (%p128) target = $region28
      $region27: #{discriminator_forward.3} parent=23 // pred_region
        %p131 = scmp.lt.s32.totalorder %s9, 1
        %s132 = scalar_select %p131, %s9, 1
        %s133 = smul.addr %s132, 165
        %s134 = smul.addr %s133, 4
        %s135 = scalar_lea.vmem %s0, %s134
      $region28: #{discriminator_forward.3} parent=23 // pred_fallthru
        _
    $region24: #{discriminator_forward.3} parent=5 // pred_fallthru
      _
    %p136 = scmp.le.s32.totalorder 1, %s9
    %p137 = scmp.lt.s32.totalorder %s9, 3
    %p138 = pnand %p136, %p137
    %p139 = pneg %p138
    // Predicated region
    $region29: #{discriminator_forward.3} parent=5 // pred_check
      _
    $region30: #{discriminator_forward.3} parent=5 // pred_check_branch
      %141 = sbr.rel (%p138) target = $region32
    $region31: #{discriminator_forward.3} parent=5 // pred_region
      %s142 = ssub.s32 %s9, 1
      %p143 = scmp.lt.s32.totalorder %s14, 1
      %s144 = scalar_select %p143, %s14, 1
      %s145 = smul.addr %s144, 165
      %s146 = smul.addr %s145, 4
      %s147 = scalar_lea.vmem %s0, %s146
      %p148 = pneg %p35
      %p149 = pneg %p32
      %p150 = pneg %p56
      %p151 = pneg %p53
      %p152 = pneg %p77
      %p153 = pneg %p74
      %p154 = pneg %p103
      %p155 = pneg %p100
      %p156 = scmp.lt.s32.totalorder %s14, 1
      %s157 = scalar_select %p156, %s14, 1
      %s158 = smul.addr %s157, 128
      %s159 = smul.addr %s158, 4
      %s160 = scalar_lea.vmem %s3, %s159
      %p161 = scmp.lt.s32.totalorder %s14, 1
      %s162 = scalar_select %p161, %s14, 1
      %s163 = smul.addr %s162, 165
      %s164 = smul.addr %s163, 4
      %s165 = scalar_lea.vmem %s0, %s164
      %p166 = scmp.lt.s32.totalorder %s14, 1
      %s167 = scalar_select %p166, %s14, 1
      %s168 = smul.addr %s167, 128
      %s169 = smul.addr %s168, 4
      %s170 = scalar_lea.vmem %s3, %s169
      %v172 = vld [vmem:[%s165] sm:$0xf]
      %v173 = vld [vmem:[%s165 + $0x4] sm:$0xf]
      %v174 = vld [vmem:[%s165 + $0x8] sm:$0xf]
      %v175 = vld [vmem:[%s165 + $0xc] sm:$0xf]
      %v176 = vld [vmem:[%s165 + $0x14] sm:$0xf]
      %v177 = vld [vmem:[%s165 + $0x18] sm:$0xf]
      %v178 = vld [vmem:[%s165 + $0x1c] sm:$0xf]
      %v179 = vld [vmem:[%s165 + $0x20] sm:$0xf]
      %v180 = vld [vmem:[%s165 + $0x28] sm:$0xf]
      %v181 = vld [vmem:[%s165 + $0x2c] sm:$0xf]
      %v182 = vld [vmem:[%s165 + $0x30] sm:$0xf]
      %v183 = vld [vmem:[%s165 + $0x34] sm:$0xf]
      %v184 = vld [vmem:[%s165 + $0x3c] sm:$0xf]
      %v185 = vld [vmem:[%s165 + $0x40] sm:$0xf]
      %v186 = vld [vmem:[%s165 + $0x44] sm:$0xf]
      %v187 = vld [vmem:[%s165 + $0x48] sm:$0xf]
      %v188 = vld [vmem:[%s165 + $0x50] sm:$0xf]
      %v189 = vld [vmem:[%s165 + $0x54] sm:$0xf]
      %v190 = vld [vmem:[%s165 + $0x58] sm:$0xf]
      %v191 = vld [vmem:[%s165 + $0x5c] sm:$0xf]
      %v192 = vld [vmem:[%s165 + $0x64] sm:$0xf]
      %v193 = vld [vmem:[%s165 + $0x68] sm:$0xf]
      %v194 = vld [vmem:[%s165 + $0x6c] sm:$0xf]
      %v195 = vld [vmem:[%s165 + $0x70] sm:$0xf]
      %v196 = vld [vmem:[%s165 + $0x78] sm:$0xf]
      %v197 = vld [vmem:[%s165 + $0x7c] sm:$0xf]
      %v198 = vld [vmem:[%s165 + $0x80] sm:$0xf]
      %v199 = vld [vmem:[%s165 + $0x84] sm:$0xf]
      %v200 = vld [vmem:[%s165 + $0x8c] sm:$0xf]
      %v201 = vld [vmem:[%s165 + $0x90] sm:$0xf]
      %v202 = vld [vmem:[%s165 + $0x94] sm:$0xf]
      %v203 = vld [vmem:[%s165 + $0x98] sm:$0xf]
      %v204 = vld [vmem:[%s165 + $0xa0] sm:$0xf]
      %v205 = vld [vmem:[%s165 + $0xa4] sm:$0xf]
      %v206 = vld [vmem:[%s165 + $0xa8] sm:$0xf]
      %v207 = vld [vmem:[%s165 + $0xac] sm:$0xf]
      %v208 = vld [vmem:[%s165 + $0xb4] sm:$0xf]
      %v209 = vld [vmem:[%s165 + $0xb8] sm:$0xf]
      %v210 = vld [vmem:[%s165 + $0xbc] sm:$0xf]
      %v211 = vld [vmem:[%s165 + $0xc0] sm:$0xf]
      %v212 = vld [vmem:[%s165 + $0xc8] sm:$0xf]
      %v213 = vld [vmem:[%s165 + $0xcc] sm:$0xf]
      %v214 = vld [vmem:[%s165 + $0xd0] sm:$0xf]
      %v215 = vld [vmem:[%s165 + $0xd4] sm:$0xf]
      %v216 = vld [vmem:[%s165 + $0xdc] sm:$0xf]
      %v217 = vld [vmem:[%s165 + $0xe0] sm:$0xf]
      %v218 = vld [vmem:[%s165 + $0xe4] sm:$0xf]
      %v219 = vld [vmem:[%s165 + $0xe8] sm:$0xf]
      %v220 = vld [vmem:[%s165 + $0xf0] sm:$0xf]
      %v221 = vld [vmem:[%s165 + $0xf4] sm:$0xf]
      %v222 = vld [vmem:[%s165 + $0xf8] sm:$0xf]
      %v223 = vld [vmem:[%s165 + $0xfc] sm:$0xf]
      %v224 = vld [vmem:[%s165 + $0x104] sm:$0xf]
      %v225 = vld [vmem:[%s165 + $0x108] sm:$0xf]
      %v226 = vld [vmem:[%s165 + $0x10c] sm:$0xf]
      %v227 = vld [vmem:[%s165 + $0x110] sm:$0xf]
      %v228 = vld [vmem:[%s165 + $0x118] sm:$0xf]
      %v229 = vld [vmem:[%s165 + $0x11c] sm:$0xf]
      %v230 = vld [vmem:[%s165 + $0x120] sm:$0xf]
      %v231 = vld [vmem:[%s165 + $0x124] sm:$0xf]
      %v232 = vld [vmem:[%s165 + $0x12c] sm:$0xf]
      %v233 = vld [vmem:[%s165 + $0x130] sm:$0xf]
      %v234 = vld [vmem:[%s165 + $0x134] sm:$0xf]
      %v235 = vld [vmem:[%s165 + $0x138] sm:$0xf]
      %v236 = vld [vmem:[%s165 + $0x140] sm:$0xf]
      %v237 = vld [vmem:[%s165 + $0x144] sm:$0xf]
      %v238 = vld [vmem:[%s165 + $0x148] sm:$0xf]
      %v239 = vld [vmem:[%s165 + $0x14c] sm:$0xf]
      %v240 = vld [vmem:[%s165 + $0x154] sm:$0xf]
      %v241 = vld [vmem:[%s165 + $0x158] sm:$0xf]
      %v242 = vld [vmem:[%s165 + $0x15c] sm:$0xf]
      %v243 = vld [vmem:[%s165 + $0x160] sm:$0xf]
      %v244 = vld [vmem:[%s165 + $0x168] sm:$0xf]
      %v245 = vld [vmem:[%s165 + $0x16c] sm:$0xf]
      %v246 = vld [vmem:[%s165 + $0x170] sm:$0xf]
      %v247 = vld [vmem:[%s165 + $0x174] sm:$0xf]
      %v248 = vld [vmem:[%s165 + $0x17c] sm:$0xf]
      %v249 = vld [vmem:[%s165 + $0x180] sm:$0xf]
      %v250 = vld [vmem:[%s165 + $0x184] sm:$0xf]
      %v251 = vld [vmem:[%s165 + $0x188] sm:$0xf]
      %v252 = vld [vmem:[%s165 + $0x190] sm:$0xf]
      %v253 = vld [vmem:[%s165 + $0x194] sm:$0xf]
      %v254 = vld [vmem:[%s165 + $0x198] sm:$0xf]
      %v255 = vld [vmem:[%s165 + $0x19c] sm:$0xf]
      %v256 = vld [vmem:[%s165 + $0x1a4] sm:$0xf]
      %v257 = vld [vmem:[%s165 + $0x1a8] sm:$0xf]
      %v258 = vld [vmem:[%s165 + $0x1ac] sm:$0xf]
      %v259 = vld [vmem:[%s165 + $0x1b0] sm:$0xf]
      %v260 = vld [vmem:[%s165 + $0x1b8] sm:$0xf]
      %v261 = vld [vmem:[%s165 + $0x1bc] sm:$0xf]
      %v262 = vld [vmem:[%s165 + $0x1c0] sm:$0xf]
      %v263 = vld [vmem:[%s165 + $0x1c4] sm:$0xf]
      %v264 = vld [vmem:[%s165 + $0x1cc] sm:$0xf]
      %v265 = vld [vmem:[%s165 + $0x1d0] sm:$0xf]
      %v266 = vld [vmem:[%s165 + $0x1d4] sm:$0xf]
      %v267 = vld [vmem:[%s165 + $0x1d8] sm:$0xf]
      %v268 = vld [vmem:[%s165 + $0x1e0] sm:$0xf]
      %v269 = vld [vmem:[%s165 + $0x1e4] sm:$0xf]
      %v270 = vld [vmem:[%s165 + $0x1e8] sm:$0xf]
      %v271 = vld [vmem:[%s165 + $0x1ec] sm:$0xf]
      %v272 = vld [vmem:[%s165 + $0x1f4] sm:$0xf]
      %v273 = vld [vmem:[%s165 + $0x1f8] sm:$0xf]
      %v274 = vld [vmem:[%s165 + $0x1fc] sm:$0xf]
      %v275 = vld [vmem:[%s165 + $0x200] sm:$0xf]
      %v276 = vld [vmem:[%s165 + $0x208] sm:$0xf]
      %v277 = vld [vmem:[%s165 + $0x20c] sm:$0xf]
      %v278 = vld [vmem:[%s165 + $0x210] sm:$0xf]
      %v279 = vld [vmem:[%s165 + $0x214] sm:$0xf]
      %v280 = vld [vmem:[%s165 + $0x21c] sm:$0xf]
      %v281 = vld [vmem:[%s165 + $0x220] sm:$0xf]
      %v282 = vld [vmem:[%s165 + $0x224] sm:$0xf]
      %v283 = vld [vmem:[%s165 + $0x228] sm:$0xf]
      %v284 = vld [vmem:[%s165 + $0x230] sm:$0xf]
      %v285 = vld [vmem:[%s165 + $0x234] sm:$0xf]
      %v286 = vld [vmem:[%s165 + $0x238] sm:$0xf]
      %v287 = vld [vmem:[%s165 + $0x23c] sm:$0xf]
      %v288 = vld [vmem:[%s165 + $0x244] sm:$0xf]
      %v289 = vld [vmem:[%s165 + $0x248] sm:$0xf]
      %v290 = vld [vmem:[%s165 + $0x24c] sm:$0xf]
      %v291 = vld [vmem:[%s165 + $0x250] sm:$0xf]
      %v292 = vld [vmem:[%s165 + $0x258] sm:$0xf]
      %v293 = vld [vmem:[%s165 + $0x25c] sm:$0xf]
      %v294 = vld [vmem:[%s165 + $0x260] sm:$0xf]
      %v295 = vld [vmem:[%s165 + $0x264] sm:$0xf]
      %v296 = vld [vmem:[%s165 + $0x26c] sm:$0xf]
      %v297 = vld [vmem:[%s165 + $0x270] sm:$0xf]
      %v298 = vld [vmem:[%s165 + $0x274] sm:$0xf]
      %v299 = vld [vmem:[%s165 + $0x278] sm:$0xf]
      %v300 = vld [vmem:[%s1] sm:$0xf]
      %v301 = vld [vmem:[%s1 + $0x4] sm:$0x3]
      %v302 = vld [vmem:[%s165 + $0x10] sm:$0x1]
      %v303 = vld [vmem:[%s165 + $0x24] sm:$0x1]
      %v304 = vld [vmem:[%s165 + $0x38] sm:$0x1]
      %v305 = vld [vmem:[%s165 + $0x4c] sm:$0x1]
      %v306 = vld [vmem:[%s165 + $0x60] sm:$0x1]
      %v307 = vld [vmem:[%s165 + $0x74] sm:$0x1]
      %v308 = vld [vmem:[%s165 + $0x88] sm:$0x1]
      %v309 = vld [vmem:[%s165 + $0x9c] sm:$0x1]
      %v310 = vld [vmem:[%s165 + $0xb0] sm:$0x1]
      %v311 = vld [vmem:[%s165 + $0xc4] sm:$0x1]
      %v312 = vld [vmem:[%s165 + $0xd8] sm:$0x1]
      %v313 = vld [vmem:[%s165 + $0xec] sm:$0x1]
      %v314 = vld [vmem:[%s165 + $0x100] sm:$0x1]
      %v315 = vld [vmem:[%s165 + $0x114] sm:$0x1]
      %v316 = vld [vmem:[%s165 + $0x128] sm:$0x1]
      %v317 = vld [vmem:[%s165 + $0x13c] sm:$0x1]
      %v318 = vld [vmem:[%s165 + $0x150] sm:$0x1]
      %v319 = vld [vmem:[%s165 + $0x164] sm:$0x1]
      %v320 = vld [vmem:[%s165 + $0x178] sm:$0x1]
      %v321 = vld [vmem:[%s165 + $0x18c] sm:$0x1]
      %v322 = vld [vmem:[%s165 + $0x1a0] sm:$0x1]
      %v323 = vld [vmem:[%s165 + $0x1b4] sm:$0x1]
      %v324 = vld [vmem:[%s165 + $0x1c8] sm:$0x1]
      %v325 = vld [vmem:[%s165 + $0x1dc] sm:$0x1]
      %v326 = vld [vmem:[%s165 + $0x1f0] sm:$0x1]
      %v327 = vld [vmem:[%s165 + $0x204] sm:$0x1]
      %v328 = vld [vmem:[%s165 + $0x218] sm:$0x1]
      %v329 = vld [vmem:[%s165 + $0x22c] sm:$0x1]
      %v330 = vld [vmem:[%s165 + $0x240] sm:$0x1]
      %v331 = vld [vmem:[%s165 + $0x254] sm:$0x1]
      %v332 = vld [vmem:[%s165 + $0x268] sm:$0x1]
      %v333 = vld [vmem:[%s165 + $0x27c] sm:$0x1]
      %vm334 = vsmask.f32 3328
      %vm335 = vsmask.f32 7440
      %vm336 = vmor %vm334, %vm335
      %v338 = vshrl.u32 %v172, 16
      %v340 = vrot.slane %v338, 4
      %v341 = vshll.u32 %v172, 16
      %v343 = vrot.slane %v341, 5
      %v344 = vor.u32 %v340, %v343
      %v345 = vrot.slane %v344, 4
      %v347 = vshll.u32 %v173, 16
      %v349 = vrot.slane %v347, 5
      %v350 = vsel %vm336, %v345, %v349
      %v351 = vshrl.u32 %v173, 16
      %v353 = vrot.slane %v351, 4
      %v354 = vor.u32 %v353, %v349
      %v355 = vrot.slane %v354, 4
      %v357 = vshll.u32 %v174, 16
      %v359 = vrot.slane %v357, 5
      %v360 = vsel %vm336, %v355, %v359
      %v361 = vshrl.u32 %v174, 16
      %v363 = vrot.slane %v361, 4
      %v364 = vor.u32 %v363, %v359
      %v365 = vrot.slane %v364, 4
      %v367 = vshll.u32 %v175, 16
      %v369 = vrot.slane %v367, 5
      %v370 = vsel %vm336, %v365, %v369
      %v371 = vshrl.u32 %v175, 16
      %v373 = vrot.slane %v371, 4
      %v374 = vor.u32 %v373, %v369
      %v375 = vrot.slane %v374, 4
      %v377 = vshll.u32 %v302, 16
      %v379 = vrot.slane %v377, 5
      %v380 = vsel %vm336, %v375, %v379
      %v382 = vshrl.u32 %v176, 16
      %v384 = vrot.slane %v382, 4
      %v385 = vshll.u32 %v176, 16
      %v387 = vrot.slane %v385, 5
      %v388 = vor.u32 %v384, %v387
      %v389 = vrot.slane %v388, 4
      %v391 = vshll.u32 %v177, 16
      %v393 = vrot.slane %v391, 5
      %v394 = vsel %vm336, %v389, %v393
      %v395 = vshrl.u32 %v177, 16
      %v397 = vrot.slane %v395, 4
      %v398 = vor.u32 %v397, %v393
      %v399 = vrot.slane %v398, 4
      %v401 = vshll.u32 %v178, 16
      %v403 = vrot.slane %v401, 5
      %v404 = vsel %vm336, %v399, %v403
      %v405 = vshrl.u32 %v178, 16
      %v407 = vrot.slane %v405, 4
      %v408 = vor.u32 %v407, %v403
      %v409 = vrot.slane %v408, 4
      %v411 = vshll.u32 %v179, 16
      %v413 = vrot.slane %v411, 5
      %v414 = vsel %vm336, %v409, %v413
      %v415 = vshrl.u32 %v179, 16
      %v417 = vrot.slane %v415, 4
      %v418 = vor.u32 %v417, %v413
      %v419 = vrot.slane %v418, 4
      %v421 = vshll.u32 %v303, 16
      %v423 = vrot.slane %v421, 5
      %v424 = vsel %vm336, %v419, %v423
      %v426 = vshrl.u32 %v180, 16
      %v428 = vrot.slane %v426, 4
      %v429 = vshll.u32 %v180, 16
      %v431 = vrot.slane %v429, 5
      %v432 = vor.u32 %v428, %v431
      %v433 = vrot.slane %v432, 4
      %v435 = vshll.u32 %v181, 16
      %v437 = vrot.slane %v435, 5
      %v438 = vsel %vm336, %v433, %v437
      %v439 = vshrl.u32 %v181, 16
      %v441 = vrot.slane %v439, 4
      %v442 = vor.u32 %v441, %v437
      %v443 = vrot.slane %v442, 4
      %v445 = vshll.u32 %v182, 16
      %v447 = vrot.slane %v445, 5
      %v448 = vsel %vm336, %v443, %v447
      %v449 = vshrl.u32 %v182, 16
      %v451 = vrot.slane %v449, 4
      %v452 = vor.u32 %v451, %v447
      %v453 = vrot.slane %v452, 4
      %v455 = vshll.u32 %v183, 16
      %v457 = vrot.slane %v455, 5
      %v458 = vsel %vm336, %v453, %v457
      %v459 = vshrl.u32 %v183, 16
      %v461 = vrot.slane %v459, 4
      %v462 = vor.u32 %v461, %v457
      %v463 = vrot.slane %v462, 4
      %v465 = vshll.u32 %v304, 16
      %v467 = vrot.slane %v465, 5
      %v468 = vsel %vm336, %v463, %v467
      %v470 = vshrl.u32 %v184, 16
      %v472 = vrot.slane %v470, 4
      %v473 = vshll.u32 %v184, 16
      %v475 = vrot.slane %v473, 5
      %v476 = vor.u32 %v472, %v475
      %v477 = vrot.slane %v476, 4
      %v479 = vshll.u32 %v185, 16
      %v481 = vrot.slane %v479, 5
      %v482 = vsel %vm336, %v477, %v481
      %v483 = vshrl.u32 %v185, 16
      %v485 = vrot.slane %v483, 4
      %v486 = vor.u32 %v485, %v481
      %v487 = vrot.slane %v486, 4
      %v489 = vshll.u32 %v186, 16
      %v491 = vrot.slane %v489, 5
      %v492 = vsel %vm336, %v487, %v491
      %v493 = vshrl.u32 %v186, 16
      %v495 = vrot.slane %v493, 4
      %v496 = vor.u32 %v495, %v491
      %v497 = vrot.slane %v496, 4
      %v499 = vshll.u32 %v187, 16
      %v501 = vrot.slane %v499, 5
      %v502 = vsel %vm336, %v497, %v501
      %v503 = vshrl.u32 %v187, 16
      %v505 = vrot.slane %v503, 4
      %v506 = vor.u32 %v505, %v501
      %v507 = vrot.slane %v506, 4
      %v509 = vshll.u32 %v305, 16
      %v511 = vrot.slane %v509, 5
      %v512 = vsel %vm336, %v507, %v511
      %v514 = vshrl.u32 %v188, 16
      %v516 = vrot.slane %v514, 4
      %v517 = vshll.u32 %v188, 16
      %v519 = vrot.slane %v517, 5
      %v520 = vor.u32 %v516, %v519
      %v521 = vrot.slane %v520, 4
      %v523 = vshll.u32 %v189, 16
      %v525 = vrot.slane %v523, 5
      %v526 = vsel %vm336, %v521, %v525
      %v527 = vshrl.u32 %v189, 16
      %v529 = vrot.slane %v527, 4
      %v530 = vor.u32 %v529, %v525
      %v531 = vrot.slane %v530, 4
      %v533 = vshll.u32 %v190, 16
      %v535 = vrot.slane %v533, 5
      %v536 = vsel %vm336, %v531, %v535
      %v537 = vshrl.u32 %v190, 16
      %v539 = vrot.slane %v537, 4
      %v540 = vor.u32 %v539, %v535
      %v541 = vrot.slane %v540, 4
      %v543 = vshll.u32 %v191, 16
      %v545 = vrot.slane %v543, 5
      %v546 = vsel %vm336, %v541, %v545
      %v547 = vshrl.u32 %v191, 16
      %v549 = vrot.slane %v547, 4
      %v550 = vor.u32 %v549, %v545
      %v551 = vrot.slane %v550, 4
      %v553 = vshll.u32 %v306, 16
      %v555 = vrot.slane %v553, 5
      %v556 = vsel %vm336, %v551, %v555
      %v558 = vshrl.u32 %v192, 16
      %v560 = vrot.slane %v558, 4
      %v561 = vshll.u32 %v192, 16
      %v563 = vrot.slane %v561, 5
      %v564 = vor.u32 %v560, %v563
      %v565 = vrot.slane %v564, 4
      %v567 = vshll.u32 %v193, 16
      %v569 = vrot.slane %v567, 5
      %v570 = vsel %vm336, %v565, %v569
      %v571 = vshrl.u32 %v193, 16
      %v573 = vrot.slane %v571, 4
      %v574 = vor.u32 %v573, %v569
      %v575 = vrot.slane %v574, 4
      %v577 = vshll.u32 %v194, 16
      %v579 = vrot.slane %v577, 5
      %v580 = vsel %vm336, %v575, %v579
      %v581 = vshrl.u32 %v194, 16
      %v583 = vrot.slane %v581, 4
      %v584 = vor.u32 %v583, %v579
      %v585 = vrot.slane %v584, 4
      %v587 = vshll.u32 %v195, 16
      %v589 = vrot.slane %v587, 5
      %v590 = vsel %vm336, %v585, %v589
      %v591 = vshrl.u32 %v195, 16
      %v593 = vrot.slane %v591, 4
      %v594 = vor.u32 %v593, %v589
      %v595 = vrot.slane %v594, 4
      %v597 = vshll.u32 %v307, 16
      %v599 = vrot.slane %v597, 5
      %v600 = vsel %vm336, %v595, %v599
      %v602 = vshrl.u32 %v196, 16
      %v604 = vrot.slane %v602, 4
      %v605 = vshll.u32 %v196, 16
      %v607 = vrot.slane %v605, 5
      %v608 = vor.u32 %v604, %v607
      %v609 = vrot.slane %v608, 4
      %v611 = vshll.u32 %v197, 16
      %v613 = vrot.slane %v611, 5
      %v614 = vsel %vm336, %v609, %v613
      %v615 = vshrl.u32 %v197, 16
      %v617 = vrot.slane %v615, 4
      %v618 = vor.u32 %v617, %v613
      %v619 = vrot.slane %v618, 4
      %v621 = vshll.u32 %v198, 16
      %v623 = vrot.slane %v621, 5
      %v624 = vsel %vm336, %v619, %v623
      %v625 = vshrl.u32 %v198, 16
      %v627 = vrot.slane %v625, 4
      %v628 = vor.u32 %v627, %v623
      %v629 = vrot.slane %v628, 4
      %v631 = vshll.u32 %v199, 16
      %v633 = vrot.slane %v631, 5
      %v634 = vsel %vm336, %v629, %v633
      %v635 = vshrl.u32 %v199, 16
      %v637 = vrot.slane %v635, 4
      %v638 = vor.u32 %v637, %v633
      %v639 = vrot.slane %v638, 4
      %v641 = vshll.u32 %v308, 16
      %v643 = vrot.slane %v641, 5
      %v644 = vsel %vm336, %v639, %v643
      %v646 = vshrl.u32 %v200, 16
      %v648 = vrot.slane %v646, 4
      %v649 = vshll.u32 %v200, 16
      %v651 = vrot.slane %v649, 5
      %v652 = vor.u32 %v648, %v651
      %v653 = vrot.slane %v652, 4
      %v655 = vshll.u32 %v201, 16
      %v657 = vrot.slane %v655, 5
      %v658 = vsel %vm336, %v653, %v657
      %v659 = vshrl.u32 %v201, 16
      %v661 = vrot.slane %v659, 4
      %v662 = vor.u32 %v661, %v657
      %v663 = vrot.slane %v662, 4
      %v665 = vshll.u32 %v202, 16
      %v667 = vrot.slane %v665, 5
      %v668 = vsel %vm336, %v663, %v667
      %v669 = vshrl.u32 %v202, 16
      %v671 = vrot.slane %v669, 4
      %v672 = vor.u32 %v671, %v667
      %v673 = vrot.slane %v672, 4
      %v675 = vshll.u32 %v203, 16
      %v677 = vrot.slane %v675, 5
      %v678 = vsel %vm336, %v673, %v677
      %v679 = vshrl.u32 %v203, 16
      %v681 = vrot.slane %v679, 4
      %v682 = vor.u32 %v681, %v677
      %v683 = vrot.slane %v682, 4
      %v685 = vshll.u32 %v309, 16
      %v687 = vrot.slane %v685, 5
      %v688 = vsel %vm336, %v683, %v687
      %v690 = vshrl.u32 %v204, 16
      %v692 = vrot.slane %v690, 4
      %v693 = vshll.u32 %v204, 16
      %v695 = vrot.slane %v693, 5
      %v696 = vor.u32 %v692, %v695
      %v697 = vrot.slane %v696, 4
      %v699 = vshll.u32 %v205, 16
      %v701 = vrot.slane %v699, 5
      %v702 = vsel %vm336, %v697, %v701
      %v703 = vshrl.u32 %v205, 16
      %v705 = vrot.slane %v703, 4
      %v706 = vor.u32 %v705, %v701
      %v707 = vrot.slane %v706, 4
      %v709 = vshll.u32 %v206, 16
      %v711 = vrot.slane %v709, 5
      %v712 = vsel %vm336, %v707, %v711
      %v713 = vshrl.u32 %v206, 16
      %v715 = vrot.slane %v713, 4
      %v716 = vor.u32 %v715, %v711
      %v717 = vrot.slane %v716, 4
      %v719 = vshll.u32 %v207, 16
      %v721 = vrot.slane %v719, 5
      %v722 = vsel %vm336, %v717, %v721
      %v723 = vshrl.u32 %v207, 16
      %v725 = vrot.slane %v723, 4
      %v726 = vor.u32 %v725, %v721
      %v727 = vrot.slane %v726, 4
      %v729 = vshll.u32 %v310, 16
      %v731 = vrot.slane %v729, 5
      %v732 = vsel %vm336, %v727, %v731
      %v734 = vshrl.u32 %v208, 16
      %v736 = vrot.slane %v734, 4
      %v737 = vshll.u32 %v208, 16
      %v739 = vrot.slane %v737, 5
      %v740 = vor.u32 %v736, %v739
      %v741 = vrot.slane %v740, 4
      %v743 = vshll.u32 %v209, 16
      %v745 = vrot.slane %v743, 5
      %v746 = vsel %vm336, %v741, %v745
      %v747 = vshrl.u32 %v209, 16
      %v749 = vrot.slane %v747, 4
      %v750 = vor.u32 %v749, %v745
      %v751 = vrot.slane %v750, 4
      %v753 = vshll.u32 %v210, 16
      %v755 = vrot.slane %v753, 5
      %v756 = vsel %vm336, %v751, %v755
      %v757 = vshrl.u32 %v210, 16
      %v759 = vrot.slane %v757, 4
      %v760 = vor.u32 %v759, %v755
      %v761 = vrot.slane %v760, 4
      %v763 = vshll.u32 %v211, 16
      %v765 = vrot.slane %v763, 5
      %v766 = vsel %vm336, %v761, %v765
      %v767 = vshrl.u32 %v211, 16
      %v769 = vrot.slane %v767, 4
      %v770 = vor.u32 %v769, %v765
      %v771 = vrot.slane %v770, 4
      %v773 = vshll.u32 %v311, 16
      %v775 = vrot.slane %v773, 5
      %v776 = vsel %vm336, %v771, %v775
      %v778 = vshrl.u32 %v212, 16
      %v780 = vrot.slane %v778, 4
      %v781 = vshll.u32 %v212, 16
      %v783 = vrot.slane %v781, 5
      %v784 = vor.u32 %v780, %v783
      %v785 = vrot.slane %v784, 4
      %v787 = vshll.u32 %v213, 16
      %v789 = vrot.slane %v787, 5
      %v790 = vsel %vm336, %v785, %v789
      %v791 = vshrl.u32 %v213, 16
      %v793 = vrot.slane %v791, 4
      %v794 = vor.u32 %v793, %v789
      %v795 = vrot.slane %v794, 4
      %v797 = vshll.u32 %v214, 16
      %v799 = vrot.slane %v797, 5
      %v800 = vsel %vm336, %v795, %v799
      %v801 = vshrl.u32 %v214, 16
      %v803 = vrot.slane %v801, 4
      %v804 = vor.u32 %v803, %v799
      %v805 = vrot.slane %v804, 4
      %v807 = vshll.u32 %v215, 16
      %v809 = vrot.slane %v807, 5
      %v810 = vsel %vm336, %v805, %v809
      %v811 = vshrl.u32 %v215, 16
      %v813 = vrot.slane %v811, 4
      %v814 = vor.u32 %v813, %v809
      %v815 = vrot.slane %v814, 4
      %v817 = vshll.u32 %v312, 16
      %v819 = vrot.slane %v817, 5
      %v820 = vsel %vm336, %v815, %v819
      %v822 = vshrl.u32 %v216, 16
      %v824 = vrot.slane %v822, 4
      %v825 = vshll.u32 %v216, 16
      %v827 = vrot.slane %v825, 5
      %v828 = vor.u32 %v824, %v827
      %v829 = vrot.slane %v828, 4
      %v831 = vshll.u32 %v217, 16
      %v833 = vrot.slane %v831, 5
      %v834 = vsel %vm336, %v829, %v833
      %v835 = vshrl.u32 %v217, 16
      %v837 = vrot.slane %v835, 4
      %v838 = vor.u32 %v837, %v833
      %v839 = vrot.slane %v838, 4
      %v841 = vshll.u32 %v218, 16
      %v843 = vrot.slane %v841, 5
      %v844 = vsel %vm336, %v839, %v843
      %v845 = vshrl.u32 %v218, 16
      %v847 = vrot.slane %v845, 4
      %v848 = vor.u32 %v847, %v843
      %v849 = vrot.slane %v848, 4
      %v851 = vshll.u32 %v219, 16
      %v853 = vrot.slane %v851, 5
      %v854 = vsel %vm336, %v849, %v853
      %v855 = vshrl.u32 %v219, 16
      %v857 = vrot.slane %v855, 4
      %v858 = vor.u32 %v857, %v853
      %v859 = vrot.slane %v858, 4
      %v861 = vshll.u32 %v313, 16
      %v863 = vrot.slane %v861, 5
      %v864 = vsel %vm336, %v859, %v863
      %v866 = vshrl.u32 %v220, 16
      %v868 = vrot.slane %v866, 4
      %v869 = vshll.u32 %v220, 16
      %v871 = vrot.slane %v869, 5
      %v872 = vor.u32 %v868, %v871
      %v873 = vrot.slane %v872, 4
      %v875 = vshll.u32 %v221, 16
      %v877 = vrot.slane %v875, 5
      %v878 = vsel %vm336, %v873, %v877
      %v879 = vshrl.u32 %v221, 16
      %v881 = vrot.slane %v879, 4
      %v882 = vor.u32 %v881, %v877
      %v883 = vrot.slane %v882, 4
      %v885 = vshll.u32 %v222, 16
      %v887 = vrot.slane %v885, 5
      %v888 = vsel %vm336, %v883, %v887
      %v889 = vshrl.u32 %v222, 16
      %v891 = vrot.slane %v889, 4
      %v892 = vor.u32 %v891, %v887
      %v893 = vrot.slane %v892, 4
      %v895 = vshll.u32 %v223, 16
      %v897 = vrot.slane %v895, 5
      %v898 = vsel %vm336, %v893, %v897
      %v899 = vshrl.u32 %v223, 16
      %v901 = vrot.slane %v899, 4
      %v902 = vor.u32 %v901, %v897
      %v903 = vrot.slane %v902, 4
      %v905 = vshll.u32 %v314, 16
      %v907 = vrot.slane %v905, 5
      %v908 = vsel %vm336, %v903, %v907
      %v910 = vshrl.u32 %v224, 16
      %v912 = vrot.slane %v910, 4
      %v913 = vshll.u32 %v224, 16
      %v915 = vrot.slane %v913, 5
      %v916 = vor.u32 %v912, %v915
      %v917 = vrot.slane %v916, 4
      %v919 = vshll.u32 %v225, 16
      %v921 = vrot.slane %v919, 5
      %v922 = vsel %vm336, %v917, %v921
      %v923 = vshrl.u32 %v225, 16
      %v925 = vrot.slane %v923, 4
      %v926 = vor.u32 %v925, %v921
      %v927 = vrot.slane %v926, 4
      %v929 = vshll.u32 %v226, 16
      %v931 = vrot.slane %v929, 5
      %v932 = vsel %vm336, %v927, %v931
      %v933 = vshrl.u32 %v226, 16
      %v935 = vrot.slane %v933, 4
      %v936 = vor.u32 %v935, %v931
      %v937 = vrot.slane %v936, 4
      %v939 = vshll.u32 %v227, 16
      %v941 = vrot.slane %v939, 5
      %v942 = vsel %vm336, %v937, %v941
      %v943 = vshrl.u32 %v227, 16
      %v945 = vrot.slane %v943, 4
      %v946 = vor.u32 %v945, %v941
      %v947 = vrot.slane %v946, 4
      %v949 = vshll.u32 %v315, 16
      %v951 = vrot.slane %v949, 5
      %v952 = vsel %vm336, %v947, %v951
      %v954 = vshrl.u32 %v228, 16
      %v956 = vrot.slane %v954, 4
      %v957 = vshll.u32 %v228, 16
      %v959 = vrot.slane %v957, 5
      %v960 = vor.u32 %v956, %v959
      %v961 = vrot.slane %v960, 4
      %v963 = vshll.u32 %v229, 16
      %v965 = vrot.slane %v963, 5
      %v966 = vsel %vm336, %v961, %v965
      %v967 = vshrl.u32 %v229, 16
      %v969 = vrot.slane %v967, 4
      %v970 = vor.u32 %v969, %v965
      %v971 = vrot.slane %v970, 4
      %v973 = vshll.u32 %v230, 16
      %v975 = vrot.slane %v973, 5
      %v976 = vsel %vm336, %v971, %v975
      %v977 = vshrl.u32 %v230, 16
      %v979 = vrot.slane %v977, 4
      %v980 = vor.u32 %v979, %v975
      %v981 = vrot.slane %v980, 4
      %v983 = vshll.u32 %v231, 16
      %v985 = vrot.slane %v983, 5
      %v986 = vsel %vm336, %v981, %v985
      %v987 = vshrl.u32 %v231, 16
      %v989 = vrot.slane %v987, 4
      %v990 = vor.u32 %v989, %v985
      %v991 = vrot.slane %v990, 4
      %v993 = vshll.u32 %v316, 16
      %v995 = vrot.slane %v993, 5
      %v996 = vsel %vm336, %v991, %v995
      %v998 = vshrl.u32 %v232, 16
      %v1000 = vrot.slane %v998, 4
      %v1001 = vshll.u32 %v232, 16
      %v1003 = vrot.slane %v1001, 5
      %v1004 = vor.u32 %v1000, %v1003
      %v1005 = vrot.slane %v1004, 4
      %v1007 = vshll.u32 %v233, 16
      %v1009 = vrot.slane %v1007, 5
      %v1010 = vsel %vm336, %v1005, %v1009
      %v1011 = vshrl.u32 %v233, 16
      %v1013 = vrot.slane %v1011, 4
      %v1014 = vor.u32 %v1013, %v1009
      %v1015 = vrot.slane %v1014, 4
      %v1017 = vshll.u32 %v234, 16
      %v1019 = vrot.slane %v1017, 5
      %v1020 = vsel %vm336, %v1015, %v1019
      %v1021 = vshrl.u32 %v234, 16
      %v1023 = vrot.slane %v1021, 4
      %v1024 = vor.u32 %v1023, %v1019
      %v1025 = vrot.slane %v1024, 4
      %v1027 = vshll.u32 %v235, 16
      %v1029 = vrot.slane %v1027, 5
      %v1030 = vsel %vm336, %v1025, %v1029
      %v1031 = vshrl.u32 %v235, 16
      %v1033 = vrot.slane %v1031, 4
      %v1034 = vor.u32 %v1033, %v1029
      %v1035 = vrot.slane %v1034, 4
      %v1037 = vshll.u32 %v317, 16
      %v1039 = vrot.slane %v1037, 5
      %v1040 = vsel %vm336, %v1035, %v1039
      %v1042 = vshrl.u32 %v236, 16
      %v1044 = vrot.slane %v1042, 4
      %v1045 = vshll.u32 %v236, 16
      %v1047 = vrot.slane %v1045, 5
      %v1048 = vor.u32 %v1044, %v1047
      %v1049 = vrot.slane %v1048, 4
      %v1051 = vshll.u32 %v237, 16
      %v1053 = vrot.slane %v1051, 5
      %v1054 = vsel %vm336, %v1049, %v1053
      %v1055 = vshrl.u32 %v237, 16
      %v1057 = vrot.slane %v1055, 4
      %v1058 = vor.u32 %v1057, %v1053
      %v1059 = vrot.slane %v1058, 4
      %v1061 = vshll.u32 %v238, 16
      %v1063 = vrot.slane %v1061, 5
      %v1064 = vsel %vm336, %v1059, %v1063
      %v1065 = vshrl.u32 %v238, 16
      %v1067 = vrot.slane %v1065, 4
      %v1068 = vor.u32 %v1067, %v1063
      %v1069 = vrot.slane %v1068, 4
      %v1071 = vshll.u32 %v239, 16
      %v1073 = vrot.slane %v1071, 5
      %v1074 = vsel %vm336, %v1069, %v1073
      %v1075 = vshrl.u32 %v239, 16
      %v1077 = vrot.slane %v1075, 4
      %v1078 = vor.u32 %v1077, %v1073
      %v1079 = vrot.slane %v1078, 4
      %v1081 = vshll.u32 %v318, 16
      %v1083 = vrot.slane %v1081, 5
      %v1084 = vsel %vm336, %v1079, %v1083
      %v1086 = vshrl.u32 %v240, 16
      %v1088 = vrot.slane %v1086, 4
      %v1089 = vshll.u32 %v240, 16
      %v1091 = vrot.slane %v1089, 5
      %v1092 = vor.u32 %v1088, %v1091
      %v1093 = vrot.slane %v1092, 4
      %v1095 = vshll.u32 %v241, 16
      %v1097 = vrot.slane %v1095, 5
      %v1098 = vsel %vm336, %v1093, %v1097
      %v1099 = vshrl.u32 %v241, 16
      %v1101 = vrot.slane %v1099, 4
      %v1102 = vor.u32 %v1101, %v1097
      %v1103 = vrot.slane %v1102, 4
      %v1105 = vshll.u32 %v242, 16
      %v1107 = vrot.slane %v1105, 5
      %v1108 = vsel %vm336, %v1103, %v1107
      %v1109 = vshrl.u32 %v242, 16
      %v1111 = vrot.slane %v1109, 4
      %v1112 = vor.u32 %v1111, %v1107
      %v1113 = vrot.slane %v1112, 4
      %v1115 = vshll.u32 %v243, 16
      %v1117 = vrot.slane %v1115, 5
      %v1118 = vsel %vm336, %v1113, %v1117
      %v1119 = vshrl.u32 %v243, 16
      %v1121 = vrot.slane %v1119, 4
      %v1122 = vor.u32 %v1121, %v1117
      %v1123 = vrot.slane %v1122, 4
      %v1125 = vshll.u32 %v319, 16
      %v1127 = vrot.slane %v1125, 5
      %v1128 = vsel %vm336, %v1123, %v1127
      %v1130 = vshrl.u32 %v244, 16
      %v1132 = vrot.slane %v1130, 4
      %v1133 = vshll.u32 %v244, 16
      %v1135 = vrot.slane %v1133, 5
      %v1136 = vor.u32 %v1132, %v1135
      %v1137 = vrot.slane %v1136, 4
      %v1139 = vshll.u32 %v245, 16
      %v1141 = vrot.slane %v1139, 5
      %v1142 = vsel %vm336, %v1137, %v1141
      %v1143 = vshrl.u32 %v245, 16
      %v1145 = vrot.slane %v1143, 4
      %v1146 = vor.u32 %v1145, %v1141
      %v1147 = vrot.slane %v1146, 4
      %v1149 = vshll.u32 %v246, 16
      %v1151 = vrot.slane %v1149, 5
      %v1152 = vsel %vm336, %v1147, %v1151
      %v1153 = vshrl.u32 %v246, 16
      %v1155 = vrot.slane %v1153, 4
      %v1156 = vor.u32 %v1155, %v1151
      %v1157 = vrot.slane %v1156, 4
      %v1159 = vshll.u32 %v247, 16
      %v1161 = vrot.slane %v1159, 5
      %v1162 = vsel %vm336, %v1157, %v1161
      %v1163 = vshrl.u32 %v247, 16
      %v1165 = vrot.slane %v1163, 4
      %v1166 = vor.u32 %v1165, %v1161
      %v1167 = vrot.slane %v1166, 4
      %v1169 = vshll.u32 %v320, 16
      %v1171 = vrot.slane %v1169, 5
      %v1172 = vsel %vm336, %v1167, %v1171
      %v1174 = vshrl.u32 %v248, 16
      %v1176 = vrot.slane %v1174, 4
      %v1177 = vshll.u32 %v248, 16
      %v1179 = vrot.slane %v1177, 5
      %v1180 = vor.u32 %v1176, %v1179
      %v1181 = vrot.slane %v1180, 4
      %v1183 = vshll.u32 %v249, 16
      %v1185 = vrot.slane %v1183, 5
      %v1186 = vsel %vm336, %v1181, %v1185
      %v1187 = vshrl.u32 %v249, 16
      %v1189 = vrot.slane %v1187, 4
      %v1190 = vor.u32 %v1189, %v1185
      %v1191 = vrot.slane %v1190, 4
      %v1193 = vshll.u32 %v250, 16
      %v1195 = vrot.slane %v1193, 5
      %v1196 = vsel %vm336, %v1191, %v1195
      %v1197 = vshrl.u32 %v250, 16
      %v1199 = vrot.slane %v1197, 4
      %v1200 = vor.u32 %v1199, %v1195
      %v1201 = vrot.slane %v1200, 4
      %v1203 = vshll.u32 %v251, 16
      %v1205 = vrot.slane %v1203, 5
      %v1206 = vsel %vm336, %v1201, %v1205
      %v1207 = vshrl.u32 %v251, 16
      %v1209 = vrot.slane %v1207, 4
      %v1210 = vor.u32 %v1209, %v1205
      %v1211 = vrot.slane %v1210, 4
      %v1213 = vshll.u32 %v321, 16
      %v1215 = vrot.slane %v1213, 5
      %v1216 = vsel %vm336, %v1211, %v1215
      %v1218 = vshrl.u32 %v252, 16
      %v1220 = vrot.slane %v1218, 4
      %v1221 = vshll.u32 %v252, 16
      %v1223 = vrot.slane %v1221, 5
      %v1224 = vor.u32 %v1220, %v1223
      %v1225 = vrot.slane %v1224, 4
      %v1227 = vshll.u32 %v253, 16
      %v1229 = vrot.slane %v1227, 5
      %v1230 = vsel %vm336, %v1225, %v1229
      %v1231 = vshrl.u32 %v253, 16
      %v1233 = vrot.slane %v1231, 4
      %v1234 = vor.u32 %v1233, %v1229
      %v1235 = vrot.slane %v1234, 4
      %v1237 = vshll.u32 %v254, 16
      %v1239 = vrot.slane %v1237, 5
      %v1240 = vsel %vm336, %v1235, %v1239
      %v1241 = vshrl.u32 %v254, 16
      %v1243 = vrot.slane %v1241, 4
      %v1244 = vor.u32 %v1243, %v1239
      %v1245 = vrot.slane %v1244, 4
      %v1247 = vshll.u32 %v255, 16
      %v1249 = vrot.slane %v1247, 5
      %v1250 = vsel %vm336, %v1245, %v1249
      %v1251 = vshrl.u32 %v255, 16
      %v1253 = vrot.slane %v1251, 4
      %v1254 = vor.u32 %v1253, %v1249
      %v1255 = vrot.slane %v1254, 4
      %v1257 = vshll.u32 %v322, 16
      %v1259 = vrot.slane %v1257, 5
      %v1260 = vsel %vm336, %v1255, %v1259
      %v1262 = vshrl.u32 %v256, 16
      %v1264 = vrot.slane %v1262, 4
      %v1265 = vshll.u32 %v256, 16
      %v1267 = vrot.slane %v1265, 5
      %v1268 = vor.u32 %v1264, %v1267
      %v1269 = vrot.slane %v1268, 4
      %v1271 = vshll.u32 %v257, 16
      %v1273 = vrot.slane %v1271, 5
      %v1274 = vsel %vm336, %v1269, %v1273
      %v1275 = vshrl.u32 %v257, 16
      %v1277 = vrot.slane %v1275, 4
      %v1278 = vor.u32 %v1277, %v1273
      %v1279 = vrot.slane %v1278, 4
      %v1281 = vshll.u32 %v258, 16
      %v1283 = vrot.slane %v1281, 5
      %v1284 = vsel %vm336, %v1279, %v1283
      %v1285 = vshrl.u32 %v258, 16
      %v1287 = vrot.slane %v1285, 4
      %v1288 = vor.u32 %v1287, %v1283
      %v1289 = vrot.slane %v1288, 4
      %v1291 = vshll.u32 %v259, 16
      %v1293 = vrot.slane %v1291, 5
      %v1294 = vsel %vm336, %v1289, %v1293
      %v1295 = vshrl.u32 %v259, 16
      %v1297 = vrot.slane %v1295, 4
      %v1298 = vor.u32 %v1297, %v1293
      %v1299 = vrot.slane %v1298, 4
      %v1301 = vshll.u32 %v323, 16
      %v1303 = vrot.slane %v1301, 5
      %v1304 = vsel %vm336, %v1299, %v1303
      %v1306 = vshrl.u32 %v260, 16
      %v1308 = vrot.slane %v1306, 4
      %v1309 = vshll.u32 %v260, 16
      %v1311 = vrot.slane %v1309, 5
      %v1312 = vor.u32 %v1308, %v1311
      %v1313 = vrot.slane %v1312, 4
      %v1315 = vshll.u32 %v261, 16
      %v1317 = vrot.slane %v1315, 5
      %v1318 = vsel %vm336, %v1313, %v1317
      %v1319 = vshrl.u32 %v261, 16
      %v1321 = vrot.slane %v1319, 4
      %v1322 = vor.u32 %v1321, %v1317
      %v1323 = vrot.slane %v1322, 4
      %v1325 = vshll.u32 %v262, 16
      %v1327 = vrot.slane %v1325, 5
      %v1328 = vsel %vm336, %v1323, %v1327
      %v1329 = vshrl.u32 %v262, 16
      %v1331 = vrot.slane %v1329, 4
      %v1332 = vor.u32 %v1331, %v1327
      %v1333 = vrot.slane %v1332, 4
      %v1335 = vshll.u32 %v263, 16
      %v1337 = vrot.slane %v1335, 5
      %v1338 = vsel %vm336, %v1333, %v1337
      %v1339 = vshrl.u32 %v263, 16
      %v1341 = vrot.slane %v1339, 4
      %v1342 = vor.u32 %v1341, %v1337
      %v1343 = vrot.slane %v1342, 4
      %v1345 = vshll.u32 %v324, 16
      %v1347 = vrot.slane %v1345, 5
      %v1348 = vsel %vm336, %v1343, %v1347
      %v1350 = vshrl.u32 %v264, 16
      %v1352 = vrot.slane %v1350, 4
      %v1353 = vshll.u32 %v264, 16
      %v1355 = vrot.slane %v1353, 5
      %v1356 = vor.u32 %v1352, %v1355
      %v1357 = vrot.slane %v1356, 4
      %v1359 = vshll.u32 %v265, 16
      %v1361 = vrot.slane %v1359, 5
      %v1362 = vsel %vm336, %v1357, %v1361
      %v1363 = vshrl.u32 %v265, 16
      %v1365 = vrot.slane %v1363, 4
      %v1366 = vor.u32 %v1365, %v1361
      %v1367 = vrot.slane %v1366, 4
      %v1369 = vshll.u32 %v266, 16
      %v1371 = vrot.slane %v1369, 5
      %v1372 = vsel %vm336, %v1367, %v1371
      %v1373 = vshrl.u32 %v266, 16
      %v1375 = vrot.slane %v1373, 4
      %v1376 = vor.u32 %v1375, %v1371
      %v1377 = vrot.slane %v1376, 4
      %v1379 = vshll.u32 %v267, 16
      %v1381 = vrot.slane %v1379, 5
      %v1382 = vsel %vm336, %v1377, %v1381
      %v1383 = vshrl.u32 %v267, 16
      %v1385 = vrot.slane %v1383, 4
      %v1386 = vor.u32 %v1385, %v1381
      %v1387 = vrot.slane %v1386, 4
      %v1389 = vshll.u32 %v325, 16
      %v1391 = vrot.slane %v1389, 5
      %v1392 = vsel %vm336, %v1387, %v1391
      %v1394 = vshrl.u32 %v268, 16
      %v1396 = vrot.slane %v1394, 4
      %v1397 = vshll.u32 %v268, 16
      %v1399 = vrot.slane %v1397, 5
      %v1400 = vor.u32 %v1396, %v1399
      %v1401 = vrot.slane %v1400, 4
      %v1403 = vshll.u32 %v269, 16
      %v1405 = vrot.slane %v1403, 5
      %v1406 = vsel %vm336, %v1401, %v1405
      %v1407 = vshrl.u32 %v269, 16
      %v1409 = vrot.slane %v1407, 4
      %v1410 = vor.u32 %v1409, %v1405
      %v1411 = vrot.slane %v1410, 4
      %v1413 = vshll.u32 %v270, 16
      %v1415 = vrot.slane %v1413, 5
      %v1416 = vsel %vm336, %v1411, %v1415
      %v1417 = vshrl.u32 %v270, 16
      %v1419 = vrot.slane %v1417, 4
      %v1420 = vor.u32 %v1419, %v1415
      %v1421 = vrot.slane %v1420, 4
      %v1423 = vshll.u32 %v271, 16
      %v1425 = vrot.slane %v1423, 5
      %v1426 = vsel %vm336, %v1421, %v1425
      %v1427 = vshrl.u32 %v271, 16
      %v1429 = vrot.slane %v1427, 4
      %v1430 = vor.u32 %v1429, %v1425
      %v1431 = vrot.slane %v1430, 4
      %v1433 = vshll.u32 %v326, 16
      %v1435 = vrot.slane %v1433, 5
      %v1436 = vsel %vm336, %v1431, %v1435
      %v1438 = vshrl.u32 %v272, 16
      %v1440 = vrot.slane %v1438, 4
      %v1441 = vshll.u32 %v272, 16
      %v1443 = vrot.slane %v1441, 5
      %v1444 = vor.u32 %v1440, %v1443
      %v1445 = vrot.slane %v1444, 4
      %v1447 = vshll.u32 %v273, 16
      %v1449 = vrot.slane %v1447, 5
      %v1450 = vsel %vm336, %v1445, %v1449
      %v1451 = vshrl.u32 %v273, 16
      %v1453 = vrot.slane %v1451, 4
      %v1454 = vor.u32 %v1453, %v1449
      %v1455 = vrot.slane %v1454, 4
      %v1457 = vshll.u32 %v274, 16
      %v1459 = vrot.slane %v1457, 5
      %v1460 = vsel %vm336, %v1455, %v1459
      %v1461 = vshrl.u32 %v274, 16
      %v1463 = vrot.slane %v1461, 4
      %v1464 = vor.u32 %v1463, %v1459
      %v1465 = vrot.slane %v1464, 4
      %v1467 = vshll.u32 %v275, 16
      %v1469 = vrot.slane %v1467, 5
      %v1470 = vsel %vm336, %v1465, %v1469
      %v1471 = vshrl.u32 %v275, 16
      %v1473 = vrot.slane %v1471, 4
      %v1474 = vor.u32 %v1473, %v1469
      %v1475 = vrot.slane %v1474, 4
      %v1477 = vshll.u32 %v327, 16
      %v1479 = vrot.slane %v1477, 5
      %v1480 = vsel %vm336, %v1475, %v1479
      %v1482 = vshrl.u32 %v276, 16
      %v1484 = vrot.slane %v1482, 4
      %v1485 = vshll.u32 %v276, 16
      %v1487 = vrot.slane %v1485, 5
      %v1488 = vor.u32 %v1484, %v1487
      %v1489 = vrot.slane %v1488, 4
      %v1491 = vshll.u32 %v277, 16
      %v1493 = vrot.slane %v1491, 5
      %v1494 = vsel %vm336, %v1489, %v1493
      %v1495 = vshrl.u32 %v277, 16
      %v1497 = vrot.slane %v1495, 4
      %v1498 = vor.u32 %v1497, %v1493
      %v1499 = vrot.slane %v1498, 4
      %v1501 = vshll.u32 %v278, 16
      %v1503 = vrot.slane %v1501, 5
      %v1504 = vsel %vm336, %v1499, %v1503
      %v1505 = vshrl.u32 %v278, 16
      %v1507 = vrot.slane %v1505, 4
      %v1508 = vor.u32 %v1507, %v1503
      %v1509 = vrot.slane %v1508, 4
      %v1511 = vshll.u32 %v279, 16
      %v1513 = vrot.slane %v1511, 5
      %v1514 = vsel %vm336, %v1509, %v1513
      %v1515 = vshrl.u32 %v279, 16
      %v1517 = vrot.slane %v1515, 4
      %v1518 = vor.u32 %v1517, %v1513
      %v1519 = vrot.slane %v1518, 4
      %v1521 = vshll.u32 %v328, 16
      %v1523 = vrot.slane %v1521, 5
      %v1524 = vsel %vm336, %v1519, %v1523
      %v1526 = vshrl.u32 %v280, 16
      %v1528 = vrot.slane %v1526, 4
      %v1529 = vshll.u32 %v280, 16
      %v1531 = vrot.slane %v1529, 5
      %v1532 = vor.u32 %v1528, %v1531
      %v1533 = vrot.slane %v1532, 4
      %v1535 = vshll.u32 %v281, 16
      %v1537 = vrot.slane %v1535, 5
      %v1538 = vsel %vm336, %v1533, %v1537
      %v1539 = vshrl.u32 %v281, 16
      %v1541 = vrot.slane %v1539, 4
      %v1542 = vor.u32 %v1541, %v1537
      %v1543 = vrot.slane %v1542, 4
      %v1545 = vshll.u32 %v282, 16
      %v1547 = vrot.slane %v1545, 5
      %v1548 = vsel %vm336, %v1543, %v1547
      %v1549 = vshrl.u32 %v282, 16
      %v1551 = vrot.slane %v1549, 4
      %v1552 = vor.u32 %v1551, %v1547
      %v1553 = vrot.slane %v1552, 4
      %v1555 = vshll.u32 %v283, 16
      %v1557 = vrot.slane %v1555, 5
      %v1558 = vsel %vm336, %v1553, %v1557
      %v1559 = vshrl.u32 %v283, 16
      %v1561 = vrot.slane %v1559, 4
      %v1562 = vor.u32 %v1561, %v1557
      %v1563 = vrot.slane %v1562, 4
      %v1565 = vshll.u32 %v329, 16
      %v1567 = vrot.slane %v1565, 5
      %v1568 = vsel %vm336, %v1563, %v1567
      %v1570 = vshrl.u32 %v284, 16
      %v1572 = vrot.slane %v1570, 4
      %v1573 = vshll.u32 %v284, 16
      %v1575 = vrot.slane %v1573, 5
      %v1576 = vor.u32 %v1572, %v1575
      %v1577 = vrot.slane %v1576, 4
      %v1579 = vshll.u32 %v285, 16
      %v1581 = vrot.slane %v1579, 5
      %v1582 = vsel %vm336, %v1577, %v1581
      %v1583 = vshrl.u32 %v285, 16
      %v1585 = vrot.slane %v1583, 4
      %v1586 = vor.u32 %v1585, %v1581
      %v1587 = vrot.slane %v1586, 4
      %v1589 = vshll.u32 %v286, 16
      %v1591 = vrot.slane %v1589, 5
      %v1592 = vsel %vm336, %v1587, %v1591
      %v1593 = vshrl.u32 %v286, 16
      %v1595 = vrot.slane %v1593, 4
      %v1596 = vor.u32 %v1595, %v1591
      %v1597 = vrot.slane %v1596, 4
      %v1599 = vshll.u32 %v287, 16
      %v1601 = vrot.slane %v1599, 5
      %v1602 = vsel %vm336, %v1597, %v1601
      %v1603 = vshrl.u32 %v287, 16
      %v1605 = vrot.slane %v1603, 4
      %v1606 = vor.u32 %v1605, %v1601
      %v1607 = vrot.slane %v1606, 4
      %v1609 = vshll.u32 %v330, 16
      %v1611 = vrot.slane %v1609, 5
      %v1612 = vsel %vm336, %v1607, %v1611
      %v1614 = vshrl.u32 %v288, 16
      %v1616 = vrot.slane %v1614, 4
      %v1617 = vshll.u32 %v288, 16
      %v1619 = vrot.slane %v1617, 5
      %v1620 = vor.u32 %v1616, %v1619
      %v1621 = vrot.slane %v1620, 4
      %v1623 = vshll.u32 %v289, 16
      %v1625 = vrot.slane %v1623, 5
      %v1626 = vsel %vm336, %v1621, %v1625
      %v1627 = vshrl.u32 %v289, 16
      %v1629 = vrot.slane %v1627, 4
      %v1630 = vor.u32 %v1629, %v1625
      %v1631 = vrot.slane %v1630, 4
      %v1633 = vshll.u32 %v290, 16
      %v1635 = vrot.slane %v1633, 5
      %v1636 = vsel %vm336, %v1631, %v1635
      %v1637 = vshrl.u32 %v290, 16
      %v1639 = vrot.slane %v1637, 4
      %v1640 = vor.u32 %v1639, %v1635
      %v1641 = vrot.slane %v1640, 4
      %v1643 = vshll.u32 %v291, 16
      %v1645 = vrot.slane %v1643, 5
      %v1646 = vsel %vm336, %v1641, %v1645
      %v1647 = vshrl.u32 %v291, 16
      %v1649 = vrot.slane %v1647, 4
      %v1650 = vor.u32 %v1649, %v1645
      %v1651 = vrot.slane %v1650, 4
      %v1653 = vshll.u32 %v331, 16
      %v1655 = vrot.slane %v1653, 5
      %v1656 = vsel %vm336, %v1651, %v1655
      %v1658 = vshrl.u32 %v292, 16
      %v1660 = vrot.slane %v1658, 4
      %v1661 = vshll.u32 %v292, 16
      %v1663 = vrot.slane %v1661, 5
      %v1664 = vor.u32 %v1660, %v1663
      %v1665 = vrot.slane %v1664, 4
      %v1667 = vshll.u32 %v293, 16
      %v1669 = vrot.slane %v1667, 5
      %v1670 = vsel %vm336, %v1665, %v1669
      %v1671 = vshrl.u32 %v293, 16
      %v1673 = vrot.slane %v1671, 4
      %v1674 = vor.u32 %v1673, %v1669
      %v1675 = vrot.slane %v1674, 4
      %v1677 = vshll.u32 %v294, 16
      %v1679 = vrot.slane %v1677, 5
      %v1680 = vsel %vm336, %v1675, %v1679
      %v1681 = vshrl.u32 %v294, 16
      %v1683 = vrot.slane %v1681, 4
      %v1684 = vor.u32 %v1683, %v1679
      %v1685 = vrot.slane %v1684, 4
      %v1687 = vshll.u32 %v295, 16
      %v1689 = vrot.slane %v1687, 5
      %v1690 = vsel %vm336, %v1685, %v1689
      %v1691 = vshrl.u32 %v295, 16
      %v1693 = vrot.slane %v1691, 4
      %v1694 = vor.u32 %v1693, %v1689
      %v1695 = vrot.slane %v1694, 4
      %v1697 = vshll.u32 %v332, 16
      %v1699 = vrot.slane %v1697, 5
      %v1700 = vsel %vm336, %v1695, %v1699
      %v1702 = vshrl.u32 %v296, 16
      %v1704 = vrot.slane %v1702, 4
      %v1705 = vshll.u32 %v296, 16
      %v1707 = vrot.slane %v1705, 5
      %v1708 = vor.u32 %v1704, %v1707
      %v1709 = vrot.slane %v1708, 4
      %v1711 = vshll.u32 %v297, 16
      %v1713 = vrot.slane %v1711, 5
      %v1714 = vsel %vm336, %v1709, %v1713
      %v1715 = vshrl.u32 %v297, 16
      %v1717 = vrot.slane %v1715, 4
      %v1718 = vor.u32 %v1717, %v1713
      %v1719 = vrot.slane %v1718, 4
      %v1721 = vshll.u32 %v298, 16
      %v1723 = vrot.slane %v1721, 5
      %v1724 = vsel %vm336, %v1719, %v1723
      %v1725 = vshrl.u32 %v298, 16
      %v1727 = vrot.slane %v1725, 4
      %v1728 = vor.u32 %v1727, %v1723
      %v1729 = vrot.slane %v1728, 4
      %v1731 = vshll.u32 %v299, 16
      %v1733 = vrot.slane %v1731, 5
      %v1734 = vsel %vm336, %v1729, %v1733
      %v1735 = vshrl.u32 %v299, 16
      %v1737 = vrot.slane %v1735, 4
      %v1738 = vor.u32 %v1737, %v1733
      %v1739 = vrot.slane %v1738, 4
      %v1741 = vshll.u32 %v333, 16
      %v1743 = vrot.slane %v1741, 5
      %v1744 = vsel %vm336, %v1739, %v1743
      %s1745 = scalar_lea.vmem %s1, 8
      %v1746 = vld [vmem:[%s1745] sm:$0xf]
      %v1747 = vld [vmem:[%s1745 + $0x4] sm:$0x3]
      %v1748 = vunpack.c.l.b16 %v350
      %v1749 = vunpack.c.l.b16 %v360
      %v1750 = vunpack.c.l.b16 %v370
      %v1751 = vunpack.c.l.b16 %v380
      %v1752 = vunpack.c.l.b16 %v394
      %v1753 = vunpack.c.l.b16 %v404
      %v1754 = vunpack.c.l.b16 %v414
      %v1755 = vunpack.c.l.b16 %v424
      %v1756 = vunpack.c.l.b16 %v438
      %v1757 = vunpack.c.l.b16 %v448
      %v1758 = vunpack.c.l.b16 %v458
      %v1759 = vunpack.c.l.b16 %v468
      %v1760 = vunpack.c.l.b16 %v482
      %v1761 = vunpack.c.l.b16 %v492
      %v1762 = vunpack.c.l.b16 %v502
      %v1763 = vunpack.c.l.b16 %v512
      %v1764 = vunpack.c.l.b16 %v526
      %v1765 = vunpack.c.l.b16 %v536
      %v1766 = vunpack.c.l.b16 %v546
      %v1767 = vunpack.c.l.b16 %v556
      %v1768 = vunpack.c.l.b16 %v570
      %v1769 = vunpack.c.l.b16 %v580
      %v1770 = vunpack.c.l.b16 %v590
      %v1771 = vunpack.c.l.b16 %v600
      %v1772 = vunpack.c.l.b16 %v614
      %v1773 = vunpack.c.l.b16 %v624
      %v1774 = vunpack.c.l.b16 %v634
      %v1775 = vunpack.c.l.b16 %v644
      %v1776 = vunpack.c.l.b16 %v658
      %v1777 = vunpack.c.l.b16 %v668
      %v1778 = vunpack.c.l.b16 %v678
      %v1779 = vunpack.c.l.b16 %v688
      %v1780 = vunpack.c.l.b16 %v702
      %v1781 = vunpack.c.l.b16 %v712
      %v1782 = vunpack.c.l.b16 %v722
      %v1783 = vunpack.c.l.b16 %v732
      %v1784 = vunpack.c.l.b16 %v746
      %v1785 = vunpack.c.l.b16 %v756
      %v1786 = vunpack.c.l.b16 %v766
      %v1787 = vunpack.c.l.b16 %v776
      %v1788 = vunpack.c.l.b16 %v790
      %v1789 = vunpack.c.l.b16 %v800
      %v1790 = vunpack.c.l.b16 %v810
      %v1791 = vunpack.c.l.b16 %v820
      %v1792 = vunpack.c.l.b16 %v834
      %v1793 = vunpack.c.l.b16 %v844
      %v1794 = vunpack.c.l.b16 %v854
      %v1795 = vunpack.c.l.b16 %v864
      %v1796 = vunpack.c.l.b16 %v878
      %v1797 = vunpack.c.l.b16 %v888
      %v1798 = vunpack.c.l.b16 %v898
      %v1799 = vunpack.c.l.b16 %v908
      %v1800 = vunpack.c.l.b16 %v922
      %v1801 = vunpack.c.l.b16 %v932
      %v1802 = vunpack.c.l.b16 %v942
      %v1803 = vunpack.c.l.b16 %v952
      %v1804 = vunpack.c.l.b16 %v966
      %v1805 = vunpack.c.l.b16 %v976
      %v1806 = vunpack.c.l.b16 %v986
      %v1807 = vunpack.c.l.b16 %v996
      %v1808 = vunpack.c.l.b16 %v1010
      %v1809 = vunpack.c.l.b16 %v1020
      %v1810 = vunpack.c.l.b16 %v1030
      %v1811 = vunpack.c.l.b16 %v1040
      %v1812 = vunpack.c.l.b16 %v1054
      %v1813 = vunpack.c.l.b16 %v1064
      %v1814 = vunpack.c.l.b16 %v1074
      %v1815 = vunpack.c.l.b16 %v1084
      %v1816 = vunpack.c.l.b16 %v1098
      %v1817 = vunpack.c.l.b16 %v1108
      %v1818 = vunpack.c.l.b16 %v1118
      %v1819 = vunpack.c.l.b16 %v1128
      %v1820 = vunpack.c.l.b16 %v1142
      %v1821 = vunpack.c.l.b16 %v1152
      %v1822 = vunpack.c.l.b16 %v1162
      %v1823 = vunpack.c.l.b16 %v1172
      %v1824 = vunpack.c.l.b16 %v1186
      %v1825 = vunpack.c.l.b16 %v1196
      %v1826 = vunpack.c.l.b16 %v1206
      %v1827 = vunpack.c.l.b16 %v1216
      %v1828 = vunpack.c.l.b16 %v1230
      %v1829 = vunpack.c.l.b16 %v1240
      %v1830 = vunpack.c.l.b16 %v1250
      %v1831 = vunpack.c.l.b16 %v1260
      %v1832 = vunpack.c.l.b16 %v1274
      %v1833 = vunpack.c.l.b16 %v1284
      %v1834 = vunpack.c.l.b16 %v1294
      %v1835 = vunpack.c.l.b16 %v1304
      %v1836 = vunpack.c.l.b16 %v1318
      %v1837 = vunpack.c.l.b16 %v1328
      %v1838 = vunpack.c.l.b16 %v1338
      %v1839 = vunpack.c.l.b16 %v1348
      %v1840 = vunpack.c.l.b16 %v1362
      %v1841 = vunpack.c.l.b16 %v1372
      %v1842 = vunpack.c.l.b16 %v1382
      %v1843 = vunpack.c.l.b16 %v1392
      %v1844 = vunpack.c.l.b16 %v1406
      %v1845 = vunpack.c.l.b16 %v1416
      %v1846 = vunpack.c.l.b16 %v1426
      %v1847 = vunpack.c.l.b16 %v1436
      %v1848 = vunpack.c.l.b16 %v1450
      %v1849 = vunpack.c.l.b16 %v1460
      %v1850 = vunpack.c.l.b16 %v1470
      %v1851 = vunpack.c.l.b16 %v1480
      %v1852 = vunpack.c.l.b16 %v1494
      %v1853 = vunpack.c.l.b16 %v1504
      %v1854 = vunpack.c.l.b16 %v1514
      %v1855 = vunpack.c.l.b16 %v1524
      %v1856 = vunpack.c.l.b16 %v1538
      %v1857 = vunpack.c.l.b16 %v1548
      %v1858 = vunpack.c.l.b16 %v1558
      %v1859 = vunpack.c.l.b16 %v1568
      %v1860 = vunpack.c.l.b16 %v1582
      %v1861 = vunpack.c.l.b16 %v1592
      %v1862 = vunpack.c.l.b16 %v1602
      %v1863 = vunpack.c.l.b16 %v1612
      %v1864 = vunpack.c.l.b16 %v1626
      %v1865 = vunpack.c.l.b16 %v1636
      %v1866 = vunpack.c.l.b16 %v1646
      %v1867 = vunpack.c.l.b16 %v1656
      %v1868 = vunpack.c.l.b16 %v1670
      %v1869 = vunpack.c.l.b16 %v1680
      %v1870 = vunpack.c.l.b16 %v1690
      %v1871 = vunpack.c.l.b16 %v1700
      %v1872 = vunpack.c.l.b16 %v1714
      %v1873 = vunpack.c.l.b16 %v1724
      %v1874 = vunpack.c.l.b16 %v1734
      %v1875 = vunpack.c.l.b16 %v1744
      %v1876 = vpack.c.b16 %v1749, %v1748
      %v1877 = vpack.c.b16 %v1751, %v1750
      %v1878 = vpack.c.b16 %v1753, %v1752
      %v1879 = vpack.c.b16 %v1755, %v1754
      %v1880 = vpack.c.b16 %v1757, %v1756
      %v1881 = vpack.c.b16 %v1759, %v1758
      %v1882 = vpack.c.b16 %v1761, %v1760
      %v1883 = vpack.c.b16 %v1763, %v1762
      %v1884 = vpack.c.b16 %v1765, %v1764
      %v1885 = vpack.c.b16 %v1767, %v1766
      %v1886 = vpack.c.b16 %v1769, %v1768
      %v1887 = vpack.c.b16 %v1771, %v1770
      %v1888 = vpack.c.b16 %v1773, %v1772
      %v1889 = vpack.c.b16 %v1775, %v1774
      %v1890 = vpack.c.b16 %v1777, %v1776
      %v1891 = vpack.c.b16 %v1779, %v1778
      %v1892 = vpack.c.b16 %v1781, %v1780
      %v1893 = vpack.c.b16 %v1783, %v1782
      %v1894 = vpack.c.b16 %v1785, %v1784
      %v1895 = vpack.c.b16 %v1787, %v1786
      %v1896 = vpack.c.b16 %v1789, %v1788
      %v1897 = vpack.c.b16 %v1791, %v1790
      %v1898 = vpack.c.b16 %v1793, %v1792
      %v1899 = vpack.c.b16 %v1795, %v1794
      %v1900 = vpack.c.b16 %v1797, %v1796
      %v1901 = vpack.c.b16 %v1799, %v1798
      %v1902 = vpack.c.b16 %v1801, %v1800
      %v1903 = vpack.c.b16 %v1803, %v1802
      %v1904 = vpack.c.b16 %v1805, %v1804
      %v1905 = vpack.c.b16 %v1807, %v1806
      %v1906 = vpack.c.b16 %v1809, %v1808
      %v1907 = vpack.c.b16 %v1811, %v1810
      %v1908 = vpack.c.b16 %v1813, %v1812
      %v1909 = vpack.c.b16 %v1815, %v1814
      %v1910 = vpack.c.b16 %v1817, %v1816
      %v1911 = vpack.c.b16 %v1819, %v1818
      %v1912 = vpack.c.b16 %v1821, %v1820
      %v1913 = vpack.c.b16 %v1823, %v1822
      %v1914 = vpack.c.b16 %v1825, %v1824
      %v1915 = vpack.c.b16 %v1827, %v1826
      %v1916 = vpack.c.b16 %v1829, %v1828
      %v1917 = vpack.c.b16 %v1831, %v1830
      %v1918 = vpack.c.b16 %v1833, %v1832
      %v1919 = vpack.c.b16 %v1835, %v1834
      %v1920 = vpack.c.b16 %v1837, %v1836
      %v1921 = vpack.c.b16 %v1839, %v1838
      %v1922 = vpack.c.b16 %v1841, %v1840
      %v1923 = vpack.c.b16 %v1843, %v1842
      %v1924 = vpack.c.b16 %v1845, %v1844
      %v1925 = vpack.c.b16 %v1847, %v1846
      %v1926 = vpack.c.b16 %v1849, %v1848
      %v1927 = vpack.c.b16 %v1851, %v1850
      %v1928 = vpack.c.b16 %v1853, %v1852
      %v1929 = vpack.c.b16 %v1855, %v1854
      %v1930 = vpack.c.b16 %v1857, %v1856
      %v1931 = vpack.c.b16 %v1859, %v1858
      %v1932 = vpack.c.b16 %v1861, %v1860
      %v1933 = vpack.c.b16 %v1863, %v1862
      %v1934 = vpack.c.b16 %v1865, %v1864
      %v1935 = vpack.c.b16 %v1867, %v1866
      %v1936 = vpack.c.b16 %v1869, %v1868
      %v1937 = vpack.c.b16 %v1871, %v1870
      %v1938 = vpack.c.b16 %v1873, %v1872
      %v1939 = vpack.c.b16 %v1875, %v1874
      %v1942 = vunpack.c.l.b16 %v1746
      %v1943 = vunpack.c.l.b16 %v1747
      %v1944 = vpack.c.b16 %v1943, %v1942
      %vm1945 = vcmask 97280
      %v1947 = vsel %vm1945, %v1876, 0
      %v1950 = vsel %vm1945, %v1877, 0
      %v1953 = vsel %vm1945, %v1878, 0
      %v1956 = vsel %vm1945, %v1879, 0
      %v1959 = vsel %vm1945, %v1880, 0
      %v1962 = vsel %vm1945, %v1881, 0
      %v1965 = vsel %vm1945, %v1882, 0
      %v1968 = vsel %vm1945, %v1883, 0
      %v1971 = vsel %vm1945, %v1884, 0
      %v1974 = vsel %vm1945, %v1885, 0
      %v1977 = vsel %vm1945, %v1886, 0
      %v1980 = vsel %vm1945, %v1887, 0
      %v1983 = vsel %vm1945, %v1888, 0
      %v1986 = vsel %vm1945, %v1889, 0
      %v1989 = vsel %vm1945, %v1890, 0
      %v1992 = vsel %vm1945, %v1891, 0
      %v1995 = vsel %vm1945, %v1892, 0
      %v1998 = vsel %vm1945, %v1893, 0
      %v2001 = vsel %vm1945, %v1894, 0
      %v2004 = vsel %vm1945, %v1895, 0
      %v2007 = vsel %vm1945, %v1896, 0
      %v2010 = vsel %vm1945, %v1897, 0
      %v2013 = vsel %vm1945, %v1898, 0
      %v2016 = vsel %vm1945, %v1899, 0
      %v2019 = vsel %vm1945, %v1900, 0
      %v2022 = vsel %vm1945, %v1901, 0
      %v2025 = vsel %vm1945, %v1902, 0
      %v2028 = vsel %vm1945, %v1903, 0
      %v2031 = vsel %vm1945, %v1904, 0
      %v2034 = vsel %vm1945, %v1905, 0
      %v2037 = vsel %vm1945, %v1906, 0
      %v2040 = vsel %vm1945, %v1907, 0
      %v2043 = vsel %vm1945, %v1908, 0
      %v2046 = vsel %vm1945, %v1909, 0
      %v2049 = vsel %vm1945, %v1910, 0
      %v2052 = vsel %vm1945, %v1911, 0
      %v2055 = vsel %vm1945, %v1912, 0
      %v2058 = vsel %vm1945, %v1913, 0
      %v2061 = vsel %vm1945, %v1914, 0
      %v2064 = vsel %vm1945, %v1915, 0
      %v2067 = vsel %vm1945, %v1916, 0
      %v2070 = vsel %vm1945, %v1917, 0
      %v2073 = vsel %vm1945, %v1918, 0
      %v2076 = vsel %vm1945, %v1919, 0
      %v2079 = vsel %vm1945, %v1920, 0
      %v2082 = vsel %vm1945, %v1921, 0
      %v2085 = vsel %vm1945, %v1922, 0
      %v2088 = vsel %vm1945, %v1923, 0
      %v2091 = vsel %vm1945, %v1924, 0
      %v2094 = vsel %vm1945, %v1925, 0
      %v2097 = vsel %vm1945, %v1926, 0
      %v2100 = vsel %vm1945, %v1927, 0
      %v2103 = vsel %vm1945, %v1928, 0
      %v2106 = vsel %vm1945, %v1929, 0
      %v2109 = vsel %vm1945, %v1930, 0
      %v2112 = vsel %vm1945, %v1931, 0
      %v2115 = vsel %vm1945, %v1932, 0
      %v2118 = vsel %vm1945, %v1933, 0
      %v2121 = vsel %vm1945, %v1934, 0
      %v2124 = vsel %vm1945, %v1935, 0
      %v2127 = vsel %vm1945, %v1936, 0
      %v2130 = vsel %vm1945, %v1937, 0
      %v2133 = vsel %vm1945, %v1938, 0
      %v2136 = vsel %vm1945, %v1939, 0
      %vm2138 = vcmask 1045504
      %v2140 = vsel %vm2138, %v1944, 0
      %2142 = vmatpush.bf16.msra.mxu0 0
      %2143 = vmatpush.bf16.msra.mxu0 0
      %2144 = vmatpush.bf16.msra.mxu0 0
      %2145 = vmatpush.bf16.msra.mxu0 0
      %2146 = vmatpush.bf16.msra.mxu0 0
      %2147 = vmatpush.bf16.msra.mxu0 0
      %2148 = vmatpush.bf16.msra.mxu0 0
      %2149 = vmatpush.bf16.msra.mxu0 %v2140
      %2150 = vmatmul.bf16.gmra.mxu0 %v1947
      %v2151 = vpop.f32.mrf.mxu0
      %v2152 = vadd.f32 0.0, %v2151
      %v2153 = vpop.f32.mrf.mxu0
      %v2154 = vadd.f32 0.0, %v2153
      %2155 = vmatmul.bf16.gmra.mxu0 %v1950
      %v2156 = vpop.f32.mrf.mxu0
      %v2157 = vadd.f32 0.0, %v2156
      %v2158 = vpop.f32.mrf.mxu0
      %v2159 = vadd.f32 0.0, %v2158
      %2160 = vmatmul.bf16.gmra.mxu0 %v1953
      %v2161 = vpop.f32.mrf.mxu0
      %v2162 = vadd.f32 0.0, %v2161
      %v2163 = vpop.f32.mrf.mxu0
      %v2164 = vadd.f32 0.0, %v2163
      %2165 = vmatmul.bf16.gmra.mxu0 %v1956
      %v2166 = vpop.f32.mrf.mxu0
      %v2167 = vadd.f32 0.0, %v2166
      %v2168 = vpop.f32.mrf.mxu0
      %v2169 = vadd.f32 0.0, %v2168
      %2170 = vmatmul.bf16.gmra.mxu0 %v1959
      %v2171 = vpop.f32.mrf.mxu0
      %v2172 = vadd.f32 0.0, %v2171
      %v2173 = vpop.f32.mrf.mxu0
      %v2174 = vadd.f32 0.0, %v2173
      %2175 = vmatmul.bf16.gmra.mxu0 %v1962
      %v2176 = vpop.f32.mrf.mxu0
      %v2177 = vadd.f32 0.0, %v2176
      %v2178 = vpop.f32.mrf.mxu0
      %v2179 = vadd.f32 0.0, %v2178
      %2180 = vmatmul.bf16.gmra.mxu0 %v1965
      %v2181 = vpop.f32.mrf.mxu0
      %v2182 = vadd.f32 0.0, %v2181
      %v2183 = vpop.f32.mrf.mxu0
      %v2184 = vadd.f32 0.0, %v2183
      %2185 = vmatmul.bf16.gmra.mxu0 %v1968
      %v2186 = vpop.f32.mrf.mxu0
      %v2187 = vadd.f32 0.0, %v2186
      %v2188 = vpop.f32.mrf.mxu0
      %v2189 = vadd.f32 0.0, %v2188
      %2190 = vmatmul.bf16.gmra.mxu0 %v1971
      %v2191 = vpop.f32.mrf.mxu0
      %v2192 = vadd.f32 0.0, %v2191
      %v2193 = vpop.f32.mrf.mxu0
      %v2194 = vadd.f32 0.0, %v2193
      %2195 = vmatmul.bf16.gmra.mxu0 %v1974
      %v2196 = vpop.f32.mrf.mxu0
      %v2197 = vadd.f32 0.0, %v2196
      %v2198 = vpop.f32.mrf.mxu0
      %v2199 = vadd.f32 0.0, %v2198
      %2200 = vmatmul.bf16.gmra.mxu0 %v1977
      %v2201 = vpop.f32.mrf.mxu0
      %v2202 = vadd.f32 0.0, %v2201
      %v2203 = vpop.f32.mrf.mxu0
      %v2204 = vadd.f32 0.0, %v2203
      %2205 = vmatmul.bf16.gmra.mxu0 %v1980
      %v2206 = vpop.f32.mrf.mxu0
      %v2207 = vadd.f32 0.0, %v2206
      %v2208 = vpop.f32.mrf.mxu0
      %v2209 = vadd.f32 0.0, %v2208
      %2210 = vmatmul.bf16.gmra.mxu0 %v1983
      %v2211 = vpop.f32.mrf.mxu0
      %v2212 = vadd.f32 0.0, %v2211
      %v2213 = vpop.f32.mrf.mxu0
      %v2214 = vadd.f32 0.0, %v2213
      %2215 = vmatmul.bf16.gmra.mxu0 %v1986
      %v2216 = vpop.f32.mrf.mxu0
      %v2217 = vadd.f32 0.0, %v2216
      %v2218 = vpop.f32.mrf.mxu0
      %v2219 = vadd.f32 0.0, %v2218
      %2220 = vmatmul.bf16.gmra.mxu0 %v1989
      %v2221 = vpop.f32.mrf.mxu0
      %v2222 = vadd.f32 0.0, %v2221
      %v2223 = vpop.f32.mrf.mxu0
      %v2224 = vadd.f32 0.0, %v2223
      %2225 = vmatmul.bf16.gmra.mxu0 %v1992
      %v2226 = vpop.f32.mrf.mxu0
      %v2227 = vadd.f32 0.0, %v2226
      %v2228 = vpop.f32.mrf.mxu0
      %v2229 = vadd.f32 0.0, %v2228
      %2230 = vmatmul.bf16.gmra.mxu0 %v1995
      %v2231 = vpop.f32.mrf.mxu0
      %v2232 = vadd.f32 0.0, %v2231
      %v2233 = vpop.f32.mrf.mxu0
      %v2234 = vadd.f32 0.0, %v2233
      %2235 = vmatmul.bf16.gmra.mxu0 %v1998
      %v2236 = vpop.f32.mrf.mxu0
      %v2237 = vadd.f32 0.0, %v2236
      %v2238 = vpop.f32.mrf.mxu0
      %v2239 = vadd.f32 0.0, %v2238
      %2240 = vmatmul.bf16.gmra.mxu0 %v2001
      %v2241 = vpop.f32.mrf.mxu0
      %v2242 = vadd.f32 0.0, %v2241
      %v2243 = vpop.f32.mrf.mxu0
      %v2244 = vadd.f32 0.0, %v2243
      %2245 = vmatmul.bf16.gmra.mxu0 %v2004
      %v2246 = vpop.f32.mrf.mxu0
      %v2247 = vadd.f32 0.0, %v2246
      %v2248 = vpop.f32.mrf.mxu0
      %v2249 = vadd.f32 0.0, %v2248
      %2250 = vmatmul.bf16.gmra.mxu0 %v2007
      %v2251 = vpop.f32.mrf.mxu0
      %v2252 = vadd.f32 0.0, %v2251
      %v2253 = vpop.f32.mrf.mxu0
      %v2254 = vadd.f32 0.0, %v2253
      %2255 = vmatmul.bf16.gmra.mxu0 %v2010
      %v2256 = vpop.f32.mrf.mxu0
      %v2257 = vadd.f32 0.0, %v2256
      %v2258 = vpop.f32.mrf.mxu0
      %v2259 = vadd.f32 0.0, %v2258
      %2260 = vmatmul.bf16.gmra.mxu0 %v2013
      %v2261 = vpop.f32.mrf.mxu0
      %v2262 = vadd.f32 0.0, %v2261
      %v2263 = vpop.f32.mrf.mxu0
      %v2264 = vadd.f32 0.0, %v2263
      %2265 = vmatmul.bf16.gmra.mxu0 %v2016
      %v2266 = vpop.f32.mrf.mxu0
      %v2267 = vadd.f32 0.0, %v2266
      %v2268 = vpop.f32.mrf.mxu0
      %v2269 = vadd.f32 0.0, %v2268
      %2270 = vmatmul.bf16.gmra.mxu0 %v2019
      %v2271 = vpop.f32.mrf.mxu0
      %v2272 = vadd.f32 0.0, %v2271
      %v2273 = vpop.f32.mrf.mxu0
      %v2274 = vadd.f32 0.0, %v2273
      %2275 = vmatmul.bf16.gmra.mxu0 %v2022
      %v2276 = vpop.f32.mrf.mxu0
      %v2277 = vadd.f32 0.0, %v2276
      %v2278 = vpop.f32.mrf.mxu0
      %v2279 = vadd.f32 0.0, %v2278
      %2280 = vmatmul.bf16.gmra.mxu0 %v2025
      %v2281 = vpop.f32.mrf.mxu0
      %v2282 = vadd.f32 0.0, %v2281
      %v2283 = vpop.f32.mrf.mxu0
      %v2284 = vadd.f32 0.0, %v2283
      %2285 = vmatmul.bf16.gmra.mxu0 %v2028
      %v2286 = vpop.f32.mrf.mxu0
      %v2287 = vadd.f32 0.0, %v2286
      %v2288 = vpop.f32.mrf.mxu0
      %v2289 = vadd.f32 0.0, %v2288
      %2290 = vmatmul.bf16.gmra.mxu0 %v2031
      %v2291 = vpop.f32.mrf.mxu0
      %v2292 = vadd.f32 0.0, %v2291
      %v2293 = vpop.f32.mrf.mxu0
      %v2294 = vadd.f32 0.0, %v2293
      %2295 = vmatmul.bf16.gmra.mxu0 %v2034
      %v2296 = vpop.f32.mrf.mxu0
      %v2297 = vadd.f32 0.0, %v2296
      %v2298 = vpop.f32.mrf.mxu0
      %v2299 = vadd.f32 0.0, %v2298
      %2300 = vmatmul.bf16.gmra.mxu0 %v2037
      %v2301 = vpop.f32.mrf.mxu0
      %v2302 = vadd.f32 0.0, %v2301
      %v2303 = vpop.f32.mrf.mxu0
      %v2304 = vadd.f32 0.0, %v2303
      %2305 = vmatmul.bf16.gmra.mxu0 %v2040
      %v2306 = vpop.f32.mrf.mxu0
      %v2307 = vadd.f32 0.0, %v2306
      %v2308 = vpop.f32.mrf.mxu0
      %v2309 = vadd.f32 0.0, %v2308
      %2310 = vmatmul.bf16.gmra.mxu0 %v2043
      %v2311 = vpop.f32.mrf.mxu0
      %v2312 = vadd.f32 0.0, %v2311
      %v2313 = vpop.f32.mrf.mxu0
      %v2314 = vadd.f32 0.0, %v2313
      %2315 = vmatmul.bf16.gmra.mxu0 %v2046
      %v2316 = vpop.f32.mrf.mxu0
      %v2317 = vadd.f32 0.0, %v2316
      %v2318 = vpop.f32.mrf.mxu0
      %v2319 = vadd.f32 0.0, %v2318
      %2320 = vmatmul.bf16.gmra.mxu0 %v2049
      %v2321 = vpop.f32.mrf.mxu0
      %v2322 = vadd.f32 0.0, %v2321
      %v2323 = vpop.f32.mrf.mxu0
      %v2324 = vadd.f32 0.0, %v2323
      %2325 = vmatmul.bf16.gmra.mxu0 %v2052
      %v2326 = vpop.f32.mrf.mxu0
      %v2327 = vadd.f32 0.0, %v2326
      %v2328 = vpop.f32.mrf.mxu0
      %v2329 = vadd.f32 0.0, %v2328
      %2330 = vmatmul.bf16.gmra.mxu0 %v2055
      %v2331 = vpop.f32.mrf.mxu0
      %v2332 = vadd.f32 0.0, %v2331
      %v2333 = vpop.f32.mrf.mxu0
      %v2334 = vadd.f32 0.0, %v2333
      %2335 = vmatmul.bf16.gmra.mxu0 %v2058
      %v2336 = vpop.f32.mrf.mxu0
      %v2337 = vadd.f32 0.0, %v2336
      %v2338 = vpop.f32.mrf.mxu0
      %v2339 = vadd.f32 0.0, %v2338
      %2340 = vmatmul.bf16.gmra.mxu0 %v2061
      %v2341 = vpop.f32.mrf.mxu0
      %v2342 = vadd.f32 0.0, %v2341
      %v2343 = vpop.f32.mrf.mxu0
      %v2344 = vadd.f32 0.0, %v2343
      %2345 = vmatmul.bf16.gmra.mxu0 %v2064
      %v2346 = vpop.f32.mrf.mxu0
      %v2347 = vadd.f32 0.0, %v2346
      %v2348 = vpop.f32.mrf.mxu0
      %v2349 = vadd.f32 0.0, %v2348
      %2350 = vmatmul.bf16.gmra.mxu0 %v2067
      %v2351 = vpop.f32.mrf.mxu0
      %v2352 = vadd.f32 0.0, %v2351
      %v2353 = vpop.f32.mrf.mxu0
      %v2354 = vadd.f32 0.0, %v2353
      %2355 = vmatmul.bf16.gmra.mxu0 %v2070
      %v2356 = vpop.f32.mrf.mxu0
      %v2357 = vadd.f32 0.0, %v2356
      %v2358 = vpop.f32.mrf.mxu0
      %v2359 = vadd.f32 0.0, %v2358
      %2360 = vmatmul.bf16.gmra.mxu0 %v2073
      %v2361 = vpop.f32.mrf.mxu0
      %v2362 = vadd.f32 0.0, %v2361
      %v2363 = vpop.f32.mrf.mxu0
      %v2364 = vadd.f32 0.0, %v2363
      %2365 = vmatmul.bf16.gmra.mxu0 %v2076
      %v2366 = vpop.f32.mrf.mxu0
      %v2367 = vadd.f32 0.0, %v2366
      %v2368 = vpop.f32.mrf.mxu0
      %v2369 = vadd.f32 0.0, %v2368
      %2370 = vmatmul.bf16.gmra.mxu0 %v2079
      %v2371 = vpop.f32.mrf.mxu0
      %v2372 = vadd.f32 0.0, %v2371
      %v2373 = vpop.f32.mrf.mxu0
      %v2374 = vadd.f32 0.0, %v2373
      %2375 = vmatmul.bf16.gmra.mxu0 %v2082
      %v2376 = vpop.f32.mrf.mxu0
      %v2377 = vadd.f32 0.0, %v2376
      %v2378 = vpop.f32.mrf.mxu0
      %v2379 = vadd.f32 0.0, %v2378
      %2380 = vmatmul.bf16.gmra.mxu0 %v2085
      %v2381 = vpop.f32.mrf.mxu0
      %v2382 = vadd.f32 0.0, %v2381
      %v2383 = vpop.f32.mrf.mxu0
      %v2384 = vadd.f32 0.0, %v2383
      %2385 = vmatmul.bf16.gmra.mxu0 %v2088
      %v2386 = vpop.f32.mrf.mxu0
      %v2387 = vadd.f32 0.0, %v2386
      %v2388 = vpop.f32.mrf.mxu0
      %v2389 = vadd.f32 0.0, %v2388
      %2390 = vmatmul.bf16.gmra.mxu0 %v2091
      %v2391 = vpop.f32.mrf.mxu0
      %v2392 = vadd.f32 0.0, %v2391
      %v2393 = vpop.f32.mrf.mxu0
      %v2394 = vadd.f32 0.0, %v2393
      %2395 = vmatmul.bf16.gmra.mxu0 %v2094
      %v2396 = vpop.f32.mrf.mxu0
      %v2397 = vadd.f32 0.0, %v2396
      %v2398 = vpop.f32.mrf.mxu0
      %v2399 = vadd.f32 0.0, %v2398
      %2400 = vmatmul.bf16.gmra.mxu0 %v2097
      %v2401 = vpop.f32.mrf.mxu0
      %v2402 = vadd.f32 0.0, %v2401
      %v2403 = vpop.f32.mrf.mxu0
      %v2404 = vadd.f32 0.0, %v2403
      %2405 = vmatmul.bf16.gmra.mxu0 %v2100
      %v2406 = vpop.f32.mrf.mxu0
      %v2407 = vadd.f32 0.0, %v2406
      %v2408 = vpop.f32.mrf.mxu0
      %v2409 = vadd.f32 0.0, %v2408
      %2410 = vmatmul.bf16.gmra.mxu0 %v2103
      %v2411 = vpop.f32.mrf.mxu0
      %v2412 = vadd.f32 0.0, %v2411
      %v2413 = vpop.f32.mrf.mxu0
      %v2414 = vadd.f32 0.0, %v2413
      %2415 = vmatmul.bf16.gmra.mxu0 %v2106
      %v2416 = vpop.f32.mrf.mxu0
      %v2417 = vadd.f32 0.0, %v2416
      %v2418 = vpop.f32.mrf.mxu0
      %v2419 = vadd.f32 0.0, %v2418
      %2420 = vmatmul.bf16.gmra.mxu0 %v2109
      %v2421 = vpop.f32.mrf.mxu0
      %v2422 = vadd.f32 0.0, %v2421
      %v2423 = vpop.f32.mrf.mxu0
      %v2424 = vadd.f32 0.0, %v2423
      %2425 = vmatmul.bf16.gmra.mxu0 %v2112
      %v2426 = vpop.f32.mrf.mxu0
      %v2427 = vadd.f32 0.0, %v2426
      %v2428 = vpop.f32.mrf.mxu0
      %v2429 = vadd.f32 0.0, %v2428
      %2430 = vmatmul.bf16.gmra.mxu0 %v2115
      %v2431 = vpop.f32.mrf.mxu0
      %v2432 = vadd.f32 0.0, %v2431
      %v2433 = vpop.f32.mrf.mxu0
      %v2434 = vadd.f32 0.0, %v2433
      %2435 = vmatmul.bf16.gmra.mxu0 %v2118
      %v2436 = vpop.f32.mrf.mxu0
      %v2437 = vadd.f32 0.0, %v2436
      %v2438 = vpop.f32.mrf.mxu0
      %v2439 = vadd.f32 0.0, %v2438
      %2440 = vmatmul.bf16.gmra.mxu0 %v2121
      %v2441 = vpop.f32.mrf.mxu0
      %v2442 = vadd.f32 0.0, %v2441
      %v2443 = vpop.f32.mrf.mxu0
      %v2444 = vadd.f32 0.0, %v2443
      %2445 = vmatmul.bf16.gmra.mxu0 %v2124
      %v2446 = vpop.f32.mrf.mxu0
      %v2447 = vadd.f32 0.0, %v2446
      %v2448 = vpop.f32.mrf.mxu0
      %v2449 = vadd.f32 0.0, %v2448
      %2450 = vmatmul.bf16.gmra.mxu0 %v2127
      %v2451 = vpop.f32.mrf.mxu0
      %v2452 = vadd.f32 0.0, %v2451
      %v2453 = vpop.f32.mrf.mxu0
      %v2454 = vadd.f32 0.0, %v2453
      %2455 = vmatmul.bf16.gmra.mxu0 %v2130
      %v2456 = vpop.f32.mrf.mxu0
      %v2457 = vadd.f32 0.0, %v2456
      %v2458 = vpop.f32.mrf.mxu0
      %v2459 = vadd.f32 0.0, %v2458
      %2460 = vmatmul.bf16.gmra.mxu0 %v2133
      %v2461 = vpop.f32.mrf.mxu0
      %v2462 = vadd.f32 0.0, %v2461
      %v2463 = vpop.f32.mrf.mxu0
      %v2464 = vadd.f32 0.0, %v2463
      %2465 = vmatmul.bf16.gmra.mxu0 %v2136
      %v2466 = vpop.f32.mrf.mxu0
      %v2467 = vadd.f32 0.0, %v2466
      %v2468 = vpop.f32.mrf.mxu0
      %v2469 = vadd.f32 0.0, %v2468
      %2470 = vdwg.mxu0
      %v2599 = vunpack.c.l.b16 %v172
      %v2600 = vunpack.c.l.b16 %v173
      %v2601 = vunpack.c.l.b16 %v174
      %v2602 = vunpack.c.l.b16 %v175
      %v2603 = vunpack.c.l.b16 %v176
      %v2604 = vunpack.c.l.b16 %v177
      %v2605 = vunpack.c.l.b16 %v178
      %v2606 = vunpack.c.l.b16 %v179
      %v2607 = vunpack.c.l.b16 %v180
      %v2608 = vunpack.c.l.b16 %v181
      %v2609 = vunpack.c.l.b16 %v182
      %v2610 = vunpack.c.l.b16 %v183
      %v2611 = vunpack.c.l.b16 %v184
      %v2612 = vunpack.c.l.b16 %v185
      %v2613 = vunpack.c.l.b16 %v186
      %v2614 = vunpack.c.l.b16 %v187
      %v2615 = vunpack.c.l.b16 %v188
      %v2616 = vunpack.c.l.b16 %v189
      %v2617 = vunpack.c.l.b16 %v190
      %v2618 = vunpack.c.l.b16 %v191
      %v2619 = vunpack.c.l.b16 %v192
      %v2620 = vunpack.c.l.b16 %v193
      %v2621 = vunpack.c.l.b16 %v194
      %v2622 = vunpack.c.l.b16 %v195
      %v2623 = vunpack.c.l.b16 %v196
      %v2624 = vunpack.c.l.b16 %v197
      %v2625 = vunpack.c.l.b16 %v198
      %v2626 = vunpack.c.l.b16 %v199
      %v2627 = vunpack.c.l.b16 %v200
      %v2628 = vunpack.c.l.b16 %v201
      %v2629 = vunpack.c.l.b16 %v202
      %v2630 = vunpack.c.l.b16 %v203
      %v2631 = vunpack.c.l.b16 %v204
      %v2632 = vunpack.c.l.b16 %v205
      %v2633 = vunpack.c.l.b16 %v206
      %v2634 = vunpack.c.l.b16 %v207
      %v2635 = vunpack.c.l.b16 %v208
      %v2636 = vunpack.c.l.b16 %v209
      %v2637 = vunpack.c.l.b16 %v210
      %v2638 = vunpack.c.l.b16 %v211
      %v2639 = vunpack.c.l.b16 %v212
      %v2640 = vunpack.c.l.b16 %v213
      %v2641 = vunpack.c.l.b16 %v214
      %v2642 = vunpack.c.l.b16 %v215
      %v2643 = vunpack.c.l.b16 %v216
      %v2644 = vunpack.c.l.b16 %v217
      %v2645 = vunpack.c.l.b16 %v218
      %v2646 = vunpack.c.l.b16 %v219
      %v2647 = vunpack.c.l.b16 %v220
      %v2648 = vunpack.c.l.b16 %v221
      %v2649 = vunpack.c.l.b16 %v222
      %v2650 = vunpack.c.l.b16 %v223
      %v2651 = vunpack.c.l.b16 %v224
      %v2652 = vunpack.c.l.b16 %v225
      %v2653 = vunpack.c.l.b16 %v226
      %v2654 = vunpack.c.l.b16 %v227
      %v2655 = vunpack.c.l.b16 %v228
      %v2656 = vunpack.c.l.b16 %v229
      %v2657 = vunpack.c.l.b16 %v230
      %v2658 = vunpack.c.l.b16 %v231
      %v2659 = vunpack.c.l.b16 %v232
      %v2660 = vunpack.c.l.b16 %v233
      %v2661 = vunpack.c.l.b16 %v234
      %v2662 = vunpack.c.l.b16 %v235
      %v2663 = vunpack.c.l.b16 %v236
      %v2664 = vunpack.c.l.b16 %v237
      %v2665 = vunpack.c.l.b16 %v238
      %v2666 = vunpack.c.l.b16 %v239
      %v2667 = vunpack.c.l.b16 %v240
      %v2668 = vunpack.c.l.b16 %v241
      %v2669 = vunpack.c.l.b16 %v242
      %v2670 = vunpack.c.l.b16 %v243
      %v2671 = vunpack.c.l.b16 %v244
      %v2672 = vunpack.c.l.b16 %v245
      %v2673 = vunpack.c.l.b16 %v246
      %v2674 = vunpack.c.l.b16 %v247
      %v2675 = vunpack.c.l.b16 %v248
      %v2676 = vunpack.c.l.b16 %v249
      %v2677 = vunpack.c.l.b16 %v250
      %v2678 = vunpack.c.l.b16 %v251
      %v2679 = vunpack.c.l.b16 %v252
      %v2680 = vunpack.c.l.b16 %v253
      %v2681 = vunpack.c.l.b16 %v254
      %v2682 = vunpack.c.l.b16 %v255
      %v2683 = vunpack.c.l.b16 %v256
      %v2684 = vunpack.c.l.b16 %v257
      %v2685 = vunpack.c.l.b16 %v258
      %v2686 = vunpack.c.l.b16 %v259
      %v2687 = vunpack.c.l.b16 %v260
      %v2688 = vunpack.c.l.b16 %v261
      %v2689 = vunpack.c.l.b16 %v262
      %v2690 = vunpack.c.l.b16 %v263
      %v2691 = vunpack.c.l.b16 %v264
      %v2692 = vunpack.c.l.b16 %v265
      %v2693 = vunpack.c.l.b16 %v266
      %v2694 = vunpack.c.l.b16 %v267
      %v2695 = vunpack.c.l.b16 %v268
      %v2696 = vunpack.c.l.b16 %v269
      %v2697 = vunpack.c.l.b16 %v270
      %v2698 = vunpack.c.l.b16 %v271
      %v2699 = vunpack.c.l.b16 %v272
      %v2700 = vunpack.c.l.b16 %v273
      %v2701 = vunpack.c.l.b16 %v274
      %v2702 = vunpack.c.l.b16 %v275
      %v2703 = vunpack.c.l.b16 %v276
      %v2704 = vunpack.c.l.b16 %v277
      %v2705 = vunpack.c.l.b16 %v278
      %v2706 = vunpack.c.l.b16 %v279
      %v2707 = vunpack.c.l.b16 %v280
      %v2708 = vunpack.c.l.b16 %v281
      %v2709 = vunpack.c.l.b16 %v282
      %v2710 = vunpack.c.l.b16 %v283
      %v2711 = vunpack.c.l.b16 %v284
      %v2712 = vunpack.c.l.b16 %v285
      %v2713 = vunpack.c.l.b16 %v286
      %v2714 = vunpack.c.l.b16 %v287
      %v2715 = vunpack.c.l.b16 %v288
      %v2716 = vunpack.c.l.b16 %v289
      %v2717 = vunpack.c.l.b16 %v290
      %v2718 = vunpack.c.l.b16 %v291
      %v2719 = vunpack.c.l.b16 %v292
      %v2720 = vunpack.c.l.b16 %v293
      %v2721 = vunpack.c.l.b16 %v294
      %v2722 = vunpack.c.l.b16 %v295
      %v2723 = vunpack.c.l.b16 %v296
      %v2724 = vunpack.c.l.b16 %v297
      %v2725 = vunpack.c.l.b16 %v298
      %v2726 = vunpack.c.l.b16 %v299
      %v2727 = vpack.c.b16 %v2600, %v2599
      %v2728 = vpack.c.b16 %v2602, %v2601
      %v2729 = vpack.c.b16 %v2604, %v2603
      %v2730 = vpack.c.b16 %v2606, %v2605
      %v2731 = vpack.c.b16 %v2608, %v2607
      %v2732 = vpack.c.b16 %v2610, %v2609
      %v2733 = vpack.c.b16 %v2612, %v2611
      %v2734 = vpack.c.b16 %v2614, %v2613
      %v2735 = vpack.c.b16 %v2616, %v2615
      %v2736 = vpack.c.b16 %v2618, %v2617
      %v2737 = vpack.c.b16 %v2620, %v2619
      %v2738 = vpack.c.b16 %v2622, %v2621
      %v2739 = vpack.c.b16 %v2624, %v2623
      %v2740 = vpack.c.b16 %v2626, %v2625
      %v2741 = vpack.c.b16 %v2628, %v2627
      %v2742 = vpack.c.b16 %v2630, %v2629
      %v2743 = vpack.c.b16 %v2632, %v2631
      %v2744 = vpack.c.b16 %v2634, %v2633
      %v2745 = vpack.c.b16 %v2636, %v2635
      %v2746 = vpack.c.b16 %v2638, %v2637
      %v2747 = vpack.c.b16 %v2640, %v2639
      %v2748 = vpack.c.b16 %v2642, %v2641
      %v2749 = vpack.c.b16 %v2644, %v2643
      %v2750 = vpack.c.b16 %v2646, %v2645
      %v2751 = vpack.c.b16 %v2648, %v2647
      %v2752 = vpack.c.b16 %v2650, %v2649
      %v2753 = vpack.c.b16 %v2652, %v2651
      %v2754 = vpack.c.b16 %v2654, %v2653
      %v2755 = vpack.c.b16 %v2656, %v2655
      %v2756 = vpack.c.b16 %v2658, %v2657
      %v2757 = vpack.c.b16 %v2660, %v2659
      %v2758 = vpack.c.b16 %v2662, %v2661
      %v2759 = vpack.c.b16 %v2664, %v2663
      %v2760 = vpack.c.b16 %v2666, %v2665
      %v2761 = vpack.c.b16 %v2668, %v2667
      %v2762 = vpack.c.b16 %v2670, %v2669
      %v2763 = vpack.c.b16 %v2672, %v2671
      %v2764 = vpack.c.b16 %v2674, %v2673
      %v2765 = vpack.c.b16 %v2676, %v2675
      %v2766 = vpack.c.b16 %v2678, %v2677
      %v2767 = vpack.c.b16 %v2680, %v2679
      %v2768 = vpack.c.b16 %v2682, %v2681
      %v2769 = vpack.c.b16 %v2684, %v2683
      %v2770 = vpack.c.b16 %v2686, %v2685
      %v2771 = vpack.c.b16 %v2688, %v2687
      %v2772 = vpack.c.b16 %v2690, %v2689
      %v2773 = vpack.c.b16 %v2692, %v2691
      %v2774 = vpack.c.b16 %v2694, %v2693
      %v2775 = vpack.c.b16 %v2696, %v2695
      %v2776 = vpack.c.b16 %v2698, %v2697
      %v2777 = vpack.c.b16 %v2700, %v2699
      %v2778 = vpack.c.b16 %v2702, %v2701
      %v2779 = vpack.c.b16 %v2704, %v2703
      %v2780 = vpack.c.b16 %v2706, %v2705
      %v2781 = vpack.c.b16 %v2708, %v2707
      %v2782 = vpack.c.b16 %v2710, %v2709
      %v2783 = vpack.c.b16 %v2712, %v2711
      %v2784 = vpack.c.b16 %v2714, %v2713
      %v2785 = vpack.c.b16 %v2716, %v2715
      %v2786 = vpack.c.b16 %v2718, %v2717
      %v2787 = vpack.c.b16 %v2720, %v2719
      %v2788 = vpack.c.b16 %v2722, %v2721
      %v2789 = vpack.c.b16 %v2724, %v2723
      %v2790 = vpack.c.b16 %v2726, %v2725
      %v2793 = vunpack.c.l.b16 %v300
      %v2794 = vunpack.c.l.b16 %v301
      %v2795 = vpack.c.b16 %v2794, %v2793
      %v2797 = vsel %vm1945, %v2727, 0
      %v2800 = vsel %vm1945, %v2728, 0
      %v2803 = vsel %vm1945, %v2729, 0
      %v2806 = vsel %vm1945, %v2730, 0
      %v2809 = vsel %vm1945, %v2731, 0
      %v2812 = vsel %vm1945, %v2732, 0
      %v2815 = vsel %vm1945, %v2733, 0
      %v2818 = vsel %vm1945, %v2734, 0
      %v2821 = vsel %vm1945, %v2735, 0
      %v2824 = vsel %vm1945, %v2736, 0
      %v2827 = vsel %vm1945, %v2737, 0
      %v2830 = vsel %vm1945, %v2738, 0
      %v2833 = vsel %vm1945, %v2739, 0
      %v2836 = vsel %vm1945, %v2740, 0
      %v2839 = vsel %vm1945, %v2741, 0
      %v2842 = vsel %vm1945, %v2742, 0
      %v2845 = vsel %vm1945, %v2743, 0
      %v2848 = vsel %vm1945, %v2744, 0
      %v2851 = vsel %vm1945, %v2745, 0
      %v2854 = vsel %vm1945, %v2746, 0
      %v2857 = vsel %vm1945, %v2747, 0
      %v2860 = vsel %vm1945, %v2748, 0
      %v2863 = vsel %vm1945, %v2749, 0
      %v2866 = vsel %vm1945, %v2750, 0
      %v2869 = vsel %vm1945, %v2751, 0
      %v2872 = vsel %vm1945, %v2752, 0
      %v2875 = vsel %vm1945, %v2753, 0
      %v2878 = vsel %vm1945, %v2754, 0
      %v2881 = vsel %vm1945, %v2755, 0
      %v2884 = vsel %vm1945, %v2756, 0
      %v2887 = vsel %vm1945, %v2757, 0
      %v2890 = vsel %vm1945, %v2758, 0
      %v2893 = vsel %vm1945, %v2759, 0
      %v2896 = vsel %vm1945, %v2760, 0
      %v2899 = vsel %vm1945, %v2761, 0
      %v2902 = vsel %vm1945, %v2762, 0
      %v2905 = vsel %vm1945, %v2763, 0
      %v2908 = vsel %vm1945, %v2764, 0
      %v2911 = vsel %vm1945, %v2765, 0
      %v2914 = vsel %vm1945, %v2766, 0
      %v2917 = vsel %vm1945, %v2767, 0
      %v2920 = vsel %vm1945, %v2768, 0
      %v2923 = vsel %vm1945, %v2769, 0
      %v2926 = vsel %vm1945, %v2770, 0
      %v2929 = vsel %vm1945, %v2771, 0
      %v2932 = vsel %vm1945, %v2772, 0
      %v2935 = vsel %vm1945, %v2773, 0
      %v2938 = vsel %vm1945, %v2774, 0
      %v2941 = vsel %vm1945, %v2775, 0
      %v2944 = vsel %vm1945, %v2776, 0
      %v2947 = vsel %vm1945, %v2777, 0
      %v2950 = vsel %vm1945, %v2778, 0
      %v2953 = vsel %vm1945, %v2779, 0
      %v2956 = vsel %vm1945, %v2780, 0
      %v2959 = vsel %vm1945, %v2781, 0
      %v2962 = vsel %vm1945, %v2782, 0
      %v2965 = vsel %vm1945, %v2783, 0
      %v2968 = vsel %vm1945, %v2784, 0
      %v2971 = vsel %vm1945, %v2785, 0
      %v2974 = vsel %vm1945, %v2786, 0
      %v2977 = vsel %vm1945, %v2787, 0
      %v2980 = vsel %vm1945, %v2788, 0
      %v2983 = vsel %vm1945, %v2789, 0
      %v2986 = vsel %vm1945, %v2790, 0
      %v2989 = vsel %vm2138, %v2795, 0
      %2991 = vmatpush.bf16.msra.mxu0 0
      %2992 = vmatpush.bf16.msra.mxu0 0
      %2993 = vmatpush.bf16.msra.mxu0 0
      %2994 = vmatpush.bf16.msra.mxu0 0
      %2995 = vmatpush.bf16.msra.mxu0 0
      %2996 = vmatpush.bf16.msra.mxu0 0
      %2997 = vmatpush.bf16.msra.mxu0 0
      %2998 = vmatpush.bf16.msra.mxu0 %v2989
      %2999 = vmatmul.bf16.gmra.mxu0 %v2797
      %v3000 = vpop.f32.mrf.mxu0
      %v3001 = vadd.f32 %v2152, %v3000
      %v3002 = vpop.f32.mrf.mxu0
      %v3003 = vadd.f32 %v2154, %v3002
      %3004 = vmatmul.bf16.gmra.mxu0 %v2800
      %v3005 = vpop.f32.mrf.mxu0
      %v3006 = vadd.f32 %v2157, %v3005
      %v3007 = vpop.f32.mrf.mxu0
      %v3008 = vadd.f32 %v2159, %v3007
      %3009 = vmatmul.bf16.gmra.mxu0 %v2803
      %v3010 = vpop.f32.mrf.mxu0
      %v3011 = vadd.f32 %v2162, %v3010
      %v3012 = vpop.f32.mrf.mxu0
      %v3013 = vadd.f32 %v2164, %v3012
      %3014 = vmatmul.bf16.gmra.mxu0 %v2806
      %v3015 = vpop.f32.mrf.mxu0
      %v3016 = vadd.f32 %v2167, %v3015
      %v3017 = vpop.f32.mrf.mxu0
      %v3018 = vadd.f32 %v2169, %v3017
      %3019 = vmatmul.bf16.gmra.mxu0 %v2809
      %v3020 = vpop.f32.mrf.mxu0
      %v3021 = vadd.f32 %v2172, %v3020
      %v3022 = vpop.f32.mrf.mxu0
      %v3023 = vadd.f32 %v2174, %v3022
      %3024 = vmatmul.bf16.gmra.mxu0 %v2812
      %v3025 = vpop.f32.mrf.mxu0
      %v3026 = vadd.f32 %v2177, %v3025
      %v3027 = vpop.f32.mrf.mxu0
      %v3028 = vadd.f32 %v2179, %v3027
      %3029 = vmatmul.bf16.gmra.mxu0 %v2815
      %v3030 = vpop.f32.mrf.mxu0
      %v3031 = vadd.f32 %v2182, %v3030
      %v3032 = vpop.f32.mrf.mxu0
      %v3033 = vadd.f32 %v2184, %v3032
      %3034 = vmatmul.bf16.gmra.mxu0 %v2818
      %v3035 = vpop.f32.mrf.mxu0
      %v3036 = vadd.f32 %v2187, %v3035
      %v3037 = vpop.f32.mrf.mxu0
      %v3038 = vadd.f32 %v2189, %v3037
      %3039 = vmatmul.bf16.gmra.mxu0 %v2821
      %v3040 = vpop.f32.mrf.mxu0
      %v3041 = vadd.f32 %v2192, %v3040
      %v3042 = vpop.f32.mrf.mxu0
      %v3043 = vadd.f32 %v2194, %v3042
      %3044 = vmatmul.bf16.gmra.mxu0 %v2824
      %v3045 = vpop.f32.mrf.mxu0
      %v3046 = vadd.f32 %v2197, %v3045
      %v3047 = vpop.f32.mrf.mxu0
      %v3048 = vadd.f32 %v2199, %v3047
      %3049 = vmatmul.bf16.gmra.mxu0 %v2827
      %v3050 = vpop.f32.mrf.mxu0
      %v3051 = vadd.f32 %v2202, %v3050
      %v3052 = vpop.f32.mrf.mxu0
      %v3053 = vadd.f32 %v2204, %v3052
      %3054 = vmatmul.bf16.gmra.mxu0 %v2830
      %v3055 = vpop.f32.mrf.mxu0
      %v3056 = vadd.f32 %v2207, %v3055
      %v3057 = vpop.f32.mrf.mxu0
      %v3058 = vadd.f32 %v2209, %v3057
      %3059 = vmatmul.bf16.gmra.mxu0 %v2833
      %v3060 = vpop.f32.mrf.mxu0
      %v3061 = vadd.f32 %v2212, %v3060
      %v3062 = vpop.f32.mrf.mxu0
      %v3063 = vadd.f32 %v2214, %v3062
      %3064 = vmatmul.bf16.gmra.mxu0 %v2836
      %v3065 = vpop.f32.mrf.mxu0
      %v3066 = vadd.f32 %v2217, %v3065
      %v3067 = vpop.f32.mrf.mxu0
      %v3068 = vadd.f32 %v2219, %v3067
      %3069 = vmatmul.bf16.gmra.mxu0 %v2839
      %v3070 = vpop.f32.mrf.mxu0
      %v3071 = vadd.f32 %v2222, %v3070
      %v3072 = vpop.f32.mrf.mxu0
      %v3073 = vadd.f32 %v2224, %v3072
      %3074 = vmatmul.bf16.gmra.mxu0 %v2842
      %v3075 = vpop.f32.mrf.mxu0
      %v3076 = vadd.f32 %v2227, %v3075
      %v3077 = vpop.f32.mrf.mxu0
      %v3078 = vadd.f32 %v2229, %v3077
      %3079 = vmatmul.bf16.gmra.mxu0 %v2845
      %v3080 = vpop.f32.mrf.mxu0
      %v3081 = vadd.f32 %v2232, %v3080
      %v3082 = vpop.f32.mrf.mxu0
      %v3083 = vadd.f32 %v2234, %v3082
      %3084 = vmatmul.bf16.gmra.mxu0 %v2848
      %v3085 = vpop.f32.mrf.mxu0
      %v3086 = vadd.f32 %v2237, %v3085
      %v3087 = vpop.f32.mrf.mxu0
      %v3088 = vadd.f32 %v2239, %v3087
      %3089 = vmatmul.bf16.gmra.mxu0 %v2851
      %v3090 = vpop.f32.mrf.mxu0
      %v3091 = vadd.f32 %v2242, %v3090
      %v3092 = vpop.f32.mrf.mxu0
      %v3093 = vadd.f32 %v2244, %v3092
      %3094 = vmatmul.bf16.gmra.mxu0 %v2854
      %v3095 = vpop.f32.mrf.mxu0
      %v3096 = vadd.f32 %v2247, %v3095
      %v3097 = vpop.f32.mrf.mxu0
      %v3098 = vadd.f32 %v2249, %v3097
      %3099 = vmatmul.bf16.gmra.mxu0 %v2857
      %v3100 = vpop.f32.mrf.mxu0
      %v3101 = vadd.f32 %v2252, %v3100
      %v3102 = vpop.f32.mrf.mxu0
      %v3103 = vadd.f32 %v2254, %v3102
      %3104 = vmatmul.bf16.gmra.mxu0 %v2860
      %v3105 = vpop.f32.mrf.mxu0
      %v3106 = vadd.f32 %v2257, %v3105
      %v3107 = vpop.f32.mrf.mxu0
      %v3108 = vadd.f32 %v2259, %v3107
      %3109 = vmatmul.bf16.gmra.mxu0 %v2863
      %v3110 = vpop.f32.mrf.mxu0
      %v3111 = vadd.f32 %v2262, %v3110
      %v3112 = vpop.f32.mrf.mxu0
      %v3113 = vadd.f32 %v2264, %v3112
      %3114 = vmatmul.bf16.gmra.mxu0 %v2866
      %v3115 = vpop.f32.mrf.mxu0
      %v3116 = vadd.f32 %v2267, %v3115
      %v3117 = vpop.f32.mrf.mxu0
      %v3118 = vadd.f32 %v2269, %v3117
      %3119 = vmatmul.bf16.gmra.mxu0 %v2869
      %v3120 = vpop.f32.mrf.mxu0
      %v3121 = vadd.f32 %v2272, %v3120
      %v3122 = vpop.f32.mrf.mxu0
      %v3123 = vadd.f32 %v2274, %v3122
      %3124 = vmatmul.bf16.gmra.mxu0 %v2872
      %v3125 = vpop.f32.mrf.mxu0
      %v3126 = vadd.f32 %v2277, %v3125
      %v3127 = vpop.f32.mrf.mxu0
      %v3128 = vadd.f32 %v2279, %v3127
      %3129 = vmatmul.bf16.gmra.mxu0 %v2875
      %v3130 = vpop.f32.mrf.mxu0
      %v3131 = vadd.f32 %v2282, %v3130
      %v3132 = vpop.f32.mrf.mxu0
      %v3133 = vadd.f32 %v2284, %v3132
      %3134 = vmatmul.bf16.gmra.mxu0 %v2878
      %v3135 = vpop.f32.mrf.mxu0
      %v3136 = vadd.f32 %v2287, %v3135
      %v3137 = vpop.f32.mrf.mxu0
      %v3138 = vadd.f32 %v2289, %v3137
      %3139 = vmatmul.bf16.gmra.mxu0 %v2881
      %v3140 = vpop.f32.mrf.mxu0
      %v3141 = vadd.f32 %v2292, %v3140
      %v3142 = vpop.f32.mrf.mxu0
      %v3143 = vadd.f32 %v2294, %v3142
      %3144 = vmatmul.bf16.gmra.mxu0 %v2884
      %v3145 = vpop.f32.mrf.mxu0
      %v3146 = vadd.f32 %v2297, %v3145
      %v3147 = vpop.f32.mrf.mxu0
      %v3148 = vadd.f32 %v2299, %v3147
      %3149 = vmatmul.bf16.gmra.mxu0 %v2887
      %v3150 = vpop.f32.mrf.mxu0
      %v3151 = vadd.f32 %v2302, %v3150
      %v3152 = vpop.f32.mrf.mxu0
      %v3153 = vadd.f32 %v2304, %v3152
      %3154 = vmatmul.bf16.gmra.mxu0 %v2890
      %v3155 = vpop.f32.mrf.mxu0
      %v3156 = vadd.f32 %v2307, %v3155
      %v3157 = vpop.f32.mrf.mxu0
      %v3158 = vadd.f32 %v2309, %v3157
      %3159 = vmatmul.bf16.gmra.mxu0 %v2893
      %v3160 = vpop.f32.mrf.mxu0
      %v3161 = vadd.f32 %v2312, %v3160
      %v3162 = vpop.f32.mrf.mxu0
      %v3163 = vadd.f32 %v2314, %v3162
      %3164 = vmatmul.bf16.gmra.mxu0 %v2896
      %v3165 = vpop.f32.mrf.mxu0
      %v3166 = vadd.f32 %v2317, %v3165
      %v3167 = vpop.f32.mrf.mxu0
      %v3168 = vadd.f32 %v2319, %v3167
      %3169 = vmatmul.bf16.gmra.mxu0 %v2899
      %v3170 = vpop.f32.mrf.mxu0
      %v3171 = vadd.f32 %v2322, %v3170
      %v3172 = vpop.f32.mrf.mxu0
      %v3173 = vadd.f32 %v2324, %v3172
      %3174 = vmatmul.bf16.gmra.mxu0 %v2902
      %v3175 = vpop.f32.mrf.mxu0
      %v3176 = vadd.f32 %v2327, %v3175
      %v3177 = vpop.f32.mrf.mxu0
      %v3178 = vadd.f32 %v2329, %v3177
      %3179 = vmatmul.bf16.gmra.mxu0 %v2905
      %v3180 = vpop.f32.mrf.mxu0
      %v3181 = vadd.f32 %v2332, %v3180
      %v3182 = vpop.f32.mrf.mxu0
      %v3183 = vadd.f32 %v2334, %v3182
      %3184 = vmatmul.bf16.gmra.mxu0 %v2908
      %v3185 = vpop.f32.mrf.mxu0
      %v3186 = vadd.f32 %v2337, %v3185
      %v3187 = vpop.f32.mrf.mxu0
      %v3188 = vadd.f32 %v2339, %v3187
      %3189 = vmatmul.bf16.gmra.mxu0 %v2911
      %v3190 = vpop.f32.mrf.mxu0
      %v3191 = vadd.f32 %v2342, %v3190
      %v3192 = vpop.f32.mrf.mxu0
      %v3193 = vadd.f32 %v2344, %v3192
      %3194 = vmatmul.bf16.gmra.mxu0 %v2914
      %v3195 = vpop.f32.mrf.mxu0
      %v3196 = vadd.f32 %v2347, %v3195
      %v3197 = vpop.f32.mrf.mxu0
      %v3198 = vadd.f32 %v2349, %v3197
      %3199 = vmatmul.bf16.gmra.mxu0 %v2917
      %v3200 = vpop.f32.mrf.mxu0
      %v3201 = vadd.f32 %v2352, %v3200
      %v3202 = vpop.f32.mrf.mxu0
      %v3203 = vadd.f32 %v2354, %v3202
      %3204 = vmatmul.bf16.gmra.mxu0 %v2920
      %v3205 = vpop.f32.mrf.mxu0
      %v3206 = vadd.f32 %v2357, %v3205
      %v3207 = vpop.f32.mrf.mxu0
      %v3208 = vadd.f32 %v2359, %v3207
      %3209 = vmatmul.bf16.gmra.mxu0 %v2923
      %v3210 = vpop.f32.mrf.mxu0
      %v3211 = vadd.f32 %v2362, %v3210
      %v3212 = vpop.f32.mrf.mxu0
      %v3213 = vadd.f32 %v2364, %v3212
      %3214 = vmatmul.bf16.gmra.mxu0 %v2926
      %v3215 = vpop.f32.mrf.mxu0
      %v3216 = vadd.f32 %v2367, %v3215
      %v3217 = vpop.f32.mrf.mxu0
      %v3218 = vadd.f32 %v2369, %v3217
      %3219 = vmatmul.bf16.gmra.mxu0 %v2929
      %v3220 = vpop.f32.mrf.mxu0
      %v3221 = vadd.f32 %v2372, %v3220
      %v3222 = vpop.f32.mrf.mxu0
      %v3223 = vadd.f32 %v2374, %v3222
      %3224 = vmatmul.bf16.gmra.mxu0 %v2932
      %v3225 = vpop.f32.mrf.mxu0
      %v3226 = vadd.f32 %v2377, %v3225
      %v3227 = vpop.f32.mrf.mxu0
      %v3228 = vadd.f32 %v2379, %v3227
      %3229 = vmatmul.bf16.gmra.mxu0 %v2935
      %v3230 = vpop.f32.mrf.mxu0
      %v3231 = vadd.f32 %v2382, %v3230
      %v3232 = vpop.f32.mrf.mxu0
      %v3233 = vadd.f32 %v2384, %v3232
      %3234 = vmatmul.bf16.gmra.mxu0 %v2938
      %v3235 = vpop.f32.mrf.mxu0
      %v3236 = vadd.f32 %v2387, %v3235
      %v3237 = vpop.f32.mrf.mxu0
      %v3238 = vadd.f32 %v2389, %v3237
      %3239 = vmatmul.bf16.gmra.mxu0 %v2941
      %v3240 = vpop.f32.mrf.mxu0
      %v3241 = vadd.f32 %v2392, %v3240
      %v3242 = vpop.f32.mrf.mxu0
      %v3243 = vadd.f32 %v2394, %v3242
      %3244 = vmatmul.bf16.gmra.mxu0 %v2944
      %v3245 = vpop.f32.mrf.mxu0
      %v3246 = vadd.f32 %v2397, %v3245
      %v3247 = vpop.f32.mrf.mxu0
      %v3248 = vadd.f32 %v2399, %v3247
      %3249 = vmatmul.bf16.gmra.mxu0 %v2947
      %v3250 = vpop.f32.mrf.mxu0
      %v3251 = vadd.f32 %v2402, %v3250
      %v3252 = vpop.f32.mrf.mxu0
      %v3253 = vadd.f32 %v2404, %v3252
      %3254 = vmatmul.bf16.gmra.mxu0 %v2950
      %v3255 = vpop.f32.mrf.mxu0
      %v3256 = vadd.f32 %v2407, %v3255
      %v3257 = vpop.f32.mrf.mxu0
      %v3258 = vadd.f32 %v2409, %v3257
      %3259 = vmatmul.bf16.gmra.mxu0 %v2953
      %v3260 = vpop.f32.mrf.mxu0
      %v3261 = vadd.f32 %v2412, %v3260
      %v3262 = vpop.f32.mrf.mxu0
      %v3263 = vadd.f32 %v2414, %v3262
      %3264 = vmatmul.bf16.gmra.mxu0 %v2956
      %v3265 = vpop.f32.mrf.mxu0
      %v3266 = vadd.f32 %v2417, %v3265
      %v3267 = vpop.f32.mrf.mxu0
      %v3268 = vadd.f32 %v2419, %v3267
      %3269 = vmatmul.bf16.gmra.mxu0 %v2959
      %v3270 = vpop.f32.mrf.mxu0
      %v3271 = vadd.f32 %v2422, %v3270
      %v3272 = vpop.f32.mrf.mxu0
      %v3273 = vadd.f32 %v2424, %v3272
      %3274 = vmatmul.bf16.gmra.mxu0 %v2962
      %v3275 = vpop.f32.mrf.mxu0
      %v3276 = vadd.f32 %v2427, %v3275
      %v3277 = vpop.f32.mrf.mxu0
      %v3278 = vadd.f32 %v2429, %v3277
      %3279 = vmatmul.bf16.gmra.mxu0 %v2965
      %v3280 = vpop.f32.mrf.mxu0
      %v3281 = vadd.f32 %v2432, %v3280
      %v3282 = vpop.f32.mrf.mxu0
      %v3283 = vadd.f32 %v2434, %v3282
      %3284 = vmatmul.bf16.gmra.mxu0 %v2968
      %v3285 = vpop.f32.mrf.mxu0
      %v3286 = vadd.f32 %v2437, %v3285
      %v3287 = vpop.f32.mrf.mxu0
      %v3288 = vadd.f32 %v2439, %v3287
      %3289 = vmatmul.bf16.gmra.mxu0 %v2971
      %v3290 = vpop.f32.mrf.mxu0
      %v3291 = vadd.f32 %v2442, %v3290
      %v3292 = vpop.f32.mrf.mxu0
      %v3293 = vadd.f32 %v2444, %v3292
      %3294 = vmatmul.bf16.gmra.mxu0 %v2974
      %v3295 = vpop.f32.mrf.mxu0
      %v3296 = vadd.f32 %v2447, %v3295
      %v3297 = vpop.f32.mrf.mxu0
      %v3298 = vadd.f32 %v2449, %v3297
      %3299 = vmatmul.bf16.gmra.mxu0 %v2977
      %v3300 = vpop.f32.mrf.mxu0
      %v3301 = vadd.f32 %v2452, %v3300
      %v3302 = vpop.f32.mrf.mxu0
      %v3303 = vadd.f32 %v2454, %v3302
      %3304 = vmatmul.bf16.gmra.mxu0 %v2980
      %v3305 = vpop.f32.mrf.mxu0
      %v3306 = vadd.f32 %v2457, %v3305
      %v3307 = vpop.f32.mrf.mxu0
      %v3308 = vadd.f32 %v2459, %v3307
      %3309 = vmatmul.bf16.gmra.mxu0 %v2983
      %v3310 = vpop.f32.mrf.mxu0
      %v3311 = vadd.f32 %v2462, %v3310
      %v3312 = vpop.f32.mrf.mxu0
      %v3313 = vadd.f32 %v2464, %v3312
      %3314 = vmatmul.bf16.gmra.mxu0 %v2986
      %v3315 = vpop.f32.mrf.mxu0
      %v3316 = vadd.f32 %v2467, %v3315
      %v3317 = vpop.f32.mrf.mxu0
      %v3318 = vadd.f32 %v2469, %v3317
      %3319 = vdwg.mxu0
      %s3320 = scalar_lea.vmem %s165, 20
      %v3321 = vld [vmem:[%s3320] sm:$0xf]
      %v3322 = vld [vmem:[%s3320 + $0x4] sm:$0xf]
      %v3323 = vld [vmem:[%s3320 + $0x8] sm:$0xf]
      %v3324 = vld [vmem:[%s3320 + $0xc] sm:$0xf]
      %v3325 = vld [vmem:[%s3320 + $0x14] sm:$0xf]
      %v3326 = vld [vmem:[%s3320 + $0x18] sm:$0xf]
      %v3327 = vld [vmem:[%s3320 + $0x1c] sm:$0xf]
      %v3328 = vld [vmem:[%s3320 + $0x20] sm:$0xf]
      %v3329 = vld [vmem:[%s3320 + $0x28] sm:$0xf]
      %v3330 = vld [vmem:[%s3320 + $0x2c] sm:$0xf]
      %v3331 = vld [vmem:[%s3320 + $0x30] sm:$0xf]
      %v3332 = vld [vmem:[%s3320 + $0x34] sm:$0xf]
      %v3333 = vld [vmem:[%s3320 + $0x3c] sm:$0xf]
      %v3334 = vld [vmem:[%s3320 + $0x40] sm:$0xf]
      %v3335 = vld [vmem:[%s3320 + $0x44] sm:$0xf]
      %v3336 = vld [vmem:[%s3320 + $0x48] sm:$0xf]
      %v3337 = vld [vmem:[%s3320 + $0x50] sm:$0xf]
      %v3338 = vld [vmem:[%s3320 + $0x54] sm:$0xf]
      %v3339 = vld [vmem:[%s3320 + $0x58] sm:$0xf]
      %v3340 = vld [vmem:[%s3320 + $0x5c] sm:$0xf]
      %v3341 = vld [vmem:[%s3320 + $0x64] sm:$0xf]
      %v3342 = vld [vmem:[%s3320 + $0x68] sm:$0xf]
      %v3343 = vld [vmem:[%s3320 + $0x6c] sm:$0xf]
      %v3344 = vld [vmem:[%s3320 + $0x70] sm:$0xf]
      %v3345 = vld [vmem:[%s3320 + $0x78] sm:$0xf]
      %v3346 = vld [vmem:[%s3320 + $0x7c] sm:$0xf]
      %v3347 = vld [vmem:[%s3320 + $0x80] sm:$0xf]
      %v3348 = vld [vmem:[%s3320 + $0x84] sm:$0xf]
      %v3349 = vld [vmem:[%s3320 + $0x8c] sm:$0xf]
      %v3350 = vld [vmem:[%s3320 + $0x90] sm:$0xf]
      %v3351 = vld [vmem:[%s3320 + $0x94] sm:$0xf]
      %v3352 = vld [vmem:[%s3320 + $0x98] sm:$0xf]
      %v3353 = vld [vmem:[%s3320 + $0xa0] sm:$0xf]
      %v3354 = vld [vmem:[%s3320 + $0xa4] sm:$0xf]
      %v3355 = vld [vmem:[%s3320 + $0xa8] sm:$0xf]
      %v3356 = vld [vmem:[%s3320 + $0xac] sm:$0xf]
      %v3357 = vld [vmem:[%s3320 + $0xb4] sm:$0xf]
      %v3358 = vld [vmem:[%s3320 + $0xb8] sm:$0xf]
      %v3359 = vld [vmem:[%s3320 + $0xbc] sm:$0xf]
      %v3360 = vld [vmem:[%s3320 + $0xc0] sm:$0xf]
      %v3361 = vld [vmem:[%s3320 + $0xc8] sm:$0xf]
      %v3362 = vld [vmem:[%s3320 + $0xcc] sm:$0xf]
      %v3363 = vld [vmem:[%s3320 + $0xd0] sm:$0xf]
      %v3364 = vld [vmem:[%s3320 + $0xd4] sm:$0xf]
      %v3365 = vld [vmem:[%s3320 + $0xdc] sm:$0xf]
      %v3366 = vld [vmem:[%s3320 + $0xe0] sm:$0xf]
      %v3367 = vld [vmem:[%s3320 + $0xe4] sm:$0xf]
      %v3368 = vld [vmem:[%s3320 + $0xe8] sm:$0xf]
      %v3369 = vld [vmem:[%s3320 + $0xf0] sm:$0xf]
      %v3370 = vld [vmem:[%s3320 + $0xf4] sm:$0xf]
      %v3371 = vld [vmem:[%s3320 + $0xf8] sm:$0xf]
      %v3372 = vld [vmem:[%s3320 + $0xfc] sm:$0xf]
      %v3373 = vld [vmem:[%s3320 + $0x104] sm:$0xf]
      %v3374 = vld [vmem:[%s3320 + $0x108] sm:$0xf]
      %v3375 = vld [vmem:[%s3320 + $0x10c] sm:$0xf]
      %v3376 = vld [vmem:[%s3320 + $0x110] sm:$0xf]
      %v3377 = vld [vmem:[%s3320 + $0x118] sm:$0xf]
      %v3378 = vld [vmem:[%s3320 + $0x11c] sm:$0xf]
      %v3379 = vld [vmem:[%s3320 + $0x120] sm:$0xf]
      %v3380 = vld [vmem:[%s3320 + $0x124] sm:$0xf]
      %v3381 = vld [vmem:[%s3320 + $0x12c] sm:$0xf]
      %v3382 = vld [vmem:[%s3320 + $0x130] sm:$0xf]
      %v3383 = vld [vmem:[%s3320 + $0x134] sm:$0xf]
      %v3384 = vld [vmem:[%s3320 + $0x138] sm:$0xf]
      %v3385 = vld [vmem:[%s3320 + $0x140] sm:$0xf]
      %v3386 = vld [vmem:[%s3320 + $0x144] sm:$0xf]
      %v3387 = vld [vmem:[%s3320 + $0x148] sm:$0xf]
      %v3388 = vld [vmem:[%s3320 + $0x14c] sm:$0xf]
      %v3389 = vld [vmem:[%s3320 + $0x154] sm:$0xf]
      %v3390 = vld [vmem:[%s3320 + $0x158] sm:$0xf]
      %v3391 = vld [vmem:[%s3320 + $0x15c] sm:$0xf]
      %v3392 = vld [vmem:[%s3320 + $0x160] sm:$0xf]
      %v3393 = vld [vmem:[%s3320 + $0x168] sm:$0xf]
      %v3394 = vld [vmem:[%s3320 + $0x16c] sm:$0xf]
      %v3395 = vld [vmem:[%s3320 + $0x170] sm:$0xf]
      %v3396 = vld [vmem:[%s3320 + $0x174] sm:$0xf]
      %v3397 = vld [vmem:[%s3320 + $0x17c] sm:$0xf]
      %v3398 = vld [vmem:[%s3320 + $0x180] sm:$0xf]
      %v3399 = vld [vmem:[%s3320 + $0x184] sm:$0xf]
      %v3400 = vld [vmem:[%s3320 + $0x188] sm:$0xf]
      %v3401 = vld [vmem:[%s3320 + $0x190] sm:$0xf]
      %v3402 = vld [vmem:[%s3320 + $0x194] sm:$0xf]
      %v3403 = vld [vmem:[%s3320 + $0x198] sm:$0xf]
      %v3404 = vld [vmem:[%s3320 + $0x19c] sm:$0xf]
      %v3405 = vld [vmem:[%s3320 + $0x1a4] sm:$0xf]
      %v3406 = vld [vmem:[%s3320 + $0x1a8] sm:$0xf]
      %v3407 = vld [vmem:[%s3320 + $0x1ac] sm:$0xf]
      %v3408 = vld [vmem:[%s3320 + $0x1b0] sm:$0xf]
      %v3409 = vld [vmem:[%s3320 + $0x1b8] sm:$0xf]
      %v3410 = vld [vmem:[%s3320 + $0x1bc] sm:$0xf]
      %v3411 = vld [vmem:[%s3320 + $0x1c0] sm:$0xf]
      %v3412 = vld [vmem:[%s3320 + $0x1c4] sm:$0xf]
      %v3413 = vld [vmem:[%s3320 + $0x1cc] sm:$0xf]
      %v3414 = vld [vmem:[%s3320 + $0x1d0] sm:$0xf]
      %v3415 = vld [vmem:[%s3320 + $0x1d4] sm:$0xf]
      %v3416 = vld [vmem:[%s3320 + $0x1d8] sm:$0xf]
      %v3417 = vld [vmem:[%s3320 + $0x1e0] sm:$0xf]
      %v3418 = vld [vmem:[%s3320 + $0x1e4] sm:$0xf]
      %v3419 = vld [vmem:[%s3320 + $0x1e8] sm:$0xf]
      %v3420 = vld [vmem:[%s3320 + $0x1ec] sm:$0xf]
      %v3421 = vld [vmem:[%s3320 + $0x1f4] sm:$0xf]
      %v3422 = vld [vmem:[%s3320 + $0x1f8] sm:$0xf]
      %v3423 = vld [vmem:[%s3320 + $0x1fc] sm:$0xf]
      %v3424 = vld [vmem:[%s3320 + $0x200] sm:$0xf]
      %v3425 = vld [vmem:[%s3320 + $0x208] sm:$0xf]
      %v3426 = vld [vmem:[%s3320 + $0x20c] sm:$0xf]
      %v3427 = vld [vmem:[%s3320 + $0x210] sm:$0xf]
      %v3428 = vld [vmem:[%s3320 + $0x214] sm:$0xf]
      %v3429 = vld [vmem:[%s3320 + $0x21c] sm:$0xf]
      %v3430 = vld [vmem:[%s3320 + $0x220] sm:$0xf]
      %v3431 = vld [vmem:[%s3320 + $0x224] sm:$0xf]
      %v3432 = vld [vmem:[%s3320 + $0x228] sm:$0xf]
      %v3433 = vld [vmem:[%s3320 + $0x230] sm:$0xf]
      %v3434 = vld [vmem:[%s3320 + $0x234] sm:$0xf]
      %v3435 = vld [vmem:[%s3320 + $0x238] sm:$0xf]
      %v3436 = vld [vmem:[%s3320 + $0x23c] sm:$0xf]
      %v3437 = vld [vmem:[%s3320 + $0x244] sm:$0xf]
      %v3438 = vld [vmem:[%s3320 + $0x248] sm:$0xf]
      %v3439 = vld [vmem:[%s3320 + $0x24c] sm:$0xf]
      %v3440 = vld [vmem:[%s3320 + $0x250] sm:$0xf]
      %v3441 = vld [vmem:[%s3320 + $0x258] sm:$0xf]
      %v3442 = vld [vmem:[%s3320 + $0x25c] sm:$0xf]
      %v3443 = vld [vmem:[%s3320 + $0x260] sm:$0xf]
      %v3444 = vld [vmem:[%s3320 + $0x264] sm:$0xf]
      %v3445 = vld [vmem:[%s3320 + $0x26c] sm:$0xf]
      %v3446 = vld [vmem:[%s3320 + $0x270] sm:$0xf]
      %v3447 = vld [vmem:[%s3320 + $0x274] sm:$0xf]
      %v3448 = vld [vmem:[%s3320 + $0x278] sm:$0xf]
      %s3449 = scalar_lea.vmem %s1, 16
      %v3450 = vld [vmem:[%s3449] sm:$0xf]
      %v3451 = vld [vmem:[%s3449 + $0x4] sm:$0x3]
      %v3580 = vunpack.c.l.b16 %v3321
      %v3581 = vunpack.c.l.b16 %v3322
      %v3582 = vunpack.c.l.b16 %v3323
      %v3583 = vunpack.c.l.b16 %v3324
      %v3584 = vunpack.c.l.b16 %v3325
      %v3585 = vunpack.c.l.b16 %v3326
      %v3586 = vunpack.c.l.b16 %v3327
      %v3587 = vunpack.c.l.b16 %v3328
      %v3588 = vunpack.c.l.b16 %v3329
      %v3589 = vunpack.c.l.b16 %v3330
      %v3590 = vunpack.c.l.b16 %v3331
      %v3591 = vunpack.c.l.b16 %v3332
      %v3592 = vunpack.c.l.b16 %v3333
      %v3593 = vunpack.c.l.b16 %v3334
      %v3594 = vunpack.c.l.b16 %v3335
      %v3595 = vunpack.c.l.b16 %v3336
      %v3596 = vunpack.c.l.b16 %v3337
      %v3597 = vunpack.c.l.b16 %v3338
      %v3598 = vunpack.c.l.b16 %v3339
      %v3599 = vunpack.c.l.b16 %v3340
      %v3600 = vunpack.c.l.b16 %v3341
      %v3601 = vunpack.c.l.b16 %v3342
      %v3602 = vunpack.c.l.b16 %v3343
      %v3603 = vunpack.c.l.b16 %v3344
      %v3604 = vunpack.c.l.b16 %v3345
      %v3605 = vunpack.c.l.b16 %v3346
      %v3606 = vunpack.c.l.b16 %v3347
      %v3607 = vunpack.c.l.b16 %v3348
      %v3608 = vunpack.c.l.b16 %v3349
      %v3609 = vunpack.c.l.b16 %v3350
      %v3610 = vunpack.c.l.b16 %v3351
      %v3611 = vunpack.c.l.b16 %v3352
      %v3612 = vunpack.c.l.b16 %v3353
      %v3613 = vunpack.c.l.b16 %v3354
      %v3614 = vunpack.c.l.b16 %v3355
      %v3615 = vunpack.c.l.b16 %v3356
      %v3616 = vunpack.c.l.b16 %v3357
      %v3617 = vunpack.c.l.b16 %v3358
      %v3618 = vunpack.c.l.b16 %v3359
      %v3619 = vunpack.c.l.b16 %v3360
      %v3620 = vunpack.c.l.b16 %v3361
      %v3621 = vunpack.c.l.b16 %v3362
      %v3622 = vunpack.c.l.b16 %v3363
      %v3623 = vunpack.c.l.b16 %v3364
      %v3624 = vunpack.c.l.b16 %v3365
      %v3625 = vunpack.c.l.b16 %v3366
      %v3626 = vunpack.c.l.b16 %v3367
      %v3627 = vunpack.c.l.b16 %v3368
      %v3628 = vunpack.c.l.b16 %v3369
      %v3629 = vunpack.c.l.b16 %v3370
      %v3630 = vunpack.c.l.b16 %v3371
      %v3631 = vunpack.c.l.b16 %v3372
      %v3632 = vunpack.c.l.b16 %v3373
      %v3633 = vunpack.c.l.b16 %v3374
      %v3634 = vunpack.c.l.b16 %v3375
      %v3635 = vunpack.c.l.b16 %v3376
      %v3636 = vunpack.c.l.b16 %v3377
      %v3637 = vunpack.c.l.b16 %v3378
      %v3638 = vunpack.c.l.b16 %v3379
      %v3639 = vunpack.c.l.b16 %v3380
      %v3640 = vunpack.c.l.b16 %v3381
      %v3641 = vunpack.c.l.b16 %v3382
      %v3642 = vunpack.c.l.b16 %v3383
      %v3643 = vunpack.c.l.b16 %v3384
      %v3644 = vunpack.c.l.b16 %v3385
      %v3645 = vunpack.c.l.b16 %v3386
      %v3646 = vunpack.c.l.b16 %v3387
      %v3647 = vunpack.c.l.b16 %v3388
      %v3648 = vunpack.c.l.b16 %v3389
      %v3649 = vunpack.c.l.b16 %v3390
      %v3650 = vunpack.c.l.b16 %v3391
      %v3651 = vunpack.c.l.b16 %v3392
      %v3652 = vunpack.c.l.b16 %v3393
      %v3653 = vunpack.c.l.b16 %v3394
      %v3654 = vunpack.c.l.b16 %v3395
      %v3655 = vunpack.c.l.b16 %v3396
      %v3656 = vunpack.c.l.b16 %v3397
      %v3657 = vunpack.c.l.b16 %v3398
      %v3658 = vunpack.c.l.b16 %v3399
      %v3659 = vunpack.c.l.b16 %v3400
      %v3660 = vunpack.c.l.b16 %v3401
      %v3661 = vunpack.c.l.b16 %v3402
      %v3662 = vunpack.c.l.b16 %v3403
      %v3663 = vunpack.c.l.b16 %v3404
      %v3664 = vunpack.c.l.b16 %v3405
      %v3665 = vunpack.c.l.b16 %v3406
      %v3666 = vunpack.c.l.b16 %v3407
      %v3667 = vunpack.c.l.b16 %v3408
      %v3668 = vunpack.c.l.b16 %v3409
      %v3669 = vunpack.c.l.b16 %v3410
      %v3670 = vunpack.c.l.b16 %v3411
      %v3671 = vunpack.c.l.b16 %v3412
      %v3672 = vunpack.c.l.b16 %v3413
      %v3673 = vunpack.c.l.b16 %v3414
      %v3674 = vunpack.c.l.b16 %v3415
      %v3675 = vunpack.c.l.b16 %v3416
      %v3676 = vunpack.c.l.b16 %v3417
      %v3677 = vunpack.c.l.b16 %v3418
      %v3678 = vunpack.c.l.b16 %v3419
      %v3679 = vunpack.c.l.b16 %v3420
      %v3680 = vunpack.c.l.b16 %v3421
      %v3681 = vunpack.c.l.b16 %v3422
      %v3682 = vunpack.c.l.b16 %v3423
      %v3683 = vunpack.c.l.b16 %v3424
      %v3684 = vunpack.c.l.b16 %v3425
      %v3685 = vunpack.c.l.b16 %v3426
      %v3686 = vunpack.c.l.b16 %v3427
      %v3687 = vunpack.c.l.b16 %v3428
      %v3688 = vunpack.c.l.b16 %v3429
      %v3689 = vunpack.c.l.b16 %v3430
      %v3690 = vunpack.c.l.b16 %v3431
      %v3691 = vunpack.c.l.b16 %v3432
      %v3692 = vunpack.c.l.b16 %v3433
      %v3693 = vunpack.c.l.b16 %v3434
      %v3694 = vunpack.c.l.b16 %v3435
      %v3695 = vunpack.c.l.b16 %v3436
      %v3696 = vunpack.c.l.b16 %v3437
      %v3697 = vunpack.c.l.b16 %v3438
      %v3698 = vunpack.c.l.b16 %v3439
      %v3699 = vunpack.c.l.b16 %v3440
      %v3700 = vunpack.c.l.b16 %v3441
      %v3701 = vunpack.c.l.b16 %v3442
      %v3702 = vunpack.c.l.b16 %v3443
      %v3703 = vunpack.c.l.b16 %v3444
      %v3704 = vunpack.c.l.b16 %v3445
      %v3705 = vunpack.c.l.b16 %v3446
      %v3706 = vunpack.c.l.b16 %v3447
      %v3707 = vunpack.c.l.b16 %v3448
      %v3708 = vpack.c.b16 %v3581, %v3580
      %v3709 = vpack.c.b16 %v3583, %v3582
      %v3710 = vpack.c.b16 %v3585, %v3584
      %v3711 = vpack.c.b16 %v3587, %v3586
      %v3712 = vpack.c.b16 %v3589, %v3588
      %v3713 = vpack.c.b16 %v3591, %v3590
      %v3714 = vpack.c.b16 %v3593, %v3592
      %v3715 = vpack.c.b16 %v3595, %v3594
      %v3716 = vpack.c.b16 %v3597, %v3596
      %v3717 = vpack.c.b16 %v3599, %v3598
      %v3718 = vpack.c.b16 %v3601, %v3600
      %v3719 = vpack.c.b16 %v3603, %v3602
      %v3720 = vpack.c.b16 %v3605, %v3604
      %v3721 = vpack.c.b16 %v3607, %v3606
      %v3722 = vpack.c.b16 %v3609, %v3608
      %v3723 = vpack.c.b16 %v3611, %v3610
      %v3724 = vpack.c.b16 %v3613, %v3612
      %v3725 = vpack.c.b16 %v3615, %v3614
      %v3726 = vpack.c.b16 %v3617, %v3616
      %v3727 = vpack.c.b16 %v3619, %v3618
      %v3728 = vpack.c.b16 %v3621, %v3620
      %v3729 = vpack.c.b16 %v3623, %v3622
      %v3730 = vpack.c.b16 %v3625, %v3624
      %v3731 = vpack.c.b16 %v3627, %v3626
      %v3732 = vpack.c.b16 %v3629, %v3628
      %v3733 = vpack.c.b16 %v3631, %v3630
      %v3734 = vpack.c.b16 %v3633, %v3632
      %v3735 = vpack.c.b16 %v3635, %v3634
      %v3736 = vpack.c.b16 %v3637, %v3636
      %v3737 = vpack.c.b16 %v3639, %v3638
      %v3738 = vpack.c.b16 %v3641, %v3640
      %v3739 = vpack.c.b16 %v3643, %v3642
      %v3740 = vpack.c.b16 %v3645, %v3644
      %v3741 = vpack.c.b16 %v3647, %v3646
      %v3742 = vpack.c.b16 %v3649, %v3648
      %v3743 = vpack.c.b16 %v3651, %v3650
      %v3744 = vpack.c.b16 %v3653, %v3652
      %v3745 = vpack.c.b16 %v3655, %v3654
      %v3746 = vpack.c.b16 %v3657, %v3656
      %v3747 = vpack.c.b16 %v3659, %v3658
      %v3748 = vpack.c.b16 %v3661, %v3660
      %v3749 = vpack.c.b16 %v3663, %v3662
      %v3750 = vpack.c.b16 %v3665, %v3664
      %v3751 = vpack.c.b16 %v3667, %v3666
      %v3752 = vpack.c.b16 %v3669, %v3668
      %v3753 = vpack.c.b16 %v3671, %v3670
      %v3754 = vpack.c.b16 %v3673, %v3672
      %v3755 = vpack.c.b16 %v3675, %v3674
      %v3756 = vpack.c.b16 %v3677, %v3676
      %v3757 = vpack.c.b16 %v3679, %v3678
      %v3758 = vpack.c.b16 %v3681, %v3680
      %v3759 = vpack.c.b16 %v3683, %v3682
      %v3760 = vpack.c.b16 %v3685, %v3684
      %v3761 = vpack.c.b16 %v3687, %v3686
      %v3762 = vpack.c.b16 %v3689, %v3688
      %v3763 = vpack.c.b16 %v3691, %v3690
      %v3764 = vpack.c.b16 %v3693, %v3692
      %v3765 = vpack.c.b16 %v3695, %v3694
      %v3766 = vpack.c.b16 %v3697, %v3696
      %v3767 = vpack.c.b16 %v3699, %v3698
      %v3768 = vpack.c.b16 %v3701, %v3700
      %v3769 = vpack.c.b16 %v3703, %v3702
      %v3770 = vpack.c.b16 %v3705, %v3704
      %v3771 = vpack.c.b16 %v3707, %v3706
      %v3774 = vunpack.c.l.b16 %v3450
      %v3775 = vunpack.c.l.b16 %v3451
      %v3776 = vpack.c.b16 %v3775, %v3774
      %v3778 = vsel %vm1945, %v3708, 0
      %v3781 = vsel %vm1945, %v3709, 0
      %v3784 = vsel %vm1945, %v3710, 0
      %v3787 = vsel %vm1945, %v3711, 0
      %v3790 = vsel %vm1945, %v3712, 0
      %v3793 = vsel %vm1945, %v3713, 0
      %v3796 = vsel %vm1945, %v3714, 0
      %v3799 = vsel %vm1945, %v3715, 0
      %v3802 = vsel %vm1945, %v3716, 0
      %v3805 = vsel %vm1945, %v3717, 0
      %v3808 = vsel %vm1945, %v3718, 0
      %v3811 = vsel %vm1945, %v3719, 0
      %v3814 = vsel %vm1945, %v3720, 0
      %v3817 = vsel %vm1945, %v3721, 0
      %v3820 = vsel %vm1945, %v3722, 0
      %v3823 = vsel %vm1945, %v3723, 0
      %v3826 = vsel %vm1945, %v3724, 0
      %v3829 = vsel %vm1945, %v3725, 0
      %v3832 = vsel %vm1945, %v3726, 0
      %v3835 = vsel %vm1945, %v3727, 0
      %v3838 = vsel %vm1945, %v3728, 0
      %v3841 = vsel %vm1945, %v3729, 0
      %v3844 = vsel %vm1945, %v3730, 0
      %v3847 = vsel %vm1945, %v3731, 0
      %v3850 = vsel %vm1945, %v3732, 0
      %v3853 = vsel %vm1945, %v3733, 0
      %v3856 = vsel %vm1945, %v3734, 0
      %v3859 = vsel %vm1945, %v3735, 0
      %v3862 = vsel %vm1945, %v3736, 0
      %v3865 = vsel %vm1945, %v3737, 0
      %v3868 = vsel %vm1945, %v3738, 0
      %v3871 = vsel %vm1945, %v3739, 0
      %v3874 = vsel %vm1945, %v3740, 0
      %v3877 = vsel %vm1945, %v3741, 0
      %v3880 = vsel %vm1945, %v3742, 0
      %v3883 = vsel %vm1945, %v3743, 0
      %v3886 = vsel %vm1945, %v3744, 0
      %v3889 = vsel %vm1945, %v3745, 0
      %v3892 = vsel %vm1945, %v3746, 0
      %v3895 = vsel %vm1945, %v3747, 0
      %v3898 = vsel %vm1945, %v3748, 0
      %v3901 = vsel %vm1945, %v3749, 0
      %v3904 = vsel %vm1945, %v3750, 0
      %v3907 = vsel %vm1945, %v3751, 0
      %v3910 = vsel %vm1945, %v3752, 0
      %v3913 = vsel %vm1945, %v3753, 0
      %v3916 = vsel %vm1945, %v3754, 0
      %v3919 = vsel %vm1945, %v3755, 0
      %v3922 = vsel %vm1945, %v3756, 0
      %v3925 = vsel %vm1945, %v3757, 0
      %v3928 = vsel %vm1945, %v3758, 0
      %v3931 = vsel %vm1945, %v3759, 0
      %v3934 = vsel %vm1945, %v3760, 0
      %v3937 = vsel %vm1945, %v3761, 0
      %v3940 = vsel %vm1945, %v3762, 0
      %v3943 = vsel %vm1945, %v3763, 0
      %v3946 = vsel %vm1945, %v3764, 0
      %v3949 = vsel %vm1945, %v3765, 0
      %v3952 = vsel %vm1945, %v3766, 0
      %v3955 = vsel %vm1945, %v3767, 0
      %v3958 = vsel %vm1945, %v3768, 0
      %v3961 = vsel %vm1945, %v3769, 0
      %v3964 = vsel %vm1945, %v3770, 0
      %v3967 = vsel %vm1945, %v3771, 0
      %v3970 = vsel %vm2138, %v3776, 0
      %3972 = vmatpush.bf16.msra.mxu0 0
      %3973 = vmatpush.bf16.msra.mxu0 0
      %3974 = vmatpush.bf16.msra.mxu0 0
      %3975 = vmatpush.bf16.msra.mxu0 0
      %3976 = vmatpush.bf16.msra.mxu0 0
      %3977 = vmatpush.bf16.msra.mxu0 0
      %3978 = vmatpush.bf16.msra.mxu0 0
      %3979 = vmatpush.bf16.msra.mxu0 %v3970
      %3980 = vmatmul.bf16.gmra.mxu0 %v3778
      %v3981 = vpop.f32.mrf.mxu0
      %v3982 = vadd.f32 0.0, %v3981
      %v3983 = vpop.f32.mrf.mxu0
      %v3984 = vadd.f32 0.0, %v3983
      %3985 = vmatmul.bf16.gmra.mxu0 %v3781
      %v3986 = vpop.f32.mrf.mxu0
      %v3987 = vadd.f32 0.0, %v3986
      %v3988 = vpop.f32.mrf.mxu0
      %v3989 = vadd.f32 0.0, %v3988
      %3990 = vmatmul.bf16.gmra.mxu0 %v3784
      %v3991 = vpop.f32.mrf.mxu0
      %v3992 = vadd.f32 0.0, %v3991
      %v3993 = vpop.f32.mrf.mxu0
      %v3994 = vadd.f32 0.0, %v3993
      %3995 = vmatmul.bf16.gmra.mxu0 %v3787
      %v3996 = vpop.f32.mrf.mxu0
      %v3997 = vadd.f32 0.0, %v3996
      %v3998 = vpop.f32.mrf.mxu0
      %v3999 = vadd.f32 0.0, %v3998
      %4000 = vmatmul.bf16.gmra.mxu0 %v3790
      %v4001 = vpop.f32.mrf.mxu0
      %v4002 = vadd.f32 0.0, %v4001
      %v4003 = vpop.f32.mrf.mxu0
      %v4004 = vadd.f32 0.0, %v4003
      %4005 = vmatmul.bf16.gmra.mxu0 %v3793
      %v4006 = vpop.f32.mrf.mxu0
      %v4007 = vadd.f32 0.0, %v4006
      %v4008 = vpop.f32.mrf.mxu0
      %v4009 = vadd.f32 0.0, %v4008
      %4010 = vmatmul.bf16.gmra.mxu0 %v3796
      %v4011 = vpop.f32.mrf.mxu0
      %v4012 = vadd.f32 0.0, %v4011
      %v4013 = vpop.f32.mrf.mxu0
      %v4014 = vadd.f32 0.0, %v4013
      %4015 = vmatmul.bf16.gmra.mxu0 %v3799
      %v4016 = vpop.f32.mrf.mxu0
      %v4017 = vadd.f32 0.0, %v4016
      %v4018 = vpop.f32.mrf.mxu0
      %v4019 = vadd.f32 0.0, %v4018
      %4020 = vmatmul.bf16.gmra.mxu0 %v3802
      %v4021 = vpop.f32.mrf.mxu0
      %v4022 = vadd.f32 0.0, %v4021
      %v4023 = vpop.f32.mrf.mxu0
      %v4024 = vadd.f32 0.0, %v4023
      %4025 = vmatmul.bf16.gmra.mxu0 %v3805
      %v4026 = vpop.f32.mrf.mxu0
      %v4027 = vadd.f32 0.0, %v4026
      %v4028 = vpop.f32.mrf.mxu0
      %v4029 = vadd.f32 0.0, %v4028
      %4030 = vmatmul.bf16.gmra.mxu0 %v3808
      %v4031 = vpop.f32.mrf.mxu0
      %v4032 = vadd.f32 0.0, %v4031
      %v4033 = vpop.f32.mrf.mxu0
      %v4034 = vadd.f32 0.0, %v4033
      %4035 = vmatmul.bf16.gmra.mxu0 %v3811
      %v4036 = vpop.f32.mrf.mxu0
      %v4037 = vadd.f32 0.0, %v4036
      %v4038 = vpop.f32.mrf.mxu0
      %v4039 = vadd.f32 0.0, %v4038
      %4040 = vmatmul.bf16.gmra.mxu0 %v3814
      %v4041 = vpop.f32.mrf.mxu0
      %v4042 = vadd.f32 0.0, %v4041
      %v4043 = vpop.f32.mrf.mxu0
      %v4044 = vadd.f32 0.0, %v4043
      %4045 = vmatmul.bf16.gmra.mxu0 %v3817
      %v4046 = vpop.f32.mrf.mxu0
      %v4047 = vadd.f32 0.0, %v4046
      %v4048 = vpop.f32.mrf.mxu0
      %v4049 = vadd.f32 0.0, %v4048
      %4050 = vmatmul.bf16.gmra.mxu0 %v3820
      %v4051 = vpop.f32.mrf.mxu0
      %v4052 = vadd.f32 0.0, %v4051
      %v4053 = vpop.f32.mrf.mxu0
      %v4054 = vadd.f32 0.0, %v4053
      %4055 = vmatmul.bf16.gmra.mxu0 %v3823
      %v4056 = vpop.f32.mrf.mxu0
      %v4057 = vadd.f32 0.0, %v4056
      %v4058 = vpop.f32.mrf.mxu0
      %v4059 = vadd.f32 0.0, %v4058
      %4060 = vmatmul.bf16.gmra.mxu0 %v3826
      %v4061 = vpop.f32.mrf.mxu0
      %v4062 = vadd.f32 0.0, %v4061
      %v4063 = vpop.f32.mrf.mxu0
      %v4064 = vadd.f32 0.0, %v4063
      %4065 = vmatmul.bf16.gmra.mxu0 %v3829
      %v4066 = vpop.f32.mrf.mxu0
      %v4067 = vadd.f32 0.0, %v4066
      %v4068 = vpop.f32.mrf.mxu0
      %v4069 = vadd.f32 0.0, %v4068
      %4070 = vmatmul.bf16.gmra.mxu0 %v3832
      %v4071 = vpop.f32.mrf.mxu0
      %v4072 = vadd.f32 0.0, %v4071
      %v4073 = vpop.f32.mrf.mxu0
      %v4074 = vadd.f32 0.0, %v4073
      %4075 = vmatmul.bf16.gmra.mxu0 %v3835
      %v4076 = vpop.f32.mrf.mxu0
      %v4077 = vadd.f32 0.0, %v4076
      %v4078 = vpop.f32.mrf.mxu0
      %v4079 = vadd.f32 0.0, %v4078
      %4080 = vmatmul.bf16.gmra.mxu0 %v3838
      %v4081 = vpop.f32.mrf.mxu0
      %v4082 = vadd.f32 0.0, %v4081
      %v4083 = vpop.f32.mrf.mxu0
      %v4084 = vadd.f32 0.0, %v4083
      %4085 = vmatmul.bf16.gmra.mxu0 %v3841
      %v4086 = vpop.f32.mrf.mxu0
      %v4087 = vadd.f32 0.0, %v4086
      %v4088 = vpop.f32.mrf.mxu0
      %v4089 = vadd.f32 0.0, %v4088
      %4090 = vmatmul.bf16.gmra.mxu0 %v3844
      %v4091 = vpop.f32.mrf.mxu0
      %v4092 = vadd.f32 0.0, %v4091
      %v4093 = vpop.f32.mrf.mxu0
      %v4094 = vadd.f32 0.0, %v4093
      %4095 = vmatmul.bf16.gmra.mxu0 %v3847
      %v4096 = vpop.f32.mrf.mxu0
      %v4097 = vadd.f32 0.0, %v4096
      %v4098 = vpop.f32.mrf.mxu0
      %v4099 = vadd.f32 0.0, %v4098
      %4100 = vmatmul.bf16.gmra.mxu0 %v3850
      %v4101 = vpop.f32.mrf.mxu0
      %v4102 = vadd.f32 0.0, %v4101
      %v4103 = vpop.f32.mrf.mxu0
      %v4104 = vadd.f32 0.0, %v4103
      %4105 = vmatmul.bf16.gmra.mxu0 %v3853
      %v4106 = vpop.f32.mrf.mxu0
      %v4107 = vadd.f32 0.0, %v4106
      %v4108 = vpop.f32.mrf.mxu0
      %v4109 = vadd.f32 0.0, %v4108
      %4110 = vmatmul.bf16.gmra.mxu0 %v3856
      %v4111 = vpop.f32.mrf.mxu0
      %v4112 = vadd.f32 0.0, %v4111
      %v4113 = vpop.f32.mrf.mxu0
      %v4114 = vadd.f32 0.0, %v4113
      %4115 = vmatmul.bf16.gmra.mxu0 %v3859
      %v4116 = vpop.f32.mrf.mxu0
      %v4117 = vadd.f32 0.0, %v4116
      %v4118 = vpop.f32.mrf.mxu0
      %v4119 = vadd.f32 0.0, %v4118
      %4120 = vmatmul.bf16.gmra.mxu0 %v3862
      %v4121 = vpop.f32.mrf.mxu0
      %v4122 = vadd.f32 0.0, %v4121
      %v4123 = vpop.f32.mrf.mxu0
      %v4124 = vadd.f32 0.0, %v4123
      %4125 = vmatmul.bf16.gmra.mxu0 %v3865
      %v4126 = vpop.f32.mrf.mxu0
      %v4127 = vadd.f32 0.0, %v4126
      %v4128 = vpop.f32.mrf.mxu0
      %v4129 = vadd.f32 0.0, %v4128
      %4130 = vmatmul.bf16.gmra.mxu0 %v3868
      %v4131 = vpop.f32.mrf.mxu0
      %v4132 = vadd.f32 0.0, %v4131
      %v4133 = vpop.f32.mrf.mxu0
      %v4134 = vadd.f32 0.0, %v4133
      %4135 = vmatmul.bf16.gmra.mxu0 %v3871
      %v4136 = vpop.f32.mrf.mxu0
      %v4137 = vadd.f32 0.0, %v4136
      %v4138 = vpop.f32.mrf.mxu0
      %v4139 = vadd.f32 0.0, %v4138
      %4140 = vmatmul.bf16.gmra.mxu0 %v3874
      %v4141 = vpop.f32.mrf.mxu0
      %v4142 = vadd.f32 0.0, %v4141
      %v4143 = vpop.f32.mrf.mxu0
      %v4144 = vadd.f32 0.0, %v4143
      %4145 = vmatmul.bf16.gmra.mxu0 %v3877
      %v4146 = vpop.f32.mrf.mxu0
      %v4147 = vadd.f32 0.0, %v4146
      %v4148 = vpop.f32.mrf.mxu0
      %v4149 = vadd.f32 0.0, %v4148
      %4150 = vmatmul.bf16.gmra.mxu0 %v3880
      %v4151 = vpop.f32.mrf.mxu0
      %v4152 = vadd.f32 0.0, %v4151
      %v4153 = vpop.f32.mrf.mxu0
      %v4154 = vadd.f32 0.0, %v4153
      %4155 = vmatmul.bf16.gmra.mxu0 %v3883
      %v4156 = vpop.f32.mrf.mxu0
      %v4157 = vadd.f32 0.0, %v4156
      %v4158 = vpop.f32.mrf.mxu0
      %v4159 = vadd.f32 0.0, %v4158
      %4160 = vmatmul.bf16.gmra.mxu0 %v3886
      %v4161 = vpop.f32.mrf.mxu0
      %v4162 = vadd.f32 0.0, %v4161
      %v4163 = vpop.f32.mrf.mxu0
      %v4164 = vadd.f32 0.0, %v4163
      %4165 = vmatmul.bf16.gmra.mxu0 %v3889
      %v4166 = vpop.f32.mrf.mxu0
      %v4167 = vadd.f32 0.0, %v4166
      %v4168 = vpop.f32.mrf.mxu0
      %v4169 = vadd.f32 0.0, %v4168
      %4170 = vmatmul.bf16.gmra.mxu0 %v3892
      %v4171 = vpop.f32.mrf.mxu0
      %v4172 = vadd.f32 0.0, %v4171
      %v4173 = vpop.f32.mrf.mxu0
      %v4174 = vadd.f32 0.0, %v4173
      %4175 = vmatmul.bf16.gmra.mxu0 %v3895
      %v4176 = vpop.f32.mrf.mxu0
      %v4177 = vadd.f32 0.0, %v4176
      %v4178 = vpop.f32.mrf.mxu0
      %v4179 = vadd.f32 0.0, %v4178
      %4180 = vmatmul.bf16.gmra.mxu0 %v3898
      %v4181 = vpop.f32.mrf.mxu0
      %v4182 = vadd.f32 0.0, %v4181
      %v4183 = vpop.f32.mrf.mxu0
      %v4184 = vadd.f32 0.0, %v4183
      %4185 = vmatmul.bf16.gmra.mxu0 %v3901
      %v4186 = vpop.f32.mrf.mxu0
      %v4187 = vadd.f32 0.0, %v4186
      %v4188 = vpop.f32.mrf.mxu0
      %v4189 = vadd.f32 0.0, %v4188
      %4190 = vmatmul.bf16.gmra.mxu0 %v3904
      %v4191 = vpop.f32.mrf.mxu0
      %v4192 = vadd.f32 0.0, %v4191
      %v4193 = vpop.f32.mrf.mxu0
      %v4194 = vadd.f32 0.0, %v4193
      %4195 = vmatmul.bf16.gmra.mxu0 %v3907
      %v4196 = vpop.f32.mrf.mxu0
      %v4197 = vadd.f32 0.0, %v4196
      %v4198 = vpop.f32.mrf.mxu0
      %v4199 = vadd.f32 0.0, %v4198
      %4200 = vmatmul.bf16.gmra.mxu0 %v3910
      %v4201 = vpop.f32.mrf.mxu0
      %v4202 = vadd.f32 0.0, %v4201
      %v4203 = vpop.f32.mrf.mxu0
      %v4204 = vadd.f32 0.0, %v4203
      %4205 = vmatmul.bf16.gmra.mxu0 %v3913
      %v4206 = vpop.f32.mrf.mxu0
      %v4207 = vadd.f32 0.0, %v4206
      %v4208 = vpop.f32.mrf.mxu0
      %v4209 = vadd.f32 0.0, %v4208
      %4210 = vmatmul.bf16.gmra.mxu0 %v3916
      %v4211 = vpop.f32.mrf.mxu0
      %v4212 = vadd.f32 0.0, %v4211
      %v4213 = vpop.f32.mrf.mxu0
      %v4214 = vadd.f32 0.0, %v4213
      %4215 = vmatmul.bf16.gmra.mxu0 %v3919
      %v4216 = vpop.f32.mrf.mxu0
      %v4217 = vadd.f32 0.0, %v4216
      %v4218 = vpop.f32.mrf.mxu0
      %v4219 = vadd.f32 0.0, %v4218
      %4220 = vmatmul.bf16.gmra.mxu0 %v3922
      %v4221 = vpop.f32.mrf.mxu0
      %v4222 = vadd.f32 0.0, %v4221
      %v4223 = vpop.f32.mrf.mxu0
      %v4224 = vadd.f32 0.0, %v4223
      %4225 = vmatmul.bf16.gmra.mxu0 %v3925
      %v4226 = vpop.f32.mrf.mxu0
      %v4227 = vadd.f32 0.0, %v4226
      %v4228 = vpop.f32.mrf.mxu0
      %v4229 = vadd.f32 0.0, %v4228
      %4230 = vmatmul.bf16.gmra.mxu0 %v3928
      %v4231 = vpop.f32.mrf.mxu0
      %v4232 = vadd.f32 0.0, %v4231
      %v4233 = vpop.f32.mrf.mxu0
      %v4234 = vadd.f32 0.0, %v4233
      %4235 = vmatmul.bf16.gmra.mxu0 %v3931
      %v4236 = vpop.f32.mrf.mxu0
      %v4237 = vadd.f32 0.0, %v4236
      %v4238 = vpop.f32.mrf.mxu0
      %v4239 = vadd.f32 0.0, %v4238
      %4240 = vmatmul.bf16.gmra.mxu0 %v3934
      %v4241 = vpop.f32.mrf.mxu0
      %v4242 = vadd.f32 0.0, %v4241
      %v4243 = vpop.f32.mrf.mxu0
      %v4244 = vadd.f32 0.0, %v4243
      %4245 = vmatmul.bf16.gmra.mxu0 %v3937
      %v4246 = vpop.f32.mrf.mxu0
      %v4247 = vadd.f32 0.0, %v4246
      %v4248 = vpop.f32.mrf.mxu0
      %v4249 = vadd.f32 0.0, %v4248
      %4250 = vmatmul.bf16.gmra.mxu0 %v3940
      %v4251 = vpop.f32.mrf.mxu0
      %v4252 = vadd.f32 0.0, %v4251
      %v4253 = vpop.f32.mrf.mxu0
      %v4254 = vadd.f32 0.0, %v4253
      %4255 = vmatmul.bf16.gmra.mxu0 %v3943
      %v4256 = vpop.f32.mrf.mxu0
      %v4257 = vadd.f32 0.0, %v4256
      %v4258 = vpop.f32.mrf.mxu0
      %v4259 = vadd.f32 0.0, %v4258
      %4260 = vmatmul.bf16.gmra.mxu0 %v3946
      %v4261 = vpop.f32.mrf.mxu0
      %v4262 = vadd.f32 0.0, %v4261
      %v4263 = vpop.f32.mrf.mxu0
      %v4264 = vadd.f32 0.0, %v4263
      %4265 = vmatmul.bf16.gmra.mxu0 %v3949
      %v4266 = vpop.f32.mrf.mxu0
      %v4267 = vadd.f32 0.0, %v4266
      %v4268 = vpop.f32.mrf.mxu0
      %v4269 = vadd.f32 0.0, %v4268
      %4270 = vmatmul.bf16.gmra.mxu0 %v3952
      %v4271 = vpop.f32.mrf.mxu0
      %v4272 = vadd.f32 0.0, %v4271
      %v4273 = vpop.f32.mrf.mxu0
      %v4274 = vadd.f32 0.0, %v4273
      %4275 = vmatmul.bf16.gmra.mxu0 %v3955
      %v4276 = vpop.f32.mrf.mxu0
      %v4277 = vadd.f32 0.0, %v4276
      %v4278 = vpop.f32.mrf.mxu0
      %v4279 = vadd.f32 0.0, %v4278
      %4280 = vmatmul.bf16.gmra.mxu0 %v3958
      %v4281 = vpop.f32.mrf.mxu0
      %v4282 = vadd.f32 0.0, %v4281
      %v4283 = vpop.f32.mrf.mxu0
      %v4284 = vadd.f32 0.0, %v4283
      %4285 = vmatmul.bf16.gmra.mxu0 %v3961
      %v4286 = vpop.f32.mrf.mxu0
      %v4287 = vadd.f32 0.0, %v4286
      %v4288 = vpop.f32.mrf.mxu0
      %v4289 = vadd.f32 0.0, %v4288
      %4290 = vmatmul.bf16.gmra.mxu0 %v3964
      %v4291 = vpop.f32.mrf.mxu0
      %v4292 = vadd.f32 0.0, %v4291
      %v4293 = vpop.f32.mrf.mxu0
      %v4294 = vadd.f32 0.0, %v4293
      %4295 = vmatmul.bf16.gmra.mxu0 %v3967
      %v4296 = vpop.f32.mrf.mxu0
      %v4297 = vadd.f32 0.0, %v4296
      %v4298 = vpop.f32.mrf.mxu0
      %v4299 = vadd.f32 0.0, %v4298
      %4300 = vdwg.mxu0
      %v4301 = vadd.f32 %v3001, %v3982
      %v4302 = vadd.f32 %v3003, %v3984
      %v4303 = vadd.f32 %v3006, %v3987
      %v4304 = vadd.f32 %v3008, %v3989
      %v4305 = vadd.f32 %v3011, %v3992
      %v4306 = vadd.f32 %v3013, %v3994
      %v4307 = vadd.f32 %v3016, %v3997
      %v4308 = vadd.f32 %v3018, %v3999
      %v4309 = vadd.f32 %v3021, %v4002
      %v4310 = vadd.f32 %v3023, %v4004
      %v4311 = vadd.f32 %v3026, %v4007
      %v4312 = vadd.f32 %v3028, %v4009
      %v4313 = vadd.f32 %v3031, %v4012
      %v4314 = vadd.f32 %v3033, %v4014
      %v4315 = vadd.f32 %v3036, %v4017
      %v4316 = vadd.f32 %v3038, %v4019
      %v4317 = vadd.f32 %v3041, %v4022
      %v4318 = vadd.f32 %v3043, %v4024
      %v4319 = vadd.f32 %v3046, %v4027
      %v4320 = vadd.f32 %v3048, %v4029
      %v4321 = vadd.f32 %v3051, %v4032
      %v4322 = vadd.f32 %v3053, %v4034
      %v4323 = vadd.f32 %v3056, %v4037
      %v4324 = vadd.f32 %v3058, %v4039
      %v4325 = vadd.f32 %v3061, %v4042
      %v4326 = vadd.f32 %v3063, %v4044
      %v4327 = vadd.f32 %v3066, %v4047
      %v4328 = vadd.f32 %v3068, %v4049
      %v4329 = vadd.f32 %v3071, %v4052
      %v4330 = vadd.f32 %v3073, %v4054
      %v4331 = vadd.f32 %v3076, %v4057
      %v4332 = vadd.f32 %v3078, %v4059
      %v4333 = vadd.f32 %v3081, %v4062
      %v4334 = vadd.f32 %v3083, %v4064
      %v4335 = vadd.f32 %v3086, %v4067
      %v4336 = vadd.f32 %v3088, %v4069
      %v4337 = vadd.f32 %v3091, %v4072
      %v4338 = vadd.f32 %v3093, %v4074
      %v4339 = vadd.f32 %v3096, %v4077
      %v4340 = vadd.f32 %v3098, %v4079
      %v4341 = vadd.f32 %v3101, %v4082
      %v4342 = vadd.f32 %v3103, %v4084
      %v4343 = vadd.f32 %v3106, %v4087
      %v4344 = vadd.f32 %v3108, %v4089
      %v4345 = vadd.f32 %v3111, %v4092
      %v4346 = vadd.f32 %v3113, %v4094
      %v4347 = vadd.f32 %v3116, %v4097
      %v4348 = vadd.f32 %v3118, %v4099
      %v4349 = vadd.f32 %v3121, %v4102
      %v4350 = vadd.f32 %v3123, %v4104
      %v4351 = vadd.f32 %v3126, %v4107
      %v4352 = vadd.f32 %v3128, %v4109
      %v4353 = vadd.f32 %v3131, %v4112
      %v4354 = vadd.f32 %v3133, %v4114
      %v4355 = vadd.f32 %v3136, %v4117
      %v4356 = vadd.f32 %v3138, %v4119
      %v4357 = vadd.f32 %v3141, %v4122
      %v4358 = vadd.f32 %v3143, %v4124
      %v4359 = vadd.f32 %v3146, %v4127
      %v4360 = vadd.f32 %v3148, %v4129
      %v4361 = vadd.f32 %v3151, %v4132
      %v4362 = vadd.f32 %v3153, %v4134
      %v4363 = vadd.f32 %v3156, %v4137
      %v4364 = vadd.f32 %v3158, %v4139
      %v4365 = vadd.f32 %v3161, %v4142
      %v4366 = vadd.f32 %v3163, %v4144
      %v4367 = vadd.f32 %v3166, %v4147
      %v4368 = vadd.f32 %v3168, %v4149
      %v4369 = vadd.f32 %v3171, %v4152
      %v4370 = vadd.f32 %v3173, %v4154
      %v4371 = vadd.f32 %v3176, %v4157
      %v4372 = vadd.f32 %v3178, %v4159
      %v4373 = vadd.f32 %v3181, %v4162
      %v4374 = vadd.f32 %v3183, %v4164
      %v4375 = vadd.f32 %v3186, %v4167
      %v4376 = vadd.f32 %v3188, %v4169
      %v4377 = vadd.f32 %v3191, %v4172
      %v4378 = vadd.f32 %v3193, %v4174
      %v4379 = vadd.f32 %v3196, %v4177
      %v4380 = vadd.f32 %v3198, %v4179
      %v4381 = vadd.f32 %v3201, %v4182
      %v4382 = vadd.f32 %v3203, %v4184
      %v4383 = vadd.f32 %v3206, %v4187
      %v4384 = vadd.f32 %v3208, %v4189
      %v4385 = vadd.f32 %v3211, %v4192
      %v4386 = vadd.f32 %v3213, %v4194
      %v4387 = vadd.f32 %v3216, %v4197
      %v4388 = vadd.f32 %v3218, %v4199
      %v4389 = vadd.f32 %v3221, %v4202
      %v4390 = vadd.f32 %v3223, %v4204
      %v4391 = vadd.f32 %v3226, %v4207
      %v4392 = vadd.f32 %v3228, %v4209
      %v4393 = vadd.f32 %v3231, %v4212
      %v4394 = vadd.f32 %v3233, %v4214
      %v4395 = vadd.f32 %v3236, %v4217
      %v4396 = vadd.f32 %v3238, %v4219
      %v4397 = vadd.f32 %v3241, %v4222
      %v4398 = vadd.f32 %v3243, %v4224
      %v4399 = vadd.f32 %v3246, %v4227
      %v4400 = vadd.f32 %v3248, %v4229
      %v4401 = vadd.f32 %v3251, %v4232
      %v4402 = vadd.f32 %v3253, %v4234
      %v4403 = vadd.f32 %v3256, %v4237
      %v4404 = vadd.f32 %v3258, %v4239
      %v4405 = vadd.f32 %v3261, %v4242
      %v4406 = vadd.f32 %v3263, %v4244
      %v4407 = vadd.f32 %v3266, %v4247
      %v4408 = vadd.f32 %v3268, %v4249
      %v4409 = vadd.f32 %v3271, %v4252
      %v4410 = vadd.f32 %v3273, %v4254
      %v4411 = vadd.f32 %v3276, %v4257
      %v4412 = vadd.f32 %v3278, %v4259
      %v4413 = vadd.f32 %v3281, %v4262
      %v4414 = vadd.f32 %v3283, %v4264
      %v4415 = vadd.f32 %v3286, %v4267
      %v4416 = vadd.f32 %v3288, %v4269
      %v4417 = vadd.f32 %v3291, %v4272
      %v4418 = vadd.f32 %v3293, %v4274
      %v4419 = vadd.f32 %v3296, %v4277
      %v4420 = vadd.f32 %v3298, %v4279
      %v4421 = vadd.f32 %v3301, %v4282
      %v4422 = vadd.f32 %v3303, %v4284
      %v4423 = vadd.f32 %v3306, %v4287
      %v4424 = vadd.f32 %v3308, %v4289
      %v4425 = vadd.f32 %v3311, %v4292
      %v4426 = vadd.f32 %v3313, %v4294
      %v4427 = vadd.f32 %v3316, %v4297
      %v4428 = vadd.f32 %v3318, %v4299
      %v4429 = vld [vmem:[%s3320] sm:$0xf]
      %v4430 = vld [vmem:[%s3320 + $0x4] sm:$0xf]
      %v4431 = vld [vmem:[%s3320 + $0x8] sm:$0xf]
      %v4432 = vld [vmem:[%s3320 + $0xc] sm:$0xf]
      %v4433 = vld [vmem:[%s3320 + $0x10] sm:$0x1]
      %v4434 = vld [vmem:[%s3320 + $0x14] sm:$0xf]
      %v4435 = vld [vmem:[%s3320 + $0x18] sm:$0xf]
      %v4436 = vld [vmem:[%s3320 + $0x1c] sm:$0xf]
      %v4437 = vld [vmem:[%s3320 + $0x20] sm:$0xf]
      %v4438 = vld [vmem:[%s3320 + $0x24] sm:$0x1]
      %v4439 = vld [vmem:[%s3320 + $0x28] sm:$0xf]
      %v4440 = vld [vmem:[%s3320 + $0x2c] sm:$0xf]
      %v4441 = vld [vmem:[%s3320 + $0x30] sm:$0xf]
      %v4442 = vld [vmem:[%s3320 + $0x34] sm:$0xf]
      %v4443 = vld [vmem:[%s3320 + $0x38] sm:$0x1]
      %v4444 = vld [vmem:[%s3320 + $0x3c] sm:$0xf]
      %v4445 = vld [vmem:[%s3320 + $0x40] sm:$0xf]
      %v4446 = vld [vmem:[%s3320 + $0x44] sm:$0xf]
      %v4447 = vld [vmem:[%s3320 + $0x48] sm:$0xf]
      %v4448 = vld [vmem:[%s3320 + $0x4c] sm:$0x1]
      %v4449 = vld [vmem:[%s3320 + $0x50] sm:$0xf]
      %v4450 = vld [vmem:[%s3320 + $0x54] sm:$0xf]
      %v4451 = vld [vmem:[%s3320 + $0x58] sm:$0xf]
      %v4452 = vld [vmem:[%s3320 + $0x5c] sm:$0xf]
      %v4453 = vld [vmem:[%s3320 + $0x60] sm:$0x1]
      %v4454 = vld [vmem:[%s3320 + $0x64] sm:$0xf]
      %v4455 = vld [vmem:[%s3320 + $0x68] sm:$0xf]
      %v4456 = vld [vmem:[%s3320 + $0x6c] sm:$0xf]
      %v4457 = vld [vmem:[%s3320 + $0x70] sm:$0xf]
      %v4458 = vld [vmem:[%s3320 + $0x74] sm:$0x1]
      %v4459 = vld [vmem:[%s3320 + $0x78] sm:$0xf]
      %v4460 = vld [vmem:[%s3320 + $0x7c] sm:$0xf]
      %v4461 = vld [vmem:[%s3320 + $0x80] sm:$0xf]
      %v4462 = vld [vmem:[%s3320 + $0x84] sm:$0xf]
      %v4463 = vld [vmem:[%s3320 + $0x88] sm:$0x1]
      %v4464 = vld [vmem:[%s3320 + $0x8c] sm:$0xf]
      %v4465 = vld [vmem:[%s3320 + $0x90] sm:$0xf]
      %v4466 = vld [vmem:[%s3320 + $0x94] sm:$0xf]
      %v4467 = vld [vmem:[%s3320 + $0x98] sm:$0xf]
      %v4468 = vld [vmem:[%s3320 + $0x9c] sm:$0x1]
      %v4469 = vld [vmem:[%s3320 + $0xa0] sm:$0xf]
      %v4470 = vld [vmem:[%s3320 + $0xa4] sm:$0xf]
      %v4471 = vld [vmem:[%s3320 + $0xa8] sm:$0xf]
      %v4472 = vld [vmem:[%s3320 + $0xac] sm:$0xf]
      %v4473 = vld [vmem:[%s3320 + $0xb0] sm:$0x1]
      %v4474 = vld [vmem:[%s3320 + $0xb4] sm:$0xf]
      %v4475 = vld [vmem:[%s3320 + $0xb8] sm:$0xf]
      %v4476 = vld [vmem:[%s3320 + $0xbc] sm:$0xf]
      %v4477 = vld [vmem:[%s3320 + $0xc0] sm:$0xf]
      %v4478 = vld [vmem:[%s3320 + $0xc4] sm:$0x1]
      %v4479 = vld [vmem:[%s3320 + $0xc8] sm:$0xf]
      %v4480 = vld [vmem:[%s3320 + $0xcc] sm:$0xf]
      %v4481 = vld [vmem:[%s3320 + $0xd0] sm:$0xf]
      %v4482 = vld [vmem:[%s3320 + $0xd4] sm:$0xf]
      %v4483 = vld [vmem:[%s3320 + $0xd8] sm:$0x1]
      %v4484 = vld [vmem:[%s3320 + $0xdc] sm:$0xf]
      %v4485 = vld [vmem:[%s3320 + $0xe0] sm:$0xf]
      %v4486 = vld [vmem:[%s3320 + $0xe4] sm:$0xf]
      %v4487 = vld [vmem:[%s3320 + $0xe8] sm:$0xf]
      %v4488 = vld [vmem:[%s3320 + $0xec] sm:$0x1]
      %v4489 = vld [vmem:[%s3320 + $0xf0] sm:$0xf]
      %v4490 = vld [vmem:[%s3320 + $0xf4] sm:$0xf]
      %v4491 = vld [vmem:[%s3320 + $0xf8] sm:$0xf]
      %v4492 = vld [vmem:[%s3320 + $0xfc] sm:$0xf]
      %v4493 = vld [vmem:[%s3320 + $0x100] sm:$0x1]
      %v4494 = vld [vmem:[%s3320 + $0x104] sm:$0xf]
      %v4495 = vld [vmem:[%s3320 + $0x108] sm:$0xf]
      %v4496 = vld [vmem:[%s3320 + $0x10c] sm:$0xf]
      %v4497 = vld [vmem:[%s3320 + $0x110] sm:$0xf]
      %v4498 = vld [vmem:[%s3320 + $0x114] sm:$0x1]
      %v4499 = vld [vmem:[%s3320 + $0x118] sm:$0xf]
      %v4500 = vld [vmem:[%s3320 + $0x11c] sm:$0xf]
      %v4501 = vld [vmem:[%s3320 + $0x120] sm:$0xf]
      %v4502 = vld [vmem:[%s3320 + $0x124] sm:$0xf]
      %v4503 = vld [vmem:[%s3320 + $0x128] sm:$0x1]
      %v4504 = vld [vmem:[%s3320 + $0x12c] sm:$0xf]
      %v4505 = vld [vmem:[%s3320 + $0x130] sm:$0xf]
      %v4506 = vld [vmem:[%s3320 + $0x134] sm:$0xf]
      %v4507 = vld [vmem:[%s3320 + $0x138] sm:$0xf]
      %v4508 = vld [vmem:[%s3320 + $0x13c] sm:$0x1]
      %v4509 = vld [vmem:[%s3320 + $0x140] sm:$0xf]
      %v4510 = vld [vmem:[%s3320 + $0x144] sm:$0xf]
      %v4511 = vld [vmem:[%s3320 + $0x148] sm:$0xf]
      %v4512 = vld [vmem:[%s3320 + $0x14c] sm:$0xf]
      %v4513 = vld [vmem:[%s3320 + $0x150] sm:$0x1]
      %v4514 = vld [vmem:[%s3320 + $0x154] sm:$0xf]
      %v4515 = vld [vmem:[%s3320 + $0x158] sm:$0xf]
      %v4516 = vld [vmem:[%s3320 + $0x15c] sm:$0xf]
      %v4517 = vld [vmem:[%s3320 + $0x160] sm:$0xf]
      %v4518 = vld [vmem:[%s3320 + $0x164] sm:$0x1]
      %v4519 = vld [vmem:[%s3320 + $0x168] sm:$0xf]
      %v4520 = vld [vmem:[%s3320 + $0x16c] sm:$0xf]
      %v4521 = vld [vmem:[%s3320 + $0x170] sm:$0xf]
      %v4522 = vld [vmem:[%s3320 + $0x174] sm:$0xf]
      %v4523 = vld [vmem:[%s3320 + $0x178] sm:$0x1]
      %v4524 = vld [vmem:[%s3320 + $0x17c] sm:$0xf]
      %v4525 = vld [vmem:[%s3320 + $0x180] sm:$0xf]
      %v4526 = vld [vmem:[%s3320 + $0x184] sm:$0xf]
      %v4527 = vld [vmem:[%s3320 + $0x188] sm:$0xf]
      %v4528 = vld [vmem:[%s3320 + $0x18c] sm:$0x1]
      %v4529 = vld [vmem:[%s3320 + $0x190] sm:$0xf]
      %v4530 = vld [vmem:[%s3320 + $0x194] sm:$0xf]
      %v4531 = vld [vmem:[%s3320 + $0x198] sm:$0xf]
      %v4532 = vld [vmem:[%s3320 + $0x19c] sm:$0xf]
      %v4533 = vld [vmem:[%s3320 + $0x1a0] sm:$0x1]
      %v4534 = vld [vmem:[%s3320 + $0x1a4] sm:$0xf]
      %v4535 = vld [vmem:[%s3320 + $0x1a8] sm:$0xf]
      %v4536 = vld [vmem:[%s3320 + $0x1ac] sm:$0xf]
      %v4537 = vld [vmem:[%s3320 + $0x1b0] sm:$0xf]
      %v4538 = vld [vmem:[%s3320 + $0x1b4] sm:$0x1]
      %v4539 = vld [vmem:[%s3320 + $0x1b8] sm:$0xf]
      %v4540 = vld [vmem:[%s3320 + $0x1bc] sm:$0xf]
      %v4541 = vld [vmem:[%s3320 + $0x1c0] sm:$0xf]
      %v4542 = vld [vmem:[%s3320 + $0x1c4] sm:$0xf]
      %v4543 = vld [vmem:[%s3320 + $0x1c8] sm:$0x1]
      %v4544 = vld [vmem:[%s3320 + $0x1cc] sm:$0xf]
      %v4545 = vld [vmem:[%s3320 + $0x1d0] sm:$0xf]
      %v4546 = vld [vmem:[%s3320 + $0x1d4] sm:$0xf]
      %v4547 = vld [vmem:[%s3320 + $0x1d8] sm:$0xf]
      %v4548 = vld [vmem:[%s3320 + $0x1dc] sm:$0x1]
      %v4549 = vld [vmem:[%s3320 + $0x1e0] sm:$0xf]
      %v4550 = vld [vmem:[%s3320 + $0x1e4] sm:$0xf]
      %v4551 = vld [vmem:[%s3320 + $0x1e8] sm:$0xf]
      %v4552 = vld [vmem:[%s3320 + $0x1ec] sm:$0xf]
      %v4553 = vld [vmem:[%s3320 + $0x1f0] sm:$0x1]
      %v4554 = vld [vmem:[%s3320 + $0x1f4] sm:$0xf]
      %v4555 = vld [vmem:[%s3320 + $0x1f8] sm:$0xf]
      %v4556 = vld [vmem:[%s3320 + $0x1fc] sm:$0xf]
      %v4557 = vld [vmem:[%s3320 + $0x200] sm:$0xf]
      %v4558 = vld [vmem:[%s3320 + $0x204] sm:$0x1]
      %v4559 = vld [vmem:[%s3320 + $0x208] sm:$0xf]
      %v4560 = vld [vmem:[%s3320 + $0x20c] sm:$0xf]
      %v4561 = vld [vmem:[%s3320 + $0x210] sm:$0xf]
      %v4562 = vld [vmem:[%s3320 + $0x214] sm:$0xf]
      %v4563 = vld [vmem:[%s3320 + $0x218] sm:$0x1]
      %v4564 = vld [vmem:[%s3320 + $0x21c] sm:$0xf]
      %v4565 = vld [vmem:[%s3320 + $0x220] sm:$0xf]
      %v4566 = vld [vmem:[%s3320 + $0x224] sm:$0xf]
      %v4567 = vld [vmem:[%s3320 + $0x228] sm:$0xf]
      %v4568 = vld [vmem:[%s3320 + $0x22c] sm:$0x1]
      %v4569 = vld [vmem:[%s3320 + $0x230] sm:$0xf]
      %v4570 = vld [vmem:[%s3320 + $0x234] sm:$0xf]
      %v4571 = vld [vmem:[%s3320 + $0x238] sm:$0xf]
      %v4572 = vld [vmem:[%s3320 + $0x23c] sm:$0xf]
      %v4573 = vld [vmem:[%s3320 + $0x240] sm:$0x1]
      %v4574 = vld [vmem:[%s3320 + $0x244] sm:$0xf]
      %v4575 = vld [vmem:[%s3320 + $0x248] sm:$0xf]
      %v4576 = vld [vmem:[%s3320 + $0x24c] sm:$0xf]
      %v4577 = vld [vmem:[%s3320 + $0x250] sm:$0xf]
      %v4578 = vld [vmem:[%s3320 + $0x254] sm:$0x1]
      %v4579 = vld [vmem:[%s3320 + $0x258] sm:$0xf]
      %v4580 = vld [vmem:[%s3320 + $0x25c] sm:$0xf]
      %v4581 = vld [vmem:[%s3320 + $0x260] sm:$0xf]
      %v4582 = vld [vmem:[%s3320 + $0x264] sm:$0xf]
      %v4583 = vld [vmem:[%s3320 + $0x268] sm:$0x1]
      %v4584 = vld [vmem:[%s3320 + $0x26c] sm:$0xf]
      %v4585 = vld [vmem:[%s3320 + $0x270] sm:$0xf]
      %v4586 = vld [vmem:[%s3320 + $0x274] sm:$0xf]
      %v4587 = vld [vmem:[%s3320 + $0x278] sm:$0xf]
      %v4588 = vld [vmem:[%s3320 + $0x27c] sm:$0x1]
      %v4590 = vshrl.u32 %v4429, 16
      %v4592 = vrot.slane %v4590, 4
      %v4593 = vshll.u32 %v4429, 16
      %v4595 = vrot.slane %v4593, 5
      %v4596 = vor.u32 %v4592, %v4595
      %v4597 = vrot.slane %v4596, 4
      %v4599 = vshll.u32 %v4430, 16
      %v4601 = vrot.slane %v4599, 5
      %v4602 = vsel %vm336, %v4597, %v4601
      %v4603 = vshrl.u32 %v4430, 16
      %v4605 = vrot.slane %v4603, 4
      %v4606 = vor.u32 %v4605, %v4601
      %v4607 = vrot.slane %v4606, 4
      %v4609 = vshll.u32 %v4431, 16
      %v4611 = vrot.slane %v4609, 5
      %v4612 = vsel %vm336, %v4607, %v4611
      %v4613 = vshrl.u32 %v4431, 16
      %v4615 = vrot.slane %v4613, 4
      %v4616 = vor.u32 %v4615, %v4611
      %v4617 = vrot.slane %v4616, 4
      %v4619 = vshll.u32 %v4432, 16
      %v4621 = vrot.slane %v4619, 5
      %v4622 = vsel %vm336, %v4617, %v4621
      %v4623 = vshrl.u32 %v4432, 16
      %v4625 = vrot.slane %v4623, 4
      %v4626 = vor.u32 %v4625, %v4621
      %v4627 = vrot.slane %v4626, 4
      %v4629 = vshll.u32 %v4433, 16
      %v4631 = vrot.slane %v4629, 5
      %v4632 = vsel %vm336, %v4627, %v4631
      %v4634 = vshrl.u32 %v4434, 16
      %v4636 = vrot.slane %v4634, 4
      %v4637 = vshll.u32 %v4434, 16
      %v4639 = vrot.slane %v4637, 5
      %v4640 = vor.u32 %v4636, %v4639
      %v4641 = vrot.slane %v4640, 4
      %v4643 = vshll.u32 %v4435, 16
      %v4645 = vrot.slane %v4643, 5
      %v4646 = vsel %vm336, %v4641, %v4645
      %v4647 = vshrl.u32 %v4435, 16
      %v4649 = vrot.slane %v4647, 4
      %v4650 = vor.u32 %v4649, %v4645
      %v4651 = vrot.slane %v4650, 4
      %v4653 = vshll.u32 %v4436, 16
      %v4655 = vrot.slane %v4653, 5
      %v4656 = vsel %vm336, %v4651, %v4655
      %v4657 = vshrl.u32 %v4436, 16
      %v4659 = vrot.slane %v4657, 4
      %v4660 = vor.u32 %v4659, %v4655
      %v4661 = vrot.slane %v4660, 4
      %v4663 = vshll.u32 %v4437, 16
      %v4665 = vrot.slane %v4663, 5
      %v4666 = vsel %vm336, %v4661, %v4665
      %v4667 = vshrl.u32 %v4437, 16
      %v4669 = vrot.slane %v4667, 4
      %v4670 = vor.u32 %v4669, %v4665
      %v4671 = vrot.slane %v4670, 4
      %v4673 = vshll.u32 %v4438, 16
      %v4675 = vrot.slane %v4673, 5
      %v4676 = vsel %vm336, %v4671, %v4675
      %v4678 = vshrl.u32 %v4439, 16
      %v4680 = vrot.slane %v4678, 4
      %v4681 = vshll.u32 %v4439, 16
      %v4683 = vrot.slane %v4681, 5
      %v4684 = vor.u32 %v4680, %v4683
      %v4685 = vrot.slane %v4684, 4
      %v4687 = vshll.u32 %v4440, 16
      %v4689 = vrot.slane %v4687, 5
      %v4690 = vsel %vm336, %v4685, %v4689
      %v4691 = vshrl.u32 %v4440, 16
      %v4693 = vrot.slane %v4691, 4
      %v4694 = vor.u32 %v4693, %v4689
      %v4695 = vrot.slane %v4694, 4
      %v4697 = vshll.u32 %v4441, 16
      %v4699 = vrot.slane %v4697, 5
      %v4700 = vsel %vm336, %v4695, %v4699
      %v4701 = vshrl.u32 %v4441, 16
      %v4703 = vrot.slane %v4701, 4
      %v4704 = vor.u32 %v4703, %v4699
      %v4705 = vrot.slane %v4704, 4
      %v4707 = vshll.u32 %v4442, 16
      %v4709 = vrot.slane %v4707, 5
      %v4710 = vsel %vm336, %v4705, %v4709
      %v4711 = vshrl.u32 %v4442, 16
      %v4713 = vrot.slane %v4711, 4
      %v4714 = vor.u32 %v4713, %v4709
      %v4715 = vrot.slane %v4714, 4
      %v4717 = vshll.u32 %v4443, 16
      %v4719 = vrot.slane %v4717, 5
      %v4720 = vsel %vm336, %v4715, %v4719
      %v4722 = vshrl.u32 %v4444, 16
      %v4724 = vrot.slane %v4722, 4
      %v4725 = vshll.u32 %v4444, 16
      %v4727 = vrot.slane %v4725, 5
      %v4728 = vor.u32 %v4724, %v4727
      %v4729 = vrot.slane %v4728, 4
      %v4731 = vshll.u32 %v4445, 16
      %v4733 = vrot.slane %v4731, 5
      %v4734 = vsel %vm336, %v4729, %v4733
      %v4735 = vshrl.u32 %v4445, 16
      %v4737 = vrot.slane %v4735, 4
      %v4738 = vor.u32 %v4737, %v4733
      %v4739 = vrot.slane %v4738, 4
      %v4741 = vshll.u32 %v4446, 16
      %v4743 = vrot.slane %v4741, 5
      %v4744 = vsel %vm336, %v4739, %v4743
      %v4745 = vshrl.u32 %v4446, 16
      %v4747 = vrot.slane %v4745, 4
      %v4748 = vor.u32 %v4747, %v4743
      %v4749 = vrot.slane %v4748, 4
      %v4751 = vshll.u32 %v4447, 16
      %v4753 = vrot.slane %v4751, 5
      %v4754 = vsel %vm336, %v4749, %v4753
      %v4755 = vshrl.u32 %v4447, 16
      %v4757 = vrot.slane %v4755, 4
      %v4758 = vor.u32 %v4757, %v4753
      %v4759 = vrot.slane %v4758, 4
      %v4761 = vshll.u32 %v4448, 16
      %v4763 = vrot.slane %v4761, 5
      %v4764 = vsel %vm336, %v4759, %v4763
      %v4766 = vshrl.u32 %v4449, 16
      %v4768 = vrot.slane %v4766, 4
      %v4769 = vshll.u32 %v4449, 16
      %v4771 = vrot.slane %v4769, 5
      %v4772 = vor.u32 %v4768, %v4771
      %v4773 = vrot.slane %v4772, 4
      %v4775 = vshll.u32 %v4450, 16
      %v4777 = vrot.slane %v4775, 5
      %v4778 = vsel %vm336, %v4773, %v4777
      %v4779 = vshrl.u32 %v4450, 16
      %v4781 = vrot.slane %v4779, 4
      %v4782 = vor.u32 %v4781, %v4777
      %v4783 = vrot.slane %v4782, 4
      %v4785 = vshll.u32 %v4451, 16
      %v4787 = vrot.slane %v4785, 5
      %v4788 = vsel %vm336, %v4783, %v4787
      %v4789 = vshrl.u32 %v4451, 16
      %v4791 = vrot.slane %v4789, 4
      %v4792 = vor.u32 %v4791, %v4787
      %v4793 = vrot.slane %v4792, 4
      %v4795 = vshll.u32 %v4452, 16
      %v4797 = vrot.slane %v4795, 5
      %v4798 = vsel %vm336, %v4793, %v4797
      %v4799 = vshrl.u32 %v4452, 16
      %v4801 = vrot.slane %v4799, 4
      %v4802 = vor.u32 %v4801, %v4797
      %v4803 = vrot.slane %v4802, 4
      %v4805 = vshll.u32 %v4453, 16
      %v4807 = vrot.slane %v4805, 5
      %v4808 = vsel %vm336, %v4803, %v4807
      %v4810 = vshrl.u32 %v4454, 16
      %v4812 = vrot.slane %v4810, 4
      %v4813 = vshll.u32 %v4454, 16
      %v4815 = vrot.slane %v4813, 5
      %v4816 = vor.u32 %v4812, %v4815
      %v4817 = vrot.slane %v4816, 4
      %v4819 = vshll.u32 %v4455, 16
      %v4821 = vrot.slane %v4819, 5
      %v4822 = vsel %vm336, %v4817, %v4821
      %v4823 = vshrl.u32 %v4455, 16
      %v4825 = vrot.slane %v4823, 4
      %v4826 = vor.u32 %v4825, %v4821
      %v4827 = vrot.slane %v4826, 4
      %v4829 = vshll.u32 %v4456, 16
      %v4831 = vrot.slane %v4829, 5
      %v4832 = vsel %vm336, %v4827, %v4831
      %v4833 = vshrl.u32 %v4456, 16
      %v4835 = vrot.slane %v4833, 4
      %v4836 = vor.u32 %v4835, %v4831
      %v4837 = vrot.slane %v4836, 4
      %v4839 = vshll.u32 %v4457, 16
      %v4841 = vrot.slane %v4839, 5
      %v4842 = vsel %vm336, %v4837, %v4841
      %v4843 = vshrl.u32 %v4457, 16
      %v4845 = vrot.slane %v4843, 4
      %v4846 = vor.u32 %v4845, %v4841
      %v4847 = vrot.slane %v4846, 4
      %v4849 = vshll.u32 %v4458, 16
      %v4851 = vrot.slane %v4849, 5
      %v4852 = vsel %vm336, %v4847, %v4851
      %v4854 = vshrl.u32 %v4459, 16
      %v4856 = vrot.slane %v4854, 4
      %v4857 = vshll.u32 %v4459, 16
      %v4859 = vrot.slane %v4857, 5
      %v4860 = vor.u32 %v4856, %v4859
      %v4861 = vrot.slane %v4860, 4
      %v4863 = vshll.u32 %v4460, 16
      %v4865 = vrot.slane %v4863, 5
      %v4866 = vsel %vm336, %v4861, %v4865
      %v4867 = vshrl.u32 %v4460, 16
      %v4869 = vrot.slane %v4867, 4
      %v4870 = vor.u32 %v4869, %v4865
      %v4871 = vrot.slane %v4870, 4
      %v4873 = vshll.u32 %v4461, 16
      %v4875 = vrot.slane %v4873, 5
      %v4876 = vsel %vm336, %v4871, %v4875
      %v4877 = vshrl.u32 %v4461, 16
      %v4879 = vrot.slane %v4877, 4
      %v4880 = vor.u32 %v4879, %v4875
      %v4881 = vrot.slane %v4880, 4
      %v4883 = vshll.u32 %v4462, 16
      %v4885 = vrot.slane %v4883, 5
      %v4886 = vsel %vm336, %v4881, %v4885
      %v4887 = vshrl.u32 %v4462, 16
      %v4889 = vrot.slane %v4887, 4
      %v4890 = vor.u32 %v4889, %v4885
      %v4891 = vrot.slane %v4890, 4
      %v4893 = vshll.u32 %v4463, 16
      %v4895 = vrot.slane %v4893, 5
      %v4896 = vsel %vm336, %v4891, %v4895
      %v4898 = vshrl.u32 %v4464, 16
      %v4900 = vrot.slane %v4898, 4
      %v4901 = vshll.u32 %v4464, 16
      %v4903 = vrot.slane %v4901, 5
      %v4904 = vor.u32 %v4900, %v4903
      %v4905 = vrot.slane %v4904, 4
      %v4907 = vshll.u32 %v4465, 16
      %v4909 = vrot.slane %v4907, 5
      %v4910 = vsel %vm336, %v4905, %v4909
      %v4911 = vshrl.u32 %v4465, 16
      %v4913 = vrot.slane %v4911, 4
      %v4914 = vor.u32 %v4913, %v4909
      %v4915 = vrot.slane %v4914, 4
      %v4917 = vshll.u32 %v4466, 16
      %v4919 = vrot.slane %v4917, 5
      %v4920 = vsel %vm336, %v4915, %v4919
      %v4921 = vshrl.u32 %v4466, 16
      %v4923 = vrot.slane %v4921, 4
      %v4924 = vor.u32 %v4923, %v4919
      %v4925 = vrot.slane %v4924, 4
      %v4927 = vshll.u32 %v4467, 16
      %v4929 = vrot.slane %v4927, 5
      %v4930 = vsel %vm336, %v4925, %v4929
      %v4931 = vshrl.u32 %v4467, 16
      %v4933 = vrot.slane %v4931, 4
      %v4934 = vor.u32 %v4933, %v4929
      %v4935 = vrot.slane %v4934, 4
      %v4937 = vshll.u32 %v4468, 16
      %v4939 = vrot.slane %v4937, 5
      %v4940 = vsel %vm336, %v4935, %v4939
      %v4942 = vshrl.u32 %v4469, 16
      %v4944 = vrot.slane %v4942, 4
      %v4945 = vshll.u32 %v4469, 16
      %v4947 = vrot.slane %v4945, 5
      %v4948 = vor.u32 %v4944, %v4947
      %v4949 = vrot.slane %v4948, 4
      %v4951 = vshll.u32 %v4470, 16
      %v4953 = vrot.slane %v4951, 5
      %v4954 = vsel %vm336, %v4949, %v4953
      %v4955 = vshrl.u32 %v4470, 16
      %v4957 = vrot.slane %v4955, 4
      %v4958 = vor.u32 %v4957, %v4953
      %v4959 = vrot.slane %v4958, 4
      %v4961 = vshll.u32 %v4471, 16
      %v4963 = vrot.slane %v4961, 5
      %v4964 = vsel %vm336, %v4959, %v4963
      %v4965 = vshrl.u32 %v4471, 16
      %v4967 = vrot.slane %v4965, 4
      %v4968 = vor.u32 %v4967, %v4963
      %v4969 = vrot.slane %v4968, 4
      %v4971 = vshll.u32 %v4472, 16
      %v4973 = vrot.slane %v4971, 5
      %v4974 = vsel %vm336, %v4969, %v4973
      %v4975 = vshrl.u32 %v4472, 16
      %v4977 = vrot.slane %v4975, 4
      %v4978 = vor.u32 %v4977, %v4973
      %v4979 = vrot.slane %v4978, 4
      %v4981 = vshll.u32 %v4473, 16
      %v4983 = vrot.slane %v4981, 5
      %v4984 = vsel %vm336, %v4979, %v4983
      %v4986 = vshrl.u32 %v4474, 16
      %v4988 = vrot.slane %v4986, 4
      %v4989 = vshll.u32 %v4474, 16
      %v4991 = vrot.slane %v4989, 5
      %v4992 = vor.u32 %v4988, %v4991
      %v4993 = vrot.slane %v4992, 4
      %v4995 = vshll.u32 %v4475, 16
      %v4997 = vrot.slane %v4995, 5
      %v4998 = vsel %vm336, %v4993, %v4997
      %v4999 = vshrl.u32 %v4475, 16
      %v5001 = vrot.slane %v4999, 4
      %v5002 = vor.u32 %v5001, %v4997
      %v5003 = vrot.slane %v5002, 4
      %v5005 = vshll.u32 %v4476, 16
      %v5007 = vrot.slane %v5005, 5
      %v5008 = vsel %vm336, %v5003, %v5007
      %v5009 = vshrl.u32 %v4476, 16
      %v5011 = vrot.slane %v5009, 4
      %v5012 = vor.u32 %v5011, %v5007
      %v5013 = vrot.slane %v5012, 4
      %v5015 = vshll.u32 %v4477, 16
      %v5017 = vrot.slane %v5015, 5
      %v5018 = vsel %vm336, %v5013, %v5017
      %v5019 = vshrl.u32 %v4477, 16
      %v5021 = vrot.slane %v5019, 4
      %v5022 = vor.u32 %v5021, %v5017
      %v5023 = vrot.slane %v5022, 4
      %v5025 = vshll.u32 %v4478, 16
      %v5027 = vrot.slane %v5025, 5
      %v5028 = vsel %vm336, %v5023, %v5027
      %v5030 = vshrl.u32 %v4479, 16
      %v5032 = vrot.slane %v5030, 4
      %v5033 = vshll.u32 %v4479, 16
      %v5035 = vrot.slane %v5033, 5
      %v5036 = vor.u32 %v5032, %v5035
      %v5037 = vrot.slane %v5036, 4
      %v5039 = vshll.u32 %v4480, 16
      %v5041 = vrot.slane %v5039, 5
      %v5042 = vsel %vm336, %v5037, %v5041
      %v5043 = vshrl.u32 %v4480, 16
      %v5045 = vrot.slane %v5043, 4
      %v5046 = vor.u32 %v5045, %v5041
      %v5047 = vrot.slane %v5046, 4
      %v5049 = vshll.u32 %v4481, 16
      %v5051 = vrot.slane %v5049, 5
      %v5052 = vsel %vm336, %v5047, %v5051
      %v5053 = vshrl.u32 %v4481, 16
      %v5055 = vrot.slane %v5053, 4
      %v5056 = vor.u32 %v5055, %v5051
      %v5057 = vrot.slane %v5056, 4
      %v5059 = vshll.u32 %v4482, 16
      %v5061 = vrot.slane %v5059, 5
      %v5062 = vsel %vm336, %v5057, %v5061
      %v5063 = vshrl.u32 %v4482, 16
      %v5065 = vrot.slane %v5063, 4
      %v5066 = vor.u32 %v5065, %v5061
      %v5067 = vrot.slane %v5066, 4
      %v5069 = vshll.u32 %v4483, 16
      %v5071 = vrot.slane %v5069, 5
      %v5072 = vsel %vm336, %v5067, %v5071
      %v5074 = vshrl.u32 %v4484, 16
      %v5076 = vrot.slane %v5074, 4
      %v5077 = vshll.u32 %v4484, 16
      %v5079 = vrot.slane %v5077, 5
      %v5080 = vor.u32 %v5076, %v5079
      %v5081 = vrot.slane %v5080, 4
      %v5083 = vshll.u32 %v4485, 16
      %v5085 = vrot.slane %v5083, 5
      %v5086 = vsel %vm336, %v5081, %v5085
      %v5087 = vshrl.u32 %v4485, 16
      %v5089 = vrot.slane %v5087, 4
      %v5090 = vor.u32 %v5089, %v5085
      %v5091 = vrot.slane %v5090, 4
      %v5093 = vshll.u32 %v4486, 16
      %v5095 = vrot.slane %v5093, 5
      %v5096 = vsel %vm336, %v5091, %v5095
      %v5097 = vshrl.u32 %v4486, 16
      %v5099 = vrot.slane %v5097, 4
      %v5100 = vor.u32 %v5099, %v5095
      %v5101 = vrot.slane %v5100, 4
      %v5103 = vshll.u32 %v4487, 16
      %v5105 = vrot.slane %v5103, 5
      %v5106 = vsel %vm336, %v5101, %v5105
      %v5107 = vshrl.u32 %v4487, 16
      %v5109 = vrot.slane %v5107, 4
      %v5110 = vor.u32 %v5109, %v5105
      %v5111 = vrot.slane %v5110, 4
      %v5113 = vshll.u32 %v4488, 16
      %v5115 = vrot.slane %v5113, 5
      %v5116 = vsel %vm336, %v5111, %v5115
      %v5118 = vshrl.u32 %v4489, 16
      %v5120 = vrot.slane %v5118, 4
      %v5121 = vshll.u32 %v4489, 16
      %v5123 = vrot.slane %v5121, 5
      %v5124 = vor.u32 %v5120, %v5123
      %v5125 = vrot.slane %v5124, 4
      %v5127 = vshll.u32 %v4490, 16
      %v5129 = vrot.slane %v5127, 5
      %v5130 = vsel %vm336, %v5125, %v5129
      %v5131 = vshrl.u32 %v4490, 16
      %v5133 = vrot.slane %v5131, 4
      %v5134 = vor.u32 %v5133, %v5129
      %v5135 = vrot.slane %v5134, 4
      %v5137 = vshll.u32 %v4491, 16
      %v5139 = vrot.slane %v5137, 5
      %v5140 = vsel %vm336, %v5135, %v5139
      %v5141 = vshrl.u32 %v4491, 16
      %v5143 = vrot.slane %v5141, 4
      %v5144 = vor.u32 %v5143, %v5139
      %v5145 = vrot.slane %v5144, 4
      %v5147 = vshll.u32 %v4492, 16
      %v5149 = vrot.slane %v5147, 5
      %v5150 = vsel %vm336, %v5145, %v5149
      %v5151 = vshrl.u32 %v4492, 16
      %v5153 = vrot.slane %v5151, 4
      %v5154 = vor.u32 %v5153, %v5149
      %v5155 = vrot.slane %v5154, 4
      %v5157 = vshll.u32 %v4493, 16
      %v5159 = vrot.slane %v5157, 5
      %v5160 = vsel %vm336, %v5155, %v5159
      %v5162 = vshrl.u32 %v4494, 16
      %v5164 = vrot.slane %v5162, 4
      %v5165 = vshll.u32 %v4494, 16
      %v5167 = vrot.slane %v5165, 5
      %v5168 = vor.u32 %v5164, %v5167
      %v5169 = vrot.slane %v5168, 4
      %v5171 = vshll.u32 %v4495, 16
      %v5173 = vrot.slane %v5171, 5
      %v5174 = vsel %vm336, %v5169, %v5173
      %v5175 = vshrl.u32 %v4495, 16
      %v5177 = vrot.slane %v5175, 4
      %v5178 = vor.u32 %v5177, %v5173
      %v5179 = vrot.slane %v5178, 4
      %v5181 = vshll.u32 %v4496, 16
      %v5183 = vrot.slane %v5181, 5
      %v5184 = vsel %vm336, %v5179, %v5183
      %v5185 = vshrl.u32 %v4496, 16
      %v5187 = vrot.slane %v5185, 4
      %v5188 = vor.u32 %v5187, %v5183
      %v5189 = vrot.slane %v5188, 4
      %v5191 = vshll.u32 %v4497, 16
      %v5193 = vrot.slane %v5191, 5
      %v5194 = vsel %vm336, %v5189, %v5193
      %v5195 = vshrl.u32 %v4497, 16
      %v5197 = vrot.slane %v5195, 4
      %v5198 = vor.u32 %v5197, %v5193
      %v5199 = vrot.slane %v5198, 4
      %v5201 = vshll.u32 %v4498, 16
      %v5203 = vrot.slane %v5201, 5
      %v5204 = vsel %vm336, %v5199, %v5203
      %v5206 = vshrl.u32 %v4499, 16
      %v5208 = vrot.slane %v5206, 4
      %v5209 = vshll.u32 %v4499, 16
      %v5211 = vrot.slane %v5209, 5
      %v5212 = vor.u32 %v5208, %v5211
      %v5213 = vrot.slane %v5212, 4
      %v5215 = vshll.u32 %v4500, 16
      %v5217 = vrot.slane %v5215, 5
      %v5218 = vsel %vm336, %v5213, %v5217
      %v5219 = vshrl.u32 %v4500, 16
      %v5221 = vrot.slane %v5219, 4
      %v5222 = vor.u32 %v5221, %v5217
      %v5223 = vrot.slane %v5222, 4
      %v5225 = vshll.u32 %v4501, 16
      %v5227 = vrot.slane %v5225, 5
      %v5228 = vsel %vm336, %v5223, %v5227
      %v5229 = vshrl.u32 %v4501, 16
      %v5231 = vrot.slane %v5229, 4
      %v5232 = vor.u32 %v5231, %v5227
      %v5233 = vrot.slane %v5232, 4
      %v5235 = vshll.u32 %v4502, 16
      %v5237 = vrot.slane %v5235, 5
      %v5238 = vsel %vm336, %v5233, %v5237
      %v5239 = vshrl.u32 %v4502, 16
      %v5241 = vrot.slane %v5239, 4
      %v5242 = vor.u32 %v5241, %v5237
      %v5243 = vrot.slane %v5242, 4
      %v5245 = vshll.u32 %v4503, 16
      %v5247 = vrot.slane %v5245, 5
      %v5248 = vsel %vm336, %v5243, %v5247
      %v5250 = vshrl.u32 %v4504, 16
      %v5252 = vrot.slane %v5250, 4
      %v5253 = vshll.u32 %v4504, 16
      %v5255 = vrot.slane %v5253, 5
      %v5256 = vor.u32 %v5252, %v5255
      %v5257 = vrot.slane %v5256, 4
      %v5259 = vshll.u32 %v4505, 16
      %v5261 = vrot.slane %v5259, 5
      %v5262 = vsel %vm336, %v5257, %v5261
      %v5263 = vshrl.u32 %v4505, 16
      %v5265 = vrot.slane %v5263, 4
      %v5266 = vor.u32 %v5265, %v5261
      %v5267 = vrot.slane %v5266, 4
      %v5269 = vshll.u32 %v4506, 16
      %v5271 = vrot.slane %v5269, 5
      %v5272 = vsel %vm336, %v5267, %v5271
      %v5273 = vshrl.u32 %v4506, 16
      %v5275 = vrot.slane %v5273, 4
      %v5276 = vor.u32 %v5275, %v5271
      %v5277 = vrot.slane %v5276, 4
      %v5279 = vshll.u32 %v4507, 16
      %v5281 = vrot.slane %v5279, 5
      %v5282 = vsel %vm336, %v5277, %v5281
      %v5283 = vshrl.u32 %v4507, 16
      %v5285 = vrot.slane %v5283, 4
      %v5286 = vor.u32 %v5285, %v5281
      %v5287 = vrot.slane %v5286, 4
      %v5289 = vshll.u32 %v4508, 16
      %v5291 = vrot.slane %v5289, 5
      %v5292 = vsel %vm336, %v5287, %v5291
      %v5294 = vshrl.u32 %v4509, 16
      %v5296 = vrot.slane %v5294, 4
      %v5297 = vshll.u32 %v4509, 16
      %v5299 = vrot.slane %v5297, 5
      %v5300 = vor.u32 %v5296, %v5299
      %v5301 = vrot.slane %v5300, 4
      %v5303 = vshll.u32 %v4510, 16
      %v5305 = vrot.slane %v5303, 5
      %v5306 = vsel %vm336, %v5301, %v5305
      %v5307 = vshrl.u32 %v4510, 16
      %v5309 = vrot.slane %v5307, 4
      %v5310 = vor.u32 %v5309, %v5305
      %v5311 = vrot.slane %v5310, 4
      %v5313 = vshll.u32 %v4511, 16
      %v5315 = vrot.slane %v5313, 5
      %v5316 = vsel %vm336, %v5311, %v5315
      %v5317 = vshrl.u32 %v4511, 16
      %v5319 = vrot.slane %v5317, 4
      %v5320 = vor.u32 %v5319, %v5315
      %v5321 = vrot.slane %v5320, 4
      %v5323 = vshll.u32 %v4512, 16
      %v5325 = vrot.slane %v5323, 5
      %v5326 = vsel %vm336, %v5321, %v5325
      %v5327 = vshrl.u32 %v4512, 16
      %v5329 = vrot.slane %v5327, 4
      %v5330 = vor.u32 %v5329, %v5325
      %v5331 = vrot.slane %v5330, 4
      %v5333 = vshll.u32 %v4513, 16
      %v5335 = vrot.slane %v5333, 5
      %v5336 = vsel %vm336, %v5331, %v5335
      %v5338 = vshrl.u32 %v4514, 16
      %v5340 = vrot.slane %v5338, 4
      %v5341 = vshll.u32 %v4514, 16
      %v5343 = vrot.slane %v5341, 5
      %v5344 = vor.u32 %v5340, %v5343
      %v5345 = vrot.slane %v5344, 4
      %v5347 = vshll.u32 %v4515, 16
      %v5349 = vrot.slane %v5347, 5
      %v5350 = vsel %vm336, %v5345, %v5349
      %v5351 = vshrl.u32 %v4515, 16
      %v5353 = vrot.slane %v5351, 4
      %v5354 = vor.u32 %v5353, %v5349
      %v5355 = vrot.slane %v5354, 4
      %v5357 = vshll.u32 %v4516, 16
      %v5359 = vrot.slane %v5357, 5
      %v5360 = vsel %vm336, %v5355, %v5359
      %v5361 = vshrl.u32 %v4516, 16
      %v5363 = vrot.slane %v5361, 4
      %v5364 = vor.u32 %v5363, %v5359
      %v5365 = vrot.slane %v5364, 4
      %v5367 = vshll.u32 %v4517, 16
      %v5369 = vrot.slane %v5367, 5
      %v5370 = vsel %vm336, %v5365, %v5369
      %v5371 = vshrl.u32 %v4517, 16
      %v5373 = vrot.slane %v5371, 4
      %v5374 = vor.u32 %v5373, %v5369
      %v5375 = vrot.slane %v5374, 4
      %v5377 = vshll.u32 %v4518, 16
      %v5379 = vrot.slane %v5377, 5
      %v5380 = vsel %vm336, %v5375, %v5379
      %v5382 = vshrl.u32 %v4519, 16
      %v5384 = vrot.slane %v5382, 4
      %v5385 = vshll.u32 %v4519, 16
      %v5387 = vrot.slane %v5385, 5
      %v5388 = vor.u32 %v5384, %v5387
      %v5389 = vrot.slane %v5388, 4
      %v5391 = vshll.u32 %v4520, 16
      %v5393 = vrot.slane %v5391, 5
      %v5394 = vsel %vm336, %v5389, %v5393
      %v5395 = vshrl.u32 %v4520, 16
      %v5397 = vrot.slane %v5395, 4
      %v5398 = vor.u32 %v5397, %v5393
      %v5399 = vrot.slane %v5398, 4
      %v5401 = vshll.u32 %v4521, 16
      %v5403 = vrot.slane %v5401, 5
      %v5404 = vsel %vm336, %v5399, %v5403
      %v5405 = vshrl.u32 %v4521, 16
      %v5407 = vrot.slane %v5405, 4
      %v5408 = vor.u32 %v5407, %v5403
      %v5409 = vrot.slane %v5408, 4
      %v5411 = vshll.u32 %v4522, 16
      %v5413 = vrot.slane %v5411, 5
      %v5414 = vsel %vm336, %v5409, %v5413
      %v5415 = vshrl.u32 %v4522, 16
      %v5417 = vrot.slane %v5415, 4
      %v5418 = vor.u32 %v5417, %v5413
      %v5419 = vrot.slane %v5418, 4
      %v5421 = vshll.u32 %v4523, 16
      %v5423 = vrot.slane %v5421, 5
      %v5424 = vsel %vm336, %v5419, %v5423
      %v5426 = vshrl.u32 %v4524, 16
      %v5428 = vrot.slane %v5426, 4
      %v5429 = vshll.u32 %v4524, 16
      %v5431 = vrot.slane %v5429, 5
      %v5432 = vor.u32 %v5428, %v5431
      %v5433 = vrot.slane %v5432, 4
      %v5435 = vshll.u32 %v4525, 16
      %v5437 = vrot.slane %v5435, 5
      %v5438 = vsel %vm336, %v5433, %v5437
      %v5439 = vshrl.u32 %v4525, 16
      %v5441 = vrot.slane %v5439, 4
      %v5442 = vor.u32 %v5441, %v5437
      %v5443 = vrot.slane %v5442, 4
      %v5445 = vshll.u32 %v4526, 16
      %v5447 = vrot.slane %v5445, 5
      %v5448 = vsel %vm336, %v5443, %v5447
      %v5449 = vshrl.u32 %v4526, 16
      %v5451 = vrot.slane %v5449, 4
      %v5452 = vor.u32 %v5451, %v5447
      %v5453 = vrot.slane %v5452, 4
      %v5455 = vshll.u32 %v4527, 16
      %v5457 = vrot.slane %v5455, 5
      %v5458 = vsel %vm336, %v5453, %v5457
      %v5459 = vshrl.u32 %v4527, 16
      %v5461 = vrot.slane %v5459, 4
      %v5462 = vor.u32 %v5461, %v5457
      %v5463 = vrot.slane %v5462, 4
      %v5465 = vshll.u32 %v4528, 16
      %v5467 = vrot.slane %v5465, 5
      %v5468 = vsel %vm336, %v5463, %v5467
      %v5470 = vshrl.u32 %v4529, 16
      %v5472 = vrot.slane %v5470, 4
      %v5473 = vshll.u32 %v4529, 16
      %v5475 = vrot.slane %v5473, 5
      %v5476 = vor.u32 %v5472, %v5475
      %v5477 = vrot.slane %v5476, 4
      %v5479 = vshll.u32 %v4530, 16
      %v5481 = vrot.slane %v5479, 5
      %v5482 = vsel %vm336, %v5477, %v5481
      %v5483 = vshrl.u32 %v4530, 16
      %v5485 = vrot.slane %v5483, 4
      %v5486 = vor.u32 %v5485, %v5481
      %v5487 = vrot.slane %v5486, 4
      %v5489 = vshll.u32 %v4531, 16
      %v5491 = vrot.slane %v5489, 5
      %v5492 = vsel %vm336, %v5487, %v5491
      %v5493 = vshrl.u32 %v4531, 16
      %v5495 = vrot.slane %v5493, 4
      %v5496 = vor.u32 %v5495, %v5491
      %v5497 = vrot.slane %v5496, 4
      %v5499 = vshll.u32 %v4532, 16
      %v5501 = vrot.slane %v5499, 5
      %v5502 = vsel %vm336, %v5497, %v5501
      %v5503 = vshrl.u32 %v4532, 16
      %v5505 = vrot.slane %v5503, 4
      %v5506 = vor.u32 %v5505, %v5501
      %v5507 = vrot.slane %v5506, 4
      %v5509 = vshll.u32 %v4533, 16
      %v5511 = vrot.slane %v5509, 5
      %v5512 = vsel %vm336, %v5507, %v5511
      %v5514 = vshrl.u32 %v4534, 16
      %v5516 = vrot.slane %v5514, 4
      %v5517 = vshll.u32 %v4534, 16
      %v5519 = vrot.slane %v5517, 5
      %v5520 = vor.u32 %v5516, %v5519
      %v5521 = vrot.slane %v5520, 4
      %v5523 = vshll.u32 %v4535, 16
      %v5525 = vrot.slane %v5523, 5
      %v5526 = vsel %vm336, %v5521, %v5525
      %v5527 = vshrl.u32 %v4535, 16
      %v5529 = vrot.slane %v5527, 4
      %v5530 = vor.u32 %v5529, %v5525
      %v5531 = vrot.slane %v5530, 4
      %v5533 = vshll.u32 %v4536, 16
      %v5535 = vrot.slane %v5533, 5
      %v5536 = vsel %vm336, %v5531, %v5535
      %v5537 = vshrl.u32 %v4536, 16
      %v5539 = vrot.slane %v5537, 4
      %v5540 = vor.u32 %v5539, %v5535
      %v5541 = vrot.slane %v5540, 4
      %v5543 = vshll.u32 %v4537, 16
      %v5545 = vrot.slane %v5543, 5
      %v5546 = vsel %vm336, %v5541, %v5545
      %v5547 = vshrl.u32 %v4537, 16
      %v5549 = vrot.slane %v5547, 4
      %v5550 = vor.u32 %v5549, %v5545
      %v5551 = vrot.slane %v5550, 4
      %v5553 = vshll.u32 %v4538, 16
      %v5555 = vrot.slane %v5553, 5
      %v5556 = vsel %vm336, %v5551, %v5555
      %v5558 = vshrl.u32 %v4539, 16
      %v5560 = vrot.slane %v5558, 4
      %v5561 = vshll.u32 %v4539, 16
      %v5563 = vrot.slane %v5561, 5
      %v5564 = vor.u32 %v5560, %v5563
      %v5565 = vrot.slane %v5564, 4
      %v5567 = vshll.u32 %v4540, 16
      %v5569 = vrot.slane %v5567, 5
      %v5570 = vsel %vm336, %v5565, %v5569
      %v5571 = vshrl.u32 %v4540, 16
      %v5573 = vrot.slane %v5571, 4
      %v5574 = vor.u32 %v5573, %v5569
      %v5575 = vrot.slane %v5574, 4
      %v5577 = vshll.u32 %v4541, 16
      %v5579 = vrot.slane %v5577, 5
      %v5580 = vsel %vm336, %v5575, %v5579
      %v5581 = vshrl.u32 %v4541, 16
      %v5583 = vrot.slane %v5581, 4
      %v5584 = vor.u32 %v5583, %v5579
      %v5585 = vrot.slane %v5584, 4
      %v5587 = vshll.u32 %v4542, 16
      %v5589 = vrot.slane %v5587, 5
      %v5590 = vsel %vm336, %v5585, %v5589
      %v5591 = vshrl.u32 %v4542, 16
      %v5593 = vrot.slane %v5591, 4
      %v5594 = vor.u32 %v5593, %v5589
      %v5595 = vrot.slane %v5594, 4
      %v5597 = vshll.u32 %v4543, 16
      %v5599 = vrot.slane %v5597, 5
      %v5600 = vsel %vm336, %v5595, %v5599
      %v5602 = vshrl.u32 %v4544, 16
      %v5604 = vrot.slane %v5602, 4
      %v5605 = vshll.u32 %v4544, 16
      %v5607 = vrot.slane %v5605, 5
      %v5608 = vor.u32 %v5604, %v5607
      %v5609 = vrot.slane %v5608, 4
      %v5611 = vshll.u32 %v4545, 16
      %v5613 = vrot.slane %v5611, 5
      %v5614 = vsel %vm336, %v5609, %v5613
      %v5615 = vshrl.u32 %v4545, 16
      %v5617 = vrot.slane %v5615, 4
      %v5618 = vor.u32 %v5617, %v5613
      %v5619 = vrot.slane %v5618, 4
      %v5621 = vshll.u32 %v4546, 16
      %v5623 = vrot.slane %v5621, 5
      %v5624 = vsel %vm336, %v5619, %v5623
      %v5625 = vshrl.u32 %v4546, 16
      %v5627 = vrot.slane %v5625, 4
      %v5628 = vor.u32 %v5627, %v5623
      %v5629 = vrot.slane %v5628, 4
      %v5631 = vshll.u32 %v4547, 16
      %v5633 = vrot.slane %v5631, 5
      %v5634 = vsel %vm336, %v5629, %v5633
      %v5635 = vshrl.u32 %v4547, 16
      %v5637 = vrot.slane %v5635, 4
      %v5638 = vor.u32 %v5637, %v5633
      %v5639 = vrot.slane %v5638, 4
      %v5641 = vshll.u32 %v4548, 16
      %v5643 = vrot.slane %v5641, 5
      %v5644 = vsel %vm336, %v5639, %v5643
      %v5646 = vshrl.u32 %v4549, 16
      %v5648 = vrot.slane %v5646, 4
      %v5649 = vshll.u32 %v4549, 16
      %v5651 = vrot.slane %v5649, 5
      %v5652 = vor.u32 %v5648, %v5651
      %v5653 = vrot.slane %v5652, 4
      %v5655 = vshll.u32 %v4550, 16
      %v5657 = vrot.slane %v5655, 5
      %v5658 = vsel %vm336, %v5653, %v5657
      %v5659 = vshrl.u32 %v4550, 16
      %v5661 = vrot.slane %v5659, 4
      %v5662 = vor.u32 %v5661, %v5657
      %v5663 = vrot.slane %v5662, 4
      %v5665 = vshll.u32 %v4551, 16
      %v5667 = vrot.slane %v5665, 5
      %v5668 = vsel %vm336, %v5663, %v5667
      %v5669 = vshrl.u32 %v4551, 16
      %v5671 = vrot.slane %v5669, 4
      %v5672 = vor.u32 %v5671, %v5667
      %v5673 = vrot.slane %v5672, 4
      %v5675 = vshll.u32 %v4552, 16
      %v5677 = vrot.slane %v5675, 5
      %v5678 = vsel %vm336, %v5673, %v5677
      %v5679 = vshrl.u32 %v4552, 16
      %v5681 = vrot.slane %v5679, 4
      %v5682 = vor.u32 %v5681, %v5677
      %v5683 = vrot.slane %v5682, 4
      %v5685 = vshll.u32 %v4553, 16
      %v5687 = vrot.slane %v5685, 5
      %v5688 = vsel %vm336, %v5683, %v5687
      %v5690 = vshrl.u32 %v4554, 16
      %v5692 = vrot.slane %v5690, 4
      %v5693 = vshll.u32 %v4554, 16
      %v5695 = vrot.slane %v5693, 5
      %v5696 = vor.u32 %v5692, %v5695
      %v5697 = vrot.slane %v5696, 4
      %v5699 = vshll.u32 %v4555, 16
      %v5701 = vrot.slane %v5699, 5
      %v5702 = vsel %vm336, %v5697, %v5701
      %v5703 = vshrl.u32 %v4555, 16
      %v5705 = vrot.slane %v5703, 4
      %v5706 = vor.u32 %v5705, %v5701
      %v5707 = vrot.slane %v5706, 4
      %v5709 = vshll.u32 %v4556, 16
      %v5711 = vrot.slane %v5709, 5
      %v5712 = vsel %vm336, %v5707, %v5711
      %v5713 = vshrl.u32 %v4556, 16
      %v5715 = vrot.slane %v5713, 4
      %v5716 = vor.u32 %v5715, %v5711
      %v5717 = vrot.slane %v5716, 4
      %v5719 = vshll.u32 %v4557, 16
      %v5721 = vrot.slane %v5719, 5
      %v5722 = vsel %vm336, %v5717, %v5721
      %v5723 = vshrl.u32 %v4557, 16
      %v5725 = vrot.slane %v5723, 4
      %v5726 = vor.u32 %v5725, %v5721
      %v5727 = vrot.slane %v5726, 4
      %v5729 = vshll.u32 %v4558, 16
      %v5731 = vrot.slane %v5729, 5
      %v5732 = vsel %vm336, %v5727, %v5731
      %v5734 = vshrl.u32 %v4559, 16
      %v5736 = vrot.slane %v5734, 4
      %v5737 = vshll.u32 %v4559, 16
      %v5739 = vrot.slane %v5737, 5
      %v5740 = vor.u32 %v5736, %v5739
      %v5741 = vrot.slane %v5740, 4
      %v5743 = vshll.u32 %v4560, 16
      %v5745 = vrot.slane %v5743, 5
      %v5746 = vsel %vm336, %v5741, %v5745
      %v5747 = vshrl.u32 %v4560, 16
      %v5749 = vrot.slane %v5747, 4
      %v5750 = vor.u32 %v5749, %v5745
      %v5751 = vrot.slane %v5750, 4
      %v5753 = vshll.u32 %v4561, 16
      %v5755 = vrot.slane %v5753, 5
      %v5756 = vsel %vm336, %v5751, %v5755
      %v5757 = vshrl.u32 %v4561, 16
      %v5759 = vrot.slane %v5757, 4
      %v5760 = vor.u32 %v5759, %v5755
      %v5761 = vrot.slane %v5760, 4
      %v5763 = vshll.u32 %v4562, 16
      %v5765 = vrot.slane %v5763, 5
      %v5766 = vsel %vm336, %v5761, %v5765
      %v5767 = vshrl.u32 %v4562, 16
      %v5769 = vrot.slane %v5767, 4
      %v5770 = vor.u32 %v5769, %v5765
      %v5771 = vrot.slane %v5770, 4
      %v5773 = vshll.u32 %v4563, 16
      %v5775 = vrot.slane %v5773, 5
      %v5776 = vsel %vm336, %v5771, %v5775
      %v5778 = vshrl.u32 %v4564, 16
      %v5780 = vrot.slane %v5778, 4
      %v5781 = vshll.u32 %v4564, 16
      %v5783 = vrot.slane %v5781, 5
      %v5784 = vor.u32 %v5780, %v5783
      %v5785 = vrot.slane %v5784, 4
      %v5787 = vshll.u32 %v4565, 16
      %v5789 = vrot.slane %v5787, 5
      %v5790 = vsel %vm336, %v5785, %v5789
      %v5791 = vshrl.u32 %v4565, 16
      %v5793 = vrot.slane %v5791, 4
      %v5794 = vor.u32 %v5793, %v5789
      %v5795 = vrot.slane %v5794, 4
      %v5797 = vshll.u32 %v4566, 16
      %v5799 = vrot.slane %v5797, 5
      %v5800 = vsel %vm336, %v5795, %v5799
      %v5801 = vshrl.u32 %v4566, 16
      %v5803 = vrot.slane %v5801, 4
      %v5804 = vor.u32 %v5803, %v5799
      %v5805 = vrot.slane %v5804, 4
      %v5807 = vshll.u32 %v4567, 16
      %v5809 = vrot.slane %v5807, 5
      %v5810 = vsel %vm336, %v5805, %v5809
      %v5811 = vshrl.u32 %v4567, 16
      %v5813 = vrot.slane %v5811, 4
      %v5814 = vor.u32 %v5813, %v5809
      %v5815 = vrot.slane %v5814, 4
      %v5817 = vshll.u32 %v4568, 16
      %v5819 = vrot.slane %v5817, 5
      %v5820 = vsel %vm336, %v5815, %v5819
      %v5822 = vshrl.u32 %v4569, 16
      %v5824 = vrot.slane %v5822, 4
      %v5825 = vshll.u32 %v4569, 16
      %v5827 = vrot.slane %v5825, 5
      %v5828 = vor.u32 %v5824, %v5827
      %v5829 = vrot.slane %v5828, 4
      %v5831 = vshll.u32 %v4570, 16
      %v5833 = vrot.slane %v5831, 5
      %v5834 = vsel %vm336, %v5829, %v5833
      %v5835 = vshrl.u32 %v4570, 16
      %v5837 = vrot.slane %v5835, 4
      %v5838 = vor.u32 %v5837, %v5833
      %v5839 = vrot.slane %v5838, 4
      %v5841 = vshll.u32 %v4571, 16
      %v5843 = vrot.slane %v5841, 5
      %v5844 = vsel %vm336, %v5839, %v5843
      %v5845 = vshrl.u32 %v4571, 16
      %v5847 = vrot.slane %v5845, 4
      %v5848 = vor.u32 %v5847, %v5843
      %v5849 = vrot.slane %v5848, 4
      %v5851 = vshll.u32 %v4572, 16
      %v5853 = vrot.slane %v5851, 5
      %v5854 = vsel %vm336, %v5849, %v5853
      %v5855 = vshrl.u32 %v4572, 16
      %v5857 = vrot.slane %v5855, 4
      %v5858 = vor.u32 %v5857, %v5853
      %v5859 = vrot.slane %v5858, 4
      %v5861 = vshll.u32 %v4573, 16
      %v5863 = vrot.slane %v5861, 5
      %v5864 = vsel %vm336, %v5859, %v5863
      %v5866 = vshrl.u32 %v4574, 16
      %v5868 = vrot.slane %v5866, 4
      %v5869 = vshll.u32 %v4574, 16
      %v5871 = vrot.slane %v5869, 5
      %v5872 = vor.u32 %v5868, %v5871
      %v5873 = vrot.slane %v5872, 4
      %v5875 = vshll.u32 %v4575, 16
      %v5877 = vrot.slane %v5875, 5
      %v5878 = vsel %vm336, %v5873, %v5877
      %v5879 = vshrl.u32 %v4575, 16
      %v5881 = vrot.slane %v5879, 4
      %v5882 = vor.u32 %v5881, %v5877
      %v5883 = vrot.slane %v5882, 4
      %v5885 = vshll.u32 %v4576, 16
      %v5887 = vrot.slane %v5885, 5
      %v5888 = vsel %vm336, %v5883, %v5887
      %v5889 = vshrl.u32 %v4576, 16
      %v5891 = vrot.slane %v5889, 4
      %v5892 = vor.u32 %v5891, %v5887
      %v5893 = vrot.slane %v5892, 4
      %v5895 = vshll.u32 %v4577, 16
      %v5897 = vrot.slane %v5895, 5
      %v5898 = vsel %vm336, %v5893, %v5897
      %v5899 = vshrl.u32 %v4577, 16
      %v5901 = vrot.slane %v5899, 4
      %v5902 = vor.u32 %v5901, %v5897
      %v5903 = vrot.slane %v5902, 4
      %v5905 = vshll.u32 %v4578, 16
      %v5907 = vrot.slane %v5905, 5
      %v5908 = vsel %vm336, %v5903, %v5907
      %v5910 = vshrl.u32 %v4579, 16
      %v5912 = vrot.slane %v5910, 4
      %v5913 = vshll.u32 %v4579, 16
      %v5915 = vrot.slane %v5913, 5
      %v5916 = vor.u32 %v5912, %v5915
      %v5917 = vrot.slane %v5916, 4
      %v5919 = vshll.u32 %v4580, 16
      %v5921 = vrot.slane %v5919, 5
      %v5922 = vsel %vm336, %v5917, %v5921
      %v5923 = vshrl.u32 %v4580, 16
      %v5925 = vrot.slane %v5923, 4
      %v5926 = vor.u32 %v5925, %v5921
      %v5927 = vrot.slane %v5926, 4
      %v5929 = vshll.u32 %v4581, 16
      %v5931 = vrot.slane %v5929, 5
      %v5932 = vsel %vm336, %v5927, %v5931
      %v5933 = vshrl.u32 %v4581, 16
      %v5935 = vrot.slane %v5933, 4
      %v5936 = vor.u32 %v5935, %v5931
      %v5937 = vrot.slane %v5936, 4
      %v5939 = vshll.u32 %v4582, 16
      %v5941 = vrot.slane %v5939, 5
      %v5942 = vsel %vm336, %v5937, %v5941
      %v5943 = vshrl.u32 %v4582, 16
      %v5945 = vrot.slane %v5943, 4
      %v5946 = vor.u32 %v5945, %v5941
      %v5947 = vrot.slane %v5946, 4
      %v5949 = vshll.u32 %v4583, 16
      %v5951 = vrot.slane %v5949, 5
      %v5952 = vsel %vm336, %v5947, %v5951
      %v5954 = vshrl.u32 %v4584, 16
      %v5956 = vrot.slane %v5954, 4
      %v5957 = vshll.u32 %v4584, 16
      %v5959 = vrot.slane %v5957, 5
      %v5960 = vor.u32 %v5956, %v5959
      %v5961 = vrot.slane %v5960, 4
      %v5963 = vshll.u32 %v4585, 16
      %v5965 = vrot.slane %v5963, 5
      %v5966 = vsel %vm336, %v5961, %v5965
      %v5967 = vshrl.u32 %v4585, 16
      %v5969 = vrot.slane %v5967, 4
      %v5970 = vor.u32 %v5969, %v5965
      %v5971 = vrot.slane %v5970, 4
      %v5973 = vshll.u32 %v4586, 16
      %v5975 = vrot.slane %v5973, 5
      %v5976 = vsel %vm336, %v5971, %v5975
      %v5977 = vshrl.u32 %v4586, 16
      %v5979 = vrot.slane %v5977, 4
      %v5980 = vor.u32 %v5979, %v5975
      %v5981 = vrot.slane %v5980, 4
      %v5983 = vshll.u32 %v4587, 16
      %v5985 = vrot.slane %v5983, 5
      %v5986 = vsel %vm336, %v5981, %v5985
      %v5987 = vshrl.u32 %v4587, 16
      %v5989 = vrot.slane %v5987, 4
      %v5990 = vor.u32 %v5989, %v5985
      %v5991 = vrot.slane %v5990, 4
      %v5993 = vshll.u32 %v4588, 16
      %v5995 = vrot.slane %v5993, 5
      %v5996 = vsel %vm336, %v5991, %v5995
      %s5997 = scalar_lea.vmem %s1, 24
      %v5998 = vld [vmem:[%s5997] sm:$0xf]
      %v5999 = vld [vmem:[%s5997 + $0x4] sm:$0x3]
      %v6000 = vunpack.c.l.b16 %v4602
      %v6001 = vunpack.c.l.b16 %v4612
      %v6002 = vunpack.c.l.b16 %v4622
      %v6003 = vunpack.c.l.b16 %v4632
      %v6004 = vunpack.c.l.b16 %v4646
      %v6005 = vunpack.c.l.b16 %v4656
      %v6006 = vunpack.c.l.b16 %v4666
      %v6007 = vunpack.c.l.b16 %v4676
      %v6008 = vunpack.c.l.b16 %v4690
      %v6009 = vunpack.c.l.b16 %v4700
      %v6010 = vunpack.c.l.b16 %v4710
      %v6011 = vunpack.c.l.b16 %v4720
      %v6012 = vunpack.c.l.b16 %v4734
      %v6013 = vunpack.c.l.b16 %v4744
      %v6014 = vunpack.c.l.b16 %v4754
      %v6015 = vunpack.c.l.b16 %v4764
      %v6016 = vunpack.c.l.b16 %v4778
      %v6017 = vunpack.c.l.b16 %v4788
      %v6018 = vunpack.c.l.b16 %v4798
      %v6019 = vunpack.c.l.b16 %v4808
      %v6020 = vunpack.c.l.b16 %v4822
      %v6021 = vunpack.c.l.b16 %v4832
      %v6022 = vunpack.c.l.b16 %v4842
      %v6023 = vunpack.c.l.b16 %v4852
      %v6024 = vunpack.c.l.b16 %v4866
      %v6025 = vunpack.c.l.b16 %v4876
      %v6026 = vunpack.c.l.b16 %v4886
      %v6027 = vunpack.c.l.b16 %v4896
      %v6028 = vunpack.c.l.b16 %v4910
      %v6029 = vunpack.c.l.b16 %v4920
      %v6030 = vunpack.c.l.b16 %v4930
      %v6031 = vunpack.c.l.b16 %v4940
      %v6032 = vunpack.c.l.b16 %v4954
      %v6033 = vunpack.c.l.b16 %v4964
      %v6034 = vunpack.c.l.b16 %v4974
      %v6035 = vunpack.c.l.b16 %v4984
      %v6036 = vunpack.c.l.b16 %v4998
      %v6037 = vunpack.c.l.b16 %v5008
      %v6038 = vunpack.c.l.b16 %v5018
      %v6039 = vunpack.c.l.b16 %v5028
      %v6040 = vunpack.c.l.b16 %v5042
      %v6041 = vunpack.c.l.b16 %v5052
      %v6042 = vunpack.c.l.b16 %v5062
      %v6043 = vunpack.c.l.b16 %v5072
      %v6044 = vunpack.c.l.b16 %v5086
      %v6045 = vunpack.c.l.b16 %v5096
      %v6046 = vunpack.c.l.b16 %v5106
      %v6047 = vunpack.c.l.b16 %v5116
      %v6048 = vunpack.c.l.b16 %v5130
      %v6049 = vunpack.c.l.b16 %v5140
      %v6050 = vunpack.c.l.b16 %v5150
      %v6051 = vunpack.c.l.b16 %v5160
      %v6052 = vunpack.c.l.b16 %v5174
      %v6053 = vunpack.c.l.b16 %v5184
      %v6054 = vunpack.c.l.b16 %v5194
      %v6055 = vunpack.c.l.b16 %v5204
      %v6056 = vunpack.c.l.b16 %v5218
      %v6057 = vunpack.c.l.b16 %v5228
      %v6058 = vunpack.c.l.b16 %v5238
      %v6059 = vunpack.c.l.b16 %v5248
      %v6060 = vunpack.c.l.b16 %v5262
      %v6061 = vunpack.c.l.b16 %v5272
      %v6062 = vunpack.c.l.b16 %v5282
      %v6063 = vunpack.c.l.b16 %v5292
      %v6064 = vunpack.c.l.b16 %v5306
      %v6065 = vunpack.c.l.b16 %v5316
      %v6066 = vunpack.c.l.b16 %v5326
      %v6067 = vunpack.c.l.b16 %v5336
      %v6068 = vunpack.c.l.b16 %v5350
      %v6069 = vunpack.c.l.b16 %v5360
      %v6070 = vunpack.c.l.b16 %v5370
      %v6071 = vunpack.c.l.b16 %v5380
      %v6072 = vunpack.c.l.b16 %v5394
      %v6073 = vunpack.c.l.b16 %v5404
      %v6074 = vunpack.c.l.b16 %v5414
      %v6075 = vunpack.c.l.b16 %v5424
      %v6076 = vunpack.c.l.b16 %v5438
      %v6077 = vunpack.c.l.b16 %v5448
      %v6078 = vunpack.c.l.b16 %v5458
      %v6079 = vunpack.c.l.b16 %v5468
      %v6080 = vunpack.c.l.b16 %v5482
      %v6081 = vunpack.c.l.b16 %v5492
      %v6082 = vunpack.c.l.b16 %v5502
      %v6083 = vunpack.c.l.b16 %v5512
      %v6084 = vunpack.c.l.b16 %v5526
      %v6085 = vunpack.c.l.b16 %v5536
      %v6086 = vunpack.c.l.b16 %v5546
      %v6087 = vunpack.c.l.b16 %v5556
      %v6088 = vunpack.c.l.b16 %v5570
      %v6089 = vunpack.c.l.b16 %v5580
      %v6090 = vunpack.c.l.b16 %v5590
      %v6091 = vunpack.c.l.b16 %v5600
      %v6092 = vunpack.c.l.b16 %v5614
      %v6093 = vunpack.c.l.b16 %v5624
      %v6094 = vunpack.c.l.b16 %v5634
      %v6095 = vunpack.c.l.b16 %v5644
      %v6096 = vunpack.c.l.b16 %v5658
      %v6097 = vunpack.c.l.b16 %v5668
      %v6098 = vunpack.c.l.b16 %v5678
      %v6099 = vunpack.c.l.b16 %v5688
      %v6100 = vunpack.c.l.b16 %v5702
      %v6101 = vunpack.c.l.b16 %v5712
      %v6102 = vunpack.c.l.b16 %v5722
      %v6103 = vunpack.c.l.b16 %v5732
      %v6104 = vunpack.c.l.b16 %v5746
      %v6105 = vunpack.c.l.b16 %v5756
      %v6106 = vunpack.c.l.b16 %v5766
      %v6107 = vunpack.c.l.b16 %v5776
      %v6108 = vunpack.c.l.b16 %v5790
      %v6109 = vunpack.c.l.b16 %v5800
      %v6110 = vunpack.c.l.b16 %v5810
      %v6111 = vunpack.c.l.b16 %v5820
      %v6112 = vunpack.c.l.b16 %v5834
      %v6113 = vunpack.c.l.b16 %v5844
      %v6114 = vunpack.c.l.b16 %v5854
      %v6115 = vunpack.c.l.b16 %v5864
      %v6116 = vunpack.c.l.b16 %v5878
      %v6117 = vunpack.c.l.b16 %v5888
      %v6118 = vunpack.c.l.b16 %v5898
      %v6119 = vunpack.c.l.b16 %v5908
      %v6120 = vunpack.c.l.b16 %v5922
      %v6121 = vunpack.c.l.b16 %v5932
      %v6122 = vunpack.c.l.b16 %v5942
      %v6123 = vunpack.c.l.b16 %v5952
      %v6124 = vunpack.c.l.b16 %v5966
      %v6125 = vunpack.c.l.b16 %v5976
      %v6126 = vunpack.c.l.b16 %v5986
      %v6127 = vunpack.c.l.b16 %v5996
      %v6128 = vpack.c.b16 %v6001, %v6000
      %v6129 = vpack.c.b16 %v6003, %v6002
      %v6130 = vpack.c.b16 %v6005, %v6004
      %v6131 = vpack.c.b16 %v6007, %v6006
      %v6132 = vpack.c.b16 %v6009, %v6008
      %v6133 = vpack.c.b16 %v6011, %v6010
      %v6134 = vpack.c.b16 %v6013, %v6012
      %v6135 = vpack.c.b16 %v6015, %v6014
      %v6136 = vpack.c.b16 %v6017, %v6016
      %v6137 = vpack.c.b16 %v6019, %v6018
      %v6138 = vpack.c.b16 %v6021, %v6020
      %v6139 = vpack.c.b16 %v6023, %v6022
      %v6140 = vpack.c.b16 %v6025, %v6024
      %v6141 = vpack.c.b16 %v6027, %v6026
      %v6142 = vpack.c.b16 %v6029, %v6028
      %v6143 = vpack.c.b16 %v6031, %v6030
      %v6144 = vpack.c.b16 %v6033, %v6032
      %v6145 = vpack.c.b16 %v6035, %v6034
      %v6146 = vpack.c.b16 %v6037, %v6036
      %v6147 = vpack.c.b16 %v6039, %v6038
      %v6148 = vpack.c.b16 %v6041, %v6040
      %v6149 = vpack.c.b16 %v6043, %v6042
      %v6150 = vpack.c.b16 %v6045, %v6044
      %v6151 = vpack.c.b16 %v6047, %v6046
      %v6152 = vpack.c.b16 %v6049, %v6048
      %v6153 = vpack.c.b16 %v6051, %v6050
      %v6154 = vpack.c.b16 %v6053, %v6052
      %v6155 = vpack.c.b16 %v6055, %v6054
      %v6156 = vpack.c.b16 %v6057, %v6056
      %v6157 = vpack.c.b16 %v6059, %v6058
      %v6158 = vpack.c.b16 %v6061, %v6060
      %v6159 = vpack.c.b16 %v6063, %v6062
      %v6160 = vpack.c.b16 %v6065, %v6064
      %v6161 = vpack.c.b16 %v6067, %v6066
      %v6162 = vpack.c.b16 %v6069, %v6068
      %v6163 = vpack.c.b16 %v6071, %v6070
      %v6164 = vpack.c.b16 %v6073, %v6072
      %v6165 = vpack.c.b16 %v6075, %v6074
      %v6166 = vpack.c.b16 %v6077, %v6076
      %v6167 = vpack.c.b16 %v6079, %v6078
      %v6168 = vpack.c.b16 %v6081, %v6080
      %v6169 = vpack.c.b16 %v6083, %v6082
      %v6170 = vpack.c.b16 %v6085, %v6084
      %v6171 = vpack.c.b16 %v6087, %v6086
      %v6172 = vpack.c.b16 %v6089, %v6088
      %v6173 = vpack.c.b16 %v6091, %v6090
      %v6174 = vpack.c.b16 %v6093, %v6092
      %v6175 = vpack.c.b16 %v6095, %v6094
      %v6176 = vpack.c.b16 %v6097, %v6096
      %v6177 = vpack.c.b16 %v6099, %v6098
      %v6178 = vpack.c.b16 %v6101, %v6100
      %v6179 = vpack.c.b16 %v6103, %v6102
      %v6180 = vpack.c.b16 %v6105, %v6104
      %v6181 = vpack.c.b16 %v6107, %v6106
      %v6182 = vpack.c.b16 %v6109, %v6108
      %v6183 = vpack.c.b16 %v6111, %v6110
      %v6184 = vpack.c.b16 %v6113, %v6112
      %v6185 = vpack.c.b16 %v6115, %v6114
      %v6186 = vpack.c.b16 %v6117, %v6116
      %v6187 = vpack.c.b16 %v6119, %v6118
      %v6188 = vpack.c.b16 %v6121, %v6120
      %v6189 = vpack.c.b16 %v6123, %v6122
      %v6190 = vpack.c.b16 %v6125, %v6124
      %v6191 = vpack.c.b16 %v6127, %v6126
      %v6194 = vunpack.c.l.b16 %v5998
      %v6195 = vunpack.c.l.b16 %v5999
      %v6196 = vpack.c.b16 %v6195, %v6194
      %v6198 = vsel %vm1945, %v6128, 0
      %v6201 = vsel %vm1945, %v6129, 0
      %v6204 = vsel %vm1945, %v6130, 0
      %v6207 = vsel %vm1945, %v6131, 0
      %v6210 = vsel %vm1945, %v6132, 0
      %v6213 = vsel %vm1945, %v6133, 0
      %v6216 = vsel %vm1945, %v6134, 0
      %v6219 = vsel %vm1945, %v6135, 0
      %v6222 = vsel %vm1945, %v6136, 0
      %v6225 = vsel %vm1945, %v6137, 0
      %v6228 = vsel %vm1945, %v6138, 0
      %v6231 = vsel %vm1945, %v6139, 0
      %v6234 = vsel %vm1945, %v6140, 0
      %v6237 = vsel %vm1945, %v6141, 0
      %v6240 = vsel %vm1945, %v6142, 0
      %v6243 = vsel %vm1945, %v6143, 0
      %v6246 = vsel %vm1945, %v6144, 0
      %v6249 = vsel %vm1945, %v6145, 0
      %v6252 = vsel %vm1945, %v6146, 0
      %v6255 = vsel %vm1945, %v6147, 0
      %v6258 = vsel %vm1945, %v6148, 0
      %v6261 = vsel %vm1945, %v6149, 0
      %v6264 = vsel %vm1945, %v6150, 0
      %v6267 = vsel %vm1945, %v6151, 0
      %v6270 = vsel %vm1945, %v6152, 0
      %v6273 = vsel %vm1945, %v6153, 0
      %v6276 = vsel %vm1945, %v6154, 0
      %v6279 = vsel %vm1945, %v6155, 0
      %v6282 = vsel %vm1945, %v6156, 0
      %v6285 = vsel %vm1945, %v6157, 0
      %v6288 = vsel %vm1945, %v6158, 0
      %v6291 = vsel %vm1945, %v6159, 0
      %v6294 = vsel %vm1945, %v6160, 0
      %v6297 = vsel %vm1945, %v6161, 0
      %v6300 = vsel %vm1945, %v6162, 0
      %v6303 = vsel %vm1945, %v6163, 0
      %v6306 = vsel %vm1945, %v6164, 0
      %v6309 = vsel %vm1945, %v6165, 0
      %v6312 = vsel %vm1945, %v6166, 0
      %v6315 = vsel %vm1945, %v6167, 0
      %v6318 = vsel %vm1945, %v6168, 0
      %v6321 = vsel %vm1945, %v6169, 0
      %v6324 = vsel %vm1945, %v6170, 0
      %v6327 = vsel %vm1945, %v6171, 0
      %v6330 = vsel %vm1945, %v6172, 0
      %v6333 = vsel %vm1945, %v6173, 0
      %v6336 = vsel %vm1945, %v6174, 0
      %v6339 = vsel %vm1945, %v6175, 0
      %v6342 = vsel %vm1945, %v6176, 0
      %v6345 = vsel %vm1945, %v6177, 0
      %v6348 = vsel %vm1945, %v6178, 0
      %v6351 = vsel %vm1945, %v6179, 0
      %v6354 = vsel %vm1945, %v6180, 0
      %v6357 = vsel %vm1945, %v6181, 0
      %v6360 = vsel %vm1945, %v6182, 0
      %v6363 = vsel %vm1945, %v6183, 0
      %v6366 = vsel %vm1945, %v6184, 0
      %v6369 = vsel %vm1945, %v6185, 0
      %v6372 = vsel %vm1945, %v6186, 0
      %v6375 = vsel %vm1945, %v6187, 0
      %v6378 = vsel %vm1945, %v6188, 0
      %v6381 = vsel %vm1945, %v6189, 0
      %v6384 = vsel %vm1945, %v6190, 0
      %v6387 = vsel %vm1945, %v6191, 0
      %v6390 = vsel %vm2138, %v6196, 0
      %6392 = vmatpush.bf16.msra.mxu0 0
      %6393 = vmatpush.bf16.msra.mxu0 0
      %6394 = vmatpush.bf16.msra.mxu0 0
      %6395 = vmatpush.bf16.msra.mxu0 0
      %6396 = vmatpush.bf16.msra.mxu0 0
      %6397 = vmatpush.bf16.msra.mxu0 0
      %6398 = vmatpush.bf16.msra.mxu0 0
      %6399 = vmatpush.bf16.msra.mxu0 %v6390
      %6400 = vmatmul.bf16.gmra.mxu0 %v6198
      %v6401 = vpop.f32.mrf.mxu0
      %v6402 = vadd.f32 0.0, %v6401
      %v6403 = vpop.f32.mrf.mxu0
      %v6404 = vadd.f32 0.0, %v6403
      %6405 = vmatmul.bf16.gmra.mxu0 %v6201
      %v6406 = vpop.f32.mrf.mxu0
      %v6407 = vadd.f32 0.0, %v6406
      %v6408 = vpop.f32.mrf.mxu0
      %v6409 = vadd.f32 0.0, %v6408
      %6410 = vmatmul.bf16.gmra.mxu0 %v6204
      %v6411 = vpop.f32.mrf.mxu0
      %v6412 = vadd.f32 0.0, %v6411
      %v6413 = vpop.f32.mrf.mxu0
      %v6414 = vadd.f32 0.0, %v6413
      %6415 = vmatmul.bf16.gmra.mxu0 %v6207
      %v6416 = vpop.f32.mrf.mxu0
      %v6417 = vadd.f32 0.0, %v6416
      %v6418 = vpop.f32.mrf.mxu0
      %v6419 = vadd.f32 0.0, %v6418
      %6420 = vmatmul.bf16.gmra.mxu0 %v6210
      %v6421 = vpop.f32.mrf.mxu0
      %v6422 = vadd.f32 0.0, %v6421
      %v6423 = vpop.f32.mrf.mxu0
      %v6424 = vadd.f32 0.0, %v6423
      %6425 = vmatmul.bf16.gmra.mxu0 %v6213
      %v6426 = vpop.f32.mrf.mxu0
      %v6427 = vadd.f32 0.0, %v6426
      %v6428 = vpop.f32.mrf.mxu0
      %v6429 = vadd.f32 0.0, %v6428
      %6430 = vmatmul.bf16.gmra.mxu0 %v6216
      %v6431 = vpop.f32.mrf.mxu0
      %v6432 = vadd.f32 0.0, %v6431
      %v6433 = vpop.f32.mrf.mxu0
      %v6434 = vadd.f32 0.0, %v6433
      %6435 = vmatmul.bf16.gmra.mxu0 %v6219
      %v6436 = vpop.f32.mrf.mxu0
      %v6437 = vadd.f32 0.0, %v6436
      %v6438 = vpop.f32.mrf.mxu0
      %v6439 = vadd.f32 0.0, %v6438
      %6440 = vmatmul.bf16.gmra.mxu0 %v6222
      %v6441 = vpop.f32.mrf.mxu0
      %v6442 = vadd.f32 0.0, %v6441
      %v6443 = vpop.f32.mrf.mxu0
      %v6444 = vadd.f32 0.0, %v6443
      %6445 = vmatmul.bf16.gmra.mxu0 %v6225
      %v6446 = vpop.f32.mrf.mxu0
      %v6447 = vadd.f32 0.0, %v6446
      %v6448 = vpop.f32.mrf.mxu0
      %v6449 = vadd.f32 0.0, %v6448
      %6450 = vmatmul.bf16.gmra.mxu0 %v6228
      %v6451 = vpop.f32.mrf.mxu0
      %v6452 = vadd.f32 0.0, %v6451
      %v6453 = vpop.f32.mrf.mxu0
      %v6454 = vadd.f32 0.0, %v6453
      %6455 = vmatmul.bf16.gmra.mxu0 %v6231
      %v6456 = vpop.f32.mrf.mxu0
      %v6457 = vadd.f32 0.0, %v6456
      %v6458 = vpop.f32.mrf.mxu0
      %v6459 = vadd.f32 0.0, %v6458
      %6460 = vmatmul.bf16.gmra.mxu0 %v6234
      %v6461 = vpop.f32.mrf.mxu0
      %v6462 = vadd.f32 0.0, %v6461
      %v6463 = vpop.f32.mrf.mxu0
      %v6464 = vadd.f32 0.0, %v6463
      %6465 = vmatmul.bf16.gmra.mxu0 %v6237
      %v6466 = vpop.f32.mrf.mxu0
      %v6467 = vadd.f32 0.0, %v6466
      %v6468 = vpop.f32.mrf.mxu0
      %v6469 = vadd.f32 0.0, %v6468
      %6470 = vmatmul.bf16.gmra.mxu0 %v6240
      %v6471 = vpop.f32.mrf.mxu0
      %v6472 = vadd.f32 0.0, %v6471
      %v6473 = vpop.f32.mrf.mxu0
      %v6474 = vadd.f32 0.0, %v6473
      %6475 = vmatmul.bf16.gmra.mxu0 %v6243
      %v6476 = vpop.f32.mrf.mxu0
      %v6477 = vadd.f32 0.0, %v6476
      %v6478 = vpop.f32.mrf.mxu0
      %v6479 = vadd.f32 0.0, %v6478
      %6480 = vmatmul.bf16.gmra.mxu0 %v6246
      %v6481 = vpop.f32.mrf.mxu0
      %v6482 = vadd.f32 0.0, %v6481
      %v6483 = vpop.f32.mrf.mxu0
      %v6484 = vadd.f32 0.0, %v6483
      %6485 = vmatmul.bf16.gmra.mxu0 %v6249
      %v6486 = vpop.f32.mrf.mxu0
      %v6487 = vadd.f32 0.0, %v6486
      %v6488 = vpop.f32.mrf.mxu0
      %v6489 = vadd.f32 0.0, %v6488
      %6490 = vmatmul.bf16.gmra.mxu0 %v6252
      %v6491 = vpop.f32.mrf.mxu0
      %v6492 = vadd.f32 0.0, %v6491
      %v6493 = vpop.f32.mrf.mxu0
      %v6494 = vadd.f32 0.0, %v6493
      %6495 = vmatmul.bf16.gmra.mxu0 %v6255
      %v6496 = vpop.f32.mrf.mxu0
      %v6497 = vadd.f32 0.0, %v6496
      %v6498 = vpop.f32.mrf.mxu0
      %v6499 = vadd.f32 0.0, %v6498
      %6500 = vmatmul.bf16.gmra.mxu0 %v6258
      %v6501 = vpop.f32.mrf.mxu0
      %v6502 = vadd.f32 0.0, %v6501
      %v6503 = vpop.f32.mrf.mxu0
      %v6504 = vadd.f32 0.0, %v6503
      %6505 = vmatmul.bf16.gmra.mxu0 %v6261
      %v6506 = vpop.f32.mrf.mxu0
      %v6507 = vadd.f32 0.0, %v6506
      %v6508 = vpop.f32.mrf.mxu0
      %v6509 = vadd.f32 0.0, %v6508
      %6510 = vmatmul.bf16.gmra.mxu0 %v6264
      %v6511 = vpop.f32.mrf.mxu0
      %v6512 = vadd.f32 0.0, %v6511
      %v6513 = vpop.f32.mrf.mxu0
      %v6514 = vadd.f32 0.0, %v6513
      %6515 = vmatmul.bf16.gmra.mxu0 %v6267
      %v6516 = vpop.f32.mrf.mxu0
      %v6517 = vadd.f32 0.0, %v6516
      %v6518 = vpop.f32.mrf.mxu0
      %v6519 = vadd.f32 0.0, %v6518
      %6520 = vmatmul.bf16.gmra.mxu0 %v6270
      %v6521 = vpop.f32.mrf.mxu0
      %v6522 = vadd.f32 0.0, %v6521
      %v6523 = vpop.f32.mrf.mxu0
      %v6524 = vadd.f32 0.0, %v6523
      %6525 = vmatmul.bf16.gmra.mxu0 %v6273
      %v6526 = vpop.f32.mrf.mxu0
      %v6527 = vadd.f32 0.0, %v6526
      %v6528 = vpop.f32.mrf.mxu0
      %v6529 = vadd.f32 0.0, %v6528
      %6530 = vmatmul.bf16.gmra.mxu0 %v6276
      %v6531 = vpop.f32.mrf.mxu0
      %v6532 = vadd.f32 0.0, %v6531
      %v6533 = vpop.f32.mrf.mxu0
      %v6534 = vadd.f32 0.0, %v6533
      %6535 = vmatmul.bf16.gmra.mxu0 %v6279
      %v6536 = vpop.f32.mrf.mxu0
      %v6537 = vadd.f32 0.0, %v6536
      %v6538 = vpop.f32.mrf.mxu0
      %v6539 = vadd.f32 0.0, %v6538
      %6540 = vmatmul.bf16.gmra.mxu0 %v6282
      %v6541 = vpop.f32.mrf.mxu0
      %v6542 = vadd.f32 0.0, %v6541
      %v6543 = vpop.f32.mrf.mxu0
      %v6544 = vadd.f32 0.0, %v6543
      %6545 = vmatmul.bf16.gmra.mxu0 %v6285
      %v6546 = vpop.f32.mrf.mxu0
      %v6547 = vadd.f32 0.0, %v6546
      %v6548 = vpop.f32.mrf.mxu0
      %v6549 = vadd.f32 0.0, %v6548
      %6550 = vmatmul.bf16.gmra.mxu0 %v6288
      %v6551 = vpop.f32.mrf.mxu0
      %v6552 = vadd.f32 0.0, %v6551
      %v6553 = vpop.f32.mrf.mxu0
      %v6554 = vadd.f32 0.0, %v6553
      %6555 = vmatmul.bf16.gmra.mxu0 %v6291
      %v6556 = vpop.f32.mrf.mxu0
      %v6557 = vadd.f32 0.0, %v6556
      %v6558 = vpop.f32.mrf.mxu0
      %v6559 = vadd.f32 0.0, %v6558
      %6560 = vmatmul.bf16.gmra.mxu0 %v6294
      %v6561 = vpop.f32.mrf.mxu0
      %v6562 = vadd.f32 0.0, %v6561
      %v6563 = vpop.f32.mrf.mxu0
      %v6564 = vadd.f32 0.0, %v6563
      %6565 = vmatmul.bf16.gmra.mxu0 %v6297
      %v6566 = vpop.f32.mrf.mxu0
      %v6567 = vadd.f32 0.0, %v6566
      %v6568 = vpop.f32.mrf.mxu0
      %v6569 = vadd.f32 0.0, %v6568
      %6570 = vmatmul.bf16.gmra.mxu0 %v6300
      %v6571 = vpop.f32.mrf.mxu0
      %v6572 = vadd.f32 0.0, %v6571
      %v6573 = vpop.f32.mrf.mxu0
      %v6574 = vadd.f32 0.0, %v6573
      %6575 = vmatmul.bf16.gmra.mxu0 %v6303
      %v6576 = vpop.f32.mrf.mxu0
      %v6577 = vadd.f32 0.0, %v6576
      %v6578 = vpop.f32.mrf.mxu0
      %v6579 = vadd.f32 0.0, %v6578
      %6580 = vmatmul.bf16.gmra.mxu0 %v6306
      %v6581 = vpop.f32.mrf.mxu0
      %v6582 = vadd.f32 0.0, %v6581
      %v6583 = vpop.f32.mrf.mxu0
      %v6584 = vadd.f32 0.0, %v6583
      %6585 = vmatmul.bf16.gmra.mxu0 %v6309
      %v6586 = vpop.f32.mrf.mxu0
      %v6587 = vadd.f32 0.0, %v6586
      %v6588 = vpop.f32.mrf.mxu0
      %v6589 = vadd.f32 0.0, %v6588
      %6590 = vmatmul.bf16.gmra.mxu0 %v6312
      %v6591 = vpop.f32.mrf.mxu0
      %v6592 = vadd.f32 0.0, %v6591
      %v6593 = vpop.f32.mrf.mxu0
      %v6594 = vadd.f32 0.0, %v6593
      %6595 = vmatmul.bf16.gmra.mxu0 %v6315
      %v6596 = vpop.f32.mrf.mxu0
      %v6597 = vadd.f32 0.0, %v6596
      %v6598 = vpop.f32.mrf.mxu0
      %v6599 = vadd.f32 0.0, %v6598
      %6600 = vmatmul.bf16.gmra.mxu0 %v6318
      %v6601 = vpop.f32.mrf.mxu0
      %v6602 = vadd.f32 0.0, %v6601
      %v6603 = vpop.f32.mrf.mxu0
      %v6604 = vadd.f32 0.0, %v6603
      %6605 = vmatmul.bf16.gmra.mxu0 %v6321
      %v6606 = vpop.f32.mrf.mxu0
      %v6607 = vadd.f32 0.0, %v6606
      %v6608 = vpop.f32.mrf.mxu0
      %v6609 = vadd.f32 0.0, %v6608
      %6610 = vmatmul.bf16.gmra.mxu0 %v6324
      %v6611 = vpop.f32.mrf.mxu0
      %v6612 = vadd.f32 0.0, %v6611
      %v6613 = vpop.f32.mrf.mxu0
      %v6614 = vadd.f32 0.0, %v6613
      %6615 = vmatmul.bf16.gmra.mxu0 %v6327
      %v6616 = vpop.f32.mrf.mxu0
      %v6617 = vadd.f32 0.0, %v6616
      %v6618 = vpop.f32.mrf.mxu0
      %v6619 = vadd.f32 0.0, %v6618
      %6620 = vmatmul.bf16.gmra.mxu0 %v6330
      %v6621 = vpop.f32.mrf.mxu0
      %v6622 = vadd.f32 0.0, %v6621
      %v6623 = vpop.f32.mrf.mxu0
      %v6624 = vadd.f32 0.0, %v6623
      %6625 = vmatmul.bf16.gmra.mxu0 %v6333
      %v6626 = vpop.f32.mrf.mxu0
      %v6627 = vadd.f32 0.0, %v6626
      %v6628 = vpop.f32.mrf.mxu0
      %v6629 = vadd.f32 0.0, %v6628
      %6630 = vmatmul.bf16.gmra.mxu0 %v6336
      %v6631 = vpop.f32.mrf.mxu0
      %v6632 = vadd.f32 0.0, %v6631
      %v6633 = vpop.f32.mrf.mxu0
      %v6634 = vadd.f32 0.0, %v6633
      %6635 = vmatmul.bf16.gmra.mxu0 %v6339
      %v6636 = vpop.f32.mrf.mxu0
      %v6637 = vadd.f32 0.0, %v6636
      %v6638 = vpop.f32.mrf.mxu0
      %v6639 = vadd.f32 0.0, %v6638
      %6640 = vmatmul.bf16.gmra.mxu0 %v6342
      %v6641 = vpop.f32.mrf.mxu0
      %v6642 = vadd.f32 0.0, %v6641
      %v6643 = vpop.f32.mrf.mxu0
      %v6644 = vadd.f32 0.0, %v6643
      %6645 = vmatmul.bf16.gmra.mxu0 %v6345
      %v6646 = vpop.f32.mrf.mxu0
      %v6647 = vadd.f32 0.0, %v6646
      %v6648 = vpop.f32.mrf.mxu0
      %v6649 = vadd.f32 0.0, %v6648
      %6650 = vmatmul.bf16.gmra.mxu0 %v6348
      %v6651 = vpop.f32.mrf.mxu0
      %v6652 = vadd.f32 0.0, %v6651
      %v6653 = vpop.f32.mrf.mxu0
      %v6654 = vadd.f32 0.0, %v6653
      %6655 = vmatmul.bf16.gmra.mxu0 %v6351
      %v6656 = vpop.f32.mrf.mxu0
      %v6657 = vadd.f32 0.0, %v6656
      %v6658 = vpop.f32.mrf.mxu0
      %v6659 = vadd.f32 0.0, %v6658
      %6660 = vmatmul.bf16.gmra.mxu0 %v6354
      %v6661 = vpop.f32.mrf.mxu0
      %v6662 = vadd.f32 0.0, %v6661
      %v6663 = vpop.f32.mrf.mxu0
      %v6664 = vadd.f32 0.0, %v6663
      %6665 = vmatmul.bf16.gmra.mxu0 %v6357
      %v6666 = vpop.f32.mrf.mxu0
      %v6667 = vadd.f32 0.0, %v6666
      %v6668 = vpop.f32.mrf.mxu0
      %v6669 = vadd.f32 0.0, %v6668
      %6670 = vmatmul.bf16.gmra.mxu0 %v6360
      %v6671 = vpop.f32.mrf.mxu0
      %v6672 = vadd.f32 0.0, %v6671
      %v6673 = vpop.f32.mrf.mxu0
      %v6674 = vadd.f32 0.0, %v6673
      %6675 = vmatmul.bf16.gmra.mxu0 %v6363
      %v6676 = vpop.f32.mrf.mxu0
      %v6677 = vadd.f32 0.0, %v6676
      %v6678 = vpop.f32.mrf.mxu0
      %v6679 = vadd.f32 0.0, %v6678
      %6680 = vmatmul.bf16.gmra.mxu0 %v6366
      %v6681 = vpop.f32.mrf.mxu0
      %v6682 = vadd.f32 0.0, %v6681
      %v6683 = vpop.f32.mrf.mxu0
      %v6684 = vadd.f32 0.0, %v6683
      %6685 = vmatmul.bf16.gmra.mxu0 %v6369
      %v6686 = vpop.f32.mrf.mxu0
      %v6687 = vadd.f32 0.0, %v6686
      %v6688 = vpop.f32.mrf.mxu0
      %v6689 = vadd.f32 0.0, %v6688
      %6690 = vmatmul.bf16.gmra.mxu0 %v6372
      %v6691 = vpop.f32.mrf.mxu0
      %v6692 = vadd.f32 0.0, %v6691
      %v6693 = vpop.f32.mrf.mxu0
      %v6694 = vadd.f32 0.0, %v6693
      %6695 = vmatmul.bf16.gmra.mxu0 %v6375
      %v6696 = vpop.f32.mrf.mxu0
      %v6697 = vadd.f32 0.0, %v6696
      %v6698 = vpop.f32.mrf.mxu0
      %v6699 = vadd.f32 0.0, %v6698
      %6700 = vmatmul.bf16.gmra.mxu0 %v6378
      %v6701 = vpop.f32.mrf.mxu0
      %v6702 = vadd.f32 0.0, %v6701
      %v6703 = vpop.f32.mrf.mxu0
      %v6704 = vadd.f32 0.0, %v6703
      %6705 = vmatmul.bf16.gmra.mxu0 %v6381
      %v6706 = vpop.f32.mrf.mxu0
      %v6707 = vadd.f32 0.0, %v6706
      %v6708 = vpop.f32.mrf.mxu0
      %v6709 = vadd.f32 0.0, %v6708
      %6710 = vmatmul.bf16.gmra.mxu0 %v6384
      %v6711 = vpop.f32.mrf.mxu0
      %v6712 = vadd.f32 0.0, %v6711
      %v6713 = vpop.f32.mrf.mxu0
      %v6714 = vadd.f32 0.0, %v6713
      %6715 = vmatmul.bf16.gmra.mxu0 %v6387
      %v6716 = vpop.f32.mrf.mxu0
      %v6717 = vadd.f32 0.0, %v6716
      %v6718 = vpop.f32.mrf.mxu0
      %v6719 = vadd.f32 0.0, %v6718
      %6720 = vdwg.mxu0
      %v6721 = vadd.f32 %v4301, %v6402
      %v6722 = vadd.f32 %v4302, %v6404
      %v6723 = vadd.f32 %v4303, %v6407
      %v6724 = vadd.f32 %v4304, %v6409
      %v6725 = vadd.f32 %v4305, %v6412
      %v6726 = vadd.f32 %v4306, %v6414
      %v6727 = vadd.f32 %v4307, %v6417
      %v6728 = vadd.f32 %v4308, %v6419
      %v6729 = vadd.f32 %v4309, %v6422
      %v6730 = vadd.f32 %v4310, %v6424
      %v6731 = vadd.f32 %v4311, %v6427
      %v6732 = vadd.f32 %v4312, %v6429
      %v6733 = vadd.f32 %v4313, %v6432
      %v6734 = vadd.f32 %v4314, %v6434
      %v6735 = vadd.f32 %v4315, %v6437
      %v6736 = vadd.f32 %v4316, %v6439
      %v6737 = vadd.f32 %v4317, %v6442
      %v6738 = vadd.f32 %v4318, %v6444
      %v6739 = vadd.f32 %v4319, %v6447
      %v6740 = vadd.f32 %v4320, %v6449
      %v6741 = vadd.f32 %v4321, %v6452
      %v6742 = vadd.f32 %v4322, %v6454
      %v6743 = vadd.f32 %v4323, %v6457
      %v6744 = vadd.f32 %v4324, %v6459
      %v6745 = vadd.f32 %v4325, %v6462
      %v6746 = vadd.f32 %v4326, %v6464
      %v6747 = vadd.f32 %v4327, %v6467
      %v6748 = vadd.f32 %v4328, %v6469
      %v6749 = vadd.f32 %v4329, %v6472
      %v6750 = vadd.f32 %v4330, %v6474
      %v6751 = vadd.f32 %v4331, %v6477
      %v6752 = vadd.f32 %v4332, %v6479
      %v6753 = vadd.f32 %v4333, %v6482
      %v6754 = vadd.f32 %v4334, %v6484
      %v6755 = vadd.f32 %v4335, %v6487
      %v6756 = vadd.f32 %v4336, %v6489
      %v6757 = vadd.f32 %v4337, %v6492
      %v6758 = vadd.f32 %v4338, %v6494
      %v6759 = vadd.f32 %v4339, %v6497
      %v6760 = vadd.f32 %v4340, %v6499
      %v6761 = vadd.f32 %v4341, %v6502
      %v6762 = vadd.f32 %v4342, %v6504
      %v6763 = vadd.f32 %v4343, %v6507
      %v6764 = vadd.f32 %v4344, %v6509
      %v6765 = vadd.f32 %v4345, %v6512
      %v6766 = vadd.f32 %v4346, %v6514
      %v6767 = vadd.f32 %v4347, %v6517
      %v6768 = vadd.f32 %v4348, %v6519
      %v6769 = vadd.f32 %v4349, %v6522
      %v6770 = vadd.f32 %v4350, %v6524
      %v6771 = vadd.f32 %v4351, %v6527
      %v6772 = vadd.f32 %v4352, %v6529
      %v6773 = vadd.f32 %v4353, %v6532
      %v6774 = vadd.f32 %v4354, %v6534
      %v6775 = vadd.f32 %v4355, %v6537
      %v6776 = vadd.f32 %v4356, %v6539
      %v6777 = vadd.f32 %v4357, %v6542
      %v6778 = vadd.f32 %v4358, %v6544
      %v6779 = vadd.f32 %v4359, %v6547
      %v6780 = vadd.f32 %v4360, %v6549
      %v6781 = vadd.f32 %v4361, %v6552
      %v6782 = vadd.f32 %v4362, %v6554
      %v6783 = vadd.f32 %v4363, %v6557
      %v6784 = vadd.f32 %v4364, %v6559
      %v6785 = vadd.f32 %v4365, %v6562
      %v6786 = vadd.f32 %v4366, %v6564
      %v6787 = vadd.f32 %v4367, %v6567
      %v6788 = vadd.f32 %v4368, %v6569
      %v6789 = vadd.f32 %v4369, %v6572
      %v6790 = vadd.f32 %v4370, %v6574
      %v6791 = vadd.f32 %v4371, %v6577
      %v6792 = vadd.f32 %v4372, %v6579
      %v6793 = vadd.f32 %v4373, %v6582
      %v6794 = vadd.f32 %v4374, %v6584
      %v6795 = vadd.f32 %v4375, %v6587
      %v6796 = vadd.f32 %v4376, %v6589
      %v6797 = vadd.f32 %v4377, %v6592
      %v6798 = vadd.f32 %v4378, %v6594
      %v6799 = vadd.f32 %v4379, %v6597
      %v6800 = vadd.f32 %v4380, %v6599
      %v6801 = vadd.f32 %v4381, %v6602
      %v6802 = vadd.f32 %v4382, %v6604
      %v6803 = vadd.f32 %v4383, %v6607
      %v6804 = vadd.f32 %v4384, %v6609
      %v6805 = vadd.f32 %v4385, %v6612
      %v6806 = vadd.f32 %v4386, %v6614
      %v6807 = vadd.f32 %v4387, %v6617
      %v6808 = vadd.f32 %v4388, %v6619
      %v6809 = vadd.f32 %v4389, %v6622
      %v6810 = vadd.f32 %v4390, %v6624
      %v6811 = vadd.f32 %v4391, %v6627
      %v6812 = vadd.f32 %v4392, %v6629
      %v6813 = vadd.f32 %v4393, %v6632
      %v6814 = vadd.f32 %v4394, %v6634
      %v6815 = vadd.f32 %v4395, %v6637
      %v6816 = vadd.f32 %v4396, %v6639
      %v6817 = vadd.f32 %v4397, %v6642
      %v6818 = vadd.f32 %v4398, %v6644
      %v6819 = vadd.f32 %v4399, %v6647
      %v6820 = vadd.f32 %v4400, %v6649
      %v6821 = vadd.f32 %v4401, %v6652
      %v6822 = vadd.f32 %v4402, %v6654
      %v6823 = vadd.f32 %v4403, %v6657
      %v6824 = vadd.f32 %v4404, %v6659
      %v6825 = vadd.f32 %v4405, %v6662
      %v6826 = vadd.f32 %v4406, %v6664
      %v6827 = vadd.f32 %v4407, %v6667
      %v6828 = vadd.f32 %v4408, %v6669
      %v6829 = vadd.f32 %v4409, %v6672
      %v6830 = vadd.f32 %v4410, %v6674
      %v6831 = vadd.f32 %v4411, %v6677
      %v6832 = vadd.f32 %v4412, %v6679
      %v6833 = vadd.f32 %v4413, %v6682
      %v6834 = vadd.f32 %v4414, %v6684
      %v6835 = vadd.f32 %v4415, %v6687
      %v6836 = vadd.f32 %v4416, %v6689
      %v6837 = vadd.f32 %v4417, %v6692
      %v6838 = vadd.f32 %v4418, %v6694
      %v6839 = vadd.f32 %v4419, %v6697
      %v6840 = vadd.f32 %v4420, %v6699
      %v6841 = vadd.f32 %v4421, %v6702
      %v6842 = vadd.f32 %v4422, %v6704
      %v6843 = vadd.f32 %v4423, %v6707
      %v6844 = vadd.f32 %v4424, %v6709
      %v6845 = vadd.f32 %v4425, %v6712
      %v6846 = vadd.f32 %v4426, %v6714
      %v6847 = vadd.f32 %v4427, %v6717
      %v6848 = vadd.f32 %v4428, %v6719
      %v6849 = vld [vmem:[%s2] sm:$0x1]
      %v6851 = vperm.slane %v6849, 0
      %v6853 = vadd.f32 %v6721, %v6851
      %v6854 = vadd.f32 %v6722, %v6851
      %v6855 = vadd.f32 %v6723, %v6851
      %v6856 = vadd.f32 %v6724, %v6851
      %v6857 = vadd.f32 %v6725, %v6851
      %v6858 = vadd.f32 %v6726, %v6851
      %v6859 = vadd.f32 %v6727, %v6851
      %v6860 = vadd.f32 %v6728, %v6851
      %v6861 = vadd.f32 %v6729, %v6851
      %v6862 = vadd.f32 %v6730, %v6851
      %v6863 = vadd.f32 %v6731, %v6851
      %v6864 = vadd.f32 %v6732, %v6851
      %v6865 = vadd.f32 %v6733, %v6851
      %v6866 = vadd.f32 %v6734, %v6851
      %v6867 = vadd.f32 %v6735, %v6851
      %v6868 = vadd.f32 %v6736, %v6851
      %v6869 = vadd.f32 %v6737, %v6851
      %v6870 = vadd.f32 %v6738, %v6851
      %v6871 = vadd.f32 %v6739, %v6851
      %v6872 = vadd.f32 %v6740, %v6851
      %v6873 = vadd.f32 %v6741, %v6851
      %v6874 = vadd.f32 %v6742, %v6851
      %v6875 = vadd.f32 %v6743, %v6851
      %v6876 = vadd.f32 %v6744, %v6851
      %v6877 = vadd.f32 %v6745, %v6851
      %v6878 = vadd.f32 %v6746, %v6851
      %v6879 = vadd.f32 %v6747, %v6851
      %v6880 = vadd.f32 %v6748, %v6851
      %v6881 = vadd.f32 %v6749, %v6851
      %v6882 = vadd.f32 %v6750, %v6851
      %v6883 = vadd.f32 %v6751, %v6851
      %v6884 = vadd.f32 %v6752, %v6851
      %v6885 = vadd.f32 %v6753, %v6851
      %v6886 = vadd.f32 %v6754, %v6851
      %v6887 = vadd.f32 %v6755, %v6851
      %v6888 = vadd.f32 %v6756, %v6851
      %v6889 = vadd.f32 %v6757, %v6851
      %v6890 = vadd.f32 %v6758, %v6851
      %v6891 = vadd.f32 %v6759, %v6851
      %v6892 = vadd.f32 %v6760, %v6851
      %v6893 = vadd.f32 %v6761, %v6851
      %v6894 = vadd.f32 %v6762, %v6851
      %v6895 = vadd.f32 %v6763, %v6851
      %v6896 = vadd.f32 %v6764, %v6851
      %v6897 = vadd.f32 %v6765, %v6851
      %v6898 = vadd.f32 %v6766, %v6851
      %v6899 = vadd.f32 %v6767, %v6851
      %v6900 = vadd.f32 %v6768, %v6851
      %v6901 = vadd.f32 %v6769, %v6851
      %v6902 = vadd.f32 %v6770, %v6851
      %v6903 = vadd.f32 %v6771, %v6851
      %v6904 = vadd.f32 %v6772, %v6851
      %v6905 = vadd.f32 %v6773, %v6851
      %v6906 = vadd.f32 %v6774, %v6851
      %v6907 = vadd.f32 %v6775, %v6851
      %v6908 = vadd.f32 %v6776, %v6851
      %v6909 = vadd.f32 %v6777, %v6851
      %v6910 = vadd.f32 %v6778, %v6851
      %v6911 = vadd.f32 %v6779, %v6851
      %v6912 = vadd.f32 %v6780, %v6851
      %v6913 = vadd.f32 %v6781, %v6851
      %v6914 = vadd.f32 %v6782, %v6851
      %v6915 = vadd.f32 %v6783, %v6851
      %v6916 = vadd.f32 %v6784, %v6851
      %v6917 = vadd.f32 %v6785, %v6851
      %v6918 = vadd.f32 %v6786, %v6851
      %v6919 = vadd.f32 %v6787, %v6851
      %v6920 = vadd.f32 %v6788, %v6851
      %v6921 = vadd.f32 %v6789, %v6851
      %v6922 = vadd.f32 %v6790, %v6851
      %v6923 = vadd.f32 %v6791, %v6851
      %v6924 = vadd.f32 %v6792, %v6851
      %v6925 = vadd.f32 %v6793, %v6851
      %v6926 = vadd.f32 %v6794, %v6851
      %v6927 = vadd.f32 %v6795, %v6851
      %v6928 = vadd.f32 %v6796, %v6851
      %v6929 = vadd.f32 %v6797, %v6851
      %v6930 = vadd.f32 %v6798, %v6851
      %v6931 = vadd.f32 %v6799, %v6851
      %v6932 = vadd.f32 %v6800, %v6851
      %v6933 = vadd.f32 %v6801, %v6851
      %v6934 = vadd.f32 %v6802, %v6851
      %v6935 = vadd.f32 %v6803, %v6851
      %v6936 = vadd.f32 %v6804, %v6851
      %v6937 = vadd.f32 %v6805, %v6851
      %v6938 = vadd.f32 %v6806, %v6851
      %v6939 = vadd.f32 %v6807, %v6851
      %v6940 = vadd.f32 %v6808, %v6851
      %v6941 = vadd.f32 %v6809, %v6851
      %v6942 = vadd.f32 %v6810, %v6851
      %v6943 = vadd.f32 %v6811, %v6851
      %v6944 = vadd.f32 %v6812, %v6851
      %v6945 = vadd.f32 %v6813, %v6851
      %v6946 = vadd.f32 %v6814, %v6851
      %v6947 = vadd.f32 %v6815, %v6851
      %v6948 = vadd.f32 %v6816, %v6851
      %v6949 = vadd.f32 %v6817, %v6851
      %v6950 = vadd.f32 %v6818, %v6851
      %v6951 = vadd.f32 %v6819, %v6851
      %v6952 = vadd.f32 %v6820, %v6851
      %v6953 = vadd.f32 %v6821, %v6851
      %v6954 = vadd.f32 %v6822, %v6851
      %v6955 = vadd.f32 %v6823, %v6851
      %v6956 = vadd.f32 %v6824, %v6851
      %v6957 = vadd.f32 %v6825, %v6851
      %v6958 = vadd.f32 %v6826, %v6851
      %v6959 = vadd.f32 %v6827, %v6851
      %v6960 = vadd.f32 %v6828, %v6851
      %v6961 = vadd.f32 %v6829, %v6851
      %v6962 = vadd.f32 %v6830, %v6851
      %v6963 = vadd.f32 %v6831, %v6851
      %v6964 = vadd.f32 %v6832, %v6851
      %v6965 = vadd.f32 %v6833, %v6851
      %v6966 = vadd.f32 %v6834, %v6851
      %v6967 = vadd.f32 %v6835, %v6851
      %v6968 = vadd.f32 %v6836, %v6851
      %v6969 = vadd.f32 %v6837, %v6851
      %v6970 = vadd.f32 %v6838, %v6851
      %v6971 = vadd.f32 %v6839, %v6851
      %v6972 = vadd.f32 %v6840, %v6851
      %v6973 = vadd.f32 %v6841, %v6851
      %v6974 = vadd.f32 %v6842, %v6851
      %v6975 = vadd.f32 %v6843, %v6851
      %v6976 = vadd.f32 %v6844, %v6851
      %v6977 = vadd.f32 %v6845, %v6851
      %v6978 = vadd.f32 %v6846, %v6851
      %v6979 = vadd.f32 %v6847, %v6851
      %v6980 = vadd.f32 %v6848, %v6851
      %vm6981 = vcmp.ge.f32.partialorder %v6853, 0.0
      %vm6982 = vcmp.ge.f32.partialorder %v6854, 0.0
      %vm6983 = vcmp.ge.f32.partialorder %v6855, 0.0
      %vm6984 = vcmp.ge.f32.partialorder %v6856, 0.0
      %vm6985 = vcmp.ge.f32.partialorder %v6857, 0.0
      %vm6986 = vcmp.ge.f32.partialorder %v6858, 0.0
      %vm6987 = vcmp.ge.f32.partialorder %v6859, 0.0
      %vm6988 = vcmp.ge.f32.partialorder %v6860, 0.0
      %vm6989 = vcmp.ge.f32.partialorder %v6861, 0.0
      %vm6990 = vcmp.ge.f32.partialorder %v6862, 0.0
      %vm6991 = vcmp.ge.f32.partialorder %v6863, 0.0
      %vm6992 = vcmp.ge.f32.partialorder %v6864, 0.0
      %vm6993 = vcmp.ge.f32.partialorder %v6865, 0.0
      %vm6994 = vcmp.ge.f32.partialorder %v6866, 0.0
      %vm6995 = vcmp.ge.f32.partialorder %v6867, 0.0
      %vm6996 = vcmp.ge.f32.partialorder %v6868, 0.0
      %vm6997 = vcmp.ge.f32.partialorder %v6869, 0.0
      %vm6998 = vcmp.ge.f32.partialorder %v6870, 0.0
      %vm6999 = vcmp.ge.f32.partialorder %v6871, 0.0
      %vm7000 = vcmp.ge.f32.partialorder %v6872, 0.0
      %vm7001 = vcmp.ge.f32.partialorder %v6873, 0.0
      %vm7002 = vcmp.ge.f32.partialorder %v6874, 0.0
      %vm7003 = vcmp.ge.f32.partialorder %v6875, 0.0
      %vm7004 = vcmp.ge.f32.partialorder %v6876, 0.0
      %vm7005 = vcmp.ge.f32.partialorder %v6877, 0.0
      %vm7006 = vcmp.ge.f32.partialorder %v6878, 0.0
      %vm7007 = vcmp.ge.f32.partialorder %v6879, 0.0
      %vm7008 = vcmp.ge.f32.partialorder %v6880, 0.0
      %vm7009 = vcmp.ge.f32.partialorder %v6881, 0.0
      %vm7010 = vcmp.ge.f32.partialorder %v6882, 0.0
      %vm7011 = vcmp.ge.f32.partialorder %v6883, 0.0
      %vm7012 = vcmp.ge.f32.partialorder %v6884, 0.0
      %vm7013 = vcmp.ge.f32.partialorder %v6885, 0.0
      %vm7014 = vcmp.ge.f32.partialorder %v6886, 0.0
      %vm7015 = vcmp.ge.f32.partialorder %v6887, 0.0
      %vm7016 = vcmp.ge.f32.partialorder %v6888, 0.0
      %vm7017 = vcmp.ge.f32.partialorder %v6889, 0.0
      %vm7018 = vcmp.ge.f32.partialorder %v6890, 0.0
      %vm7019 = vcmp.ge.f32.partialorder %v6891, 0.0
      %vm7020 = vcmp.ge.f32.partialorder %v6892, 0.0
      %vm7021 = vcmp.ge.f32.partialorder %v6893, 0.0
      %vm7022 = vcmp.ge.f32.partialorder %v6894, 0.0
      %vm7023 = vcmp.ge.f32.partialorder %v6895, 0.0
      %vm7024 = vcmp.ge.f32.partialorder %v6896, 0.0
      %vm7025 = vcmp.ge.f32.partialorder %v6897, 0.0
      %vm7026 = vcmp.ge.f32.partialorder %v6898, 0.0
      %vm7027 = vcmp.ge.f32.partialorder %v6899, 0.0
      %vm7028 = vcmp.ge.f32.partialorder %v6900, 0.0
      %vm7029 = vcmp.ge.f32.partialorder %v6901, 0.0
      %vm7030 = vcmp.ge.f32.partialorder %v6902, 0.0
      %vm7031 = vcmp.ge.f32.partialorder %v6903, 0.0
      %vm7032 = vcmp.ge.f32.partialorder %v6904, 0.0
      %vm7033 = vcmp.ge.f32.partialorder %v6905, 0.0
      %vm7034 = vcmp.ge.f32.partialorder %v6906, 0.0
      %vm7035 = vcmp.ge.f32.partialorder %v6907, 0.0
      %vm7036 = vcmp.ge.f32.partialorder %v6908, 0.0
      %vm7037 = vcmp.ge.f32.partialorder %v6909, 0.0
      %vm7038 = vcmp.ge.f32.partialorder %v6910, 0.0
      %vm7039 = vcmp.ge.f32.partialorder %v6911, 0.0
      %vm7040 = vcmp.ge.f32.partialorder %v6912, 0.0
      %vm7041 = vcmp.ge.f32.partialorder %v6913, 0.0
      %vm7042 = vcmp.ge.f32.partialorder %v6914, 0.0
      %vm7043 = vcmp.ge.f32.partialorder %v6915, 0.0
      %vm7044 = vcmp.ge.f32.partialorder %v6916, 0.0
      %vm7045 = vcmp.ge.f32.partialorder %v6917, 0.0
      %vm7046 = vcmp.ge.f32.partialorder %v6918, 0.0
      %vm7047 = vcmp.ge.f32.partialorder %v6919, 0.0
      %vm7048 = vcmp.ge.f32.partialorder %v6920, 0.0
      %vm7049 = vcmp.ge.f32.partialorder %v6921, 0.0
      %vm7050 = vcmp.ge.f32.partialorder %v6922, 0.0
      %vm7051 = vcmp.ge.f32.partialorder %v6923, 0.0
      %vm7052 = vcmp.ge.f32.partialorder %v6924, 0.0
      %vm7053 = vcmp.ge.f32.partialorder %v6925, 0.0
      %vm7054 = vcmp.ge.f32.partialorder %v6926, 0.0
      %vm7055 = vcmp.ge.f32.partialorder %v6927, 0.0
      %vm7056 = vcmp.ge.f32.partialorder %v6928, 0.0
      %vm7057 = vcmp.ge.f32.partialorder %v6929, 0.0
      %vm7058 = vcmp.ge.f32.partialorder %v6930, 0.0
      %vm7059 = vcmp.ge.f32.partialorder %v6931, 0.0
      %vm7060 = vcmp.ge.f32.partialorder %v6932, 0.0
      %vm7061 = vcmp.ge.f32.partialorder %v6933, 0.0
      %vm7062 = vcmp.ge.f32.partialorder %v6934, 0.0
      %vm7063 = vcmp.ge.f32.partialorder %v6935, 0.0
      %vm7064 = vcmp.ge.f32.partialorder %v6936, 0.0
      %vm7065 = vcmp.ge.f32.partialorder %v6937, 0.0
      %vm7066 = vcmp.ge.f32.partialorder %v6938, 0.0
      %vm7067 = vcmp.ge.f32.partialorder %v6939, 0.0
      %vm7068 = vcmp.ge.f32.partialorder %v6940, 0.0
      %vm7069 = vcmp.ge.f32.partialorder %v6941, 0.0
      %vm7070 = vcmp.ge.f32.partialorder %v6942, 0.0
      %vm7071 = vcmp.ge.f32.partialorder %v6943, 0.0
      %vm7072 = vcmp.ge.f32.partialorder %v6944, 0.0
      %vm7073 = vcmp.ge.f32.partialorder %v6945, 0.0
      %vm7074 = vcmp.ge.f32.partialorder %v6946, 0.0
      %vm7075 = vcmp.ge.f32.partialorder %v6947, 0.0
      %vm7076 = vcmp.ge.f32.partialorder %v6948, 0.0
      %vm7077 = vcmp.ge.f32.partialorder %v6949, 0.0
      %vm7078 = vcmp.ge.f32.partialorder %v6950, 0.0
      %vm7079 = vcmp.ge.f32.partialorder %v6951, 0.0
      %vm7080 = vcmp.ge.f32.partialorder %v6952, 0.0
      %vm7081 = vcmp.ge.f32.partialorder %v6953, 0.0
      %vm7082 = vcmp.ge.f32.partialorder %v6954, 0.0
      %vm7083 = vcmp.ge.f32.partialorder %v6955, 0.0
      %vm7084 = vcmp.ge.f32.partialorder %v6956, 0.0
      %vm7085 = vcmp.ge.f32.partialorder %v6957, 0.0
      %vm7086 = vcmp.ge.f32.partialorder %v6958, 0.0
      %vm7087 = vcmp.ge.f32.partialorder %v6959, 0.0
      %vm7088 = vcmp.ge.f32.partialorder %v6960, 0.0
      %vm7089 = vcmp.ge.f32.partialorder %v6961, 0.0
      %vm7090 = vcmp.ge.f32.partialorder %v6962, 0.0
      %vm7091 = vcmp.ge.f32.partialorder %v6963, 0.0
      %vm7092 = vcmp.ge.f32.partialorder %v6964, 0.0
      %vm7093 = vcmp.ge.f32.partialorder %v6965, 0.0
      %vm7094 = vcmp.ge.f32.partialorder %v6966, 0.0
      %vm7095 = vcmp.ge.f32.partialorder %v6967, 0.0
      %vm7096 = vcmp.ge.f32.partialorder %v6968, 0.0
      %vm7097 = vcmp.ge.f32.partialorder %v6969, 0.0
      %vm7098 = vcmp.ge.f32.partialorder %v6970, 0.0
      %vm7099 = vcmp.ge.f32.partialorder %v6971, 0.0
      %vm7100 = vcmp.ge.f32.partialorder %v6972, 0.0
      %vm7101 = vcmp.ge.f32.partialorder %v6973, 0.0
      %vm7102 = vcmp.ge.f32.partialorder %v6974, 0.0
      %vm7103 = vcmp.ge.f32.partialorder %v6975, 0.0
      %vm7104 = vcmp.ge.f32.partialorder %v6976, 0.0
      %vm7105 = vcmp.ge.f32.partialorder %v6977, 0.0
      %vm7106 = vcmp.ge.f32.partialorder %v6978, 0.0
      %vm7107 = vcmp.ge.f32.partialorder %v6979, 0.0
      %vm7108 = vcmp.ge.f32.partialorder %v6980, 0.0
      %v7109 = vmul.f32 %v6853, 0.2
      %v7110 = vmul.f32 %v6854, 0.2
      %v7111 = vmul.f32 %v6855, 0.2
      %v7112 = vmul.f32 %v6856, 0.2
      %v7113 = vmul.f32 %v6857, 0.2
      %v7114 = vmul.f32 %v6858, 0.2
      %v7115 = vmul.f32 %v6859, 0.2
      %v7116 = vmul.f32 %v6860, 0.2
      %v7117 = vmul.f32 %v6861, 0.2
      %v7118 = vmul.f32 %v6862, 0.2
      %v7119 = vmul.f32 %v6863, 0.2
      %v7120 = vmul.f32 %v6864, 0.2
      %v7121 = vmul.f32 %v6865, 0.2
      %v7122 = vmul.f32 %v6866, 0.2
      %v7123 = vmul.f32 %v6867, 0.2
      %v7124 = vmul.f32 %v6868, 0.2
      %v7125 = vmul.f32 %v6869, 0.2
      %v7126 = vmul.f32 %v6870, 0.2
      %v7127 = vmul.f32 %v6871, 0.2
      %v7128 = vmul.f32 %v6872, 0.2
      %v7129 = vmul.f32 %v6873, 0.2
      %v7130 = vmul.f32 %v6874, 0.2
      %v7131 = vmul.f32 %v6875, 0.2
      %v7132 = vmul.f32 %v6876, 0.2
      %v7133 = vmul.f32 %v6877, 0.2
      %v7134 = vmul.f32 %v6878, 0.2
      %v7135 = vmul.f32 %v6879, 0.2
      %v7136 = vmul.f32 %v6880, 0.2
      %v7137 = vmul.f32 %v6881, 0.2
      %v7138 = vmul.f32 %v6882, 0.2
      %v7139 = vmul.f32 %v6883, 0.2
      %v7140 = vmul.f32 %v6884, 0.2
      %v7141 = vmul.f32 %v6885, 0.2
      %v7142 = vmul.f32 %v6886, 0.2
      %v7143 = vmul.f32 %v6887, 0.2
      %v7144 = vmul.f32 %v6888, 0.2
      %v7145 = vmul.f32 %v6889, 0.2
      %v7146 = vmul.f32 %v6890, 0.2
      %v7147 = vmul.f32 %v6891, 0.2
      %v7148 = vmul.f32 %v6892, 0.2
      %v7149 = vmul.f32 %v6893, 0.2
      %v7150 = vmul.f32 %v6894, 0.2
      %v7151 = vmul.f32 %v6895, 0.2
      %v7152 = vmul.f32 %v6896, 0.2
      %v7153 = vmul.f32 %v6897, 0.2
      %v7154 = vmul.f32 %v6898, 0.2
      %v7155 = vmul.f32 %v6899, 0.2
      %v7156 = vmul.f32 %v6900, 0.2
      %v7157 = vmul.f32 %v6901, 0.2
      %v7158 = vmul.f32 %v6902, 0.2
      %v7159 = vmul.f32 %v6903, 0.2
      %v7160 = vmul.f32 %v6904, 0.2
      %v7161 = vmul.f32 %v6905, 0.2
      %v7162 = vmul.f32 %v6906, 0.2
      %v7163 = vmul.f32 %v6907, 0.2
      %v7164 = vmul.f32 %v6908, 0.2
      %v7165 = vmul.f32 %v6909, 0.2
      %v7166 = vmul.f32 %v6910, 0.2
      %v7167 = vmul.f32 %v6911, 0.2
      %v7168 = vmul.f32 %v6912, 0.2
      %v7169 = vmul.f32 %v6913, 0.2
      %v7170 = vmul.f32 %v6914, 0.2
      %v7171 = vmul.f32 %v6915, 0.2
      %v7172 = vmul.f32 %v6916, 0.2
      %v7173 = vmul.f32 %v6917, 0.2
      %v7174 = vmul.f32 %v6918, 0.2
      %v7175 = vmul.f32 %v6919, 0.2
      %v7176 = vmul.f32 %v6920, 0.2
      %v7177 = vmul.f32 %v6921, 0.2
      %v7178 = vmul.f32 %v6922, 0.2
      %v7179 = vmul.f32 %v6923, 0.2
      %v7180 = vmul.f32 %v6924, 0.2
      %v7181 = vmul.f32 %v6925, 0.2
      %v7182 = vmul.f32 %v6926, 0.2
      %v7183 = vmul.f32 %v6927, 0.2
      %v7184 = vmul.f32 %v6928, 0.2
      %v7185 = vmul.f32 %v6929, 0.2
      %v7186 = vmul.f32 %v6930, 0.2
      %v7187 = vmul.f32 %v6931, 0.2
      %v7188 = vmul.f32 %v6932, 0.2
      %v7189 = vmul.f32 %v6933, 0.2
      %v7190 = vmul.f32 %v6934, 0.2
      %v7191 = vmul.f32 %v6935, 0.2
      %v7192 = vmul.f32 %v6936, 0.2
      %v7193 = vmul.f32 %v6937, 0.2
      %v7194 = vmul.f32 %v6938, 0.2
      %v7195 = vmul.f32 %v6939, 0.2
      %v7196 = vmul.f32 %v6940, 0.2
      %v7197 = vmul.f32 %v6941, 0.2
      %v7198 = vmul.f32 %v6942, 0.2
      %v7199 = vmul.f32 %v6943, 0.2
      %v7200 = vmul.f32 %v6944, 0.2
      %v7201 = vmul.f32 %v6945, 0.2
      %v7202 = vmul.f32 %v6946, 0.2
      %v7203 = vmul.f32 %v6947, 0.2
      %v7204 = vmul.f32 %v6948, 0.2
      %v7205 = vmul.f32 %v6949, 0.2
      %v7206 = vmul.f32 %v6950, 0.2
      %v7207 = vmul.f32 %v6951, 0.2
      %v7208 = vmul.f32 %v6952, 0.2
      %v7209 = vmul.f32 %v6953, 0.2
      %v7210 = vmul.f32 %v6954, 0.2
      %v7211 = vmul.f32 %v6955, 0.2
      %v7212 = vmul.f32 %v6956, 0.2
      %v7213 = vmul.f32 %v6957, 0.2
      %v7214 = vmul.f32 %v6958, 0.2
      %v7215 = vmul.f32 %v6959, 0.2
      %v7216 = vmul.f32 %v6960, 0.2
      %v7217 = vmul.f32 %v6961, 0.2
      %v7218 = vmul.f32 %v6962, 0.2
      %v7219 = vmul.f32 %v6963, 0.2
      %v7220 = vmul.f32 %v6964, 0.2
      %v7221 = vmul.f32 %v6965, 0.2
      %v7222 = vmul.f32 %v6966, 0.2
      %v7223 = vmul.f32 %v6967, 0.2
      %v7224 = vmul.f32 %v6968, 0.2
      %v7225 = vmul.f32 %v6969, 0.2
      %v7226 = vmul.f32 %v6970, 0.2
      %v7227 = vmul.f32 %v6971, 0.2
      %v7228 = vmul.f32 %v6972, 0.2
      %v7229 = vmul.f32 %v6973, 0.2
      %v7230 = vmul.f32 %v6974, 0.2
      %v7231 = vmul.f32 %v6975, 0.2
      %v7232 = vmul.f32 %v6976, 0.2
      %v7233 = vmul.f32 %v6977, 0.2
      %v7234 = vmul.f32 %v6978, 0.2
      %v7235 = vmul.f32 %v6979, 0.2
      %v7236 = vmul.f32 %v6980, 0.2
      %v7237 = vsel %vm6981, %v6853, %v7109
      %v7238 = vsel %vm6982, %v6854, %v7110
      %v7239 = vsel %vm6983, %v6855, %v7111
      %v7240 = vsel %vm6984, %v6856, %v7112
      %v7241 = vsel %vm6985, %v6857, %v7113
      %v7242 = vsel %vm6986, %v6858, %v7114
      %v7243 = vsel %vm6987, %v6859, %v7115
      %v7244 = vsel %vm6988, %v6860, %v7116
      %v7245 = vsel %vm6989, %v6861, %v7117
      %v7246 = vsel %vm6990, %v6862, %v7118
      %v7247 = vsel %vm6991, %v6863, %v7119
      %v7248 = vsel %vm6992, %v6864, %v7120
      %v7249 = vsel %vm6993, %v6865, %v7121
      %v7250 = vsel %vm6994, %v6866, %v7122
      %v7251 = vsel %vm6995, %v6867, %v7123
      %v7252 = vsel %vm6996, %v6868, %v7124
      %v7253 = vsel %vm6997, %v6869, %v7125
      %v7254 = vsel %vm6998, %v6870, %v7126
      %v7255 = vsel %vm6999, %v6871, %v7127
      %v7256 = vsel %vm7000, %v6872, %v7128
      %v7257 = vsel %vm7001, %v6873, %v7129
      %v7258 = vsel %vm7002, %v6874, %v7130
      %v7259 = vsel %vm7003, %v6875, %v7131
      %v7260 = vsel %vm7004, %v6876, %v7132
      %v7261 = vsel %vm7005, %v6877, %v7133
      %v7262 = vsel %vm7006, %v6878, %v7134
      %v7263 = vsel %vm7007, %v6879, %v7135
      %v7264 = vsel %vm7008, %v6880, %v7136
      %v7265 = vsel %vm7009, %v6881, %v7137
      %v7266 = vsel %vm7010, %v6882, %v7138
      %v7267 = vsel %vm7011, %v6883, %v7139
      %v7268 = vsel %vm7012, %v6884, %v7140
      %v7269 = vsel %vm7013, %v6885, %v7141
      %v7270 = vsel %vm7014, %v6886, %v7142
      %v7271 = vsel %vm7015, %v6887, %v7143
      %v7272 = vsel %vm7016, %v6888, %v7144
      %v7273 = vsel %vm7017, %v6889, %v7145
      %v7274 = vsel %vm7018, %v6890, %v7146
      %v7275 = vsel %vm7019, %v6891, %v7147
      %v7276 = vsel %vm7020, %v6892, %v7148
      %v7277 = vsel %vm7021, %v6893, %v7149
      %v7278 = vsel %vm7022, %v6894, %v7150
      %v7279 = vsel %vm7023, %v6895, %v7151
      %v7280 = vsel %vm7024, %v6896, %v7152
      %v7281 = vsel %vm7025, %v6897, %v7153
      %v7282 = vsel %vm7026, %v6898, %v7154
      %v7283 = vsel %vm7027, %v6899, %v7155
      %v7284 = vsel %vm7028, %v6900, %v7156
      %v7285 = vsel %vm7029, %v6901, %v7157
      %v7286 = vsel %vm7030, %v6902, %v7158
      %v7287 = vsel %vm7031, %v6903, %v7159
      %v7288 = vsel %vm7032, %v6904, %v7160
      %v7289 = vsel %vm7033, %v6905, %v7161
      %v7290 = vsel %vm7034, %v6906, %v7162
      %v7291 = vsel %vm7035, %v6907, %v7163
      %v7292 = vsel %vm7036, %v6908, %v7164
      %v7293 = vsel %vm7037, %v6909, %v7165
      %v7294 = vsel %vm7038, %v6910, %v7166
      %v7295 = vsel %vm7039, %v6911, %v7167
      %v7296 = vsel %vm7040, %v6912, %v7168
      %v7297 = vsel %vm7041, %v6913, %v7169
      %v7298 = vsel %vm7042, %v6914, %v7170
      %v7299 = vsel %vm7043, %v6915, %v7171
      %v7300 = vsel %vm7044, %v6916, %v7172
      %v7301 = vsel %vm7045, %v6917, %v7173
      %v7302 = vsel %vm7046, %v6918, %v7174
      %v7303 = vsel %vm7047, %v6919, %v7175
      %v7304 = vsel %vm7048, %v6920, %v7176
      %v7305 = vsel %vm7049, %v6921, %v7177
      %v7306 = vsel %vm7050, %v6922, %v7178
      %v7307 = vsel %vm7051, %v6923, %v7179
      %v7308 = vsel %vm7052, %v6924, %v7180
      %v7309 = vsel %vm7053, %v6925, %v7181
      %v7310 = vsel %vm7054, %v6926, %v7182
      %v7311 = vsel %vm7055, %v6927, %v7183
      %v7312 = vsel %vm7056, %v6928, %v7184
      %v7313 = vsel %vm7057, %v6929, %v7185
      %v7314 = vsel %vm7058, %v6930, %v7186
      %v7315 = vsel %vm7059, %v6931, %v7187
      %v7316 = vsel %vm7060, %v6932, %v7188
      %v7317 = vsel %vm7061, %v6933, %v7189
      %v7318 = vsel %vm7062, %v6934, %v7190
      %v7319 = vsel %vm7063, %v6935, %v7191
      %v7320 = vsel %vm7064, %v6936, %v7192
      %v7321 = vsel %vm7065, %v6937, %v7193
      %v7322 = vsel %vm7066, %v6938, %v7194
      %v7323 = vsel %vm7067, %v6939, %v7195
      %v7324 = vsel %vm7068, %v6940, %v7196
      %v7325 = vsel %vm7069, %v6941, %v7197
      %v7326 = vsel %vm7070, %v6942, %v7198
      %v7327 = vsel %vm7071, %v6943, %v7199
      %v7328 = vsel %vm7072, %v6944, %v7200
      %v7329 = vsel %vm7073, %v6945, %v7201
      %v7330 = vsel %vm7074, %v6946, %v7202
      %v7331 = vsel %vm7075, %v6947, %v7203
      %v7332 = vsel %vm7076, %v6948, %v7204
      %v7333 = vsel %vm7077, %v6949, %v7205
      %v7334 = vsel %vm7078, %v6950, %v7206
      %v7335 = vsel %vm7079, %v6951, %v7207
      %v7336 = vsel %vm7080, %v6952, %v7208
      %v7337 = vsel %vm7081, %v6953, %v7209
      %v7338 = vsel %vm7082, %v6954, %v7210
      %v7339 = vsel %vm7083, %v6955, %v7211
      %v7340 = vsel %vm7084, %v6956, %v7212
      %v7341 = vsel %vm7085, %v6957, %v7213
      %v7342 = vsel %vm7086, %v6958, %v7214
      %v7343 = vsel %vm7087, %v6959, %v7215
      %v7344 = vsel %vm7088, %v6960, %v7216
      %v7345 = vsel %vm7089, %v6961, %v7217
      %v7346 = vsel %vm7090, %v6962, %v7218
      %v7347 = vsel %vm7091, %v6963, %v7219
      %v7348 = vsel %vm7092, %v6964, %v7220
      %v7349 = vsel %vm7093, %v6965, %v7221
      %v7350 = vsel %vm7094, %v6966, %v7222
      %v7351 = vsel %vm7095, %v6967, %v7223
      %v7352 = vsel %vm7096, %v6968, %v7224
      %v7353 = vsel %vm7097, %v6969, %v7225
      %v7354 = vsel %vm7098, %v6970, %v7226
      %v7355 = vsel %vm7099, %v6971, %v7227
      %v7356 = vsel %vm7100, %v6972, %v7228
      %v7357 = vsel %vm7101, %v6973, %v7229
      %v7358 = vsel %vm7102, %v6974, %v7230
      %v7359 = vsel %vm7103, %v6975, %v7231
      %v7360 = vsel %vm7104, %v6976, %v7232
      %v7361 = vsel %vm7105, %v6977, %v7233
      %v7362 = vsel %vm7106, %v6978, %v7234
      %v7363 = vsel %vm7107, %v6979, %v7235
      %v7364 = vsel %vm7108, %v6980, %v7236
      %v7365 = vpack.c.bf16 %v7237, %v7237
      %v7366 = vpack.c.bf16 %v7238, %v7238
      %v7367 = vpack.c.bf16 %v7239, %v7239
      %v7368 = vpack.c.bf16 %v7240, %v7240
      %v7369 = vpack.c.bf16 %v7241, %v7241
      %v7370 = vpack.c.bf16 %v7242, %v7242
      %v7371 = vpack.c.bf16 %v7243, %v7243
      %v7372 = vpack.c.bf16 %v7244, %v7244
      %v7373 = vpack.c.bf16 %v7245, %v7245
      %v7374 = vpack.c.bf16 %v7246, %v7246
      %v7375 = vpack.c.bf16 %v7247, %v7247
      %v7376 = vpack.c.bf16 %v7248, %v7248
      %v7377 = vpack.c.bf16 %v7249, %v7249
      %v7378 = vpack.c.bf16 %v7250, %v7250
      %v7379 = vpack.c.bf16 %v7251, %v7251
      %v7380 = vpack.c.bf16 %v7252, %v7252
      %v7381 = vpack.c.bf16 %v7253, %v7253
      %v7382 = vpack.c.bf16 %v7254, %v7254
      %v7383 = vpack.c.bf16 %v7255, %v7255
      %v7384 = vpack.c.bf16 %v7256, %v7256
      %v7385 = vpack.c.bf16 %v7257, %v7257
      %v7386 = vpack.c.bf16 %v7258, %v7258
      %v7387 = vpack.c.bf16 %v7259, %v7259
      %v7388 = vpack.c.bf16 %v7260, %v7260
      %v7389 = vpack.c.bf16 %v7261, %v7261
      %v7390 = vpack.c.bf16 %v7262, %v7262
      %v7391 = vpack.c.bf16 %v7263, %v7263
      %v7392 = vpack.c.bf16 %v7264, %v7264
      %v7393 = vpack.c.bf16 %v7265, %v7265
      %v7394 = vpack.c.bf16 %v7266, %v7266
      %v7395 = vpack.c.bf16 %v7267, %v7267
      %v7396 = vpack.c.bf16 %v7268, %v7268
      %v7397 = vpack.c.bf16 %v7269, %v7269
      %v7398 = vpack.c.bf16 %v7270, %v7270
      %v7399 = vpack.c.bf16 %v7271, %v7271
      %v7400 = vpack.c.bf16 %v7272, %v7272
      %v7401 = vpack.c.bf16 %v7273, %v7273
      %v7402 = vpack.c.bf16 %v7274, %v7274
      %v7403 = vpack.c.bf16 %v7275, %v7275
      %v7404 = vpack.c.bf16 %v7276, %v7276
      %v7405 = vpack.c.bf16 %v7277, %v7277
      %v7406 = vpack.c.bf16 %v7278, %v7278
      %v7407 = vpack.c.bf16 %v7279, %v7279
      %v7408 = vpack.c.bf16 %v7280, %v7280
      %v7409 = vpack.c.bf16 %v7281, %v7281
      %v7410 = vpack.c.bf16 %v7282, %v7282
      %v7411 = vpack.c.bf16 %v7283, %v7283
      %v7412 = vpack.c.bf16 %v7284, %v7284
      %v7413 = vpack.c.bf16 %v7285, %v7285
      %v7414 = vpack.c.bf16 %v7286, %v7286
      %v7415 = vpack.c.bf16 %v7287, %v7287
      %v7416 = vpack.c.bf16 %v7288, %v7288
      %v7417 = vpack.c.bf16 %v7289, %v7289
      %v7418 = vpack.c.bf16 %v7290, %v7290
      %v7419 = vpack.c.bf16 %v7291, %v7291
      %v7420 = vpack.c.bf16 %v7292, %v7292
      %v7421 = vpack.c.bf16 %v7293, %v7293
      %v7422 = vpack.c.bf16 %v7294, %v7294
      %v7423 = vpack.c.bf16 %v7295, %v7295
      %v7424 = vpack.c.bf16 %v7296, %v7296
      %v7425 = vpack.c.bf16 %v7297, %v7297
      %v7426 = vpack.c.bf16 %v7298, %v7298
      %v7427 = vpack.c.bf16 %v7299, %v7299
      %v7428 = vpack.c.bf16 %v7300, %v7300
      %v7429 = vpack.c.bf16 %v7301, %v7301
      %v7430 = vpack.c.bf16 %v7302, %v7302
      %v7431 = vpack.c.bf16 %v7303, %v7303
      %v7432 = vpack.c.bf16 %v7304, %v7304
      %v7433 = vpack.c.bf16 %v7305, %v7305
      %v7434 = vpack.c.bf16 %v7306, %v7306
      %v7435 = vpack.c.bf16 %v7307, %v7307
      %v7436 = vpack.c.bf16 %v7308, %v7308
      %v7437 = vpack.c.bf16 %v7309, %v7309
      %v7438 = vpack.c.bf16 %v7310, %v7310
      %v7439 = vpack.c.bf16 %v7311, %v7311
      %v7440 = vpack.c.bf16 %v7312, %v7312
      %v7441 = vpack.c.bf16 %v7313, %v7313
      %v7442 = vpack.c.bf16 %v7314, %v7314
      %v7443 = vpack.c.bf16 %v7315, %v7315
      %v7444 = vpack.c.bf16 %v7316, %v7316
      %v7445 = vpack.c.bf16 %v7317, %v7317
      %v7446 = vpack.c.bf16 %v7318, %v7318
      %v7447 = vpack.c.bf16 %v7319, %v7319
      %v7448 = vpack.c.bf16 %v7320, %v7320
      %v7449 = vpack.c.bf16 %v7321, %v7321
      %v7450 = vpack.c.bf16 %v7322, %v7322
      %v7451 = vpack.c.bf16 %v7323, %v7323
      %v7452 = vpack.c.bf16 %v7324, %v7324
      %v7453 = vpack.c.bf16 %v7325, %v7325
      %v7454 = vpack.c.bf16 %v7326, %v7326
      %v7455 = vpack.c.bf16 %v7327, %v7327
      %v7456 = vpack.c.bf16 %v7328, %v7328
      %v7457 = vpack.c.bf16 %v7329, %v7329
      %v7458 = vpack.c.bf16 %v7330, %v7330
      %v7459 = vpack.c.bf16 %v7331, %v7331
      %v7460 = vpack.c.bf16 %v7332, %v7332
      %v7461 = vpack.c.bf16 %v7333, %v7333
      %v7462 = vpack.c.bf16 %v7334, %v7334
      %v7463 = vpack.c.bf16 %v7335, %v7335
      %v7464 = vpack.c.bf16 %v7336, %v7336
      %v7465 = vpack.c.bf16 %v7337, %v7337
      %v7466 = vpack.c.bf16 %v7338, %v7338
      %v7467 = vpack.c.bf16 %v7339, %v7339
      %v7468 = vpack.c.bf16 %v7340, %v7340
      %v7469 = vpack.c.bf16 %v7341, %v7341
      %v7470 = vpack.c.bf16 %v7342, %v7342
      %v7471 = vpack.c.bf16 %v7343, %v7343
      %v7472 = vpack.c.bf16 %v7344, %v7344
      %v7473 = vpack.c.bf16 %v7345, %v7345
      %v7474 = vpack.c.bf16 %v7346, %v7346
      %v7475 = vpack.c.bf16 %v7347, %v7347
      %v7476 = vpack.c.bf16 %v7348, %v7348
      %v7477 = vpack.c.bf16 %v7349, %v7349
      %v7478 = vpack.c.bf16 %v7350, %v7350
      %v7479 = vpack.c.bf16 %v7351, %v7351
      %v7480 = vpack.c.bf16 %v7352, %v7352
      %v7481 = vpack.c.bf16 %v7353, %v7353
      %v7482 = vpack.c.bf16 %v7354, %v7354
      %v7483 = vpack.c.bf16 %v7355, %v7355
      %v7484 = vpack.c.bf16 %v7356, %v7356
      %v7485 = vpack.c.bf16 %v7357, %v7357
      %v7486 = vpack.c.bf16 %v7358, %v7358
      %v7487 = vpack.c.bf16 %v7359, %v7359
      %v7488 = vpack.c.bf16 %v7360, %v7360
      %v7489 = vpack.c.bf16 %v7361, %v7361
      %v7490 = vpack.c.bf16 %v7362, %v7362
      %v7491 = vpack.c.bf16 %v7363, %v7363
      %v7492 = vpack.c.bf16 %v7364, %v7364
      %vm7493 = vcmask 519168
      %7494 = vst.msk [vmem:[%s170] sm:$0xf] %vm7493, %v7365
      %7495 = vst.msk [vmem:[%s170 + $0x4] sm:$0xf] %vm7493, %v7366
      %7496 = vst.msk [vmem:[%s170 + $0x8] sm:$0xf] %vm7493, %v7367
      %7497 = vst.msk [vmem:[%s170 + $0xc] sm:$0xf] %vm7493, %v7368
      %7498 = vst.msk [vmem:[%s170 + $0x10] sm:$0xf] %vm7493, %v7369
      %7499 = vst.msk [vmem:[%s170 + $0x14] sm:$0xf] %vm7493, %v7370
      %7500 = vst.msk [vmem:[%s170 + $0x18] sm:$0xf] %vm7493, %v7371
      %7501 = vst.msk [vmem:[%s170 + $0x1c] sm:$0xf] %vm7493, %v7372
      %7502 = vst.msk [vmem:[%s170 + $0x20] sm:$0xf] %vm7493, %v7373
      %7503 = vst.msk [vmem:[%s170 + $0x24] sm:$0xf] %vm7493, %v7374
      %7504 = vst.msk [vmem:[%s170 + $0x28] sm:$0xf] %vm7493, %v7375
      %7505 = vst.msk [vmem:[%s170 + $0x2c] sm:$0xf] %vm7493, %v7376
      %7506 = vst.msk [vmem:[%s170 + $0x30] sm:$0xf] %vm7493, %v7377
      %7507 = vst.msk [vmem:[%s170 + $0x34] sm:$0xf] %vm7493, %v7378
      %7508 = vst.msk [vmem:[%s170 + $0x38] sm:$0xf] %vm7493, %v7379
      %7509 = vst.msk [vmem:[%s170 + $0x3c] sm:$0xf] %vm7493, %v7380
      %7510 = vst.msk [vmem:[%s170 + $0x40] sm:$0xf] %vm7493, %v7381
      %7511 = vst.msk [vmem:[%s170 + $0x44] sm:$0xf] %vm7493, %v7382
      %7512 = vst.msk [vmem:[%s170 + $0x48] sm:$0xf] %vm7493, %v7383
      %7513 = vst.msk [vmem:[%s170 + $0x4c] sm:$0xf] %vm7493, %v7384
      %7514 = vst.msk [vmem:[%s170 + $0x50] sm:$0xf] %vm7493, %v7385
      %7515 = vst.msk [vmem:[%s170 + $0x54] sm:$0xf] %vm7493, %v7386
      %7516 = vst.msk [vmem:[%s170 + $0x58] sm:$0xf] %vm7493, %v7387
      %7517 = vst.msk [vmem:[%s170 + $0x5c] sm:$0xf] %vm7493, %v7388
      %7518 = vst.msk [vmem:[%s170 + $0x60] sm:$0xf] %vm7493, %v7389
      %7519 = vst.msk [vmem:[%s170 + $0x64] sm:$0xf] %vm7493, %v7390
      %7520 = vst.msk [vmem:[%s170 + $0x68] sm:$0xf] %vm7493, %v7391
      %7521 = vst.msk [vmem:[%s170 + $0x6c] sm:$0xf] %vm7493, %v7392
      %7522 = vst.msk [vmem:[%s170 + $0x70] sm:$0xf] %vm7493, %v7393
      %7523 = vst.msk [vmem:[%s170 + $0x74] sm:$0xf] %vm7493, %v7394
      %7524 = vst.msk [vmem:[%s170 + $0x78] sm:$0xf] %vm7493, %v7395
      %7525 = vst.msk [vmem:[%s170 + $0x7c] sm:$0xf] %vm7493, %v7396
      %7526 = vst.msk [vmem:[%s170 + $0x80] sm:$0xf] %vm7493, %v7397
      %7527 = vst.msk [vmem:[%s170 + $0x84] sm:$0xf] %vm7493, %v7398
      %7528 = vst.msk [vmem:[%s170 + $0x88] sm:$0xf] %vm7493, %v7399
      %7529 = vst.msk [vmem:[%s170 + $0x8c] sm:$0xf] %vm7493, %v7400
      %7530 = vst.msk [vmem:[%s170 + $0x90] sm:$0xf] %vm7493, %v7401
      %7531 = vst.msk [vmem:[%s170 + $0x94] sm:$0xf] %vm7493, %v7402
      %7532 = vst.msk [vmem:[%s170 + $0x98] sm:$0xf] %vm7493, %v7403
      %7533 = vst.msk [vmem:[%s170 + $0x9c] sm:$0xf] %vm7493, %v7404
      %7534 = vst.msk [vmem:[%s170 + $0xa0] sm:$0xf] %vm7493, %v7405
      %7535 = vst.msk [vmem:[%s170 + $0xa4] sm:$0xf] %vm7493, %v7406
      %7536 = vst.msk [vmem:[%s170 + $0xa8] sm:$0xf] %vm7493, %v7407
      %7537 = vst.msk [vmem:[%s170 + $0xac] sm:$0xf] %vm7493, %v7408
      %7538 = vst.msk [vmem:[%s170 + $0xb0] sm:$0xf] %vm7493, %v7409
      %7539 = vst.msk [vmem:[%s170 + $0xb4] sm:$0xf] %vm7493, %v7410
      %7540 = vst.msk [vmem:[%s170 + $0xb8] sm:$0xf] %vm7493, %v7411
      %7541 = vst.msk [vmem:[%s170 + $0xbc] sm:$0xf] %vm7493, %v7412
      %7542 = vst.msk [vmem:[%s170 + $0xc0] sm:$0xf] %vm7493, %v7413
      %7543 = vst.msk [vmem:[%s170 + $0xc4] sm:$0xf] %vm7493, %v7414
      %7544 = vst.msk [vmem:[%s170 + $0xc8] sm:$0xf] %vm7493, %v7415
      %7545 = vst.msk [vmem:[%s170 + $0xcc] sm:$0xf] %vm7493, %v7416
      %7546 = vst.msk [vmem:[%s170 + $0xd0] sm:$0xf] %vm7493, %v7417
      %7547 = vst.msk [vmem:[%s170 + $0xd4] sm:$0xf] %vm7493, %v7418
      %7548 = vst.msk [vmem:[%s170 + $0xd8] sm:$0xf] %vm7493, %v7419
      %7549 = vst.msk [vmem:[%s170 + $0xdc] sm:$0xf] %vm7493, %v7420
      %7550 = vst.msk [vmem:[%s170 + $0xe0] sm:$0xf] %vm7493, %v7421
      %7551 = vst.msk [vmem:[%s170 + $0xe4] sm:$0xf] %vm7493, %v7422
      %7552 = vst.msk [vmem:[%s170 + $0xe8] sm:$0xf] %vm7493, %v7423
      %7553 = vst.msk [vmem:[%s170 + $0xec] sm:$0xf] %vm7493, %v7424
      %7554 = vst.msk [vmem:[%s170 + $0xf0] sm:$0xf] %vm7493, %v7425
      %7555 = vst.msk [vmem:[%s170 + $0xf4] sm:$0xf] %vm7493, %v7426
      %7556 = vst.msk [vmem:[%s170 + $0xf8] sm:$0xf] %vm7493, %v7427
      %7557 = vst.msk [vmem:[%s170 + $0xfc] sm:$0xf] %vm7493, %v7428
      %7558 = vst.msk [vmem:[%s170 + $0x100] sm:$0xf] %vm7493, %v7429
      %7559 = vst.msk [vmem:[%s170 + $0x104] sm:$0xf] %vm7493, %v7430
      %7560 = vst.msk [vmem:[%s170 + $0x108] sm:$0xf] %vm7493, %v7431
      %7561 = vst.msk [vmem:[%s170 + $0x10c] sm:$0xf] %vm7493, %v7432
      %7562 = vst.msk [vmem:[%s170 + $0x110] sm:$0xf] %vm7493, %v7433
      %7563 = vst.msk [vmem:[%s170 + $0x114] sm:$0xf] %vm7493, %v7434
      %7564 = vst.msk [vmem:[%s170 + $0x118] sm:$0xf] %vm7493, %v7435
      %7565 = vst.msk [vmem:[%s170 + $0x11c] sm:$0xf] %vm7493, %v7436
      %7566 = vst.msk [vmem:[%s170 + $0x120] sm:$0xf] %vm7493, %v7437
      %7567 = vst.msk [vmem:[%s170 + $0x124] sm:$0xf] %vm7493, %v7438
      %7568 = vst.msk [vmem:[%s170 + $0x128] sm:$0xf] %vm7493, %v7439
      %7569 = vst.msk [vmem:[%s170 + $0x12c] sm:$0xf] %vm7493, %v7440
      %7570 = vst.msk [vmem:[%s170 + $0x130] sm:$0xf] %vm7493, %v7441
      %7571 = vst.msk [vmem:[%s170 + $0x134] sm:$0xf] %vm7493, %v7442
      %7572 = vst.msk [vmem:[%s170 + $0x138] sm:$0xf] %vm7493, %v7443
      %7573 = vst.msk [vmem:[%s170 + $0x13c] sm:$0xf] %vm7493, %v7444
      %7574 = vst.msk [vmem:[%s170 + $0x140] sm:$0xf] %vm7493, %v7445
      %7575 = vst.msk [vmem:[%s170 + $0x144] sm:$0xf] %vm7493, %v7446
      %7576 = vst.msk [vmem:[%s170 + $0x148] sm:$0xf] %vm7493, %v7447
      %7577 = vst.msk [vmem:[%s170 + $0x14c] sm:$0xf] %vm7493, %v7448
      %7578 = vst.msk [vmem:[%s170 + $0x150] sm:$0xf] %vm7493, %v7449
      %7579 = vst.msk [vmem:[%s170 + $0x154] sm:$0xf] %vm7493, %v7450
      %7580 = vst.msk [vmem:[%s170 + $0x158] sm:$0xf] %vm7493, %v7451
      %7581 = vst.msk [vmem:[%s170 + $0x15c] sm:$0xf] %vm7493, %v7452
      %7582 = vst.msk [vmem:[%s170 + $0x160] sm:$0xf] %vm7493, %v7453
      %7583 = vst.msk [vmem:[%s170 + $0x164] sm:$0xf] %vm7493, %v7454
      %7584 = vst.msk [vmem:[%s170 + $0x168] sm:$0xf] %vm7493, %v7455
      %7585 = vst.msk [vmem:[%s170 + $0x16c] sm:$0xf] %vm7493, %v7456
      %7586 = vst.msk [vmem:[%s170 + $0x170] sm:$0xf] %vm7493, %v7457
      %7587 = vst.msk [vmem:[%s170 + $0x174] sm:$0xf] %vm7493, %v7458
      %7588 = vst.msk [vmem:[%s170 + $0x178] sm:$0xf] %vm7493, %v7459
      %7589 = vst.msk [vmem:[%s170 + $0x17c] sm:$0xf] %vm7493, %v7460
      %7590 = vst.msk [vmem:[%s170 + $0x180] sm:$0xf] %vm7493, %v7461
      %7591 = vst.msk [vmem:[%s170 + $0x184] sm:$0xf] %vm7493, %v7462
      %7592 = vst.msk [vmem:[%s170 + $0x188] sm:$0xf] %vm7493, %v7463
      %7593 = vst.msk [vmem:[%s170 + $0x18c] sm:$0xf] %vm7493, %v7464
      %7594 = vst.msk [vmem:[%s170 + $0x190] sm:$0xf] %vm7493, %v7465
      %7595 = vst.msk [vmem:[%s170 + $0x194] sm:$0xf] %vm7493, %v7466
      %7596 = vst.msk [vmem:[%s170 + $0x198] sm:$0xf] %vm7493, %v7467
      %7597 = vst.msk [vmem:[%s170 + $0x19c] sm:$0xf] %vm7493, %v7468
      %7598 = vst.msk [vmem:[%s170 + $0x1a0] sm:$0xf] %vm7493, %v7469
      %7599 = vst.msk [vmem:[%s170 + $0x1a4] sm:$0xf] %vm7493, %v7470
      %7600 = vst.msk [vmem:[%s170 + $0x1a8] sm:$0xf] %vm7493, %v7471
      %7601 = vst.msk [vmem:[%s170 + $0x1ac] sm:$0xf] %vm7493, %v7472
      %7602 = vst.msk [vmem:[%s170 + $0x1b0] sm:$0xf] %vm7493, %v7473
      %7603 = vst.msk [vmem:[%s170 + $0x1b4] sm:$0xf] %vm7493, %v7474
      %7604 = vst.msk [vmem:[%s170 + $0x1b8] sm:$0xf] %vm7493, %v7475
      %7605 = vst.msk [vmem:[%s170 + $0x1bc] sm:$0xf] %vm7493, %v7476
      %7606 = vst.msk [vmem:[%s170 + $0x1c0] sm:$0xf] %vm7493, %v7477
      %7607 = vst.msk [vmem:[%s170 + $0x1c4] sm:$0xf] %vm7493, %v7478
      %7608 = vst.msk [vmem:[%s170 + $0x1c8] sm:$0xf] %vm7493, %v7479
      %7609 = vst.msk [vmem:[%s170 + $0x1cc] sm:$0xf] %vm7493, %v7480
      %7610 = vst.msk [vmem:[%s170 + $0x1d0] sm:$0xf] %vm7493, %v7481
      %7611 = vst.msk [vmem:[%s170 + $0x1d4] sm:$0xf] %vm7493, %v7482
      %7612 = vst.msk [vmem:[%s170 + $0x1d8] sm:$0xf] %vm7493, %v7483
      %7613 = vst.msk [vmem:[%s170 + $0x1dc] sm:$0xf] %vm7493, %v7484
      %7614 = vst.msk [vmem:[%s170 + $0x1e0] sm:$0xf] %vm7493, %v7485
      %7615 = vst.msk [vmem:[%s170 + $0x1e4] sm:$0xf] %vm7493, %v7486
      %7616 = vst.msk [vmem:[%s170 + $0x1e8] sm:$0xf] %vm7493, %v7487
      %7617 = vst.msk [vmem:[%s170 + $0x1ec] sm:$0xf] %vm7493, %v7488
      %7618 = vst.msk [vmem:[%s170 + $0x1f0] sm:$0xf] %vm7493, %v7489
      %7619 = vst.msk [vmem:[%s170 + $0x1f4] sm:$0xf] %vm7493, %v7490
      %7620 = vst.msk [vmem:[%s170 + $0x1f8] sm:$0xf] %vm7493, %v7491
      %7621 = vst.msk [vmem:[%s170 + $0x1fc] sm:$0xf] %vm7493, %v7492
      %p7622 = scmp.lt.s32.totalorder %s14, 1
      %s7623 = scalar_select %p7622, %s14, 1
      %s7624 = smul.addr %s7623, 128
      %s7625 = smul.addr %s7624, 4
      %s7626 = scalar_lea.vmem %s3, %s7625
      // Predicated region
      $region33: #{discriminator_forward.3} parent=31 // pred_check
        %p7627 = pneg %p100
      $region34: #{discriminator_forward.3} parent=31 // pred_check_branch
        %7629 = sbr.rel (%p7627) target = $region36
      $region35: #{discriminator_forward.3} parent=31 // pred_region
        _
      $region36: #{discriminator_forward.3} parent=31 // pred_fallthru
        _
    $region32: #{discriminator_forward.3} parent=5 // pred_fallthru
      _
    %p7630 = scmp.le.s32.totalorder 2, %s9
    // Predicated region
    $region37: #{discriminator_forward.3} parent=5 // pred_check
      %p7631 = pneg %p7630
    $region38: #{discriminator_forward.3} parent=5 // pred_check_branch
      %7633 = sbr.rel (%p7631) target = $region40
    $region39: #{discriminator_forward.3} parent=5 // pred_region
      %s7634 = ssub.s32 %s9, 2
      // Predicated region
      $region41: #{discriminator_forward.3} parent=39 // pred_check
        %p7635 = pneg %p106
      $region42: #{discriminator_forward.3} parent=39 // pred_check_branch
        %7637 = sbr.rel (%p7635) target = $region44
      $region43: #{discriminator_forward.3} parent=39 // pred_region
        %p7638 = scmp.lt.s32.totalorder %s15, 1
        %s7639 = scalar_select %p7638, %s15, 1
        %s7640 = smul.addr %s7639, 128
        %s7641 = smul.addr %s7640, 4
        %s7642 = scalar_lea.vmem %s3, %s7641
      $region44: #{discriminator_forward.3} parent=39 // pred_fallthru
        _
    $region40: #{discriminator_forward.3} parent=5 // pred_fallthru
      _
  $region6: #{discriminator_forward.3} parent=0 // loop_footer
    %s13 = sadd.s32 1, %s9
  $region7: #{discriminator_forward.3} parent=0 // loop_footer_branch
    %8 = sbr.rel target = $region3
  $region8: #{discriminator_forward.3} parent=0 // loop_exit
    _

// kernel: discriminator_forward.4
$region0: #{discriminator_forward.4}
  #allocation0 [shape = 'u32[]', space=smem, size = 0x4, offset = 0x4, fixed_abs, tag = 'smem constant byte address 0x4 - core index']
  #allocation1 [shape = 'u32[72,128]{1,0:T(1,128)}', space=vmem, size = 0x9000, scoped, tag = 'internal scratch']
  %s0 = inlined_call_operand.vmem [shape: bf16[2,17,17,256], index: 0, kind: input, shape index: {}]
  %s1 = inlined_call_operand.vmem [shape: bf16[4,256,128], index: 1, kind: input, shape index: {}]
  %s2 = inlined_call_operand.vmem [shape: f32[1,128], index: 2, kind: input, shape index: {}]
  %s3 = inlined_call_operand.vmem [shape: f32[2,256,128], index: 3, kind: output, shape index: {}]
  %s4 = sld [smem:[#allocation0]]
  $region45: #{discriminator_forward.4} parent=0
    _
  %s6 = ssub.s32 1, %s4
  %s7 = scalar_select 0, %s6, %s4
  loop: start=0, step=1, limit=4
  $region2: #{discriminator_forward.4} parent=0 // loop_pre_header
    _
  $region3: #{discriminator_forward.4} parent=0 // loop_header
    %s9 = sphi 0, %s13
    %p10 = scmp.ge.s32.totalorder %s9, 4
    %s19 = sphi 0, %s21
    %s22 = sphi 0, %s19
    %s23 = sphi 0, %s22
    %s39 = sphi 0, %s23
    %s43 = sphi 0, %s43
    %s45 = sphi 0, %s43
    %s46 = sphi 0, %s45
    %s60 = sphi 0, %s46
    %s64 = sphi 0, %s64
    %s66 = sphi 0, %s64
    %s67 = sphi 0, %s66
    %s81 = sphi 0, %s67
    %s87 = sphi 0, %s89
    %s90 = sphi 0, %s87
    %s91 = sphi 0, %s90
    %s107 = sphi 0, %s91
  $region4: #{discriminator_forward.4} parent=0 // loop_header_branch
    %12 = sbr.rel (%p10) target = $region8
  $region5: #{discriminator_forward.4} parent=0 // loop_body
    %s14 = ssub.s32 %s9, 1
    %s15 = ssub.s32 %s9, 2
    %s16 = sadd.s32 %s9, 1
    %s17 = ssub.s32 %s9, %s16
    %p18 = scmp.eq.s32.totalorder %s17, 0
    %s20 = sadd.s32 %s19, 1
    %s21 = scalar_select %p18, %s19, %s20
    %p24 = pneg %p18
    %p25 = scmp.eq.s32.totalorder %s9, 1
    %p26 = por %p24, %p25
    %p27 = scmp.ne.s32.totalorder %s19, %s22
    %p28 = scmp.eq.s32.totalorder %s9, 0
    %p29 = por %p27, %p28
    %p30 = scmp.ne.s32.totalorder %s19, %s22
    %p31 = scmp.eq.s32.totalorder %s14, 1
    %p32 = por %p30, %p31
    %p33 = scmp.ne.s32.totalorder %s22, %s23
    %p34 = scmp.eq.s32.totalorder %s14, 0
    %p35 = por %p33, %p34
    %p36 = scmp.ne.s32.totalorder %s22, %s23
    %p37 = scmp.eq.s32.totalorder %s15, 1
    %p38 = por %p36, %p37
    %p40 = scmp.ne.s32.totalorder %s23, %s39
    %p41 = scmp.eq.s32.totalorder %s15, 0
    %p42 = por %p40, %p41
    %s44 = sadd.s32 %s43, 1
    %p47 = scmp.eq.s32.totalorder %s9, 1
    %p48 = scmp.ne.s32.totalorder %s43, %s45
    %p49 = scmp.eq.s32.totalorder %s9, 0
    %p50 = por %p48, %p49
    %p51 = scmp.ne.s32.totalorder %s43, %s45
    %p52 = scmp.eq.s32.totalorder %s14, 1
    %p53 = por %p51, %p52
    %p54 = scmp.ne.s32.totalorder %s45, %s46
    %p55 = scmp.eq.s32.totalorder %s14, 0
    %p56 = por %p54, %p55
    %p57 = scmp.ne.s32.totalorder %s45, %s46
    %p58 = scmp.eq.s32.totalorder %s15, 1
    %p59 = por %p57, %p58
    %p61 = scmp.ne.s32.totalorder %s46, %s60
    %p62 = scmp.eq.s32.totalorder %s15, 0
    %p63 = por %p61, %p62
    %s65 = sadd.s32 %s64, 1
    %p68 = scmp.eq.s32.totalorder %s9, 1
    %p69 = scmp.ne.s32.totalorder %s64, %s66
    %p70 = scmp.eq.s32.totalorder %s9, 0
    %p71 = por %p69, %p70
    %p72 = scmp.ne.s32.totalorder %s64, %s66
    %p73 = scmp.eq.s32.totalorder %s14, 1
    %p74 = por %p72, %p73
    %p75 = scmp.ne.s32.totalorder %s66, %s67
    %p76 = scmp.eq.s32.totalorder %s14, 0
    %p77 = por %p75, %p76
    %p78 = scmp.ne.s32.totalorder %s66, %s67
    %p79 = scmp.eq.s32.totalorder %s15, 1
    %p80 = por %p78, %p79
    %p82 = scmp.ne.s32.totalorder %s67, %s81
    %p83 = scmp.eq.s32.totalorder %s15, 0
    %p84 = por %p82, %p83
    %s85 = ssub.s32 %s9, %s16
    %p86 = scmp.eq.s32.totalorder %s85, 0
    %s88 = sadd.s32 %s87, 1
    %s89 = scalar_select %p86, %s87, %s88
    %p92 = pneg %p86
    %p93 = scmp.eq.s32.totalorder %s9, 1
    %p94 = por %p92, %p93
    %p95 = scmp.ne.s32.totalorder %s87, %s90
    %p96 = scmp.eq.s32.totalorder %s9, 0
    %p97 = por %p95, %p96
    %p98 = scmp.ne.s32.totalorder %s87, %s90
    %p99 = scmp.eq.s32.totalorder %s14, 1
    %p100 = por %p98, %p99
    %p101 = scmp.ne.s32.totalorder %s90, %s91
    %p102 = scmp.eq.s32.totalorder %s14, 0
    %p103 = por %p101, %p102
    %p104 = scmp.ne.s32.totalorder %s90, %s91
    %p105 = scmp.eq.s32.totalorder %s15, 1
    %p106 = por %p104, %p105
    %p108 = scmp.ne.s32.totalorder %s91, %s107
    %p109 = scmp.eq.s32.totalorder %s15, 0
    %p110 = por %p108, %p109
    %p111 = scmp.le.s32.totalorder 1, %s9
    %p112 = scmp.lt.s32.totalorder %s9, 3
    %p113 = pnand %p111, %p112
    %p114 = pneg %p113
    // Predicated region
    $region9: #{discriminator_forward.4} parent=5 // pred_check
      _
    $region10: #{discriminator_forward.4} parent=5 // pred_check_branch
      %116 = sbr.rel (%p113) target = $region12
    $region11: #{discriminator_forward.4} parent=5 // pred_region
      %s117 = ssub.s32 %s9, 1
      // Predicated region
      $region13: #{discriminator_forward.4} parent=11 // pred_check
        %p118 = pneg %p56
      $region14: #{discriminator_forward.4} parent=11 // pred_check_branch
        %120 = sbr.rel (%p118) target = $region16
      $region15: #{discriminator_forward.4} parent=11 // pred_region
        _
      $region16: #{discriminator_forward.4} parent=11 // pred_fallthru
        _
      // Predicated region
      $region17: #{discriminator_forward.4} parent=11 // pred_check
        %p121 = pneg %p77
      $region18: #{discriminator_forward.4} parent=11 // pred_check_branch
        %123 = sbr.rel (%p121) target = $region20
      $region19: #{discriminator_forward.4} parent=11 // pred_region
        _
      $region20: #{discriminator_forward.4} parent=11 // pred_fallthru
        _
    $region12: #{discriminator_forward.4} parent=5 // pred_fallthru
      _
    %p124 = scmp.lt.s32.totalorder %s9, 2
    // Predicated region
    $region21: #{discriminator_forward.4} parent=5 // pred_check
      %p125 = pneg %p124
    $region22: #{discriminator_forward.4} parent=5 // pred_check_branch
      %127 = sbr.rel (%p125) target = $region24
    $region23: #{discriminator_forward.4} parent=5 // pred_region
      // Predicated region
      $region25: #{discriminator_forward.4} parent=23 // pred_check
        %p128 = pneg %p29
      $region26: #{discriminator_forward.4} parent=23 // pred_check_branch
        %130 = sbr.rel (%p128) target = $region28
      $region27: #{discriminator_forward.4} parent=23 // pred_region
        %p131 = scmp.lt.s32.totalorder %s9, 1
        %s132 = scalar_select %p131, %s9, 1
        %s133 = smul.addr %s132, 102
        %s134 = smul.addr %s133, 4
        %s135 = scalar_lea.vmem %s0, %s134
      $region28: #{discriminator_forward.4} parent=23 // pred_fallthru
        _
    $region24: #{discriminator_forward.4} parent=5 // pred_fallthru
      _
    %p136 = scmp.le.s32.totalorder 1, %s9
    %p137 = scmp.lt.s32.totalorder %s9, 3
    %p138 = pnand %p136, %p137
    %p139 = pneg %p138
    // Predicated region
    $region29: #{discriminator_forward.4} parent=5 // pred_check
      _
    $region30: #{discriminator_forward.4} parent=5 // pred_check_branch
      %141 = sbr.rel (%p138) target = $region32
    $region31: #{discriminator_forward.4} parent=5 // pred_region
      %s142 = ssub.s32 %s9, 1
      %p143 = scmp.lt.s32.totalorder %s14, 1
      %s144 = scalar_select %p143, %s14, 1
      %s145 = smul.addr %s144, 102
      %s146 = smul.addr %s145, 4
      %s147 = scalar_lea.vmem %s0, %s146
      %p148 = pneg %p35
      %p149 = pneg %p32
      %p150 = pneg %p56
      %p151 = pneg %p53
      %p152 = pneg %p77
      %p153 = pneg %p74
      %p154 = pneg %p103
      %p155 = pneg %p100
      %p156 = scmp.lt.s32.totalorder %s14, 1
      %s157 = scalar_select %p156, %s14, 1
      %s158 = smul.addr %s157, 32
      %s159 = smul.addr %s158, 8
      %s160 = scalar_lea.vmem %s3, %s159
      %p161 = scmp.lt.s32.totalorder %s14, 1
      %s162 = scalar_select %p161, %s14, 1
      %s163 = smul.addr %s162, 102
      %s164 = smul.addr %s163, 4
      %s165 = scalar_lea.vmem %s0, %s164
      %p166 = scmp.lt.s32.totalorder %s14, 1
      %s167 = scalar_select %p166, %s14, 1
      %s168 = smul.addr %s167, 32
      %s169 = smul.addr %s168, 8
      %s170 = scalar_lea.vmem %s3, %s169
      %v171 = vld [vmem:[%s165] sm:$0xff]
      %v172 = vld [vmem:[%s165 + $0x8] sm:$0xff]
      %v173 = vld [vmem:[%s165 + $0x18] sm:$0xff]
      %v174 = vld [vmem:[%s165 + $0x20] sm:$0xff]
      %v175 = vld [vmem:[%s165 + $0x30] sm:$0xff]
      %v176 = vld [vmem:[%s165 + $0x38] sm:$0xff]
      %v177 = vld [vmem:[%s165 + $0x48] sm:$0xff]
      %v178 = vld [vmem:[%s165 + $0x50] sm:$0xff]
      %v179 = vld [vmem:[%s165 + $0x60] sm:$0xff]
      %v180 = vld [vmem:[%s165 + $0x68] sm:$0xff]
      %v181 = vld [vmem:[%s165 + $0x78] sm:$0xff]
      %v182 = vld [vmem:[%s165 + $0x80] sm:$0xff]
      %v183 = vld [vmem:[%s165 + $0x90] sm:$0xff]
      %v184 = vld [vmem:[%s165 + $0x98] sm:$0xff]
      %v185 = vld [vmem:[%s165 + $0xa8] sm:$0xff]
      %v186 = vld [vmem:[%s165 + $0xb0] sm:$0xff]
      %v187 = vld [vmem:[%s165 + $0xc0] sm:$0xff]
      %v188 = vld [vmem:[%s165 + $0xc8] sm:$0xff]
      %v189 = vld [vmem:[%s165 + $0xd8] sm:$0xff]
      %v190 = vld [vmem:[%s165 + $0xe0] sm:$0xff]
      %v191 = vld [vmem:[%s165 + $0xf0] sm:$0xff]
      %v192 = vld [vmem:[%s165 + $0xf8] sm:$0xff]
      %v193 = vld [vmem:[%s165 + $0x108] sm:$0xff]
      %v194 = vld [vmem:[%s165 + $0x110] sm:$0xff]
      %v195 = vld [vmem:[%s165 + $0x120] sm:$0xff]
      %v196 = vld [vmem:[%s165 + $0x128] sm:$0xff]
      %v197 = vld [vmem:[%s165 + $0x138] sm:$0xff]
      %v198 = vld [vmem:[%s165 + $0x140] sm:$0xff]
      %v199 = vld [vmem:[%s165 + $0x150] sm:$0xff]
      %v200 = vld [vmem:[%s165 + $0x158] sm:$0xff]
      %v201 = vld [vmem:[%s165 + $0x168] sm:$0xff]
      %v202 = vld [vmem:[%s165 + $0x170] sm:$0xff]
      %v203 = vld [vmem:[%s1] sm:$0xf]
      %v204 = vld [vmem:[%s1 + $0x4] sm:$0xf]
      %v205 = vld [vmem:[%s1 + $0x8] sm:$0xf]
      %v206 = vld [vmem:[%s1 + $0xc] sm:$0xf]
      %v207 = vld [vmem:[%s1 + $0x10] sm:$0xf]
      %v208 = vld [vmem:[%s1 + $0x14] sm:$0xf]
      %v209 = vld [vmem:[%s1 + $0x18] sm:$0xf]
      %v210 = vld [vmem:[%s1 + $0x1c] sm:$0xf]
      %v211 = vld [vmem:[%s1 + $0x20] sm:$0xf]
      %v212 = vld [vmem:[%s1 + $0x24] sm:$0xf]
      %v213 = vld [vmem:[%s1 + $0x28] sm:$0xf]
      %v214 = vld [vmem:[%s1 + $0x2c] sm:$0xf]
      %v215 = vld [vmem:[%s1 + $0x30] sm:$0xf]
      %v216 = vld [vmem:[%s1 + $0x34] sm:$0xf]
      %v217 = vld [vmem:[%s1 + $0x38] sm:$0xf]
      %v218 = vld [vmem:[%s1 + $0x3c] sm:$0xf]
      %v219 = vld [vmem:[%s1 + $0x40] sm:$0xf]
      %v220 = vld [vmem:[%s1 + $0x44] sm:$0xf]
      %v221 = vld [vmem:[%s1 + $0x48] sm:$0xf]
      %v222 = vld [vmem:[%s1 + $0x4c] sm:$0xf]
      %v223 = vld [vmem:[%s1 + $0x50] sm:$0xf]
      %v224 = vld [vmem:[%s1 + $0x54] sm:$0xf]
      %v225 = vld [vmem:[%s1 + $0x58] sm:$0xf]
      %v226 = vld [vmem:[%s1 + $0x5c] sm:$0xf]
      %v227 = vld [vmem:[%s1 + $0x60] sm:$0xf]
      %v228 = vld [vmem:[%s1 + $0x64] sm:$0xf]
      %v229 = vld [vmem:[%s1 + $0x68] sm:$0xf]
      %v230 = vld [vmem:[%s1 + $0x6c] sm:$0xf]
      %v231 = vld [vmem:[%s1 + $0x70] sm:$0xf]
      %v232 = vld [vmem:[%s1 + $0x74] sm:$0xf]
      %v233 = vld [vmem:[%s1 + $0x78] sm:$0xf]
      %v234 = vld [vmem:[%s1 + $0x7c] sm:$0xf]
      %v235 = vld [vmem:[%s165 + $0x10] sm:$0x11]
      %v236 = vld [vmem:[%s165 + $0x28] sm:$0x11]
      %v237 = vld [vmem:[%s165 + $0x40] sm:$0x11]
      %v238 = vld [vmem:[%s165 + $0x58] sm:$0x11]
      %v239 = vld [vmem:[%s165 + $0x70] sm:$0x11]
      %v240 = vld [vmem:[%s165 + $0x88] sm:$0x11]
      %v241 = vld [vmem:[%s165 + $0xa0] sm:$0x11]
      %v242 = vld [vmem:[%s165 + $0xb8] sm:$0x11]
      %v243 = vld [vmem:[%s165 + $0xd0] sm:$0x11]
      %v244 = vld [vmem:[%s165 + $0xe8] sm:$0x11]
      %v245 = vld [vmem:[%s165 + $0x100] sm:$0x11]
      %v246 = vld [vmem:[%s165 + $0x118] sm:$0x11]
      %v247 = vld [vmem:[%s165 + $0x130] sm:$0x11]
      %v248 = vld [vmem:[%s165 + $0x148] sm:$0x11]
      %v249 = vld [vmem:[%s165 + $0x160] sm:$0x11]
      %v250 = vld [vmem:[%s165 + $0x178] sm:$0x11]
      %vm251 = vsmask.f32 3328
      %vm252 = vsmask.f32 7440
      %vm253 = vmor %vm251, %vm252
      %v255 = vshrl.u32 %v171, 16
      %v257 = vrot.slane %v255, 4
      %v258 = vshll.u32 %v171, 16
      %v260 = vrot.slane %v258, 5
      %v261 = vor.u32 %v257, %v260
      %v262 = vrot.slane %v261, 4
      %v264 = vshll.u32 %v172, 16
      %v266 = vrot.slane %v264, 5
      %v267 = vsel %vm253, %v262, %v266
      %v268 = vshrl.u32 %v172, 16
      %v270 = vrot.slane %v268, 4
      %v271 = vor.u32 %v270, %v266
      %v272 = vrot.slane %v271, 4
      %v274 = vshll.u32 %v235, 16
      %v276 = vrot.slane %v274, 5
      %v277 = vsel %vm253, %v272, %v276
      %v279 = vshrl.u32 %v173, 16
      %v281 = vrot.slane %v279, 4
      %v282 = vshll.u32 %v173, 16
      %v284 = vrot.slane %v282, 5
      %v285 = vor.u32 %v281, %v284
      %v286 = vrot.slane %v285, 4
      %v288 = vshll.u32 %v174, 16
      %v290 = vrot.slane %v288, 5
      %v291 = vsel %vm253, %v286, %v290
      %v292 = vshrl.u32 %v174, 16
      %v294 = vrot.slane %v292, 4
      %v295 = vor.u32 %v294, %v290
      %v296 = vrot.slane %v295, 4
      %v298 = vshll.u32 %v236, 16
      %v300 = vrot.slane %v298, 5
      %v301 = vsel %vm253, %v296, %v300
      %v303 = vshrl.u32 %v175, 16
      %v305 = vrot.slane %v303, 4
      %v306 = vshll.u32 %v175, 16
      %v308 = vrot.slane %v306, 5
      %v309 = vor.u32 %v305, %v308
      %v310 = vrot.slane %v309, 4
      %v312 = vshll.u32 %v176, 16
      %v314 = vrot.slane %v312, 5
      %v315 = vsel %vm253, %v310, %v314
      %v316 = vshrl.u32 %v176, 16
      %v318 = vrot.slane %v316, 4
      %v319 = vor.u32 %v318, %v314
      %v320 = vrot.slane %v319, 4
      %v322 = vshll.u32 %v237, 16
      %v324 = vrot.slane %v322, 5
      %v325 = vsel %vm253, %v320, %v324
      %v327 = vshrl.u32 %v177, 16
      %v329 = vrot.slane %v327, 4
      %v330 = vshll.u32 %v177, 16
      %v332 = vrot.slane %v330, 5
      %v333 = vor.u32 %v329, %v332
      %v334 = vrot.slane %v333, 4
      %v336 = vshll.u32 %v178, 16
      %v338 = vrot.slane %v336, 5
      %v339 = vsel %vm253, %v334, %v338
      %v340 = vshrl.u32 %v178, 16
      %v342 = vrot.slane %v340, 4
      %v343 = vor.u32 %v342, %v338
      %v344 = vrot.slane %v343, 4
      %v346 = vshll.u32 %v238, 16
      %v348 = vrot.slane %v346, 5
      %v349 = vsel %vm253, %v344, %v348
      %v351 = vshrl.u32 %v179, 16
      %v353 = vrot.slane %v351, 4
      %v354 = vshll.u32 %v179, 16
      %v356 = vrot.slane %v354, 5
      %v357 = vor.u32 %v353, %v356
      %v358 = vrot.slane %v357, 4
      %v360 = vshll.u32 %v180, 16
      %v362 = vrot.slane %v360, 5
      %v363 = vsel %vm253, %v358, %v362
      %v364 = vshrl.u32 %v180, 16
      %v366 = vrot.slane %v364, 4
      %v367 = vor.u32 %v366, %v362
      %v368 = vrot.slane %v367, 4
      %v370 = vshll.u32 %v239, 16
      %v372 = vrot.slane %v370, 5
      %v373 = vsel %vm253, %v368, %v372
      %v375 = vshrl.u32 %v181, 16
      %v377 = vrot.slane %v375, 4
      %v378 = vshll.u32 %v181, 16
      %v380 = vrot.slane %v378, 5
      %v381 = vor.u32 %v377, %v380
      %v382 = vrot.slane %v381, 4
      %v384 = vshll.u32 %v182, 16
      %v386 = vrot.slane %v384, 5
      %v387 = vsel %vm253, %v382, %v386
      %v388 = vshrl.u32 %v182, 16
      %v390 = vrot.slane %v388, 4
      %v391 = vor.u32 %v390, %v386
      %v392 = vrot.slane %v391, 4
      %v394 = vshll.u32 %v240, 16
      %v396 = vrot.slane %v394, 5
      %v397 = vsel %vm253, %v392, %v396
      %v399 = vshrl.u32 %v183, 16
      %v401 = vrot.slane %v399, 4
      %v402 = vshll.u32 %v183, 16
      %v404 = vrot.slane %v402, 5
      %v405 = vor.u32 %v401, %v404
      %v406 = vrot.slane %v405, 4
      %v408 = vshll.u32 %v184, 16
      %v410 = vrot.slane %v408, 5
      %v411 = vsel %vm253, %v406, %v410
      %v412 = vshrl.u32 %v184, 16
      %v414 = vrot.slane %v412, 4
      %v415 = vor.u32 %v414, %v410
      %v416 = vrot.slane %v415, 4
      %v418 = vshll.u32 %v241, 16
      %v420 = vrot.slane %v418, 5
      %v421 = vsel %vm253, %v416, %v420
      %v423 = vshrl.u32 %v185, 16
      %v425 = vrot.slane %v423, 4
      %v426 = vshll.u32 %v185, 16
      %v428 = vrot.slane %v426, 5
      %v429 = vor.u32 %v425, %v428
      %v430 = vrot.slane %v429, 4
      %v432 = vshll.u32 %v186, 16
      %v434 = vrot.slane %v432, 5
      %v435 = vsel %vm253, %v430, %v434
      %v436 = vshrl.u32 %v186, 16
      %v438 = vrot.slane %v436, 4
      %v439 = vor.u32 %v438, %v434
      %v440 = vrot.slane %v439, 4
      %v442 = vshll.u32 %v242, 16
      %v444 = vrot.slane %v442, 5
      %v445 = vsel %vm253, %v440, %v444
      %v447 = vshrl.u32 %v187, 16
      %v449 = vrot.slane %v447, 4
      %v450 = vshll.u32 %v187, 16
      %v452 = vrot.slane %v450, 5
      %v453 = vor.u32 %v449, %v452
      %v454 = vrot.slane %v453, 4
      %v456 = vshll.u32 %v188, 16
      %v458 = vrot.slane %v456, 5
      %v459 = vsel %vm253, %v454, %v458
      %v460 = vshrl.u32 %v188, 16
      %v462 = vrot.slane %v460, 4
      %v463 = vor.u32 %v462, %v458
      %v464 = vrot.slane %v463, 4
      %v466 = vshll.u32 %v243, 16
      %v468 = vrot.slane %v466, 5
      %v469 = vsel %vm253, %v464, %v468
      %v471 = vshrl.u32 %v189, 16
      %v473 = vrot.slane %v471, 4
      %v474 = vshll.u32 %v189, 16
      %v476 = vrot.slane %v474, 5
      %v477 = vor.u32 %v473, %v476
      %v478 = vrot.slane %v477, 4
      %v480 = vshll.u32 %v190, 16
      %v482 = vrot.slane %v480, 5
      %v483 = vsel %vm253, %v478, %v482
      %v484 = vshrl.u32 %v190, 16
      %v486 = vrot.slane %v484, 4
      %v487 = vor.u32 %v486, %v482
      %v488 = vrot.slane %v487, 4
      %v490 = vshll.u32 %v244, 16
      %v492 = vrot.slane %v490, 5
      %v493 = vsel %vm253, %v488, %v492
      %v495 = vshrl.u32 %v191, 16
      %v497 = vrot.slane %v495, 4
      %v498 = vshll.u32 %v191, 16
      %v500 = vrot.slane %v498, 5
      %v501 = vor.u32 %v497, %v500
      %v502 = vrot.slane %v501, 4
      %v504 = vshll.u32 %v192, 16
      %v506 = vrot.slane %v504, 5
      %v507 = vsel %vm253, %v502, %v506
      %v508 = vshrl.u32 %v192, 16
      %v510 = vrot.slane %v508, 4
      %v511 = vor.u32 %v510, %v506
      %v512 = vrot.slane %v511, 4
      %v514 = vshll.u32 %v245, 16
      %v516 = vrot.slane %v514, 5
      %v517 = vsel %vm253, %v512, %v516
      %v519 = vshrl.u32 %v193, 16
      %v521 = vrot.slane %v519, 4
      %v522 = vshll.u32 %v193, 16
      %v524 = vrot.slane %v522, 5
      %v525 = vor.u32 %v521, %v524
      %v526 = vrot.slane %v525, 4
      %v528 = vshll.u32 %v194, 16
      %v530 = vrot.slane %v528, 5
      %v531 = vsel %vm253, %v526, %v530
      %v532 = vshrl.u32 %v194, 16
      %v534 = vrot.slane %v532, 4
      %v535 = vor.u32 %v534, %v530
      %v536 = vrot.slane %v535, 4
      %v538 = vshll.u32 %v246, 16
      %v540 = vrot.slane %v538, 5
      %v541 = vsel %vm253, %v536, %v540
      %v543 = vshrl.u32 %v195, 16
      %v545 = vrot.slane %v543, 4
      %v546 = vshll.u32 %v195, 16
      %v548 = vrot.slane %v546, 5
      %v549 = vor.u32 %v545, %v548
      %v550 = vrot.slane %v549, 4
      %v552 = vshll.u32 %v196, 16
      %v554 = vrot.slane %v552, 5
      %v555 = vsel %vm253, %v550, %v554
      %v556 = vshrl.u32 %v196, 16
      %v558 = vrot.slane %v556, 4
      %v559 = vor.u32 %v558, %v554
      %v560 = vrot.slane %v559, 4
      %v562 = vshll.u32 %v247, 16
      %v564 = vrot.slane %v562, 5
      %v565 = vsel %vm253, %v560, %v564
      %v567 = vshrl.u32 %v197, 16
      %v569 = vrot.slane %v567, 4
      %v570 = vshll.u32 %v197, 16
      %v572 = vrot.slane %v570, 5
      %v573 = vor.u32 %v569, %v572
      %v574 = vrot.slane %v573, 4
      %v576 = vshll.u32 %v198, 16
      %v578 = vrot.slane %v576, 5
      %v579 = vsel %vm253, %v574, %v578
      %v580 = vshrl.u32 %v198, 16
      %v582 = vrot.slane %v580, 4
      %v583 = vor.u32 %v582, %v578
      %v584 = vrot.slane %v583, 4
      %v586 = vshll.u32 %v248, 16
      %v588 = vrot.slane %v586, 5
      %v589 = vsel %vm253, %v584, %v588
      %v591 = vshrl.u32 %v199, 16
      %v593 = vrot.slane %v591, 4
      %v594 = vshll.u32 %v199, 16
      %v596 = vrot.slane %v594, 5
      %v597 = vor.u32 %v593, %v596
      %v598 = vrot.slane %v597, 4
      %v600 = vshll.u32 %v200, 16
      %v602 = vrot.slane %v600, 5
      %v603 = vsel %vm253, %v598, %v602
      %v604 = vshrl.u32 %v200, 16
      %v606 = vrot.slane %v604, 4
      %v607 = vor.u32 %v606, %v602
      %v608 = vrot.slane %v607, 4
      %v610 = vshll.u32 %v249, 16
      %v612 = vrot.slane %v610, 5
      %v613 = vsel %vm253, %v608, %v612
      %v615 = vshrl.u32 %v201, 16
      %v617 = vrot.slane %v615, 4
      %v618 = vshll.u32 %v201, 16
      %v620 = vrot.slane %v618, 5
      %v621 = vor.u32 %v617, %v620
      %v622 = vrot.slane %v621, 4
      %v624 = vshll.u32 %v202, 16
      %v626 = vrot.slane %v624, 5
      %v627 = vsel %vm253, %v622, %v626
      %v628 = vshrl.u32 %v202, 16
      %v630 = vrot.slane %v628, 4
      %v631 = vor.u32 %v630, %v626
      %v632 = vrot.slane %v631, 4
      %v634 = vshll.u32 %v250, 16
      %v636 = vrot.slane %v634, 5
      %v637 = vsel %vm253, %v632, %v636
      %s638 = scalar_lea.vmem %s1, 128
      %v639 = vld [vmem:[%s638] sm:$0xf]
      %v640 = vld [vmem:[%s638 + $0x4] sm:$0xf]
      %v641 = vld [vmem:[%s638 + $0x8] sm:$0xf]
      %v642 = vld [vmem:[%s638 + $0xc] sm:$0xf]
      %v643 = vld [vmem:[%s638 + $0x10] sm:$0xf]
      %v644 = vld [vmem:[%s638 + $0x14] sm:$0xf]
      %v645 = vld [vmem:[%s638 + $0x18] sm:$0xf]
      %v646 = vld [vmem:[%s638 + $0x1c] sm:$0xf]
      %v647 = vld [vmem:[%s638 + $0x20] sm:$0xf]
      %v648 = vld [vmem:[%s638 + $0x24] sm:$0xf]
      %v649 = vld [vmem:[%s638 + $0x28] sm:$0xf]
      %v650 = vld [vmem:[%s638 + $0x2c] sm:$0xf]
      %v651 = vld [vmem:[%s638 + $0x30] sm:$0xf]
      %v652 = vld [vmem:[%s638 + $0x34] sm:$0xf]
      %v653 = vld [vmem:[%s638 + $0x38] sm:$0xf]
      %v654 = vld [vmem:[%s638 + $0x3c] sm:$0xf]
      %v655 = vld [vmem:[%s638 + $0x40] sm:$0xf]
      %v656 = vld [vmem:[%s638 + $0x44] sm:$0xf]
      %v657 = vld [vmem:[%s638 + $0x48] sm:$0xf]
      %v658 = vld [vmem:[%s638 + $0x4c] sm:$0xf]
      %v659 = vld [vmem:[%s638 + $0x50] sm:$0xf]
      %v660 = vld [vmem:[%s638 + $0x54] sm:$0xf]
      %v661 = vld [vmem:[%s638 + $0x58] sm:$0xf]
      %v662 = vld [vmem:[%s638 + $0x5c] sm:$0xf]
      %v663 = vld [vmem:[%s638 + $0x60] sm:$0xf]
      %v664 = vld [vmem:[%s638 + $0x64] sm:$0xf]
      %v665 = vld [vmem:[%s638 + $0x68] sm:$0xf]
      %v666 = vld [vmem:[%s638 + $0x6c] sm:$0xf]
      %v667 = vld [vmem:[%s638 + $0x70] sm:$0xf]
      %v668 = vld [vmem:[%s638 + $0x74] sm:$0xf]
      %v669 = vld [vmem:[%s638 + $0x78] sm:$0xf]
      %v670 = vld [vmem:[%s638 + $0x7c] sm:$0xf]
      %v671 = vunpack.c.l.b16 %v267
      %v672 = vunpack.c.h.b16 %v267
      %v673 = vunpack.c.l.b16 %v277
      %v674 = vunpack.c.h.b16 %v277
      %v675 = vunpack.c.l.b16 %v291
      %v676 = vunpack.c.h.b16 %v291
      %v677 = vunpack.c.l.b16 %v301
      %v678 = vunpack.c.h.b16 %v301
      %v679 = vunpack.c.l.b16 %v315
      %v680 = vunpack.c.h.b16 %v315
      %v681 = vunpack.c.l.b16 %v325
      %v682 = vunpack.c.h.b16 %v325
      %v683 = vunpack.c.l.b16 %v339
      %v684 = vunpack.c.h.b16 %v339
      %v685 = vunpack.c.l.b16 %v349
      %v686 = vunpack.c.h.b16 %v349
      %v687 = vunpack.c.l.b16 %v363
      %v688 = vunpack.c.h.b16 %v363
      %v689 = vunpack.c.l.b16 %v373
      %v690 = vunpack.c.h.b16 %v373
      %v691 = vunpack.c.l.b16 %v387
      %v692 = vunpack.c.h.b16 %v387
      %v693 = vunpack.c.l.b16 %v397
      %v694 = vunpack.c.h.b16 %v397
      %v695 = vunpack.c.l.b16 %v411
      %v696 = vunpack.c.h.b16 %v411
      %v697 = vunpack.c.l.b16 %v421
      %v698 = vunpack.c.h.b16 %v421
      %v699 = vunpack.c.l.b16 %v435
      %v700 = vunpack.c.h.b16 %v435
      %v701 = vunpack.c.l.b16 %v445
      %v702 = vunpack.c.h.b16 %v445
      %v703 = vunpack.c.l.b16 %v459
      %v704 = vunpack.c.h.b16 %v459
      %v705 = vunpack.c.l.b16 %v469
      %v706 = vunpack.c.h.b16 %v469
      %v707 = vunpack.c.l.b16 %v483
      %v708 = vunpack.c.h.b16 %v483
      %v709 = vunpack.c.l.b16 %v493
      %v710 = vunpack.c.h.b16 %v493
      %v711 = vunpack.c.l.b16 %v507
      %v712 = vunpack.c.h.b16 %v507
      %v713 = vunpack.c.l.b16 %v517
      %v714 = vunpack.c.h.b16 %v517
      %v715 = vunpack.c.l.b16 %v531
      %v716 = vunpack.c.h.b16 %v531
      %v717 = vunpack.c.l.b16 %v541
      %v718 = vunpack.c.h.b16 %v541
      %v719 = vunpack.c.l.b16 %v555
      %v720 = vunpack.c.h.b16 %v555
      %v721 = vunpack.c.l.b16 %v565
      %v722 = vunpack.c.h.b16 %v565
      %v723 = vunpack.c.l.b16 %v579
      %v724 = vunpack.c.h.b16 %v579
      %v725 = vunpack.c.l.b16 %v589
      %v726 = vunpack.c.h.b16 %v589
      %v727 = vunpack.c.l.b16 %v603
      %v728 = vunpack.c.h.b16 %v603
      %v729 = vunpack.c.l.b16 %v613
      %v730 = vunpack.c.h.b16 %v613
      %v731 = vunpack.c.l.b16 %v627
      %v732 = vunpack.c.h.b16 %v627
      %v733 = vunpack.c.l.b16 %v637
      %v734 = vunpack.c.h.b16 %v637
      %v735 = vpack.c.b16 %v673, %v671
      %v736 = vpack.c.b16 %v674, %v672
      %v737 = vpack.c.b16 %v677, %v675
      %v738 = vpack.c.b16 %v678, %v676
      %v739 = vpack.c.b16 %v681, %v679
      %v740 = vpack.c.b16 %v682, %v680
      %v741 = vpack.c.b16 %v685, %v683
      %v742 = vpack.c.b16 %v686, %v684
      %v743 = vpack.c.b16 %v689, %v687
      %v744 = vpack.c.b16 %v690, %v688
      %v745 = vpack.c.b16 %v693, %v691
      %v746 = vpack.c.b16 %v694, %v692
      %v747 = vpack.c.b16 %v697, %v695
      %v748 = vpack.c.b16 %v698, %v696
      %v749 = vpack.c.b16 %v701, %v699
      %v750 = vpack.c.b16 %v702, %v700
      %v751 = vpack.c.b16 %v705, %v703
      %v752 = vpack.c.b16 %v706, %v704
      %v753 = vpack.c.b16 %v709, %v707
      %v754 = vpack.c.b16 %v710, %v708
      %v755 = vpack.c.b16 %v713, %v711
      %v756 = vpack.c.b16 %v714, %v712
      %v757 = vpack.c.b16 %v717, %v715
      %v758 = vpack.c.b16 %v718, %v716
      %v759 = vpack.c.b16 %v721, %v719
      %v760 = vpack.c.b16 %v722, %v720
      %v761 = vpack.c.b16 %v725, %v723
      %v762 = vpack.c.b16 %v726, %v724
      %v763 = vpack.c.b16 %v729, %v727
      %v764 = vpack.c.b16 %v730, %v728
      %v765 = vpack.c.b16 %v733, %v731
      %v766 = vpack.c.b16 %v734, %v732
      %v831 = vunpack.c.l.b16 %v639
      %v832 = vunpack.c.l.b16 %v640
      %v833 = vunpack.c.l.b16 %v641
      %v834 = vunpack.c.l.b16 %v642
      %v835 = vunpack.c.l.b16 %v643
      %v836 = vunpack.c.l.b16 %v644
      %v837 = vunpack.c.l.b16 %v645
      %v838 = vunpack.c.l.b16 %v646
      %v839 = vunpack.c.l.b16 %v647
      %v840 = vunpack.c.l.b16 %v648
      %v841 = vunpack.c.l.b16 %v649
      %v842 = vunpack.c.l.b16 %v650
      %v843 = vunpack.c.l.b16 %v651
      %v844 = vunpack.c.l.b16 %v652
      %v845 = vunpack.c.l.b16 %v653
      %v846 = vunpack.c.l.b16 %v654
      %v847 = vunpack.c.l.b16 %v655
      %v848 = vunpack.c.l.b16 %v656
      %v849 = vunpack.c.l.b16 %v657
      %v850 = vunpack.c.l.b16 %v658
      %v851 = vunpack.c.l.b16 %v659
      %v852 = vunpack.c.l.b16 %v660
      %v853 = vunpack.c.l.b16 %v661
      %v854 = vunpack.c.l.b16 %v662
      %v855 = vunpack.c.l.b16 %v663
      %v856 = vunpack.c.l.b16 %v664
      %v857 = vunpack.c.l.b16 %v665
      %v858 = vunpack.c.l.b16 %v666
      %v859 = vunpack.c.l.b16 %v667
      %v860 = vunpack.c.l.b16 %v668
      %v861 = vunpack.c.l.b16 %v669
      %v862 = vunpack.c.l.b16 %v670
      %v863 = vpack.c.b16 %v832, %v831
      %v864 = vpack.c.b16 %v834, %v833
      %v865 = vpack.c.b16 %v836, %v835
      %v866 = vpack.c.b16 %v838, %v837
      %v867 = vpack.c.b16 %v840, %v839
      %v868 = vpack.c.b16 %v842, %v841
      %v869 = vpack.c.b16 %v844, %v843
      %v870 = vpack.c.b16 %v846, %v845
      %v871 = vpack.c.b16 %v848, %v847
      %v872 = vpack.c.b16 %v850, %v849
      %v873 = vpack.c.b16 %v852, %v851
      %v874 = vpack.c.b16 %v854, %v853
      %v875 = vpack.c.b16 %v856, %v855
      %v876 = vpack.c.b16 %v858, %v857
      %v877 = vpack.c.b16 %v860, %v859
      %v878 = vpack.c.b16 %v862, %v861
      %895 = vmatpush.bf16.msra.mxu0 %v870
      %896 = vmatpush.bf16.msra.mxu0 %v869
      %897 = vmatpush.bf16.msra.mxu0 %v868
      %898 = vmatpush.bf16.msra.mxu0 %v867
      %899 = vmatpush.bf16.msra.mxu0 %v866
      %900 = vmatpush.bf16.msra.mxu0 %v865
      %901 = vmatpush.bf16.msra.mxu0 %v864
      %902 = vmatpush.bf16.msra.mxu0 %v863
      %903 = vmatmul.bf16.gmra.mxu0 %v735
      %v904 = vpop.f32.mrf.mxu0
      %v905 = vadd.f32 0.0, %v904
      %v906 = vpop.f32.mrf.mxu0
      %v907 = vadd.f32 0.0, %v906
      %908 = vmatmul.bf16.gmra.mxu0 %v737
      %v909 = vpop.f32.mrf.mxu0
      %v910 = vadd.f32 0.0, %v909
      %v911 = vpop.f32.mrf.mxu0
      %v912 = vadd.f32 0.0, %v911
      %913 = vmatmul.bf16.gmra.mxu0 %v739
      %v914 = vpop.f32.mrf.mxu0
      %v915 = vadd.f32 0.0, %v914
      %v916 = vpop.f32.mrf.mxu0
      %v917 = vadd.f32 0.0, %v916
      %918 = vmatmul.bf16.gmra.mxu0 %v741
      %v919 = vpop.f32.mrf.mxu0
      %v920 = vadd.f32 0.0, %v919
      %v921 = vpop.f32.mrf.mxu0
      %v922 = vadd.f32 0.0, %v921
      %923 = vmatmul.bf16.gmra.mxu0 %v743
      %v924 = vpop.f32.mrf.mxu0
      %v925 = vadd.f32 0.0, %v924
      %v926 = vpop.f32.mrf.mxu0
      %v927 = vadd.f32 0.0, %v926
      %928 = vmatmul.bf16.gmra.mxu0 %v745
      %v929 = vpop.f32.mrf.mxu0
      %v930 = vadd.f32 0.0, %v929
      %v931 = vpop.f32.mrf.mxu0
      %v932 = vadd.f32 0.0, %v931
      %933 = vmatmul.bf16.gmra.mxu0 %v747
      %v934 = vpop.f32.mrf.mxu0
      %v935 = vadd.f32 0.0, %v934
      %v936 = vpop.f32.mrf.mxu0
      %v937 = vadd.f32 0.0, %v936
      %938 = vmatmul.bf16.gmra.mxu0 %v749
      %v939 = vpop.f32.mrf.mxu0
      %v940 = vadd.f32 0.0, %v939
      %v941 = vpop.f32.mrf.mxu0
      %v942 = vadd.f32 0.0, %v941
      %943 = vmatmul.bf16.gmra.mxu0 %v751
      %v944 = vpop.f32.mrf.mxu0
      %v945 = vadd.f32 0.0, %v944
      %v946 = vpop.f32.mrf.mxu0
      %v947 = vadd.f32 0.0, %v946
      %948 = vmatmul.bf16.gmra.mxu0 %v753
      %v949 = vpop.f32.mrf.mxu0
      %v950 = vadd.f32 0.0, %v949
      %v951 = vpop.f32.mrf.mxu0
      %v952 = vadd.f32 0.0, %v951
      %953 = vmatmul.bf16.gmra.mxu0 %v755
      %v954 = vpop.f32.mrf.mxu0
      %v955 = vadd.f32 0.0, %v954
      %v956 = vpop.f32.mrf.mxu0
      %v957 = vadd.f32 0.0, %v956
      %958 = vmatmul.bf16.gmra.mxu0 %v757
      %v959 = vpop.f32.mrf.mxu0
      %v960 = vadd.f32 0.0, %v959
      %v961 = vpop.f32.mrf.mxu0
      %v962 = vadd.f32 0.0, %v961
      %963 = vmatmul.bf16.gmra.mxu0 %v759
      %v964 = vpop.f32.mrf.mxu0
      %v965 = vadd.f32 0.0, %v964
      %v966 = vpop.f32.mrf.mxu0
      %v967 = vadd.f32 0.0, %v966
      %968 = vmatmul.bf16.gmra.mxu0 %v761
      %v969 = vpop.f32.mrf.mxu0
      %v970 = vadd.f32 0.0, %v969
      %v971 = vpop.f32.mrf.mxu0
      %v972 = vadd.f32 0.0, %v971
      %973 = vmatmul.bf16.gmra.mxu0 %v763
      %v974 = vpop.f32.mrf.mxu0
      %v975 = vadd.f32 0.0, %v974
      %v976 = vpop.f32.mrf.mxu0
      %v977 = vadd.f32 0.0, %v976
      %978 = vmatmul.bf16.gmra.mxu0 %v765
      %v979 = vpop.f32.mrf.mxu0
      %v980 = vadd.f32 0.0, %v979
      %v981 = vpop.f32.mrf.mxu0
      %v982 = vadd.f32 0.0, %v981
      %983 = vdwg.mxu0
      %984 = vmatpush.bf16.msra.mxu0 %v878
      %985 = vmatpush.bf16.msra.mxu0 %v877
      %986 = vmatpush.bf16.msra.mxu0 %v876
      %987 = vmatpush.bf16.msra.mxu0 %v875
      %988 = vmatpush.bf16.msra.mxu0 %v874
      %989 = vmatpush.bf16.msra.mxu0 %v873
      %990 = vmatpush.bf16.msra.mxu0 %v872
      %991 = vmatpush.bf16.msra.mxu0 %v871
      %992 = vmatmul.bf16.gmra.mxu0 %v736
      %v993 = vpop.f32.mrf.mxu0
      %v994 = vadd.f32 %v905, %v993
      %v995 = vpop.f32.mrf.mxu0
      %v996 = vadd.f32 %v907, %v995
      %997 = vmatmul.bf16.gmra.mxu0 %v738
      %v998 = vpop.f32.mrf.mxu0
      %v999 = vadd.f32 %v910, %v998
      %v1000 = vpop.f32.mrf.mxu0
      %v1001 = vadd.f32 %v912, %v1000
      %1002 = vmatmul.bf16.gmra.mxu0 %v740
      %v1003 = vpop.f32.mrf.mxu0
      %v1004 = vadd.f32 %v915, %v1003
      %v1005 = vpop.f32.mrf.mxu0
      %v1006 = vadd.f32 %v917, %v1005
      %1007 = vmatmul.bf16.gmra.mxu0 %v742
      %v1008 = vpop.f32.mrf.mxu0
      %v1009 = vadd.f32 %v920, %v1008
      %v1010 = vpop.f32.mrf.mxu0
      %v1011 = vadd.f32 %v922, %v1010
      %1012 = vmatmul.bf16.gmra.mxu0 %v744
      %v1013 = vpop.f32.mrf.mxu0
      %v1014 = vadd.f32 %v925, %v1013
      %v1015 = vpop.f32.mrf.mxu0
      %v1016 = vadd.f32 %v927, %v1015
      %1017 = vmatmul.bf16.gmra.mxu0 %v746
      %v1018 = vpop.f32.mrf.mxu0
      %v1019 = vadd.f32 %v930, %v1018
      %v1020 = vpop.f32.mrf.mxu0
      %v1021 = vadd.f32 %v932, %v1020
      %1022 = vmatmul.bf16.gmra.mxu0 %v748
      %v1023 = vpop.f32.mrf.mxu0
      %v1024 = vadd.f32 %v935, %v1023
      %v1025 = vpop.f32.mrf.mxu0
      %v1026 = vadd.f32 %v937, %v1025
      %1027 = vmatmul.bf16.gmra.mxu0 %v750
      %v1028 = vpop.f32.mrf.mxu0
      %v1029 = vadd.f32 %v940, %v1028
      %v1030 = vpop.f32.mrf.mxu0
      %v1031 = vadd.f32 %v942, %v1030
      %1032 = vmatmul.bf16.gmra.mxu0 %v752
      %v1033 = vpop.f32.mrf.mxu0
      %v1034 = vadd.f32 %v945, %v1033
      %v1035 = vpop.f32.mrf.mxu0
      %v1036 = vadd.f32 %v947, %v1035
      %1037 = vmatmul.bf16.gmra.mxu0 %v754
      %v1038 = vpop.f32.mrf.mxu0
      %v1039 = vadd.f32 %v950, %v1038
      %v1040 = vpop.f32.mrf.mxu0
      %v1041 = vadd.f32 %v952, %v1040
      %1042 = vmatmul.bf16.gmra.mxu0 %v756
      %v1043 = vpop.f32.mrf.mxu0
      %v1044 = vadd.f32 %v955, %v1043
      %v1045 = vpop.f32.mrf.mxu0
      %v1046 = vadd.f32 %v957, %v1045
      %1047 = vmatmul.bf16.gmra.mxu0 %v758
      %v1048 = vpop.f32.mrf.mxu0
      %v1049 = vadd.f32 %v960, %v1048
      %v1050 = vpop.f32.mrf.mxu0
      %v1051 = vadd.f32 %v962, %v1050
      %1052 = vmatmul.bf16.gmra.mxu0 %v760
      %v1053 = vpop.f32.mrf.mxu0
      %v1054 = vadd.f32 %v965, %v1053
      %v1055 = vpop.f32.mrf.mxu0
      %v1056 = vadd.f32 %v967, %v1055
      %1057 = vmatmul.bf16.gmra.mxu0 %v762
      %v1058 = vpop.f32.mrf.mxu0
      %v1059 = vadd.f32 %v970, %v1058
      %v1060 = vpop.f32.mrf.mxu0
      %v1061 = vadd.f32 %v972, %v1060
      %1062 = vmatmul.bf16.gmra.mxu0 %v764
      %v1063 = vpop.f32.mrf.mxu0
      %v1064 = vadd.f32 %v975, %v1063
      %v1065 = vpop.f32.mrf.mxu0
      %v1066 = vadd.f32 %v977, %v1065
      %1067 = vmatmul.bf16.gmra.mxu0 %v766
      %v1068 = vpop.f32.mrf.mxu0
      %v1069 = vadd.f32 %v980, %v1068
      %v1070 = vpop.f32.mrf.mxu0
      %v1071 = vadd.f32 %v982, %v1070
      %1072 = vdwg.mxu0
      %v1105 = vunpack.c.l.b16 %v171
      %v1106 = vunpack.c.h.b16 %v171
      %v1107 = vunpack.c.l.b16 %v172
      %v1108 = vunpack.c.h.b16 %v172
      %v1109 = vunpack.c.l.b16 %v173
      %v1110 = vunpack.c.h.b16 %v173
      %v1111 = vunpack.c.l.b16 %v174
      %v1112 = vunpack.c.h.b16 %v174
      %v1113 = vunpack.c.l.b16 %v175
      %v1114 = vunpack.c.h.b16 %v175
      %v1115 = vunpack.c.l.b16 %v176
      %v1116 = vunpack.c.h.b16 %v176
      %v1117 = vunpack.c.l.b16 %v177
      %v1118 = vunpack.c.h.b16 %v177
      %v1119 = vunpack.c.l.b16 %v178
      %v1120 = vunpack.c.h.b16 %v178
      %v1121 = vunpack.c.l.b16 %v179
      %v1122 = vunpack.c.h.b16 %v179
      %v1123 = vunpack.c.l.b16 %v180
      %v1124 = vunpack.c.h.b16 %v180
      %v1125 = vunpack.c.l.b16 %v181
      %v1126 = vunpack.c.h.b16 %v181
      %v1127 = vunpack.c.l.b16 %v182
      %v1128 = vunpack.c.h.b16 %v182
      %v1129 = vunpack.c.l.b16 %v183
      %v1130 = vunpack.c.h.b16 %v183
      %v1131 = vunpack.c.l.b16 %v184
      %v1132 = vunpack.c.h.b16 %v184
      %v1133 = vunpack.c.l.b16 %v185
      %v1134 = vunpack.c.h.b16 %v185
      %v1135 = vunpack.c.l.b16 %v186
      %v1136 = vunpack.c.h.b16 %v186
      %v1137 = vunpack.c.l.b16 %v187
      %v1138 = vunpack.c.h.b16 %v187
      %v1139 = vunpack.c.l.b16 %v188
      %v1140 = vunpack.c.h.b16 %v188
      %v1141 = vunpack.c.l.b16 %v189
      %v1142 = vunpack.c.h.b16 %v189
      %v1143 = vunpack.c.l.b16 %v190
      %v1144 = vunpack.c.h.b16 %v190
      %v1145 = vunpack.c.l.b16 %v191
      %v1146 = vunpack.c.h.b16 %v191
      %v1147 = vunpack.c.l.b16 %v192
      %v1148 = vunpack.c.h.b16 %v192
      %v1149 = vunpack.c.l.b16 %v193
      %v1150 = vunpack.c.h.b16 %v193
      %v1151 = vunpack.c.l.b16 %v194
      %v1152 = vunpack.c.h.b16 %v194
      %v1153 = vunpack.c.l.b16 %v195
      %v1154 = vunpack.c.h.b16 %v195
      %v1155 = vunpack.c.l.b16 %v196
      %v1156 = vunpack.c.h.b16 %v196
      %v1157 = vunpack.c.l.b16 %v197
      %v1158 = vunpack.c.h.b16 %v197
      %v1159 = vunpack.c.l.b16 %v198
      %v1160 = vunpack.c.h.b16 %v198
      %v1161 = vunpack.c.l.b16 %v199
      %v1162 = vunpack.c.h.b16 %v199
      %v1163 = vunpack.c.l.b16 %v200
      %v1164 = vunpack.c.h.b16 %v200
      %v1165 = vunpack.c.l.b16 %v201
      %v1166 = vunpack.c.h.b16 %v201
      %v1167 = vunpack.c.l.b16 %v202
      %v1168 = vunpack.c.h.b16 %v202
      %v1169 = vpack.c.b16 %v1107, %v1105
      %v1170 = vpack.c.b16 %v1108, %v1106
      %v1171 = vpack.c.b16 %v1111, %v1109
      %v1172 = vpack.c.b16 %v1112, %v1110
      %v1173 = vpack.c.b16 %v1115, %v1113
      %v1174 = vpack.c.b16 %v1116, %v1114
      %v1175 = vpack.c.b16 %v1119, %v1117
      %v1176 = vpack.c.b16 %v1120, %v1118
      %v1177 = vpack.c.b16 %v1123, %v1121
      %v1178 = vpack.c.b16 %v1124, %v1122
      %v1179 = vpack.c.b16 %v1127, %v1125
      %v1180 = vpack.c.b16 %v1128, %v1126
      %v1181 = vpack.c.b16 %v1131, %v1129
      %v1182 = vpack.c.b16 %v1132, %v1130
      %v1183 = vpack.c.b16 %v1135, %v1133
      %v1184 = vpack.c.b16 %v1136, %v1134
      %v1185 = vpack.c.b16 %v1139, %v1137
      %v1186 = vpack.c.b16 %v1140, %v1138
      %v1187 = vpack.c.b16 %v1143, %v1141
      %v1188 = vpack.c.b16 %v1144, %v1142
      %v1189 = vpack.c.b16 %v1147, %v1145
      %v1190 = vpack.c.b16 %v1148, %v1146
      %v1191 = vpack.c.b16 %v1151, %v1149
      %v1192 = vpack.c.b16 %v1152, %v1150
      %v1193 = vpack.c.b16 %v1155, %v1153
      %v1194 = vpack.c.b16 %v1156, %v1154
      %v1195 = vpack.c.b16 %v1159, %v1157
      %v1196 = vpack.c.b16 %v1160, %v1158
      %v1197 = vpack.c.b16 %v1163, %v1161
      %v1198 = vpack.c.b16 %v1164, %v1162
      %v1199 = vpack.c.b16 %v1167, %v1165
      %v1200 = vpack.c.b16 %v1168, %v1166
      %v1265 = vunpack.c.l.b16 %v203
      %v1266 = vunpack.c.l.b16 %v204
      %v1267 = vunpack.c.l.b16 %v205
      %v1268 = vunpack.c.l.b16 %v206
      %v1269 = vunpack.c.l.b16 %v207
      %v1270 = vunpack.c.l.b16 %v208
      %v1271 = vunpack.c.l.b16 %v209
      %v1272 = vunpack.c.l.b16 %v210
      %v1273 = vunpack.c.l.b16 %v211
      %v1274 = vunpack.c.l.b16 %v212
      %v1275 = vunpack.c.l.b16 %v213
      %v1276 = vunpack.c.l.b16 %v214
      %v1277 = vunpack.c.l.b16 %v215
      %v1278 = vunpack.c.l.b16 %v216
      %v1279 = vunpack.c.l.b16 %v217
      %v1280 = vunpack.c.l.b16 %v218
      %v1281 = vunpack.c.l.b16 %v219
      %v1282 = vunpack.c.l.b16 %v220
      %v1283 = vunpack.c.l.b16 %v221
      %v1284 = vunpack.c.l.b16 %v222
      %v1285 = vunpack.c.l.b16 %v223
      %v1286 = vunpack.c.l.b16 %v224
      %v1287 = vunpack.c.l.b16 %v225
      %v1288 = vunpack.c.l.b16 %v226
      %v1289 = vunpack.c.l.b16 %v227
      %v1290 = vunpack.c.l.b16 %v228
      %v1291 = vunpack.c.l.b16 %v229
      %v1292 = vunpack.c.l.b16 %v230
      %v1293 = vunpack.c.l.b16 %v231
      %v1294 = vunpack.c.l.b16 %v232
      %v1295 = vunpack.c.l.b16 %v233
      %v1296 = vunpack.c.l.b16 %v234
      %v1297 = vpack.c.b16 %v1266, %v1265
      %v1298 = vpack.c.b16 %v1268, %v1267
      %v1299 = vpack.c.b16 %v1270, %v1269
      %v1300 = vpack.c.b16 %v1272, %v1271
      %v1301 = vpack.c.b16 %v1274, %v1273
      %v1302 = vpack.c.b16 %v1276, %v1275
      %v1303 = vpack.c.b16 %v1278, %v1277
      %v1304 = vpack.c.b16 %v1280, %v1279
      %v1305 = vpack.c.b16 %v1282, %v1281
      %v1306 = vpack.c.b16 %v1284, %v1283
      %v1307 = vpack.c.b16 %v1286, %v1285
      %v1308 = vpack.c.b16 %v1288, %v1287
      %v1309 = vpack.c.b16 %v1290, %v1289
      %v1310 = vpack.c.b16 %v1292, %v1291
      %v1311 = vpack.c.b16 %v1294, %v1293
      %v1312 = vpack.c.b16 %v1296, %v1295
      %1329 = vmatpush.bf16.msra.mxu0 %v1304
      %1330 = vmatpush.bf16.msra.mxu0 %v1303
      %1331 = vmatpush.bf16.msra.mxu0 %v1302
      %1332 = vmatpush.bf16.msra.mxu0 %v1301
      %1333 = vmatpush.bf16.msra.mxu0 %v1300
      %1334 = vmatpush.bf16.msra.mxu0 %v1299
      %1335 = vmatpush.bf16.msra.mxu0 %v1298
      %1336 = vmatpush.bf16.msra.mxu0 %v1297
      %1337 = vmatmul.bf16.gmra.mxu0 %v1169
      %v1338 = vpop.f32.mrf.mxu0
      %v1339 = vadd.f32 %v994, %v1338
      %v1340 = vpop.f32.mrf.mxu0
      %v1341 = vadd.f32 %v996, %v1340
      %1342 = vmatmul.bf16.gmra.mxu0 %v1171
      %v1343 = vpop.f32.mrf.mxu0
      %v1344 = vadd.f32 %v999, %v1343
      %v1345 = vpop.f32.mrf.mxu0
      %v1346 = vadd.f32 %v1001, %v1345
      %1347 = vmatmul.bf16.gmra.mxu0 %v1173
      %v1348 = vpop.f32.mrf.mxu0
      %v1349 = vadd.f32 %v1004, %v1348
      %v1350 = vpop.f32.mrf.mxu0
      %v1351 = vadd.f32 %v1006, %v1350
      %1352 = vmatmul.bf16.gmra.mxu0 %v1175
      %v1353 = vpop.f32.mrf.mxu0
      %v1354 = vadd.f32 %v1009, %v1353
      %v1355 = vpop.f32.mrf.mxu0
      %v1356 = vadd.f32 %v1011, %v1355
      %1357 = vmatmul.bf16.gmra.mxu0 %v1177
      %v1358 = vpop.f32.mrf.mxu0
      %v1359 = vadd.f32 %v1014, %v1358
      %v1360 = vpop.f32.mrf.mxu0
      %v1361 = vadd.f32 %v1016, %v1360
      %1362 = vmatmul.bf16.gmra.mxu0 %v1179
      %v1363 = vpop.f32.mrf.mxu0
      %v1364 = vadd.f32 %v1019, %v1363
      %v1365 = vpop.f32.mrf.mxu0
      %v1366 = vadd.f32 %v1021, %v1365
      %1367 = vmatmul.bf16.gmra.mxu0 %v1181
      %v1368 = vpop.f32.mrf.mxu0
      %v1369 = vadd.f32 %v1024, %v1368
      %v1370 = vpop.f32.mrf.mxu0
      %v1371 = vadd.f32 %v1026, %v1370
      %1372 = vmatmul.bf16.gmra.mxu0 %v1183
      %v1373 = vpop.f32.mrf.mxu0
      %v1374 = vadd.f32 %v1029, %v1373
      %v1375 = vpop.f32.mrf.mxu0
      %v1376 = vadd.f32 %v1031, %v1375
      %1377 = vmatmul.bf16.gmra.mxu0 %v1185
      %v1378 = vpop.f32.mrf.mxu0
      %v1379 = vadd.f32 %v1034, %v1378
      %v1380 = vpop.f32.mrf.mxu0
      %v1381 = vadd.f32 %v1036, %v1380
      %1382 = vmatmul.bf16.gmra.mxu0 %v1187
      %v1383 = vpop.f32.mrf.mxu0
      %v1384 = vadd.f32 %v1039, %v1383
      %v1385 = vpop.f32.mrf.mxu0
      %v1386 = vadd.f32 %v1041, %v1385
      %1387 = vmatmul.bf16.gmra.mxu0 %v1189
      %v1388 = vpop.f32.mrf.mxu0
      %v1389 = vadd.f32 %v1044, %v1388
      %v1390 = vpop.f32.mrf.mxu0
      %v1391 = vadd.f32 %v1046, %v1390
      %1392 = vmatmul.bf16.gmra.mxu0 %v1191
      %v1393 = vpop.f32.mrf.mxu0
      %v1394 = vadd.f32 %v1049, %v1393
      %v1395 = vpop.f32.mrf.mxu0
      %v1396 = vadd.f32 %v1051, %v1395
      %1397 = vmatmul.bf16.gmra.mxu0 %v1193
      %v1398 = vpop.f32.mrf.mxu0
      %v1399 = vadd.f32 %v1054, %v1398
      %v1400 = vpop.f32.mrf.mxu0
      %v1401 = vadd.f32 %v1056, %v1400
      %1402 = vmatmul.bf16.gmra.mxu0 %v1195
      %v1403 = vpop.f32.mrf.mxu0
      %v1404 = vadd.f32 %v1059, %v1403
      %v1405 = vpop.f32.mrf.mxu0
      %v1406 = vadd.f32 %v1061, %v1405
      %1407 = vmatmul.bf16.gmra.mxu0 %v1197
      %v1408 = vpop.f32.mrf.mxu0
      %v1409 = vadd.f32 %v1064, %v1408
      %v1410 = vpop.f32.mrf.mxu0
      %v1411 = vadd.f32 %v1066, %v1410
      %1412 = vmatmul.bf16.gmra.mxu0 %v1199
      %v1413 = vpop.f32.mrf.mxu0
      %v1414 = vadd.f32 %v1069, %v1413
      %v1415 = vpop.f32.mrf.mxu0
      %v1416 = vadd.f32 %v1071, %v1415
      %1417 = vdwg.mxu0
      %1418 = vmatpush.bf16.msra.mxu0 %v1312
      %1419 = vmatpush.bf16.msra.mxu0 %v1311
      %1420 = vmatpush.bf16.msra.mxu0 %v1310
      %1421 = vmatpush.bf16.msra.mxu0 %v1309
      %1422 = vmatpush.bf16.msra.mxu0 %v1308
      %1423 = vmatpush.bf16.msra.mxu0 %v1307
      %1424 = vmatpush.bf16.msra.mxu0 %v1306
      %1425 = vmatpush.bf16.msra.mxu0 %v1305
      %1426 = vmatmul.bf16.gmra.mxu0 %v1170
      %v1427 = vpop.f32.mrf.mxu0
      %v1428 = vadd.f32 %v1339, %v1427
      %v1429 = vpop.f32.mrf.mxu0
      %v1430 = vadd.f32 %v1341, %v1429
      %1431 = vmatmul.bf16.gmra.mxu0 %v1172
      %v1432 = vpop.f32.mrf.mxu0
      %v1433 = vadd.f32 %v1344, %v1432
      %v1434 = vpop.f32.mrf.mxu0
      %v1435 = vadd.f32 %v1346, %v1434
      %1436 = vmatmul.bf16.gmra.mxu0 %v1174
      %v1437 = vpop.f32.mrf.mxu0
      %v1438 = vadd.f32 %v1349, %v1437
      %v1439 = vpop.f32.mrf.mxu0
      %v1440 = vadd.f32 %v1351, %v1439
      %1441 = vmatmul.bf16.gmra.mxu0 %v1176
      %v1442 = vpop.f32.mrf.mxu0
      %v1443 = vadd.f32 %v1354, %v1442
      %v1444 = vpop.f32.mrf.mxu0
      %v1445 = vadd.f32 %v1356, %v1444
      %1446 = vmatmul.bf16.gmra.mxu0 %v1178
      %v1447 = vpop.f32.mrf.mxu0
      %v1448 = vadd.f32 %v1359, %v1447
      %v1449 = vpop.f32.mrf.mxu0
      %v1450 = vadd.f32 %v1361, %v1449
      %1451 = vmatmul.bf16.gmra.mxu0 %v1180
      %v1452 = vpop.f32.mrf.mxu0
      %v1453 = vadd.f32 %v1364, %v1452
      %v1454 = vpop.f32.mrf.mxu0
      %v1455 = vadd.f32 %v1366, %v1454
      %1456 = vmatmul.bf16.gmra.mxu0 %v1182
      %v1457 = vpop.f32.mrf.mxu0
      %v1458 = vadd.f32 %v1369, %v1457
      %v1459 = vpop.f32.mrf.mxu0
      %v1460 = vadd.f32 %v1371, %v1459
      %1461 = vmatmul.bf16.gmra.mxu0 %v1184
      %v1462 = vpop.f32.mrf.mxu0
      %v1463 = vadd.f32 %v1374, %v1462
      %v1464 = vpop.f32.mrf.mxu0
      %v1465 = vadd.f32 %v1376, %v1464
      %1466 = vmatmul.bf16.gmra.mxu0 %v1186
      %v1467 = vpop.f32.mrf.mxu0
      %v1468 = vadd.f32 %v1379, %v1467
      %v1469 = vpop.f32.mrf.mxu0
      %v1470 = vadd.f32 %v1381, %v1469
      %1471 = vmatmul.bf16.gmra.mxu0 %v1188
      %v1472 = vpop.f32.mrf.mxu0
      %v1473 = vadd.f32 %v1384, %v1472
      %v1474 = vpop.f32.mrf.mxu0
      %v1475 = vadd.f32 %v1386, %v1474
      %1476 = vmatmul.bf16.gmra.mxu0 %v1190
      %v1477 = vpop.f32.mrf.mxu0
      %v1478 = vadd.f32 %v1389, %v1477
      %v1479 = vpop.f32.mrf.mxu0
      %v1480 = vadd.f32 %v1391, %v1479
      %1481 = vmatmul.bf16.gmra.mxu0 %v1192
      %v1482 = vpop.f32.mrf.mxu0
      %v1483 = vadd.f32 %v1394, %v1482
      %v1484 = vpop.f32.mrf.mxu0
      %v1485 = vadd.f32 %v1396, %v1484
      %1486 = vmatmul.bf16.gmra.mxu0 %v1194
      %v1487 = vpop.f32.mrf.mxu0
      %v1488 = vadd.f32 %v1399, %v1487
      %v1489 = vpop.f32.mrf.mxu0
      %v1490 = vadd.f32 %v1401, %v1489
      %1491 = vmatmul.bf16.gmra.mxu0 %v1196
      %v1492 = vpop.f32.mrf.mxu0
      %v1493 = vadd.f32 %v1404, %v1492
      %v1494 = vpop.f32.mrf.mxu0
      %v1495 = vadd.f32 %v1406, %v1494
      %1496 = vmatmul.bf16.gmra.mxu0 %v1198
      %v1497 = vpop.f32.mrf.mxu0
      %v1498 = vadd.f32 %v1409, %v1497
      %v1499 = vpop.f32.mrf.mxu0
      %v1500 = vadd.f32 %v1411, %v1499
      %1501 = vmatmul.bf16.gmra.mxu0 %v1200
      %v1502 = vpop.f32.mrf.mxu0
      %v1503 = vadd.f32 %v1414, %v1502
      %v1504 = vpop.f32.mrf.mxu0
      %v1505 = vadd.f32 %v1416, %v1504
      %1506 = vdwg.mxu0
      %s1507 = scalar_lea.vmem %s165, 24
      %v1508 = vld [vmem:[%s1507] sm:$0xff]
      %v1509 = vld [vmem:[%s1507 + $0x8] sm:$0xff]
      %v1510 = vld [vmem:[%s1507 + $0x18] sm:$0xff]
      %v1511 = vld [vmem:[%s1507 + $0x20] sm:$0xff]
      %v1512 = vld [vmem:[%s1507 + $0x30] sm:$0xff]
      %v1513 = vld [vmem:[%s1507 + $0x38] sm:$0xff]
      %v1514 = vld [vmem:[%s1507 + $0x48] sm:$0xff]
      %v1515 = vld [vmem:[%s1507 + $0x50] sm:$0xff]
      %v1516 = vld [vmem:[%s1507 + $0x60] sm:$0xff]
      %v1517 = vld [vmem:[%s1507 + $0x68] sm:$0xff]
      %v1518 = vld [vmem:[%s1507 + $0x78] sm:$0xff]
      %v1519 = vld [vmem:[%s1507 + $0x80] sm:$0xff]
      %v1520 = vld [vmem:[%s1507 + $0x90] sm:$0xff]
      %v1521 = vld [vmem:[%s1507 + $0x98] sm:$0xff]
      %v1522 = vld [vmem:[%s1507 + $0xa8] sm:$0xff]
      %v1523 = vld [vmem:[%s1507 + $0xb0] sm:$0xff]
      %v1524 = vld [vmem:[%s1507 + $0xc0] sm:$0xff]
      %v1525 = vld [vmem:[%s1507 + $0xc8] sm:$0xff]
      %v1526 = vld [vmem:[%s1507 + $0xd8] sm:$0xff]
      %v1527 = vld [vmem:[%s1507 + $0xe0] sm:$0xff]
      %v1528 = vld [vmem:[%s1507 + $0xf0] sm:$0xff]
      %v1529 = vld [vmem:[%s1507 + $0xf8] sm:$0xff]
      %v1530 = vld [vmem:[%s1507 + $0x108] sm:$0xff]
      %v1531 = vld [vmem:[%s1507 + $0x110] sm:$0xff]
      %v1532 = vld [vmem:[%s1507 + $0x120] sm:$0xff]
      %v1533 = vld [vmem:[%s1507 + $0x128] sm:$0xff]
      %v1534 = vld [vmem:[%s1507 + $0x138] sm:$0xff]
      %v1535 = vld [vmem:[%s1507 + $0x140] sm:$0xff]
      %v1536 = vld [vmem:[%s1507 + $0x150] sm:$0xff]
      %v1537 = vld [vmem:[%s1507 + $0x158] sm:$0xff]
      %v1538 = vld [vmem:[%s1507 + $0x168] sm:$0xff]
      %v1539 = vld [vmem:[%s1507 + $0x170] sm:$0xff]
      %s1540 = scalar_lea.vmem %s1, 256
      %v1541 = vld [vmem:[%s1540] sm:$0xf]
      %v1542 = vld [vmem:[%s1540 + $0x4] sm:$0xf]
      %v1543 = vld [vmem:[%s1540 + $0x8] sm:$0xf]
      %v1544 = vld [vmem:[%s1540 + $0xc] sm:$0xf]
      %v1545 = vld [vmem:[%s1540 + $0x10] sm:$0xf]
      %v1546 = vld [vmem:[%s1540 + $0x14] sm:$0xf]
      %v1547 = vld [vmem:[%s1540 + $0x18] sm:$0xf]
      %v1548 = vld [vmem:[%s1540 + $0x1c] sm:$0xf]
      %v1549 = vld [vmem:[%s1540 + $0x20] sm:$0xf]
      %v1550 = vld [vmem:[%s1540 + $0x24] sm:$0xf]
      %v1551 = vld [vmem:[%s1540 + $0x28] sm:$0xf]
      %v1552 = vld [vmem:[%s1540 + $0x2c] sm:$0xf]
      %v1553 = vld [vmem:[%s1540 + $0x30] sm:$0xf]
      %v1554 = vld [vmem:[%s1540 + $0x34] sm:$0xf]
      %v1555 = vld [vmem:[%s1540 + $0x38] sm:$0xf]
      %v1556 = vld [vmem:[%s1540 + $0x3c] sm:$0xf]
      %v1557 = vld [vmem:[%s1540 + $0x40] sm:$0xf]
      %v1558 = vld [vmem:[%s1540 + $0x44] sm:$0xf]
      %v1559 = vld [vmem:[%s1540 + $0x48] sm:$0xf]
      %v1560 = vld [vmem:[%s1540 + $0x4c] sm:$0xf]
      %v1561 = vld [vmem:[%s1540 + $0x50] sm:$0xf]
      %v1562 = vld [vmem:[%s1540 + $0x54] sm:$0xf]
      %v1563 = vld [vmem:[%s1540 + $0x58] sm:$0xf]
      %v1564 = vld [vmem:[%s1540 + $0x5c] sm:$0xf]
      %v1565 = vld [vmem:[%s1540 + $0x60] sm:$0xf]
      %v1566 = vld [vmem:[%s1540 + $0x64] sm:$0xf]
      %v1567 = vld [vmem:[%s1540 + $0x68] sm:$0xf]
      %v1568 = vld [vmem:[%s1540 + $0x6c] sm:$0xf]
      %v1569 = vld [vmem:[%s1540 + $0x70] sm:$0xf]
      %v1570 = vld [vmem:[%s1540 + $0x74] sm:$0xf]
      %v1571 = vld [vmem:[%s1540 + $0x78] sm:$0xf]
      %v1572 = vld [vmem:[%s1540 + $0x7c] sm:$0xf]
      %v1605 = vunpack.c.l.b16 %v1508
      %v1606 = vunpack.c.h.b16 %v1508
      %v1607 = vunpack.c.l.b16 %v1509
      %v1608 = vunpack.c.h.b16 %v1509
      %v1609 = vunpack.c.l.b16 %v1510
      %v1610 = vunpack.c.h.b16 %v1510
      %v1611 = vunpack.c.l.b16 %v1511
      %v1612 = vunpack.c.h.b16 %v1511
      %v1613 = vunpack.c.l.b16 %v1512
      %v1614 = vunpack.c.h.b16 %v1512
      %v1615 = vunpack.c.l.b16 %v1513
      %v1616 = vunpack.c.h.b16 %v1513
      %v1617 = vunpack.c.l.b16 %v1514
      %v1618 = vunpack.c.h.b16 %v1514
      %v1619 = vunpack.c.l.b16 %v1515
      %v1620 = vunpack.c.h.b16 %v1515
      %v1621 = vunpack.c.l.b16 %v1516
      %v1622 = vunpack.c.h.b16 %v1516
      %v1623 = vunpack.c.l.b16 %v1517
      %v1624 = vunpack.c.h.b16 %v1517
      %v1625 = vunpack.c.l.b16 %v1518
      %v1626 = vunpack.c.h.b16 %v1518
      %v1627 = vunpack.c.l.b16 %v1519
      %v1628 = vunpack.c.h.b16 %v1519
      %v1629 = vunpack.c.l.b16 %v1520
      %v1630 = vunpack.c.h.b16 %v1520
      %v1631 = vunpack.c.l.b16 %v1521
      %v1632 = vunpack.c.h.b16 %v1521
      %v1633 = vunpack.c.l.b16 %v1522
      %v1634 = vunpack.c.h.b16 %v1522
      %v1635 = vunpack.c.l.b16 %v1523
      %v1636 = vunpack.c.h.b16 %v1523
      %v1637 = vunpack.c.l.b16 %v1524
      %v1638 = vunpack.c.h.b16 %v1524
      %v1639 = vunpack.c.l.b16 %v1525
      %v1640 = vunpack.c.h.b16 %v1525
      %v1641 = vunpack.c.l.b16 %v1526
      %v1642 = vunpack.c.h.b16 %v1526
      %v1643 = vunpack.c.l.b16 %v1527
      %v1644 = vunpack.c.h.b16 %v1527
      %v1645 = vunpack.c.l.b16 %v1528
      %v1646 = vunpack.c.h.b16 %v1528
      %v1647 = vunpack.c.l.b16 %v1529
      %v1648 = vunpack.c.h.b16 %v1529
      %v1649 = vunpack.c.l.b16 %v1530
      %v1650 = vunpack.c.h.b16 %v1530
      %v1651 = vunpack.c.l.b16 %v1531
      %v1652 = vunpack.c.h.b16 %v1531
      %v1653 = vunpack.c.l.b16 %v1532
      %v1654 = vunpack.c.h.b16 %v1532
      %v1655 = vunpack.c.l.b16 %v1533
      %v1656 = vunpack.c.h.b16 %v1533
      %v1657 = vunpack.c.l.b16 %v1534
      %v1658 = vunpack.c.h.b16 %v1534
      %v1659 = vunpack.c.l.b16 %v1535
      %v1660 = vunpack.c.h.b16 %v1535
      %v1661 = vunpack.c.l.b16 %v1536
      %v1662 = vunpack.c.h.b16 %v1536
      %v1663 = vunpack.c.l.b16 %v1537
      %v1664 = vunpack.c.h.b16 %v1537
      %v1665 = vunpack.c.l.b16 %v1538
      %v1666 = vunpack.c.h.b16 %v1538
      %v1667 = vunpack.c.l.b16 %v1539
      %v1668 = vunpack.c.h.b16 %v1539
      %v1669 = vpack.c.b16 %v1607, %v1605
      %v1670 = vpack.c.b16 %v1608, %v1606
      %v1671 = vpack.c.b16 %v1611, %v1609
      %v1672 = vpack.c.b16 %v1612, %v1610
      %v1673 = vpack.c.b16 %v1615, %v1613
      %v1674 = vpack.c.b16 %v1616, %v1614
      %v1675 = vpack.c.b16 %v1619, %v1617
      %v1676 = vpack.c.b16 %v1620, %v1618
      %v1677 = vpack.c.b16 %v1623, %v1621
      %v1678 = vpack.c.b16 %v1624, %v1622
      %v1679 = vpack.c.b16 %v1627, %v1625
      %v1680 = vpack.c.b16 %v1628, %v1626
      %v1681 = vpack.c.b16 %v1631, %v1629
      %v1682 = vpack.c.b16 %v1632, %v1630
      %v1683 = vpack.c.b16 %v1635, %v1633
      %v1684 = vpack.c.b16 %v1636, %v1634
      %v1685 = vpack.c.b16 %v1639, %v1637
      %v1686 = vpack.c.b16 %v1640, %v1638
      %v1687 = vpack.c.b16 %v1643, %v1641
      %v1688 = vpack.c.b16 %v1644, %v1642
      %v1689 = vpack.c.b16 %v1647, %v1645
      %v1690 = vpack.c.b16 %v1648, %v1646
      %v1691 = vpack.c.b16 %v1651, %v1649
      %v1692 = vpack.c.b16 %v1652, %v1650
      %v1693 = vpack.c.b16 %v1655, %v1653
      %v1694 = vpack.c.b16 %v1656, %v1654
      %v1695 = vpack.c.b16 %v1659, %v1657
      %v1696 = vpack.c.b16 %v1660, %v1658
      %v1697 = vpack.c.b16 %v1663, %v1661
      %v1698 = vpack.c.b16 %v1664, %v1662
      %v1699 = vpack.c.b16 %v1667, %v1665
      %v1700 = vpack.c.b16 %v1668, %v1666
      %v1765 = vunpack.c.l.b16 %v1541
      %v1766 = vunpack.c.l.b16 %v1542
      %v1767 = vunpack.c.l.b16 %v1543
      %v1768 = vunpack.c.l.b16 %v1544
      %v1769 = vunpack.c.l.b16 %v1545
      %v1770 = vunpack.c.l.b16 %v1546
      %v1771 = vunpack.c.l.b16 %v1547
      %v1772 = vunpack.c.l.b16 %v1548
      %v1773 = vunpack.c.l.b16 %v1549
      %v1774 = vunpack.c.l.b16 %v1550
      %v1775 = vunpack.c.l.b16 %v1551
      %v1776 = vunpack.c.l.b16 %v1552
      %v1777 = vunpack.c.l.b16 %v1553
      %v1778 = vunpack.c.l.b16 %v1554
      %v1779 = vunpack.c.l.b16 %v1555
      %v1780 = vunpack.c.l.b16 %v1556
      %v1781 = vunpack.c.l.b16 %v1557
      %v1782 = vunpack.c.l.b16 %v1558
      %v1783 = vunpack.c.l.b16 %v1559
      %v1784 = vunpack.c.l.b16 %v1560
      %v1785 = vunpack.c.l.b16 %v1561
      %v1786 = vunpack.c.l.b16 %v1562
      %v1787 = vunpack.c.l.b16 %v1563
      %v1788 = vunpack.c.l.b16 %v1564
      %v1789 = vunpack.c.l.b16 %v1565
      %v1790 = vunpack.c.l.b16 %v1566
      %v1791 = vunpack.c.l.b16 %v1567
      %v1792 = vunpack.c.l.b16 %v1568
      %v1793 = vunpack.c.l.b16 %v1569
      %v1794 = vunpack.c.l.b16 %v1570
      %v1795 = vunpack.c.l.b16 %v1571
      %v1796 = vunpack.c.l.b16 %v1572
      %v1797 = vpack.c.b16 %v1766, %v1765
      %v1798 = vpack.c.b16 %v1768, %v1767
      %v1799 = vpack.c.b16 %v1770, %v1769
      %v1800 = vpack.c.b16 %v1772, %v1771
      %v1801 = vpack.c.b16 %v1774, %v1773
      %v1802 = vpack.c.b16 %v1776, %v1775
      %v1803 = vpack.c.b16 %v1778, %v1777
      %v1804 = vpack.c.b16 %v1780, %v1779
      %v1805 = vpack.c.b16 %v1782, %v1781
      %v1806 = vpack.c.b16 %v1784, %v1783
      %v1807 = vpack.c.b16 %v1786, %v1785
      %v1808 = vpack.c.b16 %v1788, %v1787
      %v1809 = vpack.c.b16 %v1790, %v1789
      %v1810 = vpack.c.b16 %v1792, %v1791
      %v1811 = vpack.c.b16 %v1794, %v1793
      %v1812 = vpack.c.b16 %v1796, %v1795
      %1829 = vmatpush.bf16.msra.mxu0 %v1804
      %1830 = vmatpush.bf16.msra.mxu0 %v1803
      %1831 = vmatpush.bf16.msra.mxu0 %v1802
      %1832 = vmatpush.bf16.msra.mxu0 %v1801
      %1833 = vmatpush.bf16.msra.mxu0 %v1800
      %1834 = vmatpush.bf16.msra.mxu0 %v1799
      %1835 = vmatpush.bf16.msra.mxu0 %v1798
      %1836 = vmatpush.bf16.msra.mxu0 %v1797
      %1837 = vmatmul.bf16.gmra.mxu0 %v1669
      %v1838 = vpop.f32.mrf.mxu0
      %v1839 = vadd.f32 0.0, %v1838
      %v1840 = vpop.f32.mrf.mxu0
      %v1841 = vadd.f32 0.0, %v1840
      %1842 = vmatmul.bf16.gmra.mxu0 %v1671
      %v1843 = vpop.f32.mrf.mxu0
      %v1844 = vadd.f32 0.0, %v1843
      %v1845 = vpop.f32.mrf.mxu0
      %v1846 = vadd.f32 0.0, %v1845
      %1847 = vmatmul.bf16.gmra.mxu0 %v1673
      %v1848 = vpop.f32.mrf.mxu0
      %v1849 = vadd.f32 0.0, %v1848
      %v1850 = vpop.f32.mrf.mxu0
      %v1851 = vadd.f32 0.0, %v1850
      %1852 = vmatmul.bf16.gmra.mxu0 %v1675
      %v1853 = vpop.f32.mrf.mxu0
      %v1854 = vadd.f32 0.0, %v1853
      %v1855 = vpop.f32.mrf.mxu0
      %v1856 = vadd.f32 0.0, %v1855
      %1857 = vmatmul.bf16.gmra.mxu0 %v1677
      %v1858 = vpop.f32.mrf.mxu0
      %v1859 = vadd.f32 0.0, %v1858
      %v1860 = vpop.f32.mrf.mxu0
      %v1861 = vadd.f32 0.0, %v1860
      %1862 = vmatmul.bf16.gmra.mxu0 %v1679
      %v1863 = vpop.f32.mrf.mxu0
      %v1864 = vadd.f32 0.0, %v1863
      %v1865 = vpop.f32.mrf.mxu0
      %v1866 = vadd.f32 0.0, %v1865
      %1867 = vmatmul.bf16.gmra.mxu0 %v1681
      %v1868 = vpop.f32.mrf.mxu0
      %v1869 = vadd.f32 0.0, %v1868
      %v1870 = vpop.f32.mrf.mxu0
      %v1871 = vadd.f32 0.0, %v1870
      %1872 = vmatmul.bf16.gmra.mxu0 %v1683
      %v1873 = vpop.f32.mrf.mxu0
      %v1874 = vadd.f32 0.0, %v1873
      %v1875 = vpop.f32.mrf.mxu0
      %v1876 = vadd.f32 0.0, %v1875
      %1877 = vmatmul.bf16.gmra.mxu0 %v1685
      %v1878 = vpop.f32.mrf.mxu0
      %v1879 = vadd.f32 0.0, %v1878
      %v1880 = vpop.f32.mrf.mxu0
      %v1881 = vadd.f32 0.0, %v1880
      %1882 = vmatmul.bf16.gmra.mxu0 %v1687
      %v1883 = vpop.f32.mrf.mxu0
      %v1884 = vadd.f32 0.0, %v1883
      %v1885 = vpop.f32.mrf.mxu0
      %v1886 = vadd.f32 0.0, %v1885
      %1887 = vmatmul.bf16.gmra.mxu0 %v1689
      %v1888 = vpop.f32.mrf.mxu0
      %v1889 = vadd.f32 0.0, %v1888
      %v1890 = vpop.f32.mrf.mxu0
      %v1891 = vadd.f32 0.0, %v1890
      %1892 = vmatmul.bf16.gmra.mxu0 %v1691
      %v1893 = vpop.f32.mrf.mxu0
      %v1894 = vadd.f32 0.0, %v1893
      %v1895 = vpop.f32.mrf.mxu0
      %v1896 = vadd.f32 0.0, %v1895
      %1897 = vmatmul.bf16.gmra.mxu0 %v1693
      %v1898 = vpop.f32.mrf.mxu0
      %v1899 = vadd.f32 0.0, %v1898
      %v1900 = vpop.f32.mrf.mxu0
      %v1901 = vadd.f32 0.0, %v1900
      %1902 = vmatmul.bf16.gmra.mxu0 %v1695
      %v1903 = vpop.f32.mrf.mxu0
      %v1904 = vadd.f32 0.0, %v1903
      %v1905 = vpop.f32.mrf.mxu0
      %v1906 = vadd.f32 0.0, %v1905
      %1907 = vmatmul.bf16.gmra.mxu0 %v1697
      %v1908 = vpop.f32.mrf.mxu0
      %v1909 = vadd.f32 0.0, %v1908
      %v1910 = vpop.f32.mrf.mxu0
      %v1911 = vadd.f32 0.0, %v1910
      %1912 = vmatmul.bf16.gmra.mxu0 %v1699
      %v1913 = vpop.f32.mrf.mxu0
      %v1914 = vadd.f32 0.0, %v1913
      %v1915 = vpop.f32.mrf.mxu0
      %v1916 = vadd.f32 0.0, %v1915
      %1917 = vdwg.mxu0
      %1918 = vmatpush.bf16.msra.mxu0 %v1812
      %1919 = vmatpush.bf16.msra.mxu0 %v1811
      %1920 = vmatpush.bf16.msra.mxu0 %v1810
      %1921 = vmatpush.bf16.msra.mxu0 %v1809
      %1922 = vmatpush.bf16.msra.mxu0 %v1808
      %1923 = vmatpush.bf16.msra.mxu0 %v1807
      %1924 = vmatpush.bf16.msra.mxu0 %v1806
      %1925 = vmatpush.bf16.msra.mxu0 %v1805
      %1926 = vmatmul.bf16.gmra.mxu0 %v1670
      %v1927 = vpop.f32.mrf.mxu0
      %v1928 = vadd.f32 %v1839, %v1927
      %v1929 = vpop.f32.mrf.mxu0
      %v1930 = vadd.f32 %v1841, %v1929
      %1931 = vmatmul.bf16.gmra.mxu0 %v1672
      %v1932 = vpop.f32.mrf.mxu0
      %v1933 = vadd.f32 %v1844, %v1932
      %v1934 = vpop.f32.mrf.mxu0
      %v1935 = vadd.f32 %v1846, %v1934
      %1936 = vmatmul.bf16.gmra.mxu0 %v1674
      %v1937 = vpop.f32.mrf.mxu0
      %v1938 = vadd.f32 %v1849, %v1937
      %v1939 = vpop.f32.mrf.mxu0
      %v1940 = vadd.f32 %v1851, %v1939
      %1941 = vmatmul.bf16.gmra.mxu0 %v1676
      %v1942 = vpop.f32.mrf.mxu0
      %v1943 = vadd.f32 %v1854, %v1942
      %v1944 = vpop.f32.mrf.mxu0
      %v1945 = vadd.f32 %v1856, %v1944
      %1946 = vmatmul.bf16.gmra.mxu0 %v1678
      %v1947 = vpop.f32.mrf.mxu0
      %v1948 = vadd.f32 %v1859, %v1947
      %v1949 = vpop.f32.mrf.mxu0
      %v1950 = vadd.f32 %v1861, %v1949
      %1951 = vmatmul.bf16.gmra.mxu0 %v1680
      %v1952 = vpop.f32.mrf.mxu0
      %v1953 = vadd.f32 %v1864, %v1952
      %v1954 = vpop.f32.mrf.mxu0
      %v1955 = vadd.f32 %v1866, %v1954
      %1956 = vmatmul.bf16.gmra.mxu0 %v1682
      %v1957 = vpop.f32.mrf.mxu0
      %v1958 = vadd.f32 %v1869, %v1957
      %v1959 = vpop.f32.mrf.mxu0
      %v1960 = vadd.f32 %v1871, %v1959
      %1961 = vmatmul.bf16.gmra.mxu0 %v1684
      %v1962 = vpop.f32.mrf.mxu0
      %v1963 = vadd.f32 %v1874, %v1962
      %v1964 = vpop.f32.mrf.mxu0
      %v1965 = vadd.f32 %v1876, %v1964
      %1966 = vmatmul.bf16.gmra.mxu0 %v1686
      %v1967 = vpop.f32.mrf.mxu0
      %v1968 = vadd.f32 %v1879, %v1967
      %v1969 = vpop.f32.mrf.mxu0
      %v1970 = vadd.f32 %v1881, %v1969
      %1971 = vmatmul.bf16.gmra.mxu0 %v1688
      %v1972 = vpop.f32.mrf.mxu0
      %v1973 = vadd.f32 %v1884, %v1972
      %v1974 = vpop.f32.mrf.mxu0
      %v1975 = vadd.f32 %v1886, %v1974
      %1976 = vmatmul.bf16.gmra.mxu0 %v1690
      %v1977 = vpop.f32.mrf.mxu0
      %v1978 = vadd.f32 %v1889, %v1977
      %v1979 = vpop.f32.mrf.mxu0
      %v1980 = vadd.f32 %v1891, %v1979
      %1981 = vmatmul.bf16.gmra.mxu0 %v1692
      %v1982 = vpop.f32.mrf.mxu0
      %v1983 = vadd.f32 %v1894, %v1982
      %v1984 = vpop.f32.mrf.mxu0
      %v1985 = vadd.f32 %v1896, %v1984
      %1986 = vmatmul.bf16.gmra.mxu0 %v1694
      %v1987 = vpop.f32.mrf.mxu0
      %v1988 = vadd.f32 %v1899, %v1987
      %v1989 = vpop.f32.mrf.mxu0
      %v1990 = vadd.f32 %v1901, %v1989
      %1991 = vmatmul.bf16.gmra.mxu0 %v1696
      %v1992 = vpop.f32.mrf.mxu0
      %v1993 = vadd.f32 %v1904, %v1992
      %v1994 = vpop.f32.mrf.mxu0
      %v1995 = vadd.f32 %v1906, %v1994
      %1996 = vmatmul.bf16.gmra.mxu0 %v1698
      %v1997 = vpop.f32.mrf.mxu0
      %v1998 = vadd.f32 %v1909, %v1997
      %v1999 = vpop.f32.mrf.mxu0
      %v2000 = vadd.f32 %v1911, %v1999
      %2001 = vmatmul.bf16.gmra.mxu0 %v1700
      %v2002 = vpop.f32.mrf.mxu0
      %v2003 = vadd.f32 %v1914, %v2002
      %v2004 = vpop.f32.mrf.mxu0
      %v2005 = vadd.f32 %v1916, %v2004
      %2006 = vdwg.mxu0
      %v2007 = vadd.f32 %v1428, %v1928
      %v2008 = vadd.f32 %v1430, %v1930
      %v2009 = vadd.f32 %v1433, %v1933
      %v2010 = vadd.f32 %v1435, %v1935
      %v2011 = vadd.f32 %v1438, %v1938
      %v2012 = vadd.f32 %v1440, %v1940
      %v2013 = vadd.f32 %v1443, %v1943
      %v2014 = vadd.f32 %v1445, %v1945
      %v2015 = vadd.f32 %v1448, %v1948
      %v2016 = vadd.f32 %v1450, %v1950
      %v2017 = vadd.f32 %v1453, %v1953
      %v2018 = vadd.f32 %v1455, %v1955
      %v2019 = vadd.f32 %v1458, %v1958
      %v2020 = vadd.f32 %v1460, %v1960
      %v2021 = vadd.f32 %v1463, %v1963
      %v2022 = vadd.f32 %v1465, %v1965
      %v2023 = vadd.f32 %v1468, %v1968
      %v2024 = vadd.f32 %v1470, %v1970
      %v2025 = vadd.f32 %v1473, %v1973
      %v2026 = vadd.f32 %v1475, %v1975
      %v2027 = vadd.f32 %v1478, %v1978
      %v2028 = vadd.f32 %v1480, %v1980
      %v2029 = vadd.f32 %v1483, %v1983
      %v2030 = vadd.f32 %v1485, %v1985
      %v2031 = vadd.f32 %v1488, %v1988
      %v2032 = vadd.f32 %v1490, %v1990
      %v2033 = vadd.f32 %v1493, %v1993
      %v2034 = vadd.f32 %v1495, %v1995
      %v2035 = vadd.f32 %v1498, %v1998
      %v2036 = vadd.f32 %v1500, %v2000
      %v2037 = vadd.f32 %v1503, %v2003
      %v2038 = vadd.f32 %v1505, %v2005
      %v2039 = vld [vmem:[%s1507] sm:$0xff]
      %v2040 = vld [vmem:[%s1507 + $0x8] sm:$0xff]
      %v2041 = vld [vmem:[%s1507 + $0x10] sm:$0x11]
      %v2042 = vld [vmem:[%s1507 + $0x18] sm:$0xff]
      %v2043 = vld [vmem:[%s1507 + $0x20] sm:$0xff]
      %v2044 = vld [vmem:[%s1507 + $0x28] sm:$0x11]
      %v2045 = vld [vmem:[%s1507 + $0x30] sm:$0xff]
      %v2046 = vld [vmem:[%s1507 + $0x38] sm:$0xff]
      %v2047 = vld [vmem:[%s1507 + $0x40] sm:$0x11]
      %v2048 = vld [vmem:[%s1507 + $0x48] sm:$0xff]
      %v2049 = vld [vmem:[%s1507 + $0x50] sm:$0xff]
      %v2050 = vld [vmem:[%s1507 + $0x58] sm:$0x11]
      %v2051 = vld [vmem:[%s1507 + $0x60] sm:$0xff]
      %v2052 = vld [vmem:[%s1507 + $0x68] sm:$0xff]
      %v2053 = vld [vmem:[%s1507 + $0x70] sm:$0x11]
      %v2054 = vld [vmem:[%s1507 + $0x78] sm:$0xff]
      %v2055 = vld [vmem:[%s1507 + $0x80] sm:$0xff]
      %v2056 = vld [vmem:[%s1507 + $0x88] sm:$0x11]
      %v2057 = vld [vmem:[%s1507 + $0x90] sm:$0xff]
      %v2058 = vld [vmem:[%s1507 + $0x98] sm:$0xff]
      %v2059 = vld [vmem:[%s1507 + $0xa0] sm:$0x11]
      %v2060 = vld [vmem:[%s1507 + $0xa8] sm:$0xff]
      %v2061 = vld [vmem:[%s1507 + $0xb0] sm:$0xff]
      %v2062 = vld [vmem:[%s1507 + $0xb8] sm:$0x11]
      %v2063 = vld [vmem:[%s1507 + $0xc0] sm:$0xff]
      %v2064 = vld [vmem:[%s1507 + $0xc8] sm:$0xff]
      %v2065 = vld [vmem:[%s1507 + $0xd0] sm:$0x11]
      %v2066 = vld [vmem:[%s1507 + $0xd8] sm:$0xff]
      %v2067 = vld [vmem:[%s1507 + $0xe0] sm:$0xff]
      %v2068 = vld [vmem:[%s1507 + $0xe8] sm:$0x11]
      %v2069 = vld [vmem:[%s1507 + $0xf0] sm:$0xff]
      %v2070 = vld [vmem:[%s1507 + $0xf8] sm:$0xff]
      %v2071 = vld [vmem:[%s1507 + $0x100] sm:$0x11]
      %v2072 = vld [vmem:[%s1507 + $0x108] sm:$0xff]
      %v2073 = vld [vmem:[%s1507 + $0x110] sm:$0xff]
      %v2074 = vld [vmem:[%s1507 + $0x118] sm:$0x11]
      %v2075 = vld [vmem:[%s1507 + $0x120] sm:$0xff]
      %v2076 = vld [vmem:[%s1507 + $0x128] sm:$0xff]
      %v2077 = vld [vmem:[%s1507 + $0x130] sm:$0x11]
      %v2078 = vld [vmem:[%s1507 + $0x138] sm:$0xff]
      %v2079 = vld [vmem:[%s1507 + $0x140] sm:$0xff]
      %v2080 = vld [vmem:[%s1507 + $0x148] sm:$0x11]
      %v2081 = vld [vmem:[%s1507 + $0x150] sm:$0xff]
      %v2082 = vld [vmem:[%s1507 + $0x158] sm:$0xff]
      %v2083 = vld [vmem:[%s1507 + $0x160] sm:$0x11]
      %v2084 = vld [vmem:[%s1507 + $0x168] sm:$0xff]
      %v2085 = vld [vmem:[%s1507 + $0x170] sm:$0xff]
      %v2086 = vld [vmem:[%s1507 + $0x178] sm:$0x11]
      %v2088 = vshrl.u32 %v2039, 16
      %v2090 = vrot.slane %v2088, 4
      %v2091 = vshll.u32 %v2039, 16
      %v2093 = vrot.slane %v2091, 5
      %v2094 = vor.u32 %v2090, %v2093
      %v2095 = vrot.slane %v2094, 4
      %v2097 = vshll.u32 %v2040, 16
      %v2099 = vrot.slane %v2097, 5
      %v2100 = vsel %vm253, %v2095, %v2099
      %v2101 = vshrl.u32 %v2040, 16
      %v2103 = vrot.slane %v2101, 4
      %v2104 = vor.u32 %v2103, %v2099
      %v2105 = vrot.slane %v2104, 4
      %v2107 = vshll.u32 %v2041, 16
      %v2109 = vrot.slane %v2107, 5
      %v2110 = vsel %vm253, %v2105, %v2109
      %v2112 = vshrl.u32 %v2042, 16
      %v2114 = vrot.slane %v2112, 4
      %v2115 = vshll.u32 %v2042, 16
      %v2117 = vrot.slane %v2115, 5
      %v2118 = vor.u32 %v2114, %v2117
      %v2119 = vrot.slane %v2118, 4
      %v2121 = vshll.u32 %v2043, 16
      %v2123 = vrot.slane %v2121, 5
      %v2124 = vsel %vm253, %v2119, %v2123
      %v2125 = vshrl.u32 %v2043, 16
      %v2127 = vrot.slane %v2125, 4
      %v2128 = vor.u32 %v2127, %v2123
      %v2129 = vrot.slane %v2128, 4
      %v2131 = vshll.u32 %v2044, 16
      %v2133 = vrot.slane %v2131, 5
      %v2134 = vsel %vm253, %v2129, %v2133
      %v2136 = vshrl.u32 %v2045, 16
      %v2138 = vrot.slane %v2136, 4
      %v2139 = vshll.u32 %v2045, 16
      %v2141 = vrot.slane %v2139, 5
      %v2142 = vor.u32 %v2138, %v2141
      %v2143 = vrot.slane %v2142, 4
      %v2145 = vshll.u32 %v2046, 16
      %v2147 = vrot.slane %v2145, 5
      %v2148 = vsel %vm253, %v2143, %v2147
      %v2149 = vshrl.u32 %v2046, 16
      %v2151 = vrot.slane %v2149, 4
      %v2152 = vor.u32 %v2151, %v2147
      %v2153 = vrot.slane %v2152, 4
      %v2155 = vshll.u32 %v2047, 16
      %v2157 = vrot.slane %v2155, 5
      %v2158 = vsel %vm253, %v2153, %v2157
      %v2160 = vshrl.u32 %v2048, 16
      %v2162 = vrot.slane %v2160, 4
      %v2163 = vshll.u32 %v2048, 16
      %v2165 = vrot.slane %v2163, 5
      %v2166 = vor.u32 %v2162, %v2165
      %v2167 = vrot.slane %v2166, 4
      %v2169 = vshll.u32 %v2049, 16
      %v2171 = vrot.slane %v2169, 5
      %v2172 = vsel %vm253, %v2167, %v2171
      %v2173 = vshrl.u32 %v2049, 16
      %v2175 = vrot.slane %v2173, 4
      %v2176 = vor.u32 %v2175, %v2171
      %v2177 = vrot.slane %v2176, 4
      %v2179 = vshll.u32 %v2050, 16
      %v2181 = vrot.slane %v2179, 5
      %v2182 = vsel %vm253, %v2177, %v2181
      %v2184 = vshrl.u32 %v2051, 16
      %v2186 = vrot.slane %v2184, 4
      %v2187 = vshll.u32 %v2051, 16
      %v2189 = vrot.slane %v2187, 5
      %v2190 = vor.u32 %v2186, %v2189
      %v2191 = vrot.slane %v2190, 4
      %v2193 = vshll.u32 %v2052, 16
      %v2195 = vrot.slane %v2193, 5
      %v2196 = vsel %vm253, %v2191, %v2195
      %v2197 = vshrl.u32 %v2052, 16
      %v2199 = vrot.slane %v2197, 4
      %v2200 = vor.u32 %v2199, %v2195
      %v2201 = vrot.slane %v2200, 4
      %v2203 = vshll.u32 %v2053, 16
      %v2205 = vrot.slane %v2203, 5
      %v2206 = vsel %vm253, %v2201, %v2205
      %v2208 = vshrl.u32 %v2054, 16
      %v2210 = vrot.slane %v2208, 4
      %v2211 = vshll.u32 %v2054, 16
      %v2213 = vrot.slane %v2211, 5
      %v2214 = vor.u32 %v2210, %v2213
      %v2215 = vrot.slane %v2214, 4
      %v2217 = vshll.u32 %v2055, 16
      %v2219 = vrot.slane %v2217, 5
      %v2220 = vsel %vm253, %v2215, %v2219
      %v2221 = vshrl.u32 %v2055, 16
      %v2223 = vrot.slane %v2221, 4
      %v2224 = vor.u32 %v2223, %v2219
      %v2225 = vrot.slane %v2224, 4
      %v2227 = vshll.u32 %v2056, 16
      %v2229 = vrot.slane %v2227, 5
      %v2230 = vsel %vm253, %v2225, %v2229
      %v2232 = vshrl.u32 %v2057, 16
      %v2234 = vrot.slane %v2232, 4
      %v2235 = vshll.u32 %v2057, 16
      %v2237 = vrot.slane %v2235, 5
      %v2238 = vor.u32 %v2234, %v2237
      %v2239 = vrot.slane %v2238, 4
      %v2241 = vshll.u32 %v2058, 16
      %v2243 = vrot.slane %v2241, 5
      %v2244 = vsel %vm253, %v2239, %v2243
      %v2245 = vshrl.u32 %v2058, 16
      %v2247 = vrot.slane %v2245, 4
      %v2248 = vor.u32 %v2247, %v2243
      %v2249 = vrot.slane %v2248, 4
      %v2251 = vshll.u32 %v2059, 16
      %v2253 = vrot.slane %v2251, 5
      %v2254 = vsel %vm253, %v2249, %v2253
      %v2256 = vshrl.u32 %v2060, 16
      %v2258 = vrot.slane %v2256, 4
      %v2259 = vshll.u32 %v2060, 16
      %v2261 = vrot.slane %v2259, 5
      %v2262 = vor.u32 %v2258, %v2261
      %v2263 = vrot.slane %v2262, 4
      %v2265 = vshll.u32 %v2061, 16
      %v2267 = vrot.slane %v2265, 5
      %v2268 = vsel %vm253, %v2263, %v2267
      %v2269 = vshrl.u32 %v2061, 16
      %v2271 = vrot.slane %v2269, 4
      %v2272 = vor.u32 %v2271, %v2267
      %v2273 = vrot.slane %v2272, 4
      %v2275 = vshll.u32 %v2062, 16
      %v2277 = vrot.slane %v2275, 5
      %v2278 = vsel %vm253, %v2273, %v2277
      %v2280 = vshrl.u32 %v2063, 16
      %v2282 = vrot.slane %v2280, 4
      %v2283 = vshll.u32 %v2063, 16
      %v2285 = vrot.slane %v2283, 5
      %v2286 = vor.u32 %v2282, %v2285
      %v2287 = vrot.slane %v2286, 4
      %v2289 = vshll.u32 %v2064, 16
      %v2291 = vrot.slane %v2289, 5
      %v2292 = vsel %vm253, %v2287, %v2291
      %v2293 = vshrl.u32 %v2064, 16
      %v2295 = vrot.slane %v2293, 4
      %v2296 = vor.u32 %v2295, %v2291
      %v2297 = vrot.slane %v2296, 4
      %v2299 = vshll.u32 %v2065, 16
      %v2301 = vrot.slane %v2299, 5
      %v2302 = vsel %vm253, %v2297, %v2301
      %v2304 = vshrl.u32 %v2066, 16
      %v2306 = vrot.slane %v2304, 4
      %v2307 = vshll.u32 %v2066, 16
      %v2309 = vrot.slane %v2307, 5
      %v2310 = vor.u32 %v2306, %v2309
      %v2311 = vrot.slane %v2310, 4
      %v2313 = vshll.u32 %v2067, 16
      %v2315 = vrot.slane %v2313, 5
      %v2316 = vsel %vm253, %v2311, %v2315
      %v2317 = vshrl.u32 %v2067, 16
      %v2319 = vrot.slane %v2317, 4
      %v2320 = vor.u32 %v2319, %v2315
      %v2321 = vrot.slane %v2320, 4
      %v2323 = vshll.u32 %v2068, 16
      %v2325 = vrot.slane %v2323, 5
      %v2326 = vsel %vm253, %v2321, %v2325
      %v2328 = vshrl.u32 %v2069, 16
      %v2330 = vrot.slane %v2328, 4
      %v2331 = vshll.u32 %v2069, 16
      %v2333 = vrot.slane %v2331, 5
      %v2334 = vor.u32 %v2330, %v2333
      %v2335 = vrot.slane %v2334, 4
      %v2337 = vshll.u32 %v2070, 16
      %v2339 = vrot.slane %v2337, 5
      %v2340 = vsel %vm253, %v2335, %v2339
      %v2341 = vshrl.u32 %v2070, 16
      %v2343 = vrot.slane %v2341, 4
      %v2344 = vor.u32 %v2343, %v2339
      %v2345 = vrot.slane %v2344, 4
      %v2347 = vshll.u32 %v2071, 16
      %v2349 = vrot.slane %v2347, 5
      %v2350 = vsel %vm253, %v2345, %v2349
      %v2352 = vshrl.u32 %v2072, 16
      %v2354 = vrot.slane %v2352, 4
      %v2355 = vshll.u32 %v2072, 16
      %v2357 = vrot.slane %v2355, 5
      %v2358 = vor.u32 %v2354, %v2357
      %v2359 = vrot.slane %v2358, 4
      %v2361 = vshll.u32 %v2073, 16
      %v2363 = vrot.slane %v2361, 5
      %v2364 = vsel %vm253, %v2359, %v2363
      %v2365 = vshrl.u32 %v2073, 16
      %v2367 = vrot.slane %v2365, 4
      %v2368 = vor.u32 %v2367, %v2363
      %v2369 = vrot.slane %v2368, 4
      %v2371 = vshll.u32 %v2074, 16
      %v2373 = vrot.slane %v2371, 5
      %v2374 = vsel %vm253, %v2369, %v2373
      %v2376 = vshrl.u32 %v2075, 16
      %v2378 = vrot.slane %v2376, 4
      %v2379 = vshll.u32 %v2075, 16
      %v2381 = vrot.slane %v2379, 5
      %v2382 = vor.u32 %v2378, %v2381
      %v2383 = vrot.slane %v2382, 4
      %v2385 = vshll.u32 %v2076, 16
      %v2387 = vrot.slane %v2385, 5
      %v2388 = vsel %vm253, %v2383, %v2387
      %v2389 = vshrl.u32 %v2076, 16
      %v2391 = vrot.slane %v2389, 4
      %v2392 = vor.u32 %v2391, %v2387
      %v2393 = vrot.slane %v2392, 4
      %v2395 = vshll.u32 %v2077, 16
      %v2397 = vrot.slane %v2395, 5
      %v2398 = vsel %vm253, %v2393, %v2397
      %v2400 = vshrl.u32 %v2078, 16
      %v2402 = vrot.slane %v2400, 4
      %v2403 = vshll.u32 %v2078, 16
      %v2405 = vrot.slane %v2403, 5
      %v2406 = vor.u32 %v2402, %v2405
      %v2407 = vrot.slane %v2406, 4
      %v2409 = vshll.u32 %v2079, 16
      %v2411 = vrot.slane %v2409, 5
      %v2412 = vsel %vm253, %v2407, %v2411
      %v2413 = vshrl.u32 %v2079, 16
      %v2415 = vrot.slane %v2413, 4
      %v2416 = vor.u32 %v2415, %v2411
      %v2417 = vrot.slane %v2416, 4
      %v2419 = vshll.u32 %v2080, 16
      %v2421 = vrot.slane %v2419, 5
      %v2422 = vsel %vm253, %v2417, %v2421
      %v2424 = vshrl.u32 %v2081, 16
      %v2426 = vrot.slane %v2424, 4
      %v2427 = vshll.u32 %v2081, 16
      %v2429 = vrot.slane %v2427, 5
      %v2430 = vor.u32 %v2426, %v2429
      %v2431 = vrot.slane %v2430, 4
      %v2433 = vshll.u32 %v2082, 16
      %v2435 = vrot.slane %v2433, 5
      %v2436 = vsel %vm253, %v2431, %v2435
      %v2437 = vshrl.u32 %v2082, 16
      %v2439 = vrot.slane %v2437, 4
      %v2440 = vor.u32 %v2439, %v2435
      %v2441 = vrot.slane %v2440, 4
      %v2443 = vshll.u32 %v2083, 16
      %v2445 = vrot.slane %v2443, 5
      %v2446 = vsel %vm253, %v2441, %v2445
      %v2448 = vshrl.u32 %v2084, 16
      %v2450 = vrot.slane %v2448, 4
      %v2451 = vshll.u32 %v2084, 16
      %v2453 = vrot.slane %v2451, 5
      %v2454 = vor.u32 %v2450, %v2453
      %v2455 = vrot.slane %v2454, 4
      %v2457 = vshll.u32 %v2085, 16
      %v2459 = vrot.slane %v2457, 5
      %v2460 = vsel %vm253, %v2455, %v2459
      %v2461 = vshrl.u32 %v2085, 16
      %v2463 = vrot.slane %v2461, 4
      %v2464 = vor.u32 %v2463, %v2459
      %v2465 = vrot.slane %v2464, 4
      %v2467 = vshll.u32 %v2086, 16
      %v2469 = vrot.slane %v2467, 5
      %v2470 = vsel %vm253, %v2465, %v2469
      %s2471 = scalar_lea.vmem %s1, 384
      %v2472 = vld [vmem:[%s2471] sm:$0xf]
      %v2473 = vld [vmem:[%s2471 + $0x4] sm:$0xf]
      %v2474 = vld [vmem:[%s2471 + $0x8] sm:$0xf]
      %v2475 = vld [vmem:[%s2471 + $0xc] sm:$0xf]
      %v2476 = vld [vmem:[%s2471 + $0x10] sm:$0xf]
      %v2477 = vld [vmem:[%s2471 + $0x14] sm:$0xf]
      %v2478 = vld [vmem:[%s2471 + $0x18] sm:$0xf]
      %v2479 = vld [vmem:[%s2471 + $0x1c] sm:$0xf]
      %v2480 = vld [vmem:[%s2471 + $0x20] sm:$0xf]
      %v2481 = vld [vmem:[%s2471 + $0x24] sm:$0xf]
      %v2482 = vld [vmem:[%s2471 + $0x28] sm:$0xf]
      %v2483 = vld [vmem:[%s2471 + $0x2c] sm:$0xf]
      %v2484 = vld [vmem:[%s2471 + $0x30] sm:$0xf]
      %v2485 = vld [vmem:[%s2471 + $0x34] sm:$0xf]
      %v2486 = vld [vmem:[%s2471 + $0x38] sm:$0xf]
      %v2487 = vld [vmem:[%s2471 + $0x3c] sm:$0xf]
      %v2488 = vld [vmem:[%s2471 + $0x40] sm:$0xf]
      %v2489 = vld [vmem:[%s2471 + $0x44] sm:$0xf]
      %v2490 = vld [vmem:[%s2471 + $0x48] sm:$0xf]
      %v2491 = vld [vmem:[%s2471 + $0x4c] sm:$0xf]
      %v2492 = vld [vmem:[%s2471 + $0x50] sm:$0xf]
      %v2493 = vld [vmem:[%s2471 + $0x54] sm:$0xf]
      %v2494 = vld [vmem:[%s2471 + $0x58] sm:$0xf]
      %v2495 = vld [vmem:[%s2471 + $0x5c] sm:$0xf]
      %v2496 = vld [vmem:[%s2471 + $0x60] sm:$0xf]
      %v2497 = vld [vmem:[%s2471 + $0x64] sm:$0xf]
      %v2498 = vld [vmem:[%s2471 + $0x68] sm:$0xf]
      %v2499 = vld [vmem:[%s2471 + $0x6c] sm:$0xf]
      %v2500 = vld [vmem:[%s2471 + $0x70] sm:$0xf]
      %v2501 = vld [vmem:[%s2471 + $0x74] sm:$0xf]
      %v2502 = vld [vmem:[%s2471 + $0x78] sm:$0xf]
      %v2503 = vld [vmem:[%s2471 + $0x7c] sm:$0xf]
      %v2504 = vunpack.c.l.b16 %v2100
      %v2505 = vunpack.c.h.b16 %v2100
      %v2506 = vunpack.c.l.b16 %v2110
      %v2507 = vunpack.c.h.b16 %v2110
      %v2508 = vunpack.c.l.b16 %v2124
      %v2509 = vunpack.c.h.b16 %v2124
      %v2510 = vunpack.c.l.b16 %v2134
      %v2511 = vunpack.c.h.b16 %v2134
      %v2512 = vunpack.c.l.b16 %v2148
      %v2513 = vunpack.c.h.b16 %v2148
      %v2514 = vunpack.c.l.b16 %v2158
      %v2515 = vunpack.c.h.b16 %v2158
      %v2516 = vunpack.c.l.b16 %v2172
      %v2517 = vunpack.c.h.b16 %v2172
      %v2518 = vunpack.c.l.b16 %v2182
      %v2519 = vunpack.c.h.b16 %v2182
      %v2520 = vunpack.c.l.b16 %v2196
      %v2521 = vunpack.c.h.b16 %v2196
      %v2522 = vunpack.c.l.b16 %v2206
      %v2523 = vunpack.c.h.b16 %v2206
      %v2524 = vunpack.c.l.b16 %v2220
      %v2525 = vunpack.c.h.b16 %v2220
      %v2526 = vunpack.c.l.b16 %v2230
      %v2527 = vunpack.c.h.b16 %v2230
      %v2528 = vunpack.c.l.b16 %v2244
      %v2529 = vunpack.c.h.b16 %v2244
      %v2530 = vunpack.c.l.b16 %v2254
      %v2531 = vunpack.c.h.b16 %v2254
      %v2532 = vunpack.c.l.b16 %v2268
      %v2533 = vunpack.c.h.b16 %v2268
      %v2534 = vunpack.c.l.b16 %v2278
      %v2535 = vunpack.c.h.b16 %v2278
      %v2536 = vunpack.c.l.b16 %v2292
      %v2537 = vunpack.c.h.b16 %v2292
      %v2538 = vunpack.c.l.b16 %v2302
      %v2539 = vunpack.c.h.b16 %v2302
      %v2540 = vunpack.c.l.b16 %v2316
      %v2541 = vunpack.c.h.b16 %v2316
      %v2542 = vunpack.c.l.b16 %v2326
      %v2543 = vunpack.c.h.b16 %v2326
      %v2544 = vunpack.c.l.b16 %v2340
      %v2545 = vunpack.c.h.b16 %v2340
      %v2546 = vunpack.c.l.b16 %v2350
      %v2547 = vunpack.c.h.b16 %v2350
      %v2548 = vunpack.c.l.b16 %v2364
      %v2549 = vunpack.c.h.b16 %v2364
      %v2550 = vunpack.c.l.b16 %v2374
      %v2551 = vunpack.c.h.b16 %v2374
      %v2552 = vunpack.c.l.b16 %v2388
      %v2553 = vunpack.c.h.b16 %v2388
      %v2554 = vunpack.c.l.b16 %v2398
      %v2555 = vunpack.c.h.b16 %v2398
      %v2556 = vunpack.c.l.b16 %v2412
      %v2557 = vunpack.c.h.b16 %v2412
      %v2558 = vunpack.c.l.b16 %v2422
      %v2559 = vunpack.c.h.b16 %v2422
      %v2560 = vunpack.c.l.b16 %v2436
      %v2561 = vunpack.c.h.b16 %v2436
      %v2562 = vunpack.c.l.b16 %v2446
      %v2563 = vunpack.c.h.b16 %v2446
      %v2564 = vunpack.c.l.b16 %v2460
      %v2565 = vunpack.c.h.b16 %v2460
      %v2566 = vunpack.c.l.b16 %v2470
      %v2567 = vunpack.c.h.b16 %v2470
      %v2568 = vpack.c.b16 %v2506, %v2504
      %v2569 = vpack.c.b16 %v2507, %v2505
      %v2570 = vpack.c.b16 %v2510, %v2508
      %v2571 = vpack.c.b16 %v2511, %v2509
      %v2572 = vpack.c.b16 %v2514, %v2512
      %v2573 = vpack.c.b16 %v2515, %v2513
      %v2574 = vpack.c.b16 %v2518, %v2516
      %v2575 = vpack.c.b16 %v2519, %v2517
      %v2576 = vpack.c.b16 %v2522, %v2520
      %v2577 = vpack.c.b16 %v2523, %v2521
      %v2578 = vpack.c.b16 %v2526, %v2524
      %v2579 = vpack.c.b16 %v2527, %v2525
      %v2580 = vpack.c.b16 %v2530, %v2528
      %v2581 = vpack.c.b16 %v2531, %v2529
      %v2582 = vpack.c.b16 %v2534, %v2532
      %v2583 = vpack.c.b16 %v2535, %v2533
      %v2584 = vpack.c.b16 %v2538, %v2536
      %v2585 = vpack.c.b16 %v2539, %v2537
      %v2586 = vpack.c.b16 %v2542, %v2540
      %v2587 = vpack.c.b16 %v2543, %v2541
      %v2588 = vpack.c.b16 %v2546, %v2544
      %v2589 = vpack.c.b16 %v2547, %v2545
      %v2590 = vpack.c.b16 %v2550, %v2548
      %v2591 = vpack.c.b16 %v2551, %v2549
      %v2592 = vpack.c.b16 %v2554, %v2552
      %v2593 = vpack.c.b16 %v2555, %v2553
      %v2594 = vpack.c.b16 %v2558, %v2556
      %v2595 = vpack.c.b16 %v2559, %v2557
      %v2596 = vpack.c.b16 %v2562, %v2560
      %v2597 = vpack.c.b16 %v2563, %v2561
      %v2598 = vpack.c.b16 %v2566, %v2564
      %v2599 = vpack.c.b16 %v2567, %v2565
      %v2664 = vunpack.c.l.b16 %v2472
      %v2665 = vunpack.c.l.b16 %v2473
      %v2666 = vunpack.c.l.b16 %v2474
      %v2667 = vunpack.c.l.b16 %v2475
      %v2668 = vunpack.c.l.b16 %v2476
      %v2669 = vunpack.c.l.b16 %v2477
      %v2670 = vunpack.c.l.b16 %v2478
      %v2671 = vunpack.c.l.b16 %v2479
      %v2672 = vunpack.c.l.b16 %v2480
      %v2673 = vunpack.c.l.b16 %v2481
      %v2674 = vunpack.c.l.b16 %v2482
      %v2675 = vunpack.c.l.b16 %v2483
      %v2676 = vunpack.c.l.b16 %v2484
      %v2677 = vunpack.c.l.b16 %v2485
      %v2678 = vunpack.c.l.b16 %v2486
      %v2679 = vunpack.c.l.b16 %v2487
      %v2680 = vunpack.c.l.b16 %v2488
      %v2681 = vunpack.c.l.b16 %v2489
      %v2682 = vunpack.c.l.b16 %v2490
      %v2683 = vunpack.c.l.b16 %v2491
      %v2684 = vunpack.c.l.b16 %v2492
      %v2685 = vunpack.c.l.b16 %v2493
      %v2686 = vunpack.c.l.b16 %v2494
      %v2687 = vunpack.c.l.b16 %v2495
      %v2688 = vunpack.c.l.b16 %v2496
      %v2689 = vunpack.c.l.b16 %v2497
      %v2690 = vunpack.c.l.b16 %v2498
      %v2691 = vunpack.c.l.b16 %v2499
      %v2692 = vunpack.c.l.b16 %v2500
      %v2693 = vunpack.c.l.b16 %v2501
      %v2694 = vunpack.c.l.b16 %v2502
      %v2695 = vunpack.c.l.b16 %v2503
      %v2696 = vpack.c.b16 %v2665, %v2664
      %v2697 = vpack.c.b16 %v2667, %v2666
      %v2698 = vpack.c.b16 %v2669, %v2668
      %v2699 = vpack.c.b16 %v2671, %v2670
      %v2700 = vpack.c.b16 %v2673, %v2672
      %v2701 = vpack.c.b16 %v2675, %v2674
      %v2702 = vpack.c.b16 %v2677, %v2676
      %v2703 = vpack.c.b16 %v2679, %v2678
      %v2704 = vpack.c.b16 %v2681, %v2680
      %v2705 = vpack.c.b16 %v2683, %v2682
      %v2706 = vpack.c.b16 %v2685, %v2684
      %v2707 = vpack.c.b16 %v2687, %v2686
      %v2708 = vpack.c.b16 %v2689, %v2688
      %v2709 = vpack.c.b16 %v2691, %v2690
      %v2710 = vpack.c.b16 %v2693, %v2692
      %v2711 = vpack.c.b16 %v2695, %v2694
      %2728 = vmatpush.bf16.msra.mxu0 %v2703
      %2729 = vmatpush.bf16.msra.mxu0 %v2702
      %2730 = vmatpush.bf16.msra.mxu0 %v2701
      %2731 = vmatpush.bf16.msra.mxu0 %v2700
      %2732 = vmatpush.bf16.msra.mxu0 %v2699
      %2733 = vmatpush.bf16.msra.mxu0 %v2698
      %2734 = vmatpush.bf16.msra.mxu0 %v2697
      %2735 = vmatpush.bf16.msra.mxu0 %v2696
      %2736 = vmatmul.bf16.gmra.mxu0 %v2568
      %v2737 = vpop.f32.mrf.mxu0
      %v2738 = vadd.f32 0.0, %v2737
      %v2739 = vpop.f32.mrf.mxu0
      %v2740 = vadd.f32 0.0, %v2739
      %2741 = vmatmul.bf16.gmra.mxu0 %v2570
      %v2742 = vpop.f32.mrf.mxu0
      %v2743 = vadd.f32 0.0, %v2742
      %v2744 = vpop.f32.mrf.mxu0
      %v2745 = vadd.f32 0.0, %v2744
      %2746 = vmatmul.bf16.gmra.mxu0 %v2572
      %v2747 = vpop.f32.mrf.mxu0
      %v2748 = vadd.f32 0.0, %v2747
      %v2749 = vpop.f32.mrf.mxu0
      %v2750 = vadd.f32 0.0, %v2749
      %2751 = vmatmul.bf16.gmra.mxu0 %v2574
      %v2752 = vpop.f32.mrf.mxu0
      %v2753 = vadd.f32 0.0, %v2752
      %v2754 = vpop.f32.mrf.mxu0
      %v2755 = vadd.f32 0.0, %v2754
      %2756 = vmatmul.bf16.gmra.mxu0 %v2576
      %v2757 = vpop.f32.mrf.mxu0
      %v2758 = vadd.f32 0.0, %v2757
      %v2759 = vpop.f32.mrf.mxu0
      %v2760 = vadd.f32 0.0, %v2759
      %2761 = vmatmul.bf16.gmra.mxu0 %v2578
      %v2762 = vpop.f32.mrf.mxu0
      %v2763 = vadd.f32 0.0, %v2762
      %v2764 = vpop.f32.mrf.mxu0
      %v2765 = vadd.f32 0.0, %v2764
      %2766 = vmatmul.bf16.gmra.mxu0 %v2580
      %v2767 = vpop.f32.mrf.mxu0
      %v2768 = vadd.f32 0.0, %v2767
      %v2769 = vpop.f32.mrf.mxu0
      %v2770 = vadd.f32 0.0, %v2769
      %2771 = vmatmul.bf16.gmra.mxu0 %v2582
      %v2772 = vpop.f32.mrf.mxu0
      %v2773 = vadd.f32 0.0, %v2772
      %v2774 = vpop.f32.mrf.mxu0
      %v2775 = vadd.f32 0.0, %v2774
      %2776 = vmatmul.bf16.gmra.mxu0 %v2584
      %v2777 = vpop.f32.mrf.mxu0
      %v2778 = vadd.f32 0.0, %v2777
      %v2779 = vpop.f32.mrf.mxu0
      %v2780 = vadd.f32 0.0, %v2779
      %2781 = vmatmul.bf16.gmra.mxu0 %v2586
      %v2782 = vpop.f32.mrf.mxu0
      %v2783 = vadd.f32 0.0, %v2782
      %v2784 = vpop.f32.mrf.mxu0
      %v2785 = vadd.f32 0.0, %v2784
      %2786 = vmatmul.bf16.gmra.mxu0 %v2588
      %v2787 = vpop.f32.mrf.mxu0
      %v2788 = vadd.f32 0.0, %v2787
      %v2789 = vpop.f32.mrf.mxu0
      %v2790 = vadd.f32 0.0, %v2789
      %2791 = vmatmul.bf16.gmra.mxu0 %v2590
      %v2792 = vpop.f32.mrf.mxu0
      %v2793 = vadd.f32 0.0, %v2792
      %v2794 = vpop.f32.mrf.mxu0
      %v2795 = vadd.f32 0.0, %v2794
      %2796 = vmatmul.bf16.gmra.mxu0 %v2592
      %v2797 = vpop.f32.mrf.mxu0
      %v2798 = vadd.f32 0.0, %v2797
      %v2799 = vpop.f32.mrf.mxu0
      %v2800 = vadd.f32 0.0, %v2799
      %2801 = vmatmul.bf16.gmra.mxu0 %v2594
      %v2802 = vpop.f32.mrf.mxu0
      %v2803 = vadd.f32 0.0, %v2802
      %v2804 = vpop.f32.mrf.mxu0
      %v2805 = vadd.f32 0.0, %v2804
      %2806 = vmatmul.bf16.gmra.mxu0 %v2596
      %v2807 = vpop.f32.mrf.mxu0
      %v2808 = vadd.f32 0.0, %v2807
      %v2809 = vpop.f32.mrf.mxu0
      %v2810 = vadd.f32 0.0, %v2809
      %2811 = vmatmul.bf16.gmra.mxu0 %v2598
      %v2812 = vpop.f32.mrf.mxu0
      %v2813 = vadd.f32 0.0, %v2812
      %v2814 = vpop.f32.mrf.mxu0
      %v2815 = vadd.f32 0.0, %v2814
      %2816 = vdwg.mxu0
      %2817 = vmatpush.bf16.msra.mxu0 %v2711
      %2818 = vmatpush.bf16.msra.mxu0 %v2710
      %2819 = vmatpush.bf16.msra.mxu0 %v2709
      %2820 = vmatpush.bf16.msra.mxu0 %v2708
      %2821 = vmatpush.bf16.msra.mxu0 %v2707
      %2822 = vmatpush.bf16.msra.mxu0 %v2706
      %2823 = vmatpush.bf16.msra.mxu0 %v2705
      %2824 = vmatpush.bf16.msra.mxu0 %v2704
      %2825 = vmatmul.bf16.gmra.mxu0 %v2569
      %v2826 = vpop.f32.mrf.mxu0
      %v2827 = vadd.f32 %v2738, %v2826
      %v2828 = vpop.f32.mrf.mxu0
      %v2829 = vadd.f32 %v2740, %v2828
      %2830 = vmatmul.bf16.gmra.mxu0 %v2571
      %v2831 = vpop.f32.mrf.mxu0
      %v2832 = vadd.f32 %v2743, %v2831
      %v2833 = vpop.f32.mrf.mxu0
      %v2834 = vadd.f32 %v2745, %v2833
      %2835 = vmatmul.bf16.gmra.mxu0 %v2573
      %v2836 = vpop.f32.mrf.mxu0
      %v2837 = vadd.f32 %v2748, %v2836
      %v2838 = vpop.f32.mrf.mxu0
      %v2839 = vadd.f32 %v2750, %v2838
      %2840 = vmatmul.bf16.gmra.mxu0 %v2575
      %v2841 = vpop.f32.mrf.mxu0
      %v2842 = vadd.f32 %v2753, %v2841
      %v2843 = vpop.f32.mrf.mxu0
      %v2844 = vadd.f32 %v2755, %v2843
      %2845 = vmatmul.bf16.gmra.mxu0 %v2577
      %v2846 = vpop.f32.mrf.mxu0
      %v2847 = vadd.f32 %v2758, %v2846
      %v2848 = vpop.f32.mrf.mxu0
      %v2849 = vadd.f32 %v2760, %v2848
      %2850 = vmatmul.bf16.gmra.mxu0 %v2579
      %v2851 = vpop.f32.mrf.mxu0
      %v2852 = vadd.f32 %v2763, %v2851
      %v2853 = vpop.f32.mrf.mxu0
      %v2854 = vadd.f32 %v2765, %v2853
      %2855 = vmatmul.bf16.gmra.mxu0 %v2581
      %v2856 = vpop.f32.mrf.mxu0
      %v2857 = vadd.f32 %v2768, %v2856
      %v2858 = vpop.f32.mrf.mxu0
      %v2859 = vadd.f32 %v2770, %v2858
      %2860 = vmatmul.bf16.gmra.mxu0 %v2583
      %v2861 = vpop.f32.mrf.mxu0
      %v2862 = vadd.f32 %v2773, %v2861
      %v2863 = vpop.f32.mrf.mxu0
      %v2864 = vadd.f32 %v2775, %v2863
      %2865 = vmatmul.bf16.gmra.mxu0 %v2585
      %v2866 = vpop.f32.mrf.mxu0
      %v2867 = vadd.f32 %v2778, %v2866
      %v2868 = vpop.f32.mrf.mxu0
      %v2869 = vadd.f32 %v2780, %v2868
      %2870 = vmatmul.bf16.gmra.mxu0 %v2587
      %v2871 = vpop.f32.mrf.mxu0
      %v2872 = vadd.f32 %v2783, %v2871
      %v2873 = vpop.f32.mrf.mxu0
      %v2874 = vadd.f32 %v2785, %v2873
      %2875 = vmatmul.bf16.gmra.mxu0 %v2589
      %v2876 = vpop.f32.mrf.mxu0
      %v2877 = vadd.f32 %v2788, %v2876
      %v2878 = vpop.f32.mrf.mxu0
      %v2879 = vadd.f32 %v2790, %v2878
      %2880 = vmatmul.bf16.gmra.mxu0 %v2591
      %v2881 = vpop.f32.mrf.mxu0
      %v2882 = vadd.f32 %v2793, %v2881
      %v2883 = vpop.f32.mrf.mxu0
      %v2884 = vadd.f32 %v2795, %v2883
      %2885 = vmatmul.bf16.gmra.mxu0 %v2593
      %v2886 = vpop.f32.mrf.mxu0
      %v2887 = vadd.f32 %v2798, %v2886
      %v2888 = vpop.f32.mrf.mxu0
      %v2889 = vadd.f32 %v2800, %v2888
      %2890 = vmatmul.bf16.gmra.mxu0 %v2595
      %v2891 = vpop.f32.mrf.mxu0
      %v2892 = vadd.f32 %v2803, %v2891
      %v2893 = vpop.f32.mrf.mxu0
      %v2894 = vadd.f32 %v2805, %v2893
      %2895 = vmatmul.bf16.gmra.mxu0 %v2597
      %v2896 = vpop.f32.mrf.mxu0
      %v2897 = vadd.f32 %v2808, %v2896
      %v2898 = vpop.f32.mrf.mxu0
      %v2899 = vadd.f32 %v2810, %v2898
      %2900 = vmatmul.bf16.gmra.mxu0 %v2599
      %v2901 = vpop.f32.mrf.mxu0
      %v2902 = vadd.f32 %v2813, %v2901
      %v2903 = vpop.f32.mrf.mxu0
      %v2904 = vadd.f32 %v2815, %v2903
      %2905 = vdwg.mxu0
      %v2906 = vadd.f32 %v2007, %v2827
      %v2907 = vadd.f32 %v2008, %v2829
      %v2908 = vadd.f32 %v2009, %v2832
      %v2909 = vadd.f32 %v2010, %v2834
      %v2910 = vadd.f32 %v2011, %v2837
      %v2911 = vadd.f32 %v2012, %v2839
      %v2912 = vadd.f32 %v2013, %v2842
      %v2913 = vadd.f32 %v2014, %v2844
      %v2914 = vadd.f32 %v2015, %v2847
      %v2915 = vadd.f32 %v2016, %v2849
      %v2916 = vadd.f32 %v2017, %v2852
      %v2917 = vadd.f32 %v2018, %v2854
      %v2918 = vadd.f32 %v2019, %v2857
      %v2919 = vadd.f32 %v2020, %v2859
      %v2920 = vadd.f32 %v2021, %v2862
      %v2921 = vadd.f32 %v2022, %v2864
      %v2922 = vadd.f32 %v2023, %v2867
      %v2923 = vadd.f32 %v2024, %v2869
      %v2924 = vadd.f32 %v2025, %v2872
      %v2925 = vadd.f32 %v2026, %v2874
      %v2926 = vadd.f32 %v2027, %v2877
      %v2927 = vadd.f32 %v2028, %v2879
      %v2928 = vadd.f32 %v2029, %v2882
      %v2929 = vadd.f32 %v2030, %v2884
      %v2930 = vadd.f32 %v2031, %v2887
      %v2931 = vadd.f32 %v2032, %v2889
      %v2932 = vadd.f32 %v2033, %v2892
      %v2933 = vadd.f32 %v2034, %v2894
      %v2934 = vadd.f32 %v2035, %v2897
      %v2935 = vadd.f32 %v2036, %v2899
      %v2936 = vadd.f32 %v2037, %v2902
      %v2937 = vadd.f32 %v2038, %v2904
      %v2938 = vld [vmem:[%s2] sm:$0x1]
      %v2940 = vperm.slane %v2938, 0
      %v2942 = vadd.f32 %v2906, %v2940
      %v2943 = vadd.f32 %v2907, %v2940
      %v2944 = vadd.f32 %v2908, %v2940
      %v2945 = vadd.f32 %v2909, %v2940
      %v2946 = vadd.f32 %v2910, %v2940
      %v2947 = vadd.f32 %v2911, %v2940
      %v2948 = vadd.f32 %v2912, %v2940
      %v2949 = vadd.f32 %v2913, %v2940
      %v2950 = vadd.f32 %v2914, %v2940
      %v2951 = vadd.f32 %v2915, %v2940
      %v2952 = vadd.f32 %v2916, %v2940
      %v2953 = vadd.f32 %v2917, %v2940
      %v2954 = vadd.f32 %v2918, %v2940
      %v2955 = vadd.f32 %v2919, %v2940
      %v2956 = vadd.f32 %v2920, %v2940
      %v2957 = vadd.f32 %v2921, %v2940
      %v2958 = vadd.f32 %v2922, %v2940
      %v2959 = vadd.f32 %v2923, %v2940
      %v2960 = vadd.f32 %v2924, %v2940
      %v2961 = vadd.f32 %v2925, %v2940
      %v2962 = vadd.f32 %v2926, %v2940
      %v2963 = vadd.f32 %v2927, %v2940
      %v2964 = vadd.f32 %v2928, %v2940
      %v2965 = vadd.f32 %v2929, %v2940
      %v2966 = vadd.f32 %v2930, %v2940
      %v2967 = vadd.f32 %v2931, %v2940
      %v2968 = vadd.f32 %v2932, %v2940
      %v2969 = vadd.f32 %v2933, %v2940
      %v2970 = vadd.f32 %v2934, %v2940
      %v2971 = vadd.f32 %v2935, %v2940
      %v2972 = vadd.f32 %v2936, %v2940
      %v2973 = vadd.f32 %v2937, %v2940
      %vm2974 = vcmp.ge.f32.partialorder %v2942, 0.0
      %vm2975 = vcmp.ge.f32.partialorder %v2943, 0.0
      %vm2976 = vcmp.ge.f32.partialorder %v2944, 0.0
      %vm2977 = vcmp.ge.f32.partialorder %v2945, 0.0
      %vm2978 = vcmp.ge.f32.partialorder %v2946, 0.0
      %vm2979 = vcmp.ge.f32.partialorder %v2947, 0.0
      %vm2980 = vcmp.ge.f32.partialorder %v2948, 0.0
      %vm2981 = vcmp.ge.f32.partialorder %v2949, 0.0
      %vm2982 = vcmp.ge.f32.partialorder %v2950, 0.0
      %vm2983 = vcmp.ge.f32.partialorder %v2951, 0.0
      %vm2984 = vcmp.ge.f32.partialorder %v2952, 0.0
      %vm2985 = vcmp.ge.f32.partialorder %v2953, 0.0
      %vm2986 = vcmp.ge.f32.partialorder %v2954, 0.0
      %vm2987 = vcmp.ge.f32.partialorder %v2955, 0.0
      %vm2988 = vcmp.ge.f32.partialorder %v2956, 0.0
      %vm2989 = vcmp.ge.f32.partialorder %v2957, 0.0
      %vm2990 = vcmp.ge.f32.partialorder %v2958, 0.0
      %vm2991 = vcmp.ge.f32.partialorder %v2959, 0.0
      %vm2992 = vcmp.ge.f32.partialorder %v2960, 0.0
      %vm2993 = vcmp.ge.f32.partialorder %v2961, 0.0
      %vm2994 = vcmp.ge.f32.partialorder %v2962, 0.0
      %vm2995 = vcmp.ge.f32.partialorder %v2963, 0.0
      %vm2996 = vcmp.ge.f32.partialorder %v2964, 0.0
      %vm2997 = vcmp.ge.f32.partialorder %v2965, 0.0
      %vm2998 = vcmp.ge.f32.partialorder %v2966, 0.0
      %vm2999 = vcmp.ge.f32.partialorder %v2967, 0.0
      %vm3000 = vcmp.ge.f32.partialorder %v2968, 0.0
      %vm3001 = vcmp.ge.f32.partialorder %v2969, 0.0
      %vm3002 = vcmp.ge.f32.partialorder %v2970, 0.0
      %vm3003 = vcmp.ge.f32.partialorder %v2971, 0.0
      %vm3004 = vcmp.ge.f32.partialorder %v2972, 0.0
      %vm3005 = vcmp.ge.f32.partialorder %v2973, 0.0
      %v3006 = vmul.f32 %v2942, 0.2
      %v3007 = vmul.f32 %v2943, 0.2
      %v3008 = vmul.f32 %v2944, 0.2
      %v3009 = vmul.f32 %v2945, 0.2
      %v3010 = vmul.f32 %v2946, 0.2
      %v3011 = vmul.f32 %v2947, 0.2
      %v3012 = vmul.f32 %v2948, 0.2
      %v3013 = vmul.f32 %v2949, 0.2
      %v3014 = vmul.f32 %v2950, 0.2
      %v3015 = vmul.f32 %v2951, 0.2
      %v3016 = vmul.f32 %v2952, 0.2
      %v3017 = vmul.f32 %v2953, 0.2
      %v3018 = vmul.f32 %v2954, 0.2
      %v3019 = vmul.f32 %v2955, 0.2
      %v3020 = vmul.f32 %v2956, 0.2
      %v3021 = vmul.f32 %v2957, 0.2
      %v3022 = vmul.f32 %v2958, 0.2
      %v3023 = vmul.f32 %v2959, 0.2
      %v3024 = vmul.f32 %v2960, 0.2
      %v3025 = vmul.f32 %v2961, 0.2
      %v3026 = vmul.f32 %v2962, 0.2
      %v3027 = vmul.f32 %v2963, 0.2
      %v3028 = vmul.f32 %v2964, 0.2
      %v3029 = vmul.f32 %v2965, 0.2
      %v3030 = vmul.f32 %v2966, 0.2
      %v3031 = vmul.f32 %v2967, 0.2
      %v3032 = vmul.f32 %v2968, 0.2
      %v3033 = vmul.f32 %v2969, 0.2
      %v3034 = vmul.f32 %v2970, 0.2
      %v3035 = vmul.f32 %v2971, 0.2
      %v3036 = vmul.f32 %v2972, 0.2
      %v3037 = vmul.f32 %v2973, 0.2
      %v3038 = vsel %vm2974, %v2942, %v3006
      %v3039 = vsel %vm2975, %v2943, %v3007
      %v3040 = vsel %vm2976, %v2944, %v3008
      %v3041 = vsel %vm2977, %v2945, %v3009
      %v3042 = vsel %vm2978, %v2946, %v3010
      %v3043 = vsel %vm2979, %v2947, %v3011
      %v3044 = vsel %vm2980, %v2948, %v3012
      %v3045 = vsel %vm2981, %v2949, %v3013
      %v3046 = vsel %vm2982, %v2950, %v3014
      %v3047 = vsel %vm2983, %v2951, %v3015
      %v3048 = vsel %vm2984, %v2952, %v3016
      %v3049 = vsel %vm2985, %v2953, %v3017
      %v3050 = vsel %vm2986, %v2954, %v3018
      %v3051 = vsel %vm2987, %v2955, %v3019
      %v3052 = vsel %vm2988, %v2956, %v3020
      %v3053 = vsel %vm2989, %v2957, %v3021
      %v3054 = vsel %vm2990, %v2958, %v3022
      %v3055 = vsel %vm2991, %v2959, %v3023
      %v3056 = vsel %vm2992, %v2960, %v3024
      %v3057 = vsel %vm2993, %v2961, %v3025
      %v3058 = vsel %vm2994, %v2962, %v3026
      %v3059 = vsel %vm2995, %v2963, %v3027
      %v3060 = vsel %vm2996, %v2964, %v3028
      %v3061 = vsel %vm2997, %v2965, %v3029
      %v3062 = vsel %vm2998, %v2966, %v3030
      %v3063 = vsel %vm2999, %v2967, %v3031
      %v3064 = vsel %vm3000, %v2968, %v3032
      %v3065 = vsel %vm3001, %v2969, %v3033
      %v3066 = vsel %vm3002, %v2970, %v3034
      %v3067 = vsel %vm3003, %v2971, %v3035
      %v3068 = vsel %vm3004, %v2972, %v3036
      %v3069 = vsel %vm3005, %v2973, %v3037
      %3070 = vst [vmem:[%s170] sm:$0xff] %v3038
      %3071 = vst [vmem:[%s170 + $0x8] sm:$0xff] %v3039
      %3072 = vst [vmem:[%s170 + $0x10] sm:$0xff] %v3040
      %3073 = vst [vmem:[%s170 + $0x18] sm:$0xff] %v3041
      %3074 = vst [vmem:[%s170 + $0x20] sm:$0xff] %v3042
      %3075 = vst [vmem:[%s170 + $0x28] sm:$0xff] %v3043
      %3076 = vst [vmem:[%s170 + $0x30] sm:$0xff] %v3044
      %3077 = vst [vmem:[%s170 + $0x38] sm:$0xff] %v3045
      %3078 = vst [vmem:[%s170 + $0x40] sm:$0xff] %v3046
      %3079 = vst [vmem:[%s170 + $0x48] sm:$0xff] %v3047
      %3080 = vst [vmem:[%s170 + $0x50] sm:$0xff] %v3048
      %3081 = vst [vmem:[%s170 + $0x58] sm:$0xff] %v3049
      %3082 = vst [vmem:[%s170 + $0x60] sm:$0xff] %v3050
      %3083 = vst [vmem:[%s170 + $0x68] sm:$0xff] %v3051
      %3084 = vst [vmem:[%s170 + $0x70] sm:$0xff] %v3052
      %3085 = vst [vmem:[%s170 + $0x78] sm:$0xff] %v3053
      %3086 = vst [vmem:[%s170 + $0x80] sm:$0xff] %v3054
      %3087 = vst [vmem:[%s170 + $0x88] sm:$0xff] %v3055
      %3088 = vst [vmem:[%s170 + $0x90] sm:$0xff] %v3056
      %3089 = vst [vmem:[%s170 + $0x98] sm:$0xff] %v3057
      %3090 = vst [vmem:[%s170 + $0xa0] sm:$0xff] %v3058
      %3091 = vst [vmem:[%s170 + $0xa8] sm:$0xff] %v3059
      %3092 = vst [vmem:[%s170 + $0xb0] sm:$0xff] %v3060
      %3093 = vst [vmem:[%s170 + $0xb8] sm:$0xff] %v3061
      %3094 = vst [vmem:[%s170 + $0xc0] sm:$0xff] %v3062
      %3095 = vst [vmem:[%s170 + $0xc8] sm:$0xff] %v3063
      %3096 = vst [vmem:[%s170 + $0xd0] sm:$0xff] %v3064
      %3097 = vst [vmem:[%s170 + $0xd8] sm:$0xff] %v3065
      %3098 = vst [vmem:[%s170 + $0xe0] sm:$0xff] %v3066
      %3099 = vst [vmem:[%s170 + $0xe8] sm:$0xff] %v3067
      %3100 = vst [vmem:[%s170 + $0xf0] sm:$0xff] %v3068
      %3101 = vst [vmem:[%s170 + $0xf8] sm:$0xff] %v3069
      %p3102 = scmp.lt.s32.totalorder %s14, 1
      %s3103 = scalar_select %p3102, %s14, 1
      %s3104 = smul.addr %s3103, 32
      %s3105 = smul.addr %s3104, 8
      %s3106 = scalar_lea.vmem %s3, %s3105
      // Predicated region
      $region33: #{discriminator_forward.4} parent=31 // pred_check
        %p3107 = pneg %p100
      $region34: #{discriminator_forward.4} parent=31 // pred_check_branch
        %3109 = sbr.rel (%p3107) target = $region36
      $region35: #{discriminator_forward.4} parent=31 // pred_region
        _
      $region36: #{discriminator_forward.4} parent=31 // pred_fallthru
        _
    $region32: #{discriminator_forward.4} parent=5 // pred_fallthru
      _
    %p3110 = scmp.le.s32.totalorder 2, %s9
    // Predicated region
    $region37: #{discriminator_forward.4} parent=5 // pred_check
      %p3111 = pneg %p3110
    $region38: #{discriminator_forward.4} parent=5 // pred_check_branch
      %3113 = sbr.rel (%p3111) target = $region40
    $region39: #{discriminator_forward.4} parent=5 // pred_region
      %s3114 = ssub.s32 %s9, 2
      // Predicated region
      $region41: #{discriminator_forward.4} parent=39 // pred_check
        %p3115 = pneg %p106
      $region42: #{discriminator_forward.4} parent=39 // pred_check_branch
        %3117 = sbr.rel (%p3115) target = $region44
      $region43: #{discriminator_forward.4} parent=39 // pred_region
        %p3118 = scmp.lt.s32.totalorder %s15, 1
        %s3119 = scalar_select %p3118, %s15, 1
        %s3120 = smul.addr %s3119, 32
        %s3121 = smul.addr %s3120, 8
        %s3122 = scalar_lea.vmem %s3, %s3121
      $region44: #{discriminator_forward.4} parent=39 // pred_fallthru
        _
    $region40: #{discriminator_forward.4} parent=5 // pred_fallthru
      _
  $region6: #{discriminator_forward.4} parent=0 // loop_footer
    %s13 = sadd.s32 1, %s9
  $region7: #{discriminator_forward.4} parent=0 // loop_footer_branch
    %8 = sbr.rel target = $region3
  $region8: #{discriminator_forward.4} parent=0 // loop_exit
    _

// kernel: discriminator_forward.5
$region0: #{discriminator_forward.5}
  #allocation0 [shape = 'u32[]', space=smem, size = 0x4, offset = 0x4, fixed_abs, tag = 'smem constant byte address 0x4 - core index']
  #allocation1 [shape = 'u32[72,128]{1,0:T(1,128)}', space=vmem, size = 0x9000, scoped, tag = 'internal scratch']
  #allocation2 [shape = 'f32[1,1]{1,0:T(1,128)S(1)}', space=vmem, size = 0x200, scoped, tag = 'scoped memory for discriminator_forward.5']
  %s0 = inlined_call_operand.vmem [shape: f32[2,9,9,512], index: 0, kind: input, shape index: {}]
  %s1 = inlined_call_operand.vmem [shape: bf16[4,512,256], index: 1, kind: input, shape index: {}]
  %s2 = inlined_call_operand.vmem [shape: f32[1,256], index: 2, kind: input, shape index: {}]
  %s3 = inlined_call_operand.vmem [shape: f32[64,256], index: 3, kind: input, shape index: {}]
  %s4 = inlined_call_operand.<no memory space> [shape: f32[1,1], index: 4, kind: input, shape index: {}]
  %s5 = inlined_call_operand.vmem [shape: f32[2,1,1], index: 5, kind: output, shape index: {}]
  %s6 = sld [smem:[#allocation0]]
  $region53: #{discriminator_forward.5} parent=0
    _
  %s8 = ssub.s32 1, %s6
  %s9 = scalar_select 0, %s8, %s6
  %v10 = vstv %s4
  %11 = vst [vmem:[#allocation2] sm:$0x1] %v10
  loop: start=0, step=1, limit=4
  $region2: #{discriminator_forward.5} parent=0 // loop_pre_header
    _
  $region3: #{discriminator_forward.5} parent=0 // loop_header
    %s13 = sphi 0, %s17
    %p14 = scmp.ge.s32.totalorder %s13, 4
    %s23 = sphi 0, %s25
    %s26 = sphi 0, %s23
    %s27 = sphi 0, %s26
    %s43 = sphi 0, %s27
    %s47 = sphi 0, %s47
    %s49 = sphi 0, %s47
    %s50 = sphi 0, %s49
    %s64 = sphi 0, %s50
    %s68 = sphi 0, %s68
    %s70 = sphi 0, %s68
    %s71 = sphi 0, %s70
    %s85 = sphi 0, %s71
    %s89 = sphi 0, %s89
    %s91 = sphi 0, %s89
    %s92 = sphi 0, %s91
    %s106 = sphi 0, %s92
    %s110 = sphi 0, %s110
    %s112 = sphi 0, %s110
    %s113 = sphi 0, %s112
    %s127 = sphi 0, %s113
    %s133 = sphi 0, %s135
    %s136 = sphi 0, %s133
    %s137 = sphi 0, %s136
    %s153 = sphi 0, %s137
  $region4: #{discriminator_forward.5} parent=0 // loop_header_branch
    %16 = sbr.rel (%p14) target = $region8
  $region5: #{discriminator_forward.5} parent=0 // loop_body
    %s18 = ssub.s32 %s13, 1
    %s19 = ssub.s32 %s13, 2
    %s20 = sadd.s32 %s13, 1
    %s21 = ssub.s32 %s13, %s20
    %p22 = scmp.eq.s32.totalorder %s21, 0
    %s24 = sadd.s32 %s23, 1
    %s25 = scalar_select %p22, %s23, %s24
    %p28 = pneg %p22
    %p29 = scmp.eq.s32.totalorder %s13, 1
    %p30 = por %p28, %p29
    %p31 = scmp.ne.s32.totalorder %s23, %s26
    %p32 = scmp.eq.s32.totalorder %s13, 0
    %p33 = por %p31, %p32
    %p34 = scmp.ne.s32.totalorder %s23, %s26
    %p35 = scmp.eq.s32.totalorder %s18, 1
    %p36 = por %p34, %p35
    %p37 = scmp.ne.s32.totalorder %s26, %s27
    %p38 = scmp.eq.s32.totalorder %s18, 0
    %p39 = por %p37, %p38
    %p40 = scmp.ne.s32.totalorder %s26, %s27
    %p41 = scmp.eq.s32.totalorder %s19, 1
    %p42 = por %p40, %p41
    %p44 = scmp.ne.s32.totalorder %s27, %s43
    %p45 = scmp.eq.s32.totalorder %s19, 0
    %p46 = por %p44, %p45
    %s48 = sadd.s32 %s47, 1
    %p51 = scmp.eq.s32.totalorder %s13, 1
    %p52 = scmp.ne.s32.totalorder %s47, %s49
    %p53 = scmp.eq.s32.totalorder %s13, 0
    %p54 = por %p52, %p53
    %p55 = scmp.ne.s32.totalorder %s47, %s49
    %p56 = scmp.eq.s32.totalorder %s18, 1
    %p57 = por %p55, %p56
    %p58 = scmp.ne.s32.totalorder %s49, %s50
    %p59 = scmp.eq.s32.totalorder %s18, 0
    %p60 = por %p58, %p59
    %p61 = scmp.ne.s32.totalorder %s49, %s50
    %p62 = scmp.eq.s32.totalorder %s19, 1
    %p63 = por %p61, %p62
    %p65 = scmp.ne.s32.totalorder %s50, %s64
    %p66 = scmp.eq.s32.totalorder %s19, 0
    %p67 = por %p65, %p66
    %s69 = sadd.s32 %s68, 1
    %p72 = scmp.eq.s32.totalorder %s13, 1
    %p73 = scmp.ne.s32.totalorder %s68, %s70
    %p74 = scmp.eq.s32.totalorder %s13, 0
    %p75 = por %p73, %p74
    %p76 = scmp.ne.s32.totalorder %s68, %s70
    %p77 = scmp.eq.s32.totalorder %s18, 1
    %p78 = por %p76, %p77
    %p79 = scmp.ne.s32.totalorder %s70, %s71
    %p80 = scmp.eq.s32.totalorder %s18, 0
    %p81 = por %p79, %p80
    %p82 = scmp.ne.s32.totalorder %s70, %s71
    %p83 = scmp.eq.s32.totalorder %s19, 1
    %p84 = por %p82, %p83
    %p86 = scmp.ne.s32.totalorder %s71, %s85
    %p87 = scmp.eq.s32.totalorder %s19, 0
    %p88 = por %p86, %p87
    %s90 = sadd.s32 %s89, 1
    %p93 = scmp.eq.s32.totalorder %s13, 1
    %p94 = scmp.ne.s32.totalorder %s89, %s91
    %p95 = scmp.eq.s32.totalorder %s13, 0
    %p96 = por %p94, %p95
    %p97 = scmp.ne.s32.totalorder %s89, %s91
    %p98 = scmp.eq.s32.totalorder %s18, 1
    %p99 = por %p97, %p98
    %p100 = scmp.ne.s32.totalorder %s91, %s92
    %p101 = scmp.eq.s32.totalorder %s18, 0
    %p102 = por %p100, %p101
    %p103 = scmp.ne.s32.totalorder %s91, %s92
    %p104 = scmp.eq.s32.totalorder %s19, 1
    %p105 = por %p103, %p104
    %p107 = scmp.ne.s32.totalorder %s92, %s106
    %p108 = scmp.eq.s32.totalorder %s19, 0
    %p109 = por %p107, %p108
    %s111 = sadd.s32 %s110, 1
    %p114 = scmp.eq.s32.totalorder %s13, 1
    %p115 = scmp.ne.s32.totalorder %s110, %s112
    %p116 = scmp.eq.s32.totalorder %s13, 0
    %p117 = por %p115, %p116
    %p118 = scmp.ne.s32.totalorder %s110, %s112
    %p119 = scmp.eq.s32.totalorder %s18, 1
    %p120 = por %p118, %p119
    %p121 = scmp.ne.s32.totalorder %s112, %s113
    %p122 = scmp.eq.s32.totalorder %s18, 0
    %p123 = por %p121, %p122
    %p124 = scmp.ne.s32.totalorder %s112, %s113
    %p125 = scmp.eq.s32.totalorder %s19, 1
    %p126 = por %p124, %p125
    %p128 = scmp.ne.s32.totalorder %s113, %s127
    %p129 = scmp.eq.s32.totalorder %s19, 0
    %p130 = por %p128, %p129
    %s131 = ssub.s32 %s13, %s20
    %p132 = scmp.eq.s32.totalorder %s131, 0
    %s134 = sadd.s32 %s133, 1
    %s135 = scalar_select %p132, %s133, %s134
    %p138 = pneg %p132
    %p139 = scmp.eq.s32.totalorder %s13, 1
    %p140 = por %p138, %p139
    %p141 = scmp.ne.s32.totalorder %s133, %s136
    %p142 = scmp.eq.s32.totalorder %s13, 0
    %p143 = por %p141, %p142
    %p144 = scmp.ne.s32.totalorder %s133, %s136
    %p145 = scmp.eq.s32.totalorder %s18, 1
    %p146 = por %p144, %p145
    %p147 = scmp.ne.s32.totalorder %s136, %s137
    %p148 = scmp.eq.s32.totalorder %s18, 0
    %p149 = por %p147, %p148
    %p150 = scmp.ne.s32.totalorder %s136, %s137
    %p151 = scmp.eq.s32.totalorder %s19, 1
    %p152 = por %p150, %p151
    %p154 = scmp.ne.s32.totalorder %s137, %s153
    %p155 = scmp.eq.s32.totalorder %s19, 0
    %p156 = por %p154, %p155
    %p157 = scmp.le.s32.totalorder 1, %s13
    %p158 = scmp.lt.s32.totalorder %s13, 3
    %p159 = pnand %p157, %p158
    %p160 = pneg %p159
    // Predicated region
    $region9: #{discriminator_forward.5} parent=5 // pred_check
      _
    $region10: #{discriminator_forward.5} parent=5 // pred_check_branch
      %162 = sbr.rel (%p159) target = $region12
    $region11: #{discriminator_forward.5} parent=5 // pred_region
      %s163 = ssub.s32 %s13, 1
      // Predicated region
      $region13: #{discriminator_forward.5} parent=11 // pred_check
        %p164 = pneg %p60
      $region14: #{discriminator_forward.5} parent=11 // pred_check_branch
        %166 = sbr.rel (%p164) target = $region16
      $region15: #{discriminator_forward.5} parent=11 // pred_region
        _
      $region16: #{discriminator_forward.5} parent=11 // pred_fallthru
        _
      // Predicated region
      $region17: #{discriminator_forward.5} parent=11 // pred_check
        %p167 = pneg %p81
      $region18: #{discriminator_forward.5} parent=11 // pred_check_branch
        %169 = sbr.rel (%p167) target = $region20
      $region19: #{discriminator_forward.5} parent=11 // pred_region
        _
      $region20: #{discriminator_forward.5} parent=11 // pred_fallthru
        _
      // Predicated region
      $region21: #{discriminator_forward.5} parent=11 // pred_check
        %p170 = pneg %p102
      $region22: #{discriminator_forward.5} parent=11 // pred_check_branch
        %172 = sbr.rel (%p170) target = $region24
      $region23: #{discriminator_forward.5} parent=11 // pred_region
        _
      $region24: #{discriminator_forward.5} parent=11 // pred_fallthru
        _
      // Predicated region
      $region25: #{discriminator_forward.5} parent=11 // pred_check
        %p173 = pneg %p123
      $region26: #{discriminator_forward.5} parent=11 // pred_check_branch
        %175 = sbr.rel (%p173) target = $region28
      $region27: #{discriminator_forward.5} parent=11 // pred_region
        _
      $region28: #{discriminator_forward.5} parent=11 // pred_fallthru
        _
    $region12: #{discriminator_forward.5} parent=5 // pred_fallthru
      _
    %p176 = scmp.lt.s32.totalorder %s13, 2
    // Predicated region
    $region29: #{discriminator_forward.5} parent=5 // pred_check
      %p177 = pneg %p176
    $region30: #{discriminator_forward.5} parent=5 // pred_check_branch
      %179 = sbr.rel (%p177) target = $region32
    $region31: #{discriminator_forward.5} parent=5 // pred_region
      // Predicated region
      $region33: #{discriminator_forward.5} parent=31 // pred_check
        %p180 = pneg %p33
      $region34: #{discriminator_forward.5} parent=31 // pred_check_branch
        %182 = sbr.rel (%p180) target = $region36
      $region35: #{discriminator_forward.5} parent=31 // pred_region
        %p183 = scmp.lt.s32.totalorder %s13, 1
        %s184 = scalar_select %p183, %s13, 1
        %s185 = smul.addr %s184, 72
        %s186 = smul.addr %s185, 8
        %s187 = scalar_lea.vmem %s0, %s186
      $region36: #{discriminator_forward.5} parent=31 // pred_fallthru
        _
    $region32: #{discriminator_forward.5} parent=5 // pred_fallthru
      _
    %p188 = scmp.le.s32.totalorder 1, %s13
    %p189 = scmp.lt.s32.totalorder %s13, 3
    %p190 = pnand %p188, %p189
    %p191 = pneg %p190
    // Predicated region
    $region37: #{discriminator_forward.5} parent=5 // pred_check
      _
    $region38: #{discriminator_forward.5} parent=5 // pred_check_branch
      %193 = sbr.rel (%p190) target = $region40
    $region39: #{discriminator_forward.5} parent=5 // pred_region
      %s194 = ssub.s32 %s13, 1
      %p195 = scmp.lt.s32.totalorder %s18, 1
      %s196 = scalar_select %p195, %s18, 1
      %s197 = smul.addr %s196, 72
      %s198 = smul.addr %s197, 8
      %s199 = scalar_lea.vmem %s0, %s198
      %p200 = pneg %p39
      %p201 = pneg %p36
      %p202 = pneg %p60
      %p203 = pneg %p57
      %p204 = pneg %p81
      %p205 = pneg %p78
      %p206 = pneg %p102
      %p207 = pneg %p99
      %p208 = pneg %p123
      %p209 = pneg %p120
      %p210 = pneg %p149
      %p211 = pneg %p146
      %p212 = scmp.lt.s32.totalorder %s18, 1
      %s213 = scalar_select %p212, %s18, 1
      %s214 = scalar_lea.vmem %s5, %s213
      %p215 = scmp.lt.s32.totalorder %s18, 1
      %s216 = scalar_select %p215, %s18, 1
      %s217 = smul.addr %s216, 72
      %s218 = smul.addr %s217, 8
      %s219 = scalar_lea.vmem %s0, %s218
      %p220 = scmp.lt.s32.totalorder %s18, 1
      %s221 = scalar_select %p220, %s18, 1
      %s222 = scalar_lea.vmem %s5, %s221
      %v223 = vld [vmem:[%s219] sm:$0xff]
      %v224 = vld [vmem:[%s219 + $0x8] sm:$0xff]
      %v225 = vld [vmem:[%s219 + $0x10] sm:$0xff]
      %v226 = vld [vmem:[%s219 + $0x18] sm:$0xff]
      %v227 = vld [vmem:[%s219 + $0x40] sm:$0xff]
      %v228 = vld [vmem:[%s219 + $0x48] sm:$0xff]
      %v229 = vld [vmem:[%s219 + $0x50] sm:$0xff]
      %v230 = vld [vmem:[%s219 + $0x58] sm:$0xff]
      %v231 = vld [vmem:[%s219 + $0x80] sm:$0xff]
      %v232 = vld [vmem:[%s219 + $0x88] sm:$0xff]
      %v233 = vld [vmem:[%s219 + $0x90] sm:$0xff]
      %v234 = vld [vmem:[%s219 + $0x98] sm:$0xff]
      %v235 = vld [vmem:[%s219 + $0xc0] sm:$0xff]
      %v236 = vld [vmem:[%s219 + $0xc8] sm:$0xff]
      %v237 = vld [vmem:[%s219 + $0xd0] sm:$0xff]
      %v238 = vld [vmem:[%s219 + $0xd8] sm:$0xff]
      %v239 = vld [vmem:[%s219 + $0x100] sm:$0xff]
      %v240 = vld [vmem:[%s219 + $0x108] sm:$0xff]
      %v241 = vld [vmem:[%s219 + $0x110] sm:$0xff]
      %v242 = vld [vmem:[%s219 + $0x118] sm:$0xff]
      %v243 = vld [vmem:[%s219 + $0x140] sm:$0xff]
      %v244 = vld [vmem:[%s219 + $0x148] sm:$0xff]
      %v245 = vld [vmem:[%s219 + $0x150] sm:$0xff]
      %v246 = vld [vmem:[%s219 + $0x158] sm:$0xff]
      %v247 = vld [vmem:[%s219 + $0x180] sm:$0xff]
      %v248 = vld [vmem:[%s219 + $0x188] sm:$0xff]
      %v249 = vld [vmem:[%s219 + $0x190] sm:$0xff]
      %v250 = vld [vmem:[%s219 + $0x198] sm:$0xff]
      %v251 = vld [vmem:[%s219 + $0x1c0] sm:$0xff]
      %v252 = vld [vmem:[%s219 + $0x1c8] sm:$0xff]
      %v253 = vld [vmem:[%s219 + $0x1d0] sm:$0xff]
      %v254 = vld [vmem:[%s219 + $0x1d8] sm:$0xff]
      %v255 = vpack.c.bf16 %v227, %v223
      %v256 = vpack.c.bf16 %v228, %v224
      %v257 = vpack.c.bf16 %v229, %v225
      %v258 = vpack.c.bf16 %v230, %v226
      %v259 = vpack.c.bf16 %v235, %v231
      %v260 = vpack.c.bf16 %v236, %v232
      %v261 = vpack.c.bf16 %v237, %v233
      %v262 = vpack.c.bf16 %v238, %v234
      %v263 = vpack.c.bf16 %v243, %v239
      %v264 = vpack.c.bf16 %v244, %v240
      %v265 = vpack.c.bf16 %v245, %v241
      %v266 = vpack.c.bf16 %v246, %v242
      %v267 = vpack.c.bf16 %v251, %v247
      %v268 = vpack.c.bf16 %v252, %v248
      %v269 = vpack.c.bf16 %v253, %v249
      %v270 = vpack.c.bf16 %v254, %v250
      %v271 = vld [vmem:[%s1] sm:$0xff]
      %v272 = vld [vmem:[%s1 + $0x8] sm:$0xff]
      %v273 = vld [vmem:[%s1 + $0x10] sm:$0xff]
      %v274 = vld [vmem:[%s1 + $0x18] sm:$0xff]
      %v275 = vld [vmem:[%s1 + $0x20] sm:$0xff]
      %v276 = vld [vmem:[%s1 + $0x28] sm:$0xff]
      %v277 = vld [vmem:[%s1 + $0x30] sm:$0xff]
      %v278 = vld [vmem:[%s1 + $0x38] sm:$0xff]
      %v279 = vld [vmem:[%s1 + $0x40] sm:$0xff]
      %v280 = vld [vmem:[%s1 + $0x48] sm:$0xff]
      %v281 = vld [vmem:[%s1 + $0x50] sm:$0xff]
      %v282 = vld [vmem:[%s1 + $0x58] sm:$0xff]
      %v283 = vld [vmem:[%s1 + $0x60] sm:$0xff]
      %v284 = vld [vmem:[%s1 + $0x68] sm:$0xff]
      %v285 = vld [vmem:[%s1 + $0x70] sm:$0xff]
      %v286 = vld [vmem:[%s1 + $0x78] sm:$0xff]
      %v287 = vld [vmem:[%s1 + $0x80] sm:$0xff]
      %v288 = vld [vmem:[%s1 + $0x88] sm:$0xff]
      %v289 = vld [vmem:[%s1 + $0x90] sm:$0xff]
      %v290 = vld [vmem:[%s1 + $0x98] sm:$0xff]
      %v291 = vld [vmem:[%s1 + $0xa0] sm:$0xff]
      %v292 = vld [vmem:[%s1 + $0xa8] sm:$0xff]
      %v293 = vld [vmem:[%s1 + $0xb0] sm:$0xff]
      %v294 = vld [vmem:[%s1 + $0xb8] sm:$0xff]
      %v295 = vld [vmem:[%s1 + $0xc0] sm:$0xff]
      %v296 = vld [vmem:[%s1 + $0xc8] sm:$0xff]
      %v297 = vld [vmem:[%s1 + $0xd0] sm:$0xff]
      %v298 = vld [vmem:[%s1 + $0xd8] sm:$0xff]
      %v299 = vld [vmem:[%s1 + $0xe0] sm:$0xff]
      %v300 = vld [vmem:[%s1 + $0xe8] sm:$0xff]
      %v301 = vld [vmem:[%s1 + $0xf0] sm:$0xff]
      %v302 = vld [vmem:[%s1 + $0xf8] sm:$0xff]
      %v303 = vld [vmem:[%s1 + $0x100] sm:$0xff]
      %v304 = vld [vmem:[%s1 + $0x108] sm:$0xff]
      %v305 = vld [vmem:[%s1 + $0x110] sm:$0xff]
      %v306 = vld [vmem:[%s1 + $0x118] sm:$0xff]
      %v307 = vld [vmem:[%s1 + $0x120] sm:$0xff]
      %v308 = vld [vmem:[%s1 + $0x128] sm:$0xff]
      %v309 = vld [vmem:[%s1 + $0x130] sm:$0xff]
      %v310 = vld [vmem:[%s1 + $0x138] sm:$0xff]
      %v311 = vld [vmem:[%s1 + $0x140] sm:$0xff]
      %v312 = vld [vmem:[%s1 + $0x148] sm:$0xff]
      %v313 = vld [vmem:[%s1 + $0x150] sm:$0xff]
      %v314 = vld [vmem:[%s1 + $0x158] sm:$0xff]
      %v315 = vld [vmem:[%s1 + $0x160] sm:$0xff]
      %v316 = vld [vmem:[%s1 + $0x168] sm:$0xff]
      %v317 = vld [vmem:[%s1 + $0x170] sm:$0xff]
      %v318 = vld [vmem:[%s1 + $0x178] sm:$0xff]
      %v319 = vld [vmem:[%s1 + $0x180] sm:$0xff]
      %v320 = vld [vmem:[%s1 + $0x188] sm:$0xff]
      %v321 = vld [vmem:[%s1 + $0x190] sm:$0xff]
      %v322 = vld [vmem:[%s1 + $0x198] sm:$0xff]
      %v323 = vld [vmem:[%s1 + $0x1a0] sm:$0xff]
      %v324 = vld [vmem:[%s1 + $0x1a8] sm:$0xff]
      %v325 = vld [vmem:[%s1 + $0x1b0] sm:$0xff]
      %v326 = vld [vmem:[%s1 + $0x1b8] sm:$0xff]
      %v327 = vld [vmem:[%s1 + $0x1c0] sm:$0xff]
      %v328 = vld [vmem:[%s1 + $0x1c8] sm:$0xff]
      %v329 = vld [vmem:[%s1 + $0x1d0] sm:$0xff]
      %v330 = vld [vmem:[%s1 + $0x1d8] sm:$0xff]
      %v331 = vld [vmem:[%s1 + $0x1e0] sm:$0xff]
      %v332 = vld [vmem:[%s1 + $0x1e8] sm:$0xff]
      %v333 = vld [vmem:[%s1 + $0x1f0] sm:$0xff]
      %v334 = vld [vmem:[%s1 + $0x1f8] sm:$0xff]
      %v335 = vld [vmem:[%s219] sm:$0xfe]
      %v336 = vld [vmem:[%s219 + $0x8] sm:$0xfe]
      %v337 = vld [vmem:[%s219 + $0x10] sm:$0xfe]
      %v338 = vld [vmem:[%s219 + $0x18] sm:$0xfe]
      %v339 = vld [vmem:[%s219 + $0x20] sm:$0x1]
      %v340 = vld [vmem:[%s219 + $0x28] sm:$0x1]
      %v341 = vld [vmem:[%s219 + $0x30] sm:$0x1]
      %v342 = vld [vmem:[%s219 + $0x38] sm:$0x1]
      %v343 = vld [vmem:[%s219 + $0x40] sm:$0xfe]
      %v344 = vld [vmem:[%s219 + $0x48] sm:$0xfe]
      %v345 = vld [vmem:[%s219 + $0x50] sm:$0xfe]
      %v346 = vld [vmem:[%s219 + $0x58] sm:$0xfe]
      %v347 = vld [vmem:[%s219 + $0x60] sm:$0x1]
      %v348 = vld [vmem:[%s219 + $0x68] sm:$0x1]
      %v349 = vld [vmem:[%s219 + $0x70] sm:$0x1]
      %v350 = vld [vmem:[%s219 + $0x78] sm:$0x1]
      %v351 = vld [vmem:[%s219 + $0x80] sm:$0xfe]
      %v352 = vld [vmem:[%s219 + $0x88] sm:$0xfe]
      %v353 = vld [vmem:[%s219 + $0x90] sm:$0xfe]
      %v354 = vld [vmem:[%s219 + $0x98] sm:$0xfe]
      %v355 = vld [vmem:[%s219 + $0xa0] sm:$0x1]
      %v356 = vld [vmem:[%s219 + $0xa8] sm:$0x1]
      %v357 = vld [vmem:[%s219 + $0xb0] sm:$0x1]
      %v358 = vld [vmem:[%s219 + $0xb8] sm:$0x1]
      %v359 = vld [vmem:[%s219 + $0xc0] sm:$0xfe]
      %v360 = vld [vmem:[%s219 + $0xc8] sm:$0xfe]
      %v361 = vld [vmem:[%s219 + $0xd0] sm:$0xfe]
      %v362 = vld [vmem:[%s219 + $0xd8] sm:$0xfe]
      %v363 = vld [vmem:[%s219 + $0xe0] sm:$0x1]
      %v364 = vld [vmem:[%s219 + $0xe8] sm:$0x1]
      %v365 = vld [vmem:[%s219 + $0xf0] sm:$0x1]
      %v366 = vld [vmem:[%s219 + $0xf8] sm:$0x1]
      %v367 = vld [vmem:[%s219 + $0x100] sm:$0xfe]
      %v368 = vld [vmem:[%s219 + $0x108] sm:$0xfe]
      %v369 = vld [vmem:[%s219 + $0x110] sm:$0xfe]
      %v370 = vld [vmem:[%s219 + $0x118] sm:$0xfe]
      %v371 = vld [vmem:[%s219 + $0x120] sm:$0x1]
      %v372 = vld [vmem:[%s219 + $0x128] sm:$0x1]
      %v373 = vld [vmem:[%s219 + $0x130] sm:$0x1]
      %v374 = vld [vmem:[%s219 + $0x138] sm:$0x1]
      %v375 = vld [vmem:[%s219 + $0x140] sm:$0xfe]
      %v376 = vld [vmem:[%s219 + $0x148] sm:$0xfe]
      %v377 = vld [vmem:[%s219 + $0x150] sm:$0xfe]
      %v378 = vld [vmem:[%s219 + $0x158] sm:$0xfe]
      %v379 = vld [vmem:[%s219 + $0x160] sm:$0x1]
      %v380 = vld [vmem:[%s219 + $0x168] sm:$0x1]
      %v381 = vld [vmem:[%s219 + $0x170] sm:$0x1]
      %v382 = vld [vmem:[%s219 + $0x178] sm:$0x1]
      %v383 = vld [vmem:[%s219 + $0x180] sm:$0xfe]
      %v384 = vld [vmem:[%s219 + $0x188] sm:$0xfe]
      %v385 = vld [vmem:[%s219 + $0x190] sm:$0xfe]
      %v386 = vld [vmem:[%s219 + $0x198] sm:$0xfe]
      %v387 = vld [vmem:[%s219 + $0x1a0] sm:$0x1]
      %v388 = vld [vmem:[%s219 + $0x1a8] sm:$0x1]
      %v389 = vld [vmem:[%s219 + $0x1b0] sm:$0x1]
      %v390 = vld [vmem:[%s219 + $0x1b8] sm:$0x1]
      %v391 = vld [vmem:[%s219 + $0x1c0] sm:$0xfe]
      %v392 = vld [vmem:[%s219 + $0x1c8] sm:$0xfe]
      %v393 = vld [vmem:[%s219 + $0x1d0] sm:$0xfe]
      %v394 = vld [vmem:[%s219 + $0x1d8] sm:$0xfe]
      %v395 = vld [vmem:[%s219 + $0x1e0] sm:$0x1]
      %v396 = vld [vmem:[%s219 + $0x1e8] sm:$0x1]
      %v397 = vld [vmem:[%s219 + $0x1f0] sm:$0x1]
      %v398 = vld [vmem:[%s219 + $0x1f8] sm:$0x1]
      %vm463 = vcmask 1046528
      %v464 = vrot.slane %v335, 1
      %v465 = vrot.slane %v339, 1
      %v466 = vsel %vm463, %v464, %v465
      %v467 = vrot.slane %v336, 1
      %v468 = vrot.slane %v340, 1
      %v469 = vsel %vm463, %v467, %v468
      %v470 = vrot.slane %v337, 1
      %v471 = vrot.slane %v341, 1
      %v472 = vsel %vm463, %v470, %v471
      %v473 = vrot.slane %v338, 1
      %v474 = vrot.slane %v342, 1
      %v475 = vsel %vm463, %v473, %v474
      %v476 = vrot.slane %v343, 1
      %v477 = vrot.slane %v347, 1
      %v478 = vsel %vm463, %v476, %v477
      %v479 = vrot.slane %v344, 1
      %v480 = vrot.slane %v348, 1
      %v481 = vsel %vm463, %v479, %v480
      %v482 = vrot.slane %v345, 1
      %v483 = vrot.slane %v349, 1
      %v484 = vsel %vm463, %v482, %v483
      %v485 = vrot.slane %v346, 1
      %v486 = vrot.slane %v350, 1
      %v487 = vsel %vm463, %v485, %v486
      %v488 = vrot.slane %v351, 1
      %v489 = vrot.slane %v355, 1
      %v490 = vsel %vm463, %v488, %v489
      %v491 = vrot.slane %v352, 1
      %v492 = vrot.slane %v356, 1
      %v493 = vsel %vm463, %v491, %v492
      %v494 = vrot.slane %v353, 1
      %v495 = vrot.slane %v357, 1
      %v496 = vsel %vm463, %v494, %v495
      %v497 = vrot.slane %v354, 1
      %v498 = vrot.slane %v358, 1
      %v499 = vsel %vm463, %v497, %v498
      %v500 = vrot.slane %v359, 1
      %v501 = vrot.slane %v363, 1
      %v502 = vsel %vm463, %v500, %v501
      %v503 = vrot.slane %v360, 1
      %v504 = vrot.slane %v364, 1
      %v505 = vsel %vm463, %v503, %v504
      %v506 = vrot.slane %v361, 1
      %v507 = vrot.slane %v365, 1
      %v508 = vsel %vm463, %v506, %v507
      %v509 = vrot.slane %v362, 1
      %v510 = vrot.slane %v366, 1
      %v511 = vsel %vm463, %v509, %v510
      %v512 = vrot.slane %v367, 1
      %v513 = vrot.slane %v371, 1
      %v514 = vsel %vm463, %v512, %v513
      %v515 = vrot.slane %v368, 1
      %v516 = vrot.slane %v372, 1
      %v517 = vsel %vm463, %v515, %v516
      %v518 = vrot.slane %v369, 1
      %v519 = vrot.slane %v373, 1
      %v520 = vsel %vm463, %v518, %v519
      %v521 = vrot.slane %v370, 1
      %v522 = vrot.slane %v374, 1
      %v523 = vsel %vm463, %v521, %v522
      %v524 = vrot.slane %v375, 1
      %v525 = vrot.slane %v379, 1
      %v526 = vsel %vm463, %v524, %v525
      %v527 = vrot.slane %v376, 1
      %v528 = vrot.slane %v380, 1
      %v529 = vsel %vm463, %v527, %v528
      %v530 = vrot.slane %v377, 1
      %v531 = vrot.slane %v381, 1
      %v532 = vsel %vm463, %v530, %v531
      %v533 = vrot.slane %v378, 1
      %v534 = vrot.slane %v382, 1
      %v535 = vsel %vm463, %v533, %v534
      %v536 = vrot.slane %v383, 1
      %v537 = vrot.slane %v387, 1
      %v538 = vsel %vm463, %v536, %v537
      %v539 = vrot.slane %v384, 1
      %v540 = vrot.slane %v388, 1
      %v541 = vsel %vm463, %v539, %v540
      %v542 = vrot.slane %v385, 1
      %v543 = vrot.slane %v389, 1
      %v544 = vsel %vm463, %v542, %v543
      %v545 = vrot.slane %v386, 1
      %v546 = vrot.slane %v390, 1
      %v547 = vsel %vm463, %v545, %v546
      %v548 = vrot.slane %v391, 1
      %v549 = vrot.slane %v395, 1
      %v550 = vsel %vm463, %v548, %v549
      %v551 = vrot.slane %v392, 1
      %v552 = vrot.slane %v396, 1
      %v553 = vsel %vm463, %v551, %v552
      %v554 = vrot.slane %v393, 1
      %v555 = vrot.slane %v397, 1
      %v556 = vsel %vm463, %v554, %v555
      %v557 = vrot.slane %v394, 1
      %v558 = vrot.slane %v398, 1
      %v559 = vsel %vm463, %v557, %v558
      %v592 = vpack.c.bf16 %v478, %v466
      %v593 = vpack.c.bf16 %v481, %v469
      %v594 = vpack.c.bf16 %v484, %v472
      %v595 = vpack.c.bf16 %v487, %v475
      %v596 = vpack.c.bf16 %v502, %v490
      %v597 = vpack.c.bf16 %v505, %v493
      %v598 = vpack.c.bf16 %v508, %v496
      %v599 = vpack.c.bf16 %v511, %v499
      %v600 = vpack.c.bf16 %v526, %v514
      %v601 = vpack.c.bf16 %v529, %v517
      %v602 = vpack.c.bf16 %v532, %v520
      %v603 = vpack.c.bf16 %v535, %v523
      %v604 = vpack.c.bf16 %v550, %v538
      %v605 = vpack.c.bf16 %v553, %v541
      %v606 = vpack.c.bf16 %v556, %v544
      %v607 = vpack.c.bf16 %v559, %v547
      %s608 = scalar_lea.vmem %s1, 512
      %v609 = vld [vmem:[%s608] sm:$0xff]
      %v610 = vld [vmem:[%s608 + $0x8] sm:$0xff]
      %v611 = vld [vmem:[%s608 + $0x10] sm:$0xff]
      %v612 = vld [vmem:[%s608 + $0x18] sm:$0xff]
      %v613 = vld [vmem:[%s608 + $0x20] sm:$0xff]
      %v614 = vld [vmem:[%s608 + $0x28] sm:$0xff]
      %v615 = vld [vmem:[%s608 + $0x30] sm:$0xff]
      %v616 = vld [vmem:[%s608 + $0x38] sm:$0xff]
      %v617 = vld [vmem:[%s608 + $0x40] sm:$0xff]
      %v618 = vld [vmem:[%s608 + $0x48] sm:$0xff]
      %v619 = vld [vmem:[%s608 + $0x50] sm:$0xff]
      %v620 = vld [vmem:[%s608 + $0x58] sm:$0xff]
      %v621 = vld [vmem:[%s608 + $0x60] sm:$0xff]
      %v622 = vld [vmem:[%s608 + $0x68] sm:$0xff]
      %v623 = vld [vmem:[%s608 + $0x70] sm:$0xff]
      %v624 = vld [vmem:[%s608 + $0x78] sm:$0xff]
      %v625 = vld [vmem:[%s608 + $0x80] sm:$0xff]
      %v626 = vld [vmem:[%s608 + $0x88] sm:$0xff]
      %v627 = vld [vmem:[%s608 + $0x90] sm:$0xff]
      %v628 = vld [vmem:[%s608 + $0x98] sm:$0xff]
      %v629 = vld [vmem:[%s608 + $0xa0] sm:$0xff]
      %v630 = vld [vmem:[%s608 + $0xa8] sm:$0xff]
      %v631 = vld [vmem:[%s608 + $0xb0] sm:$0xff]
      %v632 = vld [vmem:[%s608 + $0xb8] sm:$0xff]
      %v633 = vld [vmem:[%s608 + $0xc0] sm:$0xff]
      %v634 = vld [vmem:[%s608 + $0xc8] sm:$0xff]
      %v635 = vld [vmem:[%s608 + $0xd0] sm:$0xff]
      %v636 = vld [vmem:[%s608 + $0xd8] sm:$0xff]
      %v637 = vld [vmem:[%s608 + $0xe0] sm:$0xff]
      %v638 = vld [vmem:[%s608 + $0xe8] sm:$0xff]
      %v639 = vld [vmem:[%s608 + $0xf0] sm:$0xff]
      %v640 = vld [vmem:[%s608 + $0xf8] sm:$0xff]
      %v641 = vld [vmem:[%s608 + $0x100] sm:$0xff]
      %v642 = vld [vmem:[%s608 + $0x108] sm:$0xff]
      %v643 = vld [vmem:[%s608 + $0x110] sm:$0xff]
      %v644 = vld [vmem:[%s608 + $0x118] sm:$0xff]
      %v645 = vld [vmem:[%s608 + $0x120] sm:$0xff]
      %v646 = vld [vmem:[%s608 + $0x128] sm:$0xff]
      %v647 = vld [vmem:[%s608 + $0x130] sm:$0xff]
      %v648 = vld [vmem:[%s608 + $0x138] sm:$0xff]
      %v649 = vld [vmem:[%s608 + $0x140] sm:$0xff]
      %v650 = vld [vmem:[%s608 + $0x148] sm:$0xff]
      %v651 = vld [vmem:[%s608 + $0x150] sm:$0xff]
      %v652 = vld [vmem:[%s608 + $0x158] sm:$0xff]
      %v653 = vld [vmem:[%s608 + $0x160] sm:$0xff]
      %v654 = vld [vmem:[%s608 + $0x168] sm:$0xff]
      %v655 = vld [vmem:[%s608 + $0x170] sm:$0xff]
      %v656 = vld [vmem:[%s608 + $0x178] sm:$0xff]
      %v657 = vld [vmem:[%s608 + $0x180] sm:$0xff]
      %v658 = vld [vmem:[%s608 + $0x188] sm:$0xff]
      %v659 = vld [vmem:[%s608 + $0x190] sm:$0xff]
      %v660 = vld [vmem:[%s608 + $0x198] sm:$0xff]
      %v661 = vld [vmem:[%s608 + $0x1a0] sm:$0xff]
      %v662 = vld [vmem:[%s608 + $0x1a8] sm:$0xff]
      %v663 = vld [vmem:[%s608 + $0x1b0] sm:$0xff]
      %v664 = vld [vmem:[%s608 + $0x1b8] sm:$0xff]
      %v665 = vld [vmem:[%s608 + $0x1c0] sm:$0xff]
      %v666 = vld [vmem:[%s608 + $0x1c8] sm:$0xff]
      %v667 = vld [vmem:[%s608 + $0x1d0] sm:$0xff]
      %v668 = vld [vmem:[%s608 + $0x1d8] sm:$0xff]
      %v669 = vld [vmem:[%s608 + $0x1e0] sm:$0xff]
      %v670 = vld [vmem:[%s608 + $0x1e8] sm:$0xff]
      %v671 = vld [vmem:[%s608 + $0x1f0] sm:$0xff]
      %v672 = vld [vmem:[%s608 + $0x1f8] sm:$0xff]
      %v737 = vunpack.c.l.b16 %v609
      %v738 = vunpack.c.h.b16 %v609
      %v739 = vunpack.c.l.b16 %v610
      %v740 = vunpack.c.h.b16 %v610
      %v741 = vunpack.c.l.b16 %v611
      %v742 = vunpack.c.h.b16 %v611
      %v743 = vunpack.c.l.b16 %v612
      %v744 = vunpack.c.h.b16 %v612
      %v745 = vunpack.c.l.b16 %v613
      %v746 = vunpack.c.h.b16 %v613
      %v747 = vunpack.c.l.b16 %v614
      %v748 = vunpack.c.h.b16 %v614
      %v749 = vunpack.c.l.b16 %v615
      %v750 = vunpack.c.h.b16 %v615
      %v751 = vunpack.c.l.b16 %v616
      %v752 = vunpack.c.h.b16 %v616
      %v753 = vunpack.c.l.b16 %v617
      %v754 = vunpack.c.h.b16 %v617
      %v755 = vunpack.c.l.b16 %v618
      %v756 = vunpack.c.h.b16 %v618
      %v757 = vunpack.c.l.b16 %v619
      %v758 = vunpack.c.h.b16 %v619
      %v759 = vunpack.c.l.b16 %v620
      %v760 = vunpack.c.h.b16 %v620
      %v761 = vunpack.c.l.b16 %v621
      %v762 = vunpack.c.h.b16 %v621
      %v763 = vunpack.c.l.b16 %v622
      %v764 = vunpack.c.h.b16 %v622
      %v765 = vunpack.c.l.b16 %v623
      %v766 = vunpack.c.h.b16 %v623
      %v767 = vunpack.c.l.b16 %v624
      %v768 = vunpack.c.h.b16 %v624
      %v769 = vunpack.c.l.b16 %v625
      %v770 = vunpack.c.h.b16 %v625
      %v771 = vunpack.c.l.b16 %v626
      %v772 = vunpack.c.h.b16 %v626
      %v773 = vunpack.c.l.b16 %v627
      %v774 = vunpack.c.h.b16 %v627
      %v775 = vunpack.c.l.b16 %v628
      %v776 = vunpack.c.h.b16 %v628
      %v777 = vunpack.c.l.b16 %v629
      %v778 = vunpack.c.h.b16 %v629
      %v779 = vunpack.c.l.b16 %v630
      %v780 = vunpack.c.h.b16 %v630
      %v781 = vunpack.c.l.b16 %v631
      %v782 = vunpack.c.h.b16 %v631
      %v783 = vunpack.c.l.b16 %v632
      %v784 = vunpack.c.h.b16 %v632
      %v785 = vunpack.c.l.b16 %v633
      %v786 = vunpack.c.h.b16 %v633
      %v787 = vunpack.c.l.b16 %v634
      %v788 = vunpack.c.h.b16 %v634
      %v789 = vunpack.c.l.b16 %v635
      %v790 = vunpack.c.h.b16 %v635
      %v791 = vunpack.c.l.b16 %v636
      %v792 = vunpack.c.h.b16 %v636
      %v793 = vunpack.c.l.b16 %v637
      %v794 = vunpack.c.h.b16 %v637
      %v795 = vunpack.c.l.b16 %v638
      %v796 = vunpack.c.h.b16 %v638
      %v797 = vunpack.c.l.b16 %v639
      %v798 = vunpack.c.h.b16 %v639
      %v799 = vunpack.c.l.b16 %v640
      %v800 = vunpack.c.h.b16 %v640
      %v801 = vunpack.c.l.b16 %v641
      %v802 = vunpack.c.h.b16 %v641
      %v803 = vunpack.c.l.b16 %v642
      %v804 = vunpack.c.h.b16 %v642
      %v805 = vunpack.c.l.b16 %v643
      %v806 = vunpack.c.h.b16 %v643
      %v807 = vunpack.c.l.b16 %v644
      %v808 = vunpack.c.h.b16 %v644
      %v809 = vunpack.c.l.b16 %v645
      %v810 = vunpack.c.h.b16 %v645
      %v811 = vunpack.c.l.b16 %v646
      %v812 = vunpack.c.h.b16 %v646
      %v813 = vunpack.c.l.b16 %v647
      %v814 = vunpack.c.h.b16 %v647
      %v815 = vunpack.c.l.b16 %v648
      %v816 = vunpack.c.h.b16 %v648
      %v817 = vunpack.c.l.b16 %v649
      %v818 = vunpack.c.h.b16 %v649
      %v819 = vunpack.c.l.b16 %v650
      %v820 = vunpack.c.h.b16 %v650
      %v821 = vunpack.c.l.b16 %v651
      %v822 = vunpack.c.h.b16 %v651
      %v823 = vunpack.c.l.b16 %v652
      %v824 = vunpack.c.h.b16 %v652
      %v825 = vunpack.c.l.b16 %v653
      %v826 = vunpack.c.h.b16 %v653
      %v827 = vunpack.c.l.b16 %v654
      %v828 = vunpack.c.h.b16 %v654
      %v829 = vunpack.c.l.b16 %v655
      %v830 = vunpack.c.h.b16 %v655
      %v831 = vunpack.c.l.b16 %v656
      %v832 = vunpack.c.h.b16 %v656
      %v833 = vunpack.c.l.b16 %v657
      %v834 = vunpack.c.h.b16 %v657
      %v835 = vunpack.c.l.b16 %v658
      %v836 = vunpack.c.h.b16 %v658
      %v837 = vunpack.c.l.b16 %v659
      %v838 = vunpack.c.h.b16 %v659
      %v839 = vunpack.c.l.b16 %v660
      %v840 = vunpack.c.h.b16 %v660
      %v841 = vunpack.c.l.b16 %v661
      %v842 = vunpack.c.h.b16 %v661
      %v843 = vunpack.c.l.b16 %v662
      %v844 = vunpack.c.h.b16 %v662
      %v845 = vunpack.c.l.b16 %v663
      %v846 = vunpack.c.h.b16 %v663
      %v847 = vunpack.c.l.b16 %v664
      %v848 = vunpack.c.h.b16 %v664
      %v849 = vunpack.c.l.b16 %v665
      %v850 = vunpack.c.h.b16 %v665
      %v851 = vunpack.c.l.b16 %v666
      %v852 = vunpack.c.h.b16 %v666
      %v853 = vunpack.c.l.b16 %v667
      %v854 = vunpack.c.h.b16 %v667
      %v855 = vunpack.c.l.b16 %v668
      %v856 = vunpack.c.h.b16 %v668
      %v857 = vunpack.c.l.b16 %v669
      %v858 = vunpack.c.h.b16 %v669
      %v859 = vunpack.c.l.b16 %v670
      %v860 = vunpack.c.h.b16 %v670
      %v861 = vunpack.c.l.b16 %v671
      %v862 = vunpack.c.h.b16 %v671
      %v863 = vunpack.c.l.b16 %v672
      %v864 = vunpack.c.h.b16 %v672
      %v865 = vpack.c.b16 %v739, %v737
      %v866 = vpack.c.b16 %v740, %v738
      %v867 = vpack.c.b16 %v743, %v741
      %v868 = vpack.c.b16 %v744, %v742
      %v869 = vpack.c.b16 %v747, %v745
      %v870 = vpack.c.b16 %v748, %v746
      %v871 = vpack.c.b16 %v751, %v749
      %v872 = vpack.c.b16 %v752, %v750
      %v873 = vpack.c.b16 %v755, %v753
      %v874 = vpack.c.b16 %v756, %v754
      %v875 = vpack.c.b16 %v759, %v757
      %v876 = vpack.c.b16 %v760, %v758
      %v877 = vpack.c.b16 %v763, %v761
      %v878 = vpack.c.b16 %v764, %v762
      %v879 = vpack.c.b16 %v767, %v765
      %v880 = vpack.c.b16 %v768, %v766
      %v881 = vpack.c.b16 %v771, %v769
      %v882 = vpack.c.b16 %v772, %v770
      %v883 = vpack.c.b16 %v775, %v773
      %v884 = vpack.c.b16 %v776, %v774
      %v885 = vpack.c.b16 %v779, %v777
      %v886 = vpack.c.b16 %v780, %v778
      %v887 = vpack.c.b16 %v783, %v781
      %v888 = vpack.c.b16 %v784, %v782
      %v889 = vpack.c.b16 %v787, %v785
      %v890 = vpack.c.b16 %v788, %v786
      %v891 = vpack.c.b16 %v791, %v789
      %v892 = vpack.c.b16 %v792, %v790
      %v893 = vpack.c.b16 %v795, %v793
      %v894 = vpack.c.b16 %v796, %v794
      %v895 = vpack.c.b16 %v799, %v797
      %v896 = vpack.c.b16 %v800, %v798
      %v897 = vpack.c.b16 %v803, %v801
      %v898 = vpack.c.b16 %v804, %v802
      %v899 = vpack.c.b16 %v807, %v805
      %v900 = vpack.c.b16 %v808, %v806
      %v901 = vpack.c.b16 %v811, %v809
      %v902 = vpack.c.b16 %v812, %v810
      %v903 = vpack.c.b16 %v815, %v813
      %v904 = vpack.c.b16 %v816, %v814
      %v905 = vpack.c.b16 %v819, %v817
      %v906 = vpack.c.b16 %v820, %v818
      %v907 = vpack.c.b16 %v823, %v821
      %v908 = vpack.c.b16 %v824, %v822
      %v909 = vpack.c.b16 %v827, %v825
      %v910 = vpack.c.b16 %v828, %v826
      %v911 = vpack.c.b16 %v831, %v829
      %v912 = vpack.c.b16 %v832, %v830
      %v913 = vpack.c.b16 %v835, %v833
      %v914 = vpack.c.b16 %v836, %v834
      %v915 = vpack.c.b16 %v839, %v837
      %v916 = vpack.c.b16 %v840, %v838
      %v917 = vpack.c.b16 %v843, %v841
      %v918 = vpack.c.b16 %v844, %v842
      %v919 = vpack.c.b16 %v847, %v845
      %v920 = vpack.c.b16 %v848, %v846
      %v921 = vpack.c.b16 %v851, %v849
      %v922 = vpack.c.b16 %v852, %v850
      %v923 = vpack.c.b16 %v855, %v853
      %v924 = vpack.c.b16 %v856, %v854
      %v925 = vpack.c.b16 %v859, %v857
      %v926 = vpack.c.b16 %v860, %v858
      %v927 = vpack.c.b16 %v863, %v861
      %v928 = vpack.c.b16 %v864, %v862
      %993 = vmatpush.bf16.msra.mxu0 %v879
      %994 = vmatpush.bf16.msra.mxu0 %v877
      %995 = vmatpush.bf16.msra.mxu0 %v875
      %996 = vmatpush.bf16.msra.mxu0 %v873
      %997 = vmatpush.bf16.msra.mxu0 %v871
      %998 = vmatpush.bf16.msra.mxu0 %v869
      %999 = vmatpush.bf16.msra.mxu0 %v867
      %1000 = vmatpush.bf16.msra.mxu0 %v865
      %1001 = vmatmul.bf16.gmra.mxu0 %v592
      %v1002 = vpop.f32.mrf.mxu0
      %v1003 = vadd.f32 0.0, %v1002
      %v1004 = vpop.f32.mrf.mxu0
      %v1005 = vadd.f32 0.0, %v1004
      %1006 = vmatmul.bf16.gmra.mxu0 %v596
      %v1007 = vpop.f32.mrf.mxu0
      %v1008 = vadd.f32 0.0, %v1007
      %v1009 = vpop.f32.mrf.mxu0
      %v1010 = vadd.f32 0.0, %v1009
      %1011 = vmatmul.bf16.gmra.mxu0 %v600
      %v1012 = vpop.f32.mrf.mxu0
      %v1013 = vadd.f32 0.0, %v1012
      %v1014 = vpop.f32.mrf.mxu0
      %v1015 = vadd.f32 0.0, %v1014
      %1016 = vmatmul.bf16.gmra.mxu0 %v604
      %v1017 = vpop.f32.mrf.mxu0
      %v1018 = vadd.f32 0.0, %v1017
      %v1019 = vpop.f32.mrf.mxu0
      %v1020 = vadd.f32 0.0, %v1019
      %1021 = vdwg.mxu0
      %1022 = vmatpush.bf16.msra.mxu0 %v895
      %1023 = vmatpush.bf16.msra.mxu0 %v893
      %1024 = vmatpush.bf16.msra.mxu0 %v891
      %1025 = vmatpush.bf16.msra.mxu0 %v889
      %1026 = vmatpush.bf16.msra.mxu0 %v887
      %1027 = vmatpush.bf16.msra.mxu0 %v885
      %1028 = vmatpush.bf16.msra.mxu0 %v883
      %1029 = vmatpush.bf16.msra.mxu0 %v881
      %1030 = vmatmul.bf16.gmra.mxu0 %v593
      %v1031 = vpop.f32.mrf.mxu0
      %v1032 = vadd.f32 %v1003, %v1031
      %v1033 = vpop.f32.mrf.mxu0
      %v1034 = vadd.f32 %v1005, %v1033
      %1035 = vmatmul.bf16.gmra.mxu0 %v597
      %v1036 = vpop.f32.mrf.mxu0
      %v1037 = vadd.f32 %v1008, %v1036
      %v1038 = vpop.f32.mrf.mxu0
      %v1039 = vadd.f32 %v1010, %v1038
      %1040 = vmatmul.bf16.gmra.mxu0 %v601
      %v1041 = vpop.f32.mrf.mxu0
      %v1042 = vadd.f32 %v1013, %v1041
      %v1043 = vpop.f32.mrf.mxu0
      %v1044 = vadd.f32 %v1015, %v1043
      %1045 = vmatmul.bf16.gmra.mxu0 %v605
      %v1046 = vpop.f32.mrf.mxu0
      %v1047 = vadd.f32 %v1018, %v1046
      %v1048 = vpop.f32.mrf.mxu0
      %v1049 = vadd.f32 %v1020, %v1048
      %1050 = vdwg.mxu0
      %1051 = vmatpush.bf16.msra.mxu0 %v911
      %1052 = vmatpush.bf16.msra.mxu0 %v909
      %1053 = vmatpush.bf16.msra.mxu0 %v907
      %1054 = vmatpush.bf16.msra.mxu0 %v905
      %1055 = vmatpush.bf16.msra.mxu0 %v903
      %1056 = vmatpush.bf16.msra.mxu0 %v901
      %1057 = vmatpush.bf16.msra.mxu0 %v899
      %1058 = vmatpush.bf16.msra.mxu0 %v897
      %1059 = vmatmul.bf16.gmra.mxu0 %v594
      %v1060 = vpop.f32.mrf.mxu0
      %v1061 = vadd.f32 %v1032, %v1060
      %v1062 = vpop.f32.mrf.mxu0
      %v1063 = vadd.f32 %v1034, %v1062
      %1064 = vmatmul.bf16.gmra.mxu0 %v598
      %v1065 = vpop.f32.mrf.mxu0
      %v1066 = vadd.f32 %v1037, %v1065
      %v1067 = vpop.f32.mrf.mxu0
      %v1068 = vadd.f32 %v1039, %v1067
      %1069 = vmatmul.bf16.gmra.mxu0 %v602
      %v1070 = vpop.f32.mrf.mxu0
      %v1071 = vadd.f32 %v1042, %v1070
      %v1072 = vpop.f32.mrf.mxu0
      %v1073 = vadd.f32 %v1044, %v1072
      %1074 = vmatmul.bf16.gmra.mxu0 %v606
      %v1075 = vpop.f32.mrf.mxu0
      %v1076 = vadd.f32 %v1047, %v1075
      %v1077 = vpop.f32.mrf.mxu0
      %v1078 = vadd.f32 %v1049, %v1077
      %1079 = vdwg.mxu0
      %1080 = vmatpush.bf16.msra.mxu0 %v927
      %1081 = vmatpush.bf16.msra.mxu0 %v925
      %1082 = vmatpush.bf16.msra.mxu0 %v923
      %1083 = vmatpush.bf16.msra.mxu0 %v921
      %1084 = vmatpush.bf16.msra.mxu0 %v919
      %1085 = vmatpush.bf16.msra.mxu0 %v917
      %1086 = vmatpush.bf16.msra.mxu0 %v915
      %1087 = vmatpush.bf16.msra.mxu0 %v913
      %1088 = vmatmul.bf16.gmra.mxu0 %v595
      %v1089 = vpop.f32.mrf.mxu0
      %v1090 = vadd.f32 %v1061, %v1089
      %v1091 = vpop.f32.mrf.mxu0
      %v1092 = vadd.f32 %v1063, %v1091
      %1093 = vmatmul.bf16.gmra.mxu0 %v599
      %v1094 = vpop.f32.mrf.mxu0
      %v1095 = vadd.f32 %v1066, %v1094
      %v1096 = vpop.f32.mrf.mxu0
      %v1097 = vadd.f32 %v1068, %v1096
      %1098 = vmatmul.bf16.gmra.mxu0 %v603
      %v1099 = vpop.f32.mrf.mxu0
      %v1100 = vadd.f32 %v1071, %v1099
      %v1101 = vpop.f32.mrf.mxu0
      %v1102 = vadd.f32 %v1073, %v1101
      %1103 = vmatmul.bf16.gmra.mxu0 %v607
      %v1104 = vpop.f32.mrf.mxu0
      %v1105 = vadd.f32 %v1076, %v1104
      %v1106 = vpop.f32.mrf.mxu0
      %v1107 = vadd.f32 %v1078, %v1106
      %1108 = vdwg.mxu0
      %1109 = vmatpush.bf16.msra.mxu0 %v880
      %1110 = vmatpush.bf16.msra.mxu0 %v878
      %1111 = vmatpush.bf16.msra.mxu0 %v876
      %1112 = vmatpush.bf16.msra.mxu0 %v874
      %1113 = vmatpush.bf16.msra.mxu0 %v872
      %1114 = vmatpush.bf16.msra.mxu0 %v870
      %1115 = vmatpush.bf16.msra.mxu0 %v868
      %1116 = vmatpush.bf16.msra.mxu0 %v866
      %1117 = vmatmul.bf16.gmra.mxu0 %v592
      %v1118 = vpop.f32.mrf.mxu0
      %v1119 = vadd.f32 0.0, %v1118
      %v1120 = vpop.f32.mrf.mxu0
      %v1121 = vadd.f32 0.0, %v1120
      %1122 = vmatmul.bf16.gmra.mxu0 %v596
      %v1123 = vpop.f32.mrf.mxu0
      %v1124 = vadd.f32 0.0, %v1123
      %v1125 = vpop.f32.mrf.mxu0
      %v1126 = vadd.f32 0.0, %v1125
      %1127 = vmatmul.bf16.gmra.mxu0 %v600
      %v1128 = vpop.f32.mrf.mxu0
      %v1129 = vadd.f32 0.0, %v1128
      %v1130 = vpop.f32.mrf.mxu0
      %v1131 = vadd.f32 0.0, %v1130
      %1132 = vmatmul.bf16.gmra.mxu0 %v604
      %v1133 = vpop.f32.mrf.mxu0
      %v1134 = vadd.f32 0.0, %v1133
      %v1135 = vpop.f32.mrf.mxu0
      %v1136 = vadd.f32 0.0, %v1135
      %1137 = vdwg.mxu0
      %1138 = vmatpush.bf16.msra.mxu0 %v896
      %1139 = vmatpush.bf16.msra.mxu0 %v894
      %1140 = vmatpush.bf16.msra.mxu0 %v892
      %1141 = vmatpush.bf16.msra.mxu0 %v890
      %1142 = vmatpush.bf16.msra.mxu0 %v888
      %1143 = vmatpush.bf16.msra.mxu0 %v886
      %1144 = vmatpush.bf16.msra.mxu0 %v884
      %1145 = vmatpush.bf16.msra.mxu0 %v882
      %1146 = vmatmul.bf16.gmra.mxu0 %v593
      %v1147 = vpop.f32.mrf.mxu0
      %v1148 = vadd.f32 %v1119, %v1147
      %v1149 = vpop.f32.mrf.mxu0
      %v1150 = vadd.f32 %v1121, %v1149
      %1151 = vmatmul.bf16.gmra.mxu0 %v597
      %v1152 = vpop.f32.mrf.mxu0
      %v1153 = vadd.f32 %v1124, %v1152
      %v1154 = vpop.f32.mrf.mxu0
      %v1155 = vadd.f32 %v1126, %v1154
      %1156 = vmatmul.bf16.gmra.mxu0 %v601
      %v1157 = vpop.f32.mrf.mxu0
      %v1158 = vadd.f32 %v1129, %v1157
      %v1159 = vpop.f32.mrf.mxu0
      %v1160 = vadd.f32 %v1131, %v1159
      %1161 = vmatmul.bf16.gmra.mxu0 %v605
      %v1162 = vpop.f32.mrf.mxu0
      %v1163 = vadd.f32 %v1134, %v1162
      %v1164 = vpop.f32.mrf.mxu0
      %v1165 = vadd.f32 %v1136, %v1164
      %1166 = vdwg.mxu0
      %1167 = vmatpush.bf16.msra.mxu0 %v912
      %1168 = vmatpush.bf16.msra.mxu0 %v910
      %1169 = vmatpush.bf16.msra.mxu0 %v908
      %1170 = vmatpush.bf16.msra.mxu0 %v906
      %1171 = vmatpush.bf16.msra.mxu0 %v904
      %1172 = vmatpush.bf16.msra.mxu0 %v902
      %1173 = vmatpush.bf16.msra.mxu0 %v900
      %1174 = vmatpush.bf16.msra.mxu0 %v898
      %1175 = vmatmul.bf16.gmra.mxu0 %v594
      %v1176 = vpop.f32.mrf.mxu0
      %v1177 = vadd.f32 %v1148, %v1176
      %v1178 = vpop.f32.mrf.mxu0
      %v1179 = vadd.f32 %v1150, %v1178
      %1180 = vmatmul.bf16.gmra.mxu0 %v598
      %v1181 = vpop.f32.mrf.mxu0
      %v1182 = vadd.f32 %v1153, %v1181
      %v1183 = vpop.f32.mrf.mxu0
      %v1184 = vadd.f32 %v1155, %v1183
      %1185 = vmatmul.bf16.gmra.mxu0 %v602
      %v1186 = vpop.f32.mrf.mxu0
      %v1187 = vadd.f32 %v1158, %v1186
      %v1188 = vpop.f32.mrf.mxu0
      %v1189 = vadd.f32 %v1160, %v1188
      %1190 = vmatmul.bf16.gmra.mxu0 %v606
      %v1191 = vpop.f32.mrf.mxu0
      %v1192 = vadd.f32 %v1163, %v1191
      %v1193 = vpop.f32.mrf.mxu0
      %v1194 = vadd.f32 %v1165, %v1193
      %1195 = vdwg.mxu0
      %1196 = vmatpush.bf16.msra.mxu0 %v928
      %1197 = vmatpush.bf16.msra.mxu0 %v926
      %1198 = vmatpush.bf16.msra.mxu0 %v924
      %1199 = vmatpush.bf16.msra.mxu0 %v922
      %1200 = vmatpush.bf16.msra.mxu0 %v920
      %1201 = vmatpush.bf16.msra.mxu0 %v918
      %1202 = vmatpush.bf16.msra.mxu0 %v916
      %1203 = vmatpush.bf16.msra.mxu0 %v914
      %1204 = vmatmul.bf16.gmra.mxu0 %v595
      %v1205 = vpop.f32.mrf.mxu0
      %v1206 = vadd.f32 %v1177, %v1205
      %v1207 = vpop.f32.mrf.mxu0
      %v1208 = vadd.f32 %v1179, %v1207
      %1209 = vmatmul.bf16.gmra.mxu0 %v599
      %v1210 = vpop.f32.mrf.mxu0
      %v1211 = vadd.f32 %v1182, %v1210
      %v1212 = vpop.f32.mrf.mxu0
      %v1213 = vadd.f32 %v1184, %v1212
      %1214 = vmatmul.bf16.gmra.mxu0 %v603
      %v1215 = vpop.f32.mrf.mxu0
      %v1216 = vadd.f32 %v1187, %v1215
      %v1217 = vpop.f32.mrf.mxu0
      %v1218 = vadd.f32 %v1189, %v1217
      %1219 = vmatmul.bf16.gmra.mxu0 %v607
      %v1220 = vpop.f32.mrf.mxu0
      %v1221 = vadd.f32 %v1192, %v1220
      %v1222 = vpop.f32.mrf.mxu0
      %v1223 = vadd.f32 %v1194, %v1222
      %1224 = vdwg.mxu0
      %v1289 = vunpack.c.l.b16 %v271
      %v1290 = vunpack.c.h.b16 %v271
      %v1291 = vunpack.c.l.b16 %v272
      %v1292 = vunpack.c.h.b16 %v272
      %v1293 = vunpack.c.l.b16 %v273
      %v1294 = vunpack.c.h.b16 %v273
      %v1295 = vunpack.c.l.b16 %v274
      %v1296 = vunpack.c.h.b16 %v274
      %v1297 = vunpack.c.l.b16 %v275
      %v1298 = vunpack.c.h.b16 %v275
      %v1299 = vunpack.c.l.b16 %v276
      %v1300 = vunpack.c.h.b16 %v276
      %v1301 = vunpack.c.l.b16 %v277
      %v1302 = vunpack.c.h.b16 %v277
      %v1303 = vunpack.c.l.b16 %v278
      %v1304 = vunpack.c.h.b16 %v278
      %v1305 = vunpack.c.l.b16 %v279
      %v1306 = vunpack.c.h.b16 %v279
      %v1307 = vunpack.c.l.b16 %v280
      %v1308 = vunpack.c.h.b16 %v280
      %v1309 = vunpack.c.l.b16 %v281
      %v1310 = vunpack.c.h.b16 %v281
      %v1311 = vunpack.c.l.b16 %v282
      %v1312 = vunpack.c.h.b16 %v282
      %v1313 = vunpack.c.l.b16 %v283
      %v1314 = vunpack.c.h.b16 %v283
      %v1315 = vunpack.c.l.b16 %v284
      %v1316 = vunpack.c.h.b16 %v284
      %v1317 = vunpack.c.l.b16 %v285
      %v1318 = vunpack.c.h.b16 %v285
      %v1319 = vunpack.c.l.b16 %v286
      %v1320 = vunpack.c.h.b16 %v286
      %v1321 = vunpack.c.l.b16 %v287
      %v1322 = vunpack.c.h.b16 %v287
      %v1323 = vunpack.c.l.b16 %v288
      %v1324 = vunpack.c.h.b16 %v288
      %v1325 = vunpack.c.l.b16 %v289
      %v1326 = vunpack.c.h.b16 %v289
      %v1327 = vunpack.c.l.b16 %v290
      %v1328 = vunpack.c.h.b16 %v290
      %v1329 = vunpack.c.l.b16 %v291
      %v1330 = vunpack.c.h.b16 %v291
      %v1331 = vunpack.c.l.b16 %v292
      %v1332 = vunpack.c.h.b16 %v292
      %v1333 = vunpack.c.l.b16 %v293
      %v1334 = vunpack.c.h.b16 %v293
      %v1335 = vunpack.c.l.b16 %v294
      %v1336 = vunpack.c.h.b16 %v294
      %v1337 = vunpack.c.l.b16 %v295
      %v1338 = vunpack.c.h.b16 %v295
      %v1339 = vunpack.c.l.b16 %v296
      %v1340 = vunpack.c.h.b16 %v296
      %v1341 = vunpack.c.l.b16 %v297
      %v1342 = vunpack.c.h.b16 %v297
      %v1343 = vunpack.c.l.b16 %v298
      %v1344 = vunpack.c.h.b16 %v298
      %v1345 = vunpack.c.l.b16 %v299
      %v1346 = vunpack.c.h.b16 %v299
      %v1347 = vunpack.c.l.b16 %v300
      %v1348 = vunpack.c.h.b16 %v300
      %v1349 = vunpack.c.l.b16 %v301
      %v1350 = vunpack.c.h.b16 %v301
      %v1351 = vunpack.c.l.b16 %v302
      %v1352 = vunpack.c.h.b16 %v302
      %v1353 = vunpack.c.l.b16 %v303
      %v1354 = vunpack.c.h.b16 %v303
      %v1355 = vunpack.c.l.b16 %v304
      %v1356 = vunpack.c.h.b16 %v304
      %v1357 = vunpack.c.l.b16 %v305
      %v1358 = vunpack.c.h.b16 %v305
      %v1359 = vunpack.c.l.b16 %v306
      %v1360 = vunpack.c.h.b16 %v306
      %v1361 = vunpack.c.l.b16 %v307
      %v1362 = vunpack.c.h.b16 %v307
      %v1363 = vunpack.c.l.b16 %v308
      %v1364 = vunpack.c.h.b16 %v308
      %v1365 = vunpack.c.l.b16 %v309
      %v1366 = vunpack.c.h.b16 %v309
      %v1367 = vunpack.c.l.b16 %v310
      %v1368 = vunpack.c.h.b16 %v310
      %v1369 = vunpack.c.l.b16 %v311
      %v1370 = vunpack.c.h.b16 %v311
      %v1371 = vunpack.c.l.b16 %v312
      %v1372 = vunpack.c.h.b16 %v312
      %v1373 = vunpack.c.l.b16 %v313
      %v1374 = vunpack.c.h.b16 %v313
      %v1375 = vunpack.c.l.b16 %v314
      %v1376 = vunpack.c.h.b16 %v314
      %v1377 = vunpack.c.l.b16 %v315
      %v1378 = vunpack.c.h.b16 %v315
      %v1379 = vunpack.c.l.b16 %v316
      %v1380 = vunpack.c.h.b16 %v316
      %v1381 = vunpack.c.l.b16 %v317
      %v1382 = vunpack.c.h.b16 %v317
      %v1383 = vunpack.c.l.b16 %v318
      %v1384 = vunpack.c.h.b16 %v318
      %v1385 = vunpack.c.l.b16 %v319
      %v1386 = vunpack.c.h.b16 %v319
      %v1387 = vunpack.c.l.b16 %v320
      %v1388 = vunpack.c.h.b16 %v320
      %v1389 = vunpack.c.l.b16 %v321
      %v1390 = vunpack.c.h.b16 %v321
      %v1391 = vunpack.c.l.b16 %v322
      %v1392 = vunpack.c.h.b16 %v322
      %v1393 = vunpack.c.l.b16 %v323
      %v1394 = vunpack.c.h.b16 %v323
      %v1395 = vunpack.c.l.b16 %v324
      %v1396 = vunpack.c.h.b16 %v324
      %v1397 = vunpack.c.l.b16 %v325
      %v1398 = vunpack.c.h.b16 %v325
      %v1399 = vunpack.c.l.b16 %v326
      %v1400 = vunpack.c.h.b16 %v326
      %v1401 = vunpack.c.l.b16 %v327
      %v1402 = vunpack.c.h.b16 %v327
      %v1403 = vunpack.c.l.b16 %v328
      %v1404 = vunpack.c.h.b16 %v328
      %v1405 = vunpack.c.l.b16 %v329
      %v1406 = vunpack.c.h.b16 %v329
      %v1407 = vunpack.c.l.b16 %v330
      %v1408 = vunpack.c.h.b16 %v330
      %v1409 = vunpack.c.l.b16 %v331
      %v1410 = vunpack.c.h.b16 %v331
      %v1411 = vunpack.c.l.b16 %v332
      %v1412 = vunpack.c.h.b16 %v332
      %v1413 = vunpack.c.l.b16 %v333
      %v1414 = vunpack.c.h.b16 %v333
      %v1415 = vunpack.c.l.b16 %v334
      %v1416 = vunpack.c.h.b16 %v334
      %v1417 = vpack.c.b16 %v1291, %v1289
      %v1418 = vpack.c.b16 %v1292, %v1290
      %v1419 = vpack.c.b16 %v1295, %v1293
      %v1420 = vpack.c.b16 %v1296, %v1294
      %v1421 = vpack.c.b16 %v1299, %v1297
      %v1422 = vpack.c.b16 %v1300, %v1298
      %v1423 = vpack.c.b16 %v1303, %v1301
      %v1424 = vpack.c.b16 %v1304, %v1302
      %v1425 = vpack.c.b16 %v1307, %v1305
      %v1426 = vpack.c.b16 %v1308, %v1306
      %v1427 = vpack.c.b16 %v1311, %v1309
      %v1428 = vpack.c.b16 %v1312, %v1310
      %v1429 = vpack.c.b16 %v1315, %v1313
      %v1430 = vpack.c.b16 %v1316, %v1314
      %v1431 = vpack.c.b16 %v1319, %v1317
      %v1432 = vpack.c.b16 %v1320, %v1318
      %v1433 = vpack.c.b16 %v1323, %v1321
      %v1434 = vpack.c.b16 %v1324, %v1322
      %v1435 = vpack.c.b16 %v1327, %v1325
      %v1436 = vpack.c.b16 %v1328, %v1326
      %v1437 = vpack.c.b16 %v1331, %v1329
      %v1438 = vpack.c.b16 %v1332, %v1330
      %v1439 = vpack.c.b16 %v1335, %v1333
      %v1440 = vpack.c.b16 %v1336, %v1334
      %v1441 = vpack.c.b16 %v1339, %v1337
      %v1442 = vpack.c.b16 %v1340, %v1338
      %v1443 = vpack.c.b16 %v1343, %v1341
      %v1444 = vpack.c.b16 %v1344, %v1342
      %v1445 = vpack.c.b16 %v1347, %v1345
      %v1446 = vpack.c.b16 %v1348, %v1346
      %v1447 = vpack.c.b16 %v1351, %v1349
      %v1448 = vpack.c.b16 %v1352, %v1350
      %v1449 = vpack.c.b16 %v1355, %v1353
      %v1450 = vpack.c.b16 %v1356, %v1354
      %v1451 = vpack.c.b16 %v1359, %v1357
      %v1452 = vpack.c.b16 %v1360, %v1358
      %v1453 = vpack.c.b16 %v1363, %v1361
      %v1454 = vpack.c.b16 %v1364, %v1362
      %v1455 = vpack.c.b16 %v1367, %v1365
      %v1456 = vpack.c.b16 %v1368, %v1366
      %v1457 = vpack.c.b16 %v1371, %v1369
      %v1458 = vpack.c.b16 %v1372, %v1370
      %v1459 = vpack.c.b16 %v1375, %v1373
      %v1460 = vpack.c.b16 %v1376, %v1374
      %v1461 = vpack.c.b16 %v1379, %v1377
      %v1462 = vpack.c.b16 %v1380, %v1378
      %v1463 = vpack.c.b16 %v1383, %v1381
      %v1464 = vpack.c.b16 %v1384, %v1382
      %v1465 = vpack.c.b16 %v1387, %v1385
      %v1466 = vpack.c.b16 %v1388, %v1386
      %v1467 = vpack.c.b16 %v1391, %v1389
      %v1468 = vpack.c.b16 %v1392, %v1390
      %v1469 = vpack.c.b16 %v1395, %v1393
      %v1470 = vpack.c.b16 %v1396, %v1394
      %v1471 = vpack.c.b16 %v1399, %v1397
      %v1472 = vpack.c.b16 %v1400, %v1398
      %v1473 = vpack.c.b16 %v1403, %v1401
      %v1474 = vpack.c.b16 %v1404, %v1402
      %v1475 = vpack.c.b16 %v1407, %v1405
      %v1476 = vpack.c.b16 %v1408, %v1406
      %v1477 = vpack.c.b16 %v1411, %v1409
      %v1478 = vpack.c.b16 %v1412, %v1410
      %v1479 = vpack.c.b16 %v1415, %v1413
      %v1480 = vpack.c.b16 %v1416, %v1414
      %1545 = vmatpush.bf16.msra.mxu0 %v1431
      %1546 = vmatpush.bf16.msra.mxu0 %v1429
      %1547 = vmatpush.bf16.msra.mxu0 %v1427
      %1548 = vmatpush.bf16.msra.mxu0 %v1425
      %1549 = vmatpush.bf16.msra.mxu0 %v1423
      %1550 = vmatpush.bf16.msra.mxu0 %v1421
      %1551 = vmatpush.bf16.msra.mxu0 %v1419
      %1552 = vmatpush.bf16.msra.mxu0 %v1417
      %1553 = vmatmul.bf16.gmra.mxu0 %v255
      %v1554 = vpop.f32.mrf.mxu0
      %v1555 = vadd.f32 %v1090, %v1554
      %v1556 = vpop.f32.mrf.mxu0
      %v1557 = vadd.f32 %v1092, %v1556
      %1558 = vmatmul.bf16.gmra.mxu0 %v259
      %v1559 = vpop.f32.mrf.mxu0
      %v1560 = vadd.f32 %v1095, %v1559
      %v1561 = vpop.f32.mrf.mxu0
      %v1562 = vadd.f32 %v1097, %v1561
      %1563 = vmatmul.bf16.gmra.mxu0 %v263
      %v1564 = vpop.f32.mrf.mxu0
      %v1565 = vadd.f32 %v1100, %v1564
      %v1566 = vpop.f32.mrf.mxu0
      %v1567 = vadd.f32 %v1102, %v1566
      %1568 = vmatmul.bf16.gmra.mxu0 %v267
      %v1569 = vpop.f32.mrf.mxu0
      %v1570 = vadd.f32 %v1105, %v1569
      %v1571 = vpop.f32.mrf.mxu0
      %v1572 = vadd.f32 %v1107, %v1571
      %1573 = vdwg.mxu0
      %1574 = vmatpush.bf16.msra.mxu0 %v1447
      %1575 = vmatpush.bf16.msra.mxu0 %v1445
      %1576 = vmatpush.bf16.msra.mxu0 %v1443
      %1577 = vmatpush.bf16.msra.mxu0 %v1441
      %1578 = vmatpush.bf16.msra.mxu0 %v1439
      %1579 = vmatpush.bf16.msra.mxu0 %v1437
      %1580 = vmatpush.bf16.msra.mxu0 %v1435
      %1581 = vmatpush.bf16.msra.mxu0 %v1433
      %1582 = vmatmul.bf16.gmra.mxu0 %v256
      %v1583 = vpop.f32.mrf.mxu0
      %v1584 = vadd.f32 %v1555, %v1583
      %v1585 = vpop.f32.mrf.mxu0
      %v1586 = vadd.f32 %v1557, %v1585
      %1587 = vmatmul.bf16.gmra.mxu0 %v260
      %v1588 = vpop.f32.mrf.mxu0
      %v1589 = vadd.f32 %v1560, %v1588
      %v1590 = vpop.f32.mrf.mxu0
      %v1591 = vadd.f32 %v1562, %v1590
      %1592 = vmatmul.bf16.gmra.mxu0 %v264
      %v1593 = vpop.f32.mrf.mxu0
      %v1594 = vadd.f32 %v1565, %v1593
      %v1595 = vpop.f32.mrf.mxu0
      %v1596 = vadd.f32 %v1567, %v1595
      %1597 = vmatmul.bf16.gmra.mxu0 %v268
      %v1598 = vpop.f32.mrf.mxu0
      %v1599 = vadd.f32 %v1570, %v1598
      %v1600 = vpop.f32.mrf.mxu0
      %v1601 = vadd.f32 %v1572, %v1600
      %1602 = vdwg.mxu0
      %1603 = vmatpush.bf16.msra.mxu0 %v1463
      %1604 = vmatpush.bf16.msra.mxu0 %v1461
      %1605 = vmatpush.bf16.msra.mxu0 %v1459
      %1606 = vmatpush.bf16.msra.mxu0 %v1457
      %1607 = vmatpush.bf16.msra.mxu0 %v1455
      %1608 = vmatpush.bf16.msra.mxu0 %v1453
      %1609 = vmatpush.bf16.msra.mxu0 %v1451
      %1610 = vmatpush.bf16.msra.mxu0 %v1449
      %1611 = vmatmul.bf16.gmra.mxu0 %v257
      %v1612 = vpop.f32.mrf.mxu0
      %v1613 = vadd.f32 %v1584, %v1612
      %v1614 = vpop.f32.mrf.mxu0
      %v1615 = vadd.f32 %v1586, %v1614
      %1616 = vmatmul.bf16.gmra.mxu0 %v261
      %v1617 = vpop.f32.mrf.mxu0
      %v1618 = vadd.f32 %v1589, %v1617
      %v1619 = vpop.f32.mrf.mxu0
      %v1620 = vadd.f32 %v1591, %v1619
      %1621 = vmatmul.bf16.gmra.mxu0 %v265
      %v1622 = vpop.f32.mrf.mxu0
      %v1623 = vadd.f32 %v1594, %v1622
      %v1624 = vpop.f32.mrf.mxu0
      %v1625 = vadd.f32 %v1596, %v1624
      %1626 = vmatmul.bf16.gmra.mxu0 %v269
      %v1627 = vpop.f32.mrf.mxu0
      %v1628 = vadd.f32 %v1599, %v1627
      %v1629 = vpop.f32.mrf.mxu0
      %v1630 = vadd.f32 %v1601, %v1629
      %1631 = vdwg.mxu0
      %1632 = vmatpush.bf16.msra.mxu0 %v1479
      %1633 = vmatpush.bf16.msra.mxu0 %v1477
      %1634 = vmatpush.bf16.msra.mxu0 %v1475
      %1635 = vmatpush.bf16.msra.mxu0 %v1473
      %1636 = vmatpush.bf16.msra.mxu0 %v1471
      %1637 = vmatpush.bf16.msra.mxu0 %v1469
      %1638 = vmatpush.bf16.msra.mxu0 %v1467
      %1639 = vmatpush.bf16.msra.mxu0 %v1465
      %1640 = vmatmul.bf16.gmra.mxu0 %v258
      %v1641 = vpop.f32.mrf.mxu0
      %v1642 = vadd.f32 %v1613, %v1641
      %v1643 = vpop.f32.mrf.mxu0
      %v1644 = vadd.f32 %v1615, %v1643
      %1645 = vmatmul.bf16.gmra.mxu0 %v262
      %v1646 = vpop.f32.mrf.mxu0
      %v1647 = vadd.f32 %v1618, %v1646
      %v1648 = vpop.f32.mrf.mxu0
      %v1649 = vadd.f32 %v1620, %v1648
      %1650 = vmatmul.bf16.gmra.mxu0 %v266
      %v1651 = vpop.f32.mrf.mxu0
      %v1652 = vadd.f32 %v1623, %v1651
      %v1653 = vpop.f32.mrf.mxu0
      %v1654 = vadd.f32 %v1625, %v1653
      %1655 = vmatmul.bf16.gmra.mxu0 %v270
      %v1656 = vpop.f32.mrf.mxu0
      %v1657 = vadd.f32 %v1628, %v1656
      %v1658 = vpop.f32.mrf.mxu0
      %v1659 = vadd.f32 %v1630, %v1658
      %1660 = vdwg.mxu0
      %1661 = vmatpush.bf16.msra.mxu0 %v1432
      %1662 = vmatpush.bf16.msra.mxu0 %v1430
      %1663 = vmatpush.bf16.msra.mxu0 %v1428
      %1664 = vmatpush.bf16.msra.mxu0 %v1426
      %1665 = vmatpush.bf16.msra.mxu0 %v1424
      %1666 = vmatpush.bf16.msra.mxu0 %v1422
      %1667 = vmatpush.bf16.msra.mxu0 %v1420
      %1668 = vmatpush.bf16.msra.mxu0 %v1418
      %1669 = vmatmul.bf16.gmra.mxu0 %v255
      %v1670 = vpop.f32.mrf.mxu0
      %v1671 = vadd.f32 %v1206, %v1670
      %v1672 = vpop.f32.mrf.mxu0
      %v1673 = vadd.f32 %v1208, %v1672
      %1674 = vmatmul.bf16.gmra.mxu0 %v259
      %v1675 = vpop.f32.mrf.mxu0
      %v1676 = vadd.f32 %v1211, %v1675
      %v1677 = vpop.f32.mrf.mxu0
      %v1678 = vadd.f32 %v1213, %v1677
      %1679 = vmatmul.bf16.gmra.mxu0 %v263
      %v1680 = vpop.f32.mrf.mxu0
      %v1681 = vadd.f32 %v1216, %v1680
      %v1682 = vpop.f32.mrf.mxu0
      %v1683 = vadd.f32 %v1218, %v1682
      %1684 = vmatmul.bf16.gmra.mxu0 %v267
      %v1685 = vpop.f32.mrf.mxu0
      %v1686 = vadd.f32 %v1221, %v1685
      %v1687 = vpop.f32.mrf.mxu0
      %v1688 = vadd.f32 %v1223, %v1687
      %1689 = vdwg.mxu0
      %1690 = vmatpush.bf16.msra.mxu0 %v1448
      %1691 = vmatpush.bf16.msra.mxu0 %v1446
      %1692 = vmatpush.bf16.msra.mxu0 %v1444
      %1693 = vmatpush.bf16.msra.mxu0 %v1442
      %1694 = vmatpush.bf16.msra.mxu0 %v1440
      %1695 = vmatpush.bf16.msra.mxu0 %v1438
      %1696 = vmatpush.bf16.msra.mxu0 %v1436
      %1697 = vmatpush.bf16.msra.mxu0 %v1434
      %1698 = vmatmul.bf16.gmra.mxu0 %v256
      %v1699 = vpop.f32.mrf.mxu0
      %v1700 = vadd.f32 %v1671, %v1699
      %v1701 = vpop.f32.mrf.mxu0
      %v1702 = vadd.f32 %v1673, %v1701
      %1703 = vmatmul.bf16.gmra.mxu0 %v260
      %v1704 = vpop.f32.mrf.mxu0
      %v1705 = vadd.f32 %v1676, %v1704
      %v1706 = vpop.f32.mrf.mxu0
      %v1707 = vadd.f32 %v1678, %v1706
      %1708 = vmatmul.bf16.gmra.mxu0 %v264
      %v1709 = vpop.f32.mrf.mxu0
      %v1710 = vadd.f32 %v1681, %v1709
      %v1711 = vpop.f32.mrf.mxu0
      %v1712 = vadd.f32 %v1683, %v1711
      %1713 = vmatmul.bf16.gmra.mxu0 %v268
      %v1714 = vpop.f32.mrf.mxu0
      %v1715 = vadd.f32 %v1686, %v1714
      %v1716 = vpop.f32.mrf.mxu0
      %v1717 = vadd.f32 %v1688, %v1716
      %1718 = vdwg.mxu0
      %1719 = vmatpush.bf16.msra.mxu0 %v1464
      %1720 = vmatpush.bf16.msra.mxu0 %v1462
      %1721 = vmatpush.bf16.msra.mxu0 %v1460
      %1722 = vmatpush.bf16.msra.mxu0 %v1458
      %1723 = vmatpush.bf16.msra.mxu0 %v1456
      %1724 = vmatpush.bf16.msra.mxu0 %v1454
      %1725 = vmatpush.bf16.msra.mxu0 %v1452
      %1726 = vmatpush.bf16.msra.mxu0 %v1450
      %1727 = vmatmul.bf16.gmra.mxu0 %v257
      %v1728 = vpop.f32.mrf.mxu0
      %v1729 = vadd.f32 %v1700, %v1728
      %v1730 = vpop.f32.mrf.mxu0
      %v1731 = vadd.f32 %v1702, %v1730
      %1732 = vmatmul.bf16.gmra.mxu0 %v261
      %v1733 = vpop.f32.mrf.mxu0
      %v1734 = vadd.f32 %v1705, %v1733
      %v1735 = vpop.f32.mrf.mxu0
      %v1736 = vadd.f32 %v1707, %v1735
      %1737 = vmatmul.bf16.gmra.mxu0 %v265
      %v1738 = vpop.f32.mrf.mxu0
      %v1739 = vadd.f32 %v1710, %v1738
      %v1740 = vpop.f32.mrf.mxu0
      %v1741 = vadd.f32 %v1712, %v1740
      %1742 = vmatmul.bf16.gmra.mxu0 %v269
      %v1743 = vpop.f32.mrf.mxu0
      %v1744 = vadd.f32 %v1715, %v1743
      %v1745 = vpop.f32.mrf.mxu0
      %v1746 = vadd.f32 %v1717, %v1745
      %1747 = vdwg.mxu0
      %1748 = vmatpush.bf16.msra.mxu0 %v1480
      %1749 = vmatpush.bf16.msra.mxu0 %v1478
      %1750 = vmatpush.bf16.msra.mxu0 %v1476
      %1751 = vmatpush.bf16.msra.mxu0 %v1474
      %1752 = vmatpush.bf16.msra.mxu0 %v1472
      %1753 = vmatpush.bf16.msra.mxu0 %v1470
      %1754 = vmatpush.bf16.msra.mxu0 %v1468
      %1755 = vmatpush.bf16.msra.mxu0 %v1466
      %1756 = vmatmul.bf16.gmra.mxu0 %v258
      %v1757 = vpop.f32.mrf.mxu0
      %v1758 = vadd.f32 %v1729, %v1757
      %v1759 = vpop.f32.mrf.mxu0
      %v1760 = vadd.f32 %v1731, %v1759
      %1761 = vmatmul.bf16.gmra.mxu0 %v262
      %v1762 = vpop.f32.mrf.mxu0
      %v1763 = vadd.f32 %v1734, %v1762
      %v1764 = vpop.f32.mrf.mxu0
      %v1765 = vadd.f32 %v1736, %v1764
      %1766 = vmatmul.bf16.gmra.mxu0 %v266
      %v1767 = vpop.f32.mrf.mxu0
      %v1768 = vadd.f32 %v1739, %v1767
      %v1769 = vpop.f32.mrf.mxu0
      %v1770 = vadd.f32 %v1741, %v1769
      %1771 = vmatmul.bf16.gmra.mxu0 %v270
      %v1772 = vpop.f32.mrf.mxu0
      %v1773 = vadd.f32 %v1744, %v1772
      %v1774 = vpop.f32.mrf.mxu0
      %v1775 = vadd.f32 %v1746, %v1774
      %1776 = vdwg.mxu0
      %s1777 = scalar_lea.vmem %s219, 64
      %v1778 = vld [vmem:[%s1777] sm:$0xff]
      %v1779 = vld [vmem:[%s1777 + $0x8] sm:$0xff]
      %v1780 = vld [vmem:[%s1777 + $0x10] sm:$0xff]
      %v1781 = vld [vmem:[%s1777 + $0x18] sm:$0xff]
      %v1782 = vld [vmem:[%s1777 + $0x40] sm:$0xff]
      %v1783 = vld [vmem:[%s1777 + $0x48] sm:$0xff]
      %v1784 = vld [vmem:[%s1777 + $0x50] sm:$0xff]
      %v1785 = vld [vmem:[%s1777 + $0x58] sm:$0xff]
      %v1786 = vld [vmem:[%s1777 + $0x80] sm:$0xff]
      %v1787 = vld [vmem:[%s1777 + $0x88] sm:$0xff]
      %v1788 = vld [vmem:[%s1777 + $0x90] sm:$0xff]
      %v1789 = vld [vmem:[%s1777 + $0x98] sm:$0xff]
      %v1790 = vld [vmem:[%s1777 + $0xc0] sm:$0xff]
      %v1791 = vld [vmem:[%s1777 + $0xc8] sm:$0xff]
      %v1792 = vld [vmem:[%s1777 + $0xd0] sm:$0xff]
      %v1793 = vld [vmem:[%s1777 + $0xd8] sm:$0xff]
      %v1794 = vld [vmem:[%s1777 + $0x100] sm:$0xff]
      %v1795 = vld [vmem:[%s1777 + $0x108] sm:$0xff]
      %v1796 = vld [vmem:[%s1777 + $0x110] sm:$0xff]
      %v1797 = vld [vmem:[%s1777 + $0x118] sm:$0xff]
      %v1798 = vld [vmem:[%s1777 + $0x140] sm:$0xff]
      %v1799 = vld [vmem:[%s1777 + $0x148] sm:$0xff]
      %v1800 = vld [vmem:[%s1777 + $0x150] sm:$0xff]
      %v1801 = vld [vmem:[%s1777 + $0x158] sm:$0xff]
      %v1802 = vld [vmem:[%s1777 + $0x180] sm:$0xff]
      %v1803 = vld [vmem:[%s1777 + $0x188] sm:$0xff]
      %v1804 = vld [vmem:[%s1777 + $0x190] sm:$0xff]
      %v1805 = vld [vmem:[%s1777 + $0x198] sm:$0xff]
      %v1806 = vld [vmem:[%s1777 + $0x1c0] sm:$0xff]
      %v1807 = vld [vmem:[%s1777 + $0x1c8] sm:$0xff]
      %v1808 = vld [vmem:[%s1777 + $0x1d0] sm:$0xff]
      %v1809 = vld [vmem:[%s1777 + $0x1d8] sm:$0xff]
      %v1810 = vpack.c.bf16 %v1782, %v1778
      %v1811 = vpack.c.bf16 %v1783, %v1779
      %v1812 = vpack.c.bf16 %v1784, %v1780
      %v1813 = vpack.c.bf16 %v1785, %v1781
      %v1814 = vpack.c.bf16 %v1790, %v1786
      %v1815 = vpack.c.bf16 %v1791, %v1787
      %v1816 = vpack.c.bf16 %v1792, %v1788
      %v1817 = vpack.c.bf16 %v1793, %v1789
      %v1818 = vpack.c.bf16 %v1798, %v1794
      %v1819 = vpack.c.bf16 %v1799, %v1795
      %v1820 = vpack.c.bf16 %v1800, %v1796
      %v1821 = vpack.c.bf16 %v1801, %v1797
      %v1822 = vpack.c.bf16 %v1806, %v1802
      %v1823 = vpack.c.bf16 %v1807, %v1803
      %v1824 = vpack.c.bf16 %v1808, %v1804
      %v1825 = vpack.c.bf16 %v1809, %v1805
      %s1826 = scalar_lea.vmem %s1, 1024
      %v1827 = vld [vmem:[%s1826] sm:$0xff]
      %v1828 = vld [vmem:[%s1826 + $0x8] sm:$0xff]
      %v1829 = vld [vmem:[%s1826 + $0x10] sm:$0xff]
      %v1830 = vld [vmem:[%s1826 + $0x18] sm:$0xff]
      %v1831 = vld [vmem:[%s1826 + $0x20] sm:$0xff]
      %v1832 = vld [vmem:[%s1826 + $0x28] sm:$0xff]
      %v1833 = vld [vmem:[%s1826 + $0x30] sm:$0xff]
      %v1834 = vld [vmem:[%s1826 + $0x38] sm:$0xff]
      %v1835 = vld [vmem:[%s1826 + $0x40] sm:$0xff]
      %v1836 = vld [vmem:[%s1826 + $0x48] sm:$0xff]
      %v1837 = vld [vmem:[%s1826 + $0x50] sm:$0xff]
      %v1838 = vld [vmem:[%s1826 + $0x58] sm:$0xff]
      %v1839 = vld [vmem:[%s1826 + $0x60] sm:$0xff]
      %v1840 = vld [vmem:[%s1826 + $0x68] sm:$0xff]
      %v1841 = vld [vmem:[%s1826 + $0x70] sm:$0xff]
      %v1842 = vld [vmem:[%s1826 + $0x78] sm:$0xff]
      %v1843 = vld [vmem:[%s1826 + $0x80] sm:$0xff]
      %v1844 = vld [vmem:[%s1826 + $0x88] sm:$0xff]
      %v1845 = vld [vmem:[%s1826 + $0x90] sm:$0xff]
      %v1846 = vld [vmem:[%s1826 + $0x98] sm:$0xff]
      %v1847 = vld [vmem:[%s1826 + $0xa0] sm:$0xff]
      %v1848 = vld [vmem:[%s1826 + $0xa8] sm:$0xff]
      %v1849 = vld [vmem:[%s1826 + $0xb0] sm:$0xff]
      %v1850 = vld [vmem:[%s1826 + $0xb8] sm:$0xff]
      %v1851 = vld [vmem:[%s1826 + $0xc0] sm:$0xff]
      %v1852 = vld [vmem:[%s1826 + $0xc8] sm:$0xff]
      %v1853 = vld [vmem:[%s1826 + $0xd0] sm:$0xff]
      %v1854 = vld [vmem:[%s1826 + $0xd8] sm:$0xff]
      %v1855 = vld [vmem:[%s1826 + $0xe0] sm:$0xff]
      %v1856 = vld [vmem:[%s1826 + $0xe8] sm:$0xff]
      %v1857 = vld [vmem:[%s1826 + $0xf0] sm:$0xff]
      %v1858 = vld [vmem:[%s1826 + $0xf8] sm:$0xff]
      %v1859 = vld [vmem:[%s1826 + $0x100] sm:$0xff]
      %v1860 = vld [vmem:[%s1826 + $0x108] sm:$0xff]
      %v1861 = vld [vmem:[%s1826 + $0x110] sm:$0xff]
      %v1862 = vld [vmem:[%s1826 + $0x118] sm:$0xff]
      %v1863 = vld [vmem:[%s1826 + $0x120] sm:$0xff]
      %v1864 = vld [vmem:[%s1826 + $0x128] sm:$0xff]
      %v1865 = vld [vmem:[%s1826 + $0x130] sm:$0xff]
      %v1866 = vld [vmem:[%s1826 + $0x138] sm:$0xff]
      %v1867 = vld [vmem:[%s1826 + $0x140] sm:$0xff]
      %v1868 = vld [vmem:[%s1826 + $0x148] sm:$0xff]
      %v1869 = vld [vmem:[%s1826 + $0x150] sm:$0xff]
      %v1870 = vld [vmem:[%s1826 + $0x158] sm:$0xff]
      %v1871 = vld [vmem:[%s1826 + $0x160] sm:$0xff]
      %v1872 = vld [vmem:[%s1826 + $0x168] sm:$0xff]
      %v1873 = vld [vmem:[%s1826 + $0x170] sm:$0xff]
      %v1874 = vld [vmem:[%s1826 + $0x178] sm:$0xff]
      %v1875 = vld [vmem:[%s1826 + $0x180] sm:$0xff]
      %v1876 = vld [vmem:[%s1826 + $0x188] sm:$0xff]
      %v1877 = vld [vmem:[%s1826 + $0x190] sm:$0xff]
      %v1878 = vld [vmem:[%s1826 + $0x198] sm:$0xff]
      %v1879 = vld [vmem:[%s1826 + $0x1a0] sm:$0xff]
      %v1880 = vld [vmem:[%s1826 + $0x1a8] sm:$0xff]
      %v1881 = vld [vmem:[%s1826 + $0x1b0] sm:$0xff]
      %v1882 = vld [vmem:[%s1826 + $0x1b8] sm:$0xff]
      %v1883 = vld [vmem:[%s1826 + $0x1c0] sm:$0xff]
      %v1884 = vld [vmem:[%s1826 + $0x1c8] sm:$0xff]
      %v1885 = vld [vmem:[%s1826 + $0x1d0] sm:$0xff]
      %v1886 = vld [vmem:[%s1826 + $0x1d8] sm:$0xff]
      %v1887 = vld [vmem:[%s1826 + $0x1e0] sm:$0xff]
      %v1888 = vld [vmem:[%s1826 + $0x1e8] sm:$0xff]
      %v1889 = vld [vmem:[%s1826 + $0x1f0] sm:$0xff]
      %v1890 = vld [vmem:[%s1826 + $0x1f8] sm:$0xff]
      %v1955 = vunpack.c.l.b16 %v1827
      %v1956 = vunpack.c.h.b16 %v1827
      %v1957 = vunpack.c.l.b16 %v1828
      %v1958 = vunpack.c.h.b16 %v1828
      %v1959 = vunpack.c.l.b16 %v1829
      %v1960 = vunpack.c.h.b16 %v1829
      %v1961 = vunpack.c.l.b16 %v1830
      %v1962 = vunpack.c.h.b16 %v1830
      %v1963 = vunpack.c.l.b16 %v1831
      %v1964 = vunpack.c.h.b16 %v1831
      %v1965 = vunpack.c.l.b16 %v1832
      %v1966 = vunpack.c.h.b16 %v1832
      %v1967 = vunpack.c.l.b16 %v1833
      %v1968 = vunpack.c.h.b16 %v1833
      %v1969 = vunpack.c.l.b16 %v1834
      %v1970 = vunpack.c.h.b16 %v1834
      %v1971 = vunpack.c.l.b16 %v1835
      %v1972 = vunpack.c.h.b16 %v1835
      %v1973 = vunpack.c.l.b16 %v1836
      %v1974 = vunpack.c.h.b16 %v1836
      %v1975 = vunpack.c.l.b16 %v1837
      %v1976 = vunpack.c.h.b16 %v1837
      %v1977 = vunpack.c.l.b16 %v1838
      %v1978 = vunpack.c.h.b16 %v1838
      %v1979 = vunpack.c.l.b16 %v1839
      %v1980 = vunpack.c.h.b16 %v1839
      %v1981 = vunpack.c.l.b16 %v1840
      %v1982 = vunpack.c.h.b16 %v1840
      %v1983 = vunpack.c.l.b16 %v1841
      %v1984 = vunpack.c.h.b16 %v1841
      %v1985 = vunpack.c.l.b16 %v1842
      %v1986 = vunpack.c.h.b16 %v1842
      %v1987 = vunpack.c.l.b16 %v1843
      %v1988 = vunpack.c.h.b16 %v1843
      %v1989 = vunpack.c.l.b16 %v1844
      %v1990 = vunpack.c.h.b16 %v1844
      %v1991 = vunpack.c.l.b16 %v1845
      %v1992 = vunpack.c.h.b16 %v1845
      %v1993 = vunpack.c.l.b16 %v1846
      %v1994 = vunpack.c.h.b16 %v1846
      %v1995 = vunpack.c.l.b16 %v1847
      %v1996 = vunpack.c.h.b16 %v1847
      %v1997 = vunpack.c.l.b16 %v1848
      %v1998 = vunpack.c.h.b16 %v1848
      %v1999 = vunpack.c.l.b16 %v1849
      %v2000 = vunpack.c.h.b16 %v1849
      %v2001 = vunpack.c.l.b16 %v1850
      %v2002 = vunpack.c.h.b16 %v1850
      %v2003 = vunpack.c.l.b16 %v1851
      %v2004 = vunpack.c.h.b16 %v1851
      %v2005 = vunpack.c.l.b16 %v1852
      %v2006 = vunpack.c.h.b16 %v1852
      %v2007 = vunpack.c.l.b16 %v1853
      %v2008 = vunpack.c.h.b16 %v1853
      %v2009 = vunpack.c.l.b16 %v1854
      %v2010 = vunpack.c.h.b16 %v1854
      %v2011 = vunpack.c.l.b16 %v1855
      %v2012 = vunpack.c.h.b16 %v1855
      %v2013 = vunpack.c.l.b16 %v1856
      %v2014 = vunpack.c.h.b16 %v1856
      %v2015 = vunpack.c.l.b16 %v1857
      %v2016 = vunpack.c.h.b16 %v1857
      %v2017 = vunpack.c.l.b16 %v1858
      %v2018 = vunpack.c.h.b16 %v1858
      %v2019 = vunpack.c.l.b16 %v1859
      %v2020 = vunpack.c.h.b16 %v1859
      %v2021 = vunpack.c.l.b16 %v1860
      %v2022 = vunpack.c.h.b16 %v1860
      %v2023 = vunpack.c.l.b16 %v1861
      %v2024 = vunpack.c.h.b16 %v1861
      %v2025 = vunpack.c.l.b16 %v1862
      %v2026 = vunpack.c.h.b16 %v1862
      %v2027 = vunpack.c.l.b16 %v1863
      %v2028 = vunpack.c.h.b16 %v1863
      %v2029 = vunpack.c.l.b16 %v1864
      %v2030 = vunpack.c.h.b16 %v1864
      %v2031 = vunpack.c.l.b16 %v1865
      %v2032 = vunpack.c.h.b16 %v1865
      %v2033 = vunpack.c.l.b16 %v1866
      %v2034 = vunpack.c.h.b16 %v1866
      %v2035 = vunpack.c.l.b16 %v1867
      %v2036 = vunpack.c.h.b16 %v1867
      %v2037 = vunpack.c.l.b16 %v1868
      %v2038 = vunpack.c.h.b16 %v1868
      %v2039 = vunpack.c.l.b16 %v1869
      %v2040 = vunpack.c.h.b16 %v1869
      %v2041 = vunpack.c.l.b16 %v1870
      %v2042 = vunpack.c.h.b16 %v1870
      %v2043 = vunpack.c.l.b16 %v1871
      %v2044 = vunpack.c.h.b16 %v1871
      %v2045 = vunpack.c.l.b16 %v1872
      %v2046 = vunpack.c.h.b16 %v1872
      %v2047 = vunpack.c.l.b16 %v1873
      %v2048 = vunpack.c.h.b16 %v1873
      %v2049 = vunpack.c.l.b16 %v1874
      %v2050 = vunpack.c.h.b16 %v1874
      %v2051 = vunpack.c.l.b16 %v1875
      %v2052 = vunpack.c.h.b16 %v1875
      %v2053 = vunpack.c.l.b16 %v1876
      %v2054 = vunpack.c.h.b16 %v1876
      %v2055 = vunpack.c.l.b16 %v1877
      %v2056 = vunpack.c.h.b16 %v1877
      %v2057 = vunpack.c.l.b16 %v1878
      %v2058 = vunpack.c.h.b16 %v1878
      %v2059 = vunpack.c.l.b16 %v1879
      %v2060 = vunpack.c.h.b16 %v1879
      %v2061 = vunpack.c.l.b16 %v1880
      %v2062 = vunpack.c.h.b16 %v1880
      %v2063 = vunpack.c.l.b16 %v1881
      %v2064 = vunpack.c.h.b16 %v1881
      %v2065 = vunpack.c.l.b16 %v1882
      %v2066 = vunpack.c.h.b16 %v1882
      %v2067 = vunpack.c.l.b16 %v1883
      %v2068 = vunpack.c.h.b16 %v1883
      %v2069 = vunpack.c.l.b16 %v1884
      %v2070 = vunpack.c.h.b16 %v1884
      %v2071 = vunpack.c.l.b16 %v1885
      %v2072 = vunpack.c.h.b16 %v1885
      %v2073 = vunpack.c.l.b16 %v1886
      %v2074 = vunpack.c.h.b16 %v1886
      %v2075 = vunpack.c.l.b16 %v1887
      %v2076 = vunpack.c.h.b16 %v1887
      %v2077 = vunpack.c.l.b16 %v1888
      %v2078 = vunpack.c.h.b16 %v1888
      %v2079 = vunpack.c.l.b16 %v1889
      %v2080 = vunpack.c.h.b16 %v1889
      %v2081 = vunpack.c.l.b16 %v1890
      %v2082 = vunpack.c.h.b16 %v1890
      %v2083 = vpack.c.b16 %v1957, %v1955
      %v2084 = vpack.c.b16 %v1958, %v1956
      %v2085 = vpack.c.b16 %v1961, %v1959
      %v2086 = vpack.c.b16 %v1962, %v1960
      %v2087 = vpack.c.b16 %v1965, %v1963
      %v2088 = vpack.c.b16 %v1966, %v1964
      %v2089 = vpack.c.b16 %v1969, %v1967
      %v2090 = vpack.c.b16 %v1970, %v1968
      %v2091 = vpack.c.b16 %v1973, %v1971
      %v2092 = vpack.c.b16 %v1974, %v1972
      %v2093 = vpack.c.b16 %v1977, %v1975
      %v2094 = vpack.c.b16 %v1978, %v1976
      %v2095 = vpack.c.b16 %v1981, %v1979
      %v2096 = vpack.c.b16 %v1982, %v1980
      %v2097 = vpack.c.b16 %v1985, %v1983
      %v2098 = vpack.c.b16 %v1986, %v1984
      %v2099 = vpack.c.b16 %v1989, %v1987
      %v2100 = vpack.c.b16 %v1990, %v1988
      %v2101 = vpack.c.b16 %v1993, %v1991
      %v2102 = vpack.c.b16 %v1994, %v1992
      %v2103 = vpack.c.b16 %v1997, %v1995
      %v2104 = vpack.c.b16 %v1998, %v1996
      %v2105 = vpack.c.b16 %v2001, %v1999
      %v2106 = vpack.c.b16 %v2002, %v2000
      %v2107 = vpack.c.b16 %v2005, %v2003
      %v2108 = vpack.c.b16 %v2006, %v2004
      %v2109 = vpack.c.b16 %v2009, %v2007
      %v2110 = vpack.c.b16 %v2010, %v2008
      %v2111 = vpack.c.b16 %v2013, %v2011
      %v2112 = vpack.c.b16 %v2014, %v2012
      %v2113 = vpack.c.b16 %v2017, %v2015
      %v2114 = vpack.c.b16 %v2018, %v2016
      %v2115 = vpack.c.b16 %v2021, %v2019
      %v2116 = vpack.c.b16 %v2022, %v2020
      %v2117 = vpack.c.b16 %v2025, %v2023
      %v2118 = vpack.c.b16 %v2026, %v2024
      %v2119 = vpack.c.b16 %v2029, %v2027
      %v2120 = vpack.c.b16 %v2030, %v2028
      %v2121 = vpack.c.b16 %v2033, %v2031
      %v2122 = vpack.c.b16 %v2034, %v2032
      %v2123 = vpack.c.b16 %v2037, %v2035
      %v2124 = vpack.c.b16 %v2038, %v2036
      %v2125 = vpack.c.b16 %v2041, %v2039
      %v2126 = vpack.c.b16 %v2042, %v2040
      %v2127 = vpack.c.b16 %v2045, %v2043
      %v2128 = vpack.c.b16 %v2046, %v2044
      %v2129 = vpack.c.b16 %v2049, %v2047
      %v2130 = vpack.c.b16 %v2050, %v2048
      %v2131 = vpack.c.b16 %v2053, %v2051
      %v2132 = vpack.c.b16 %v2054, %v2052
      %v2133 = vpack.c.b16 %v2057, %v2055
      %v2134 = vpack.c.b16 %v2058, %v2056
      %v2135 = vpack.c.b16 %v2061, %v2059
      %v2136 = vpack.c.b16 %v2062, %v2060
      %v2137 = vpack.c.b16 %v2065, %v2063
      %v2138 = vpack.c.b16 %v2066, %v2064
      %v2139 = vpack.c.b16 %v2069, %v2067
      %v2140 = vpack.c.b16 %v2070, %v2068
      %v2141 = vpack.c.b16 %v2073, %v2071
      %v2142 = vpack.c.b16 %v2074, %v2072
      %v2143 = vpack.c.b16 %v2077, %v2075
      %v2144 = vpack.c.b16 %v2078, %v2076
      %v2145 = vpack.c.b16 %v2081, %v2079
      %v2146 = vpack.c.b16 %v2082, %v2080
      %2211 = vmatpush.bf16.msra.mxu0 %v2097
      %2212 = vmatpush.bf16.msra.mxu0 %v2095
      %2213 = vmatpush.bf16.msra.mxu0 %v2093
      %2214 = vmatpush.bf16.msra.mxu0 %v2091
      %2215 = vmatpush.bf16.msra.mxu0 %v2089
      %2216 = vmatpush.bf16.msra.mxu0 %v2087
      %2217 = vmatpush.bf16.msra.mxu0 %v2085
      %2218 = vmatpush.bf16.msra.mxu0 %v2083
      %2219 = vmatmul.bf16.gmra.mxu0 %v1810
      %v2220 = vpop.f32.mrf.mxu0
      %v2221 = vadd.f32 0.0, %v2220
      %v2222 = vpop.f32.mrf.mxu0
      %v2223 = vadd.f32 0.0, %v2222
      %2224 = vmatmul.bf16.gmra.mxu0 %v1814
      %v2225 = vpop.f32.mrf.mxu0
      %v2226 = vadd.f32 0.0, %v2225
      %v2227 = vpop.f32.mrf.mxu0
      %v2228 = vadd.f32 0.0, %v2227
      %2229 = vmatmul.bf16.gmra.mxu0 %v1818
      %v2230 = vpop.f32.mrf.mxu0
      %v2231 = vadd.f32 0.0, %v2230
      %v2232 = vpop.f32.mrf.mxu0
      %v2233 = vadd.f32 0.0, %v2232
      %2234 = vmatmul.bf16.gmra.mxu0 %v1822
      %v2235 = vpop.f32.mrf.mxu0
      %v2236 = vadd.f32 0.0, %v2235
      %v2237 = vpop.f32.mrf.mxu0
      %v2238 = vadd.f32 0.0, %v2237
      %2239 = vdwg.mxu0
      %2240 = vmatpush.bf16.msra.mxu0 %v2113
      %2241 = vmatpush.bf16.msra.mxu0 %v2111
      %2242 = vmatpush.bf16.msra.mxu0 %v2109
      %2243 = vmatpush.bf16.msra.mxu0 %v2107
      %2244 = vmatpush.bf16.msra.mxu0 %v2105
      %2245 = vmatpush.bf16.msra.mxu0 %v2103
      %2246 = vmatpush.bf16.msra.mxu0 %v2101
      %2247 = vmatpush.bf16.msra.mxu0 %v2099
      %2248 = vmatmul.bf16.gmra.mxu0 %v1811
      %v2249 = vpop.f32.mrf.mxu0
      %v2250 = vadd.f32 %v2221, %v2249
      %v2251 = vpop.f32.mrf.mxu0
      %v2252 = vadd.f32 %v2223, %v2251
      %2253 = vmatmul.bf16.gmra.mxu0 %v1815
      %v2254 = vpop.f32.mrf.mxu0
      %v2255 = vadd.f32 %v2226, %v2254
      %v2256 = vpop.f32.mrf.mxu0
      %v2257 = vadd.f32 %v2228, %v2256
      %2258 = vmatmul.bf16.gmra.mxu0 %v1819
      %v2259 = vpop.f32.mrf.mxu0
      %v2260 = vadd.f32 %v2231, %v2259
      %v2261 = vpop.f32.mrf.mxu0
      %v2262 = vadd.f32 %v2233, %v2261
      %2263 = vmatmul.bf16.gmra.mxu0 %v1823
      %v2264 = vpop.f32.mrf.mxu0
      %v2265 = vadd.f32 %v2236, %v2264
      %v2266 = vpop.f32.mrf.mxu0
      %v2267 = vadd.f32 %v2238, %v2266
      %2268 = vdwg.mxu0
      %2269 = vmatpush.bf16.msra.mxu0 %v2129
      %2270 = vmatpush.bf16.msra.mxu0 %v2127
      %2271 = vmatpush.bf16.msra.mxu0 %v2125
      %2272 = vmatpush.bf16.msra.mxu0 %v2123
      %2273 = vmatpush.bf16.msra.mxu0 %v2121
      %2274 = vmatpush.bf16.msra.mxu0 %v2119
      %2275 = vmatpush.bf16.msra.mxu0 %v2117
      %2276 = vmatpush.bf16.msra.mxu0 %v2115
      %2277 = vmatmul.bf16.gmra.mxu0 %v1812
      %v2278 = vpop.f32.mrf.mxu0
      %v2279 = vadd.f32 %v2250, %v2278
      %v2280 = vpop.f32.mrf.mxu0
      %v2281 = vadd.f32 %v2252, %v2280
      %2282 = vmatmul.bf16.gmra.mxu0 %v1816
      %v2283 = vpop.f32.mrf.mxu0
      %v2284 = vadd.f32 %v2255, %v2283
      %v2285 = vpop.f32.mrf.mxu0
      %v2286 = vadd.f32 %v2257, %v2285
      %2287 = vmatmul.bf16.gmra.mxu0 %v1820
      %v2288 = vpop.f32.mrf.mxu0
      %v2289 = vadd.f32 %v2260, %v2288
      %v2290 = vpop.f32.mrf.mxu0
      %v2291 = vadd.f32 %v2262, %v2290
      %2292 = vmatmul.bf16.gmra.mxu0 %v1824
      %v2293 = vpop.f32.mrf.mxu0
      %v2294 = vadd.f32 %v2265, %v2293
      %v2295 = vpop.f32.mrf.mxu0
      %v2296 = vadd.f32 %v2267, %v2295
      %2297 = vdwg.mxu0
      %2298 = vmatpush.bf16.msra.mxu0 %v2145
      %2299 = vmatpush.bf16.msra.mxu0 %v2143
      %2300 = vmatpush.bf16.msra.mxu0 %v2141
      %2301 = vmatpush.bf16.msra.mxu0 %v2139
      %2302 = vmatpush.bf16.msra.mxu0 %v2137
      %2303 = vmatpush.bf16.msra.mxu0 %v2135
      %2304 = vmatpush.bf16.msra.mxu0 %v2133
      %2305 = vmatpush.bf16.msra.mxu0 %v2131
      %2306 = vmatmul.bf16.gmra.mxu0 %v1813
      %v2307 = vpop.f32.mrf.mxu0
      %v2308 = vadd.f32 %v2279, %v2307
      %v2309 = vpop.f32.mrf.mxu0
      %v2310 = vadd.f32 %v2281, %v2309
      %2311 = vmatmul.bf16.gmra.mxu0 %v1817
      %v2312 = vpop.f32.mrf.mxu0
      %v2313 = vadd.f32 %v2284, %v2312
      %v2314 = vpop.f32.mrf.mxu0
      %v2315 = vadd.f32 %v2286, %v2314
      %2316 = vmatmul.bf16.gmra.mxu0 %v1821
      %v2317 = vpop.f32.mrf.mxu0
      %v2318 = vadd.f32 %v2289, %v2317
      %v2319 = vpop.f32.mrf.mxu0
      %v2320 = vadd.f32 %v2291, %v2319
      %2321 = vmatmul.bf16.gmra.mxu0 %v1825
      %v2322 = vpop.f32.mrf.mxu0
      %v2323 = vadd.f32 %v2294, %v2322
      %v2324 = vpop.f32.mrf.mxu0
      %v2325 = vadd.f32 %v2296, %v2324
      %2326 = vdwg.mxu0
      %2327 = vmatpush.bf16.msra.mxu0 %v2098
      %2328 = vmatpush.bf16.msra.mxu0 %v2096
      %2329 = vmatpush.bf16.msra.mxu0 %v2094
      %2330 = vmatpush.bf16.msra.mxu0 %v2092
      %2331 = vmatpush.bf16.msra.mxu0 %v2090
      %2332 = vmatpush.bf16.msra.mxu0 %v2088
      %2333 = vmatpush.bf16.msra.mxu0 %v2086
      %2334 = vmatpush.bf16.msra.mxu0 %v2084
      %2335 = vmatmul.bf16.gmra.mxu0 %v1810
      %v2336 = vpop.f32.mrf.mxu0
      %v2337 = vadd.f32 0.0, %v2336
      %v2338 = vpop.f32.mrf.mxu0
      %v2339 = vadd.f32 0.0, %v2338
      %2340 = vmatmul.bf16.gmra.mxu0 %v1814
      %v2341 = vpop.f32.mrf.mxu0
      %v2342 = vadd.f32 0.0, %v2341
      %v2343 = vpop.f32.mrf.mxu0
      %v2344 = vadd.f32 0.0, %v2343
      %2345 = vmatmul.bf16.gmra.mxu0 %v1818
      %v2346 = vpop.f32.mrf.mxu0
      %v2347 = vadd.f32 0.0, %v2346
      %v2348 = vpop.f32.mrf.mxu0
      %v2349 = vadd.f32 0.0, %v2348
      %2350 = vmatmul.bf16.gmra.mxu0 %v1822
      %v2351 = vpop.f32.mrf.mxu0
      %v2352 = vadd.f32 0.0, %v2351
      %v2353 = vpop.f32.mrf.mxu0
      %v2354 = vadd.f32 0.0, %v2353
      %2355 = vdwg.mxu0
      %2356 = vmatpush.bf16.msra.mxu0 %v2114
      %2357 = vmatpush.bf16.msra.mxu0 %v2112
      %2358 = vmatpush.bf16.msra.mxu0 %v2110
      %2359 = vmatpush.bf16.msra.mxu0 %v2108
      %2360 = vmatpush.bf16.msra.mxu0 %v2106
      %2361 = vmatpush.bf16.msra.mxu0 %v2104
      %2362 = vmatpush.bf16.msra.mxu0 %v2102
      %2363 = vmatpush.bf16.msra.mxu0 %v2100
      %2364 = vmatmul.bf16.gmra.mxu0 %v1811
      %v2365 = vpop.f32.mrf.mxu0
      %v2366 = vadd.f32 %v2337, %v2365
      %v2367 = vpop.f32.mrf.mxu0
      %v2368 = vadd.f32 %v2339, %v2367
      %2369 = vmatmul.bf16.gmra.mxu0 %v1815
      %v2370 = vpop.f32.mrf.mxu0
      %v2371 = vadd.f32 %v2342, %v2370
      %v2372 = vpop.f32.mrf.mxu0
      %v2373 = vadd.f32 %v2344, %v2372
      %2374 = vmatmul.bf16.gmra.mxu0 %v1819
      %v2375 = vpop.f32.mrf.mxu0
      %v2376 = vadd.f32 %v2347, %v2375
      %v2377 = vpop.f32.mrf.mxu0
      %v2378 = vadd.f32 %v2349, %v2377
      %2379 = vmatmul.bf16.gmra.mxu0 %v1823
      %v2380 = vpop.f32.mrf.mxu0
      %v2381 = vadd.f32 %v2352, %v2380
      %v2382 = vpop.f32.mrf.mxu0
      %v2383 = vadd.f32 %v2354, %v2382
      %2384 = vdwg.mxu0
      %2385 = vmatpush.bf16.msra.mxu0 %v2130
      %2386 = vmatpush.bf16.msra.mxu0 %v2128
      %2387 = vmatpush.bf16.msra.mxu0 %v2126
      %2388 = vmatpush.bf16.msra.mxu0 %v2124
      %2389 = vmatpush.bf16.msra.mxu0 %v2122
      %2390 = vmatpush.bf16.msra.mxu0 %v2120
      %2391 = vmatpush.bf16.msra.mxu0 %v2118
      %2392 = vmatpush.bf16.msra.mxu0 %v2116
      %2393 = vmatmul.bf16.gmra.mxu0 %v1812
      %v2394 = vpop.f32.mrf.mxu0
      %v2395 = vadd.f32 %v2366, %v2394
      %v2396 = vpop.f32.mrf.mxu0
      %v2397 = vadd.f32 %v2368, %v2396
      %2398 = vmatmul.bf16.gmra.mxu0 %v1816
      %v2399 = vpop.f32.mrf.mxu0
      %v2400 = vadd.f32 %v2371, %v2399
      %v2401 = vpop.f32.mrf.mxu0
      %v2402 = vadd.f32 %v2373, %v2401
      %2403 = vmatmul.bf16.gmra.mxu0 %v1820
      %v2404 = vpop.f32.mrf.mxu0
      %v2405 = vadd.f32 %v2376, %v2404
      %v2406 = vpop.f32.mrf.mxu0
      %v2407 = vadd.f32 %v2378, %v2406
      %2408 = vmatmul.bf16.gmra.mxu0 %v1824
      %v2409 = vpop.f32.mrf.mxu0
      %v2410 = vadd.f32 %v2381, %v2409
      %v2411 = vpop.f32.mrf.mxu0
      %v2412 = vadd.f32 %v2383, %v2411
      %2413 = vdwg.mxu0
      %2414 = vmatpush.bf16.msra.mxu0 %v2146
      %2415 = vmatpush.bf16.msra.mxu0 %v2144
      %2416 = vmatpush.bf16.msra.mxu0 %v2142
      %2417 = vmatpush.bf16.msra.mxu0 %v2140
      %2418 = vmatpush.bf16.msra.mxu0 %v2138
      %2419 = vmatpush.bf16.msra.mxu0 %v2136
      %2420 = vmatpush.bf16.msra.mxu0 %v2134
      %2421 = vmatpush.bf16.msra.mxu0 %v2132
      %2422 = vmatmul.bf16.gmra.mxu0 %v1813
      %v2423 = vpop.f32.mrf.mxu0
      %v2424 = vadd.f32 %v2395, %v2423
      %v2425 = vpop.f32.mrf.mxu0
      %v2426 = vadd.f32 %v2397, %v2425
      %2427 = vmatmul.bf16.gmra.mxu0 %v1817
      %v2428 = vpop.f32.mrf.mxu0
      %v2429 = vadd.f32 %v2400, %v2428
      %v2430 = vpop.f32.mrf.mxu0
      %v2431 = vadd.f32 %v2402, %v2430
      %2432 = vmatmul.bf16.gmra.mxu0 %v1821
      %v2433 = vpop.f32.mrf.mxu0
      %v2434 = vadd.f32 %v2405, %v2433
      %v2435 = vpop.f32.mrf.mxu0
      %v2436 = vadd.f32 %v2407, %v2435
      %2437 = vmatmul.bf16.gmra.mxu0 %v1825
      %v2438 = vpop.f32.mrf.mxu0
      %v2439 = vadd.f32 %v2410, %v2438
      %v2440 = vpop.f32.mrf.mxu0
      %v2441 = vadd.f32 %v2412, %v2440
      %2442 = vdwg.mxu0
      %v2443 = vadd.f32 %v1642, %v2308
      %v2444 = vadd.f32 %v1758, %v2424
      %v2445 = vadd.f32 %v1644, %v2310
      %v2446 = vadd.f32 %v1760, %v2426
      %v2447 = vadd.f32 %v1647, %v2313
      %v2448 = vadd.f32 %v1763, %v2429
      %v2449 = vadd.f32 %v1649, %v2315
      %v2450 = vadd.f32 %v1765, %v2431
      %v2451 = vadd.f32 %v1652, %v2318
      %v2452 = vadd.f32 %v1768, %v2434
      %v2453 = vadd.f32 %v1654, %v2320
      %v2454 = vadd.f32 %v1770, %v2436
      %v2455 = vadd.f32 %v1657, %v2323
      %v2456 = vadd.f32 %v1773, %v2439
      %v2457 = vadd.f32 %v1659, %v2325
      %v2458 = vadd.f32 %v1775, %v2441
      %v2459 = vld [vmem:[%s1777] sm:$0xfe]
      %v2460 = vld [vmem:[%s1777 + $0x8] sm:$0xfe]
      %v2461 = vld [vmem:[%s1777 + $0x10] sm:$0xfe]
      %v2462 = vld [vmem:[%s1777 + $0x18] sm:$0xfe]
      %v2463 = vld [vmem:[%s1777 + $0x20] sm:$0x1]
      %v2464 = vld [vmem:[%s1777 + $0x28] sm:$0x1]
      %v2465 = vld [vmem:[%s1777 + $0x30] sm:$0x1]
      %v2466 = vld [vmem:[%s1777 + $0x38] sm:$0x1]
      %v2467 = vld [vmem:[%s1777 + $0x40] sm:$0xfe]
      %v2468 = vld [vmem:[%s1777 + $0x48] sm:$0xfe]
      %v2469 = vld [vmem:[%s1777 + $0x50] sm:$0xfe]
      %v2470 = vld [vmem:[%s1777 + $0x58] sm:$0xfe]
      %v2471 = vld [vmem:[%s1777 + $0x60] sm:$0x1]
      %v2472 = vld [vmem:[%s1777 + $0x68] sm:$0x1]
      %v2473 = vld [vmem:[%s1777 + $0x70] sm:$0x1]
      %v2474 = vld [vmem:[%s1777 + $0x78] sm:$0x1]
      %v2475 = vld [vmem:[%s1777 + $0x80] sm:$0xfe]
      %v2476 = vld [vmem:[%s1777 + $0x88] sm:$0xfe]
      %v2477 = vld [vmem:[%s1777 + $0x90] sm:$0xfe]
      %v2478 = vld [vmem:[%s1777 + $0x98] sm:$0xfe]
      %v2479 = vld [vmem:[%s1777 + $0xa0] sm:$0x1]
      %v2480 = vld [vmem:[%s1777 + $0xa8] sm:$0x1]
      %v2481 = vld [vmem:[%s1777 + $0xb0] sm:$0x1]
      %v2482 = vld [vmem:[%s1777 + $0xb8] sm:$0x1]
      %v2483 = vld [vmem:[%s1777 + $0xc0] sm:$0xfe]
      %v2484 = vld [vmem:[%s1777 + $0xc8] sm:$0xfe]
      %v2485 = vld [vmem:[%s1777 + $0xd0] sm:$0xfe]
      %v2486 = vld [vmem:[%s1777 + $0xd8] sm:$0xfe]
      %v2487 = vld [vmem:[%s1777 + $0xe0] sm:$0x1]
      %v2488 = vld [vmem:[%s1777 + $0xe8] sm:$0x1]
      %v2489 = vld [vmem:[%s1777 + $0xf0] sm:$0x1]
      %v2490 = vld [vmem:[%s1777 + $0xf8] sm:$0x1]
      %v2491 = vld [vmem:[%s1777 + $0x100] sm:$0xfe]
      %v2492 = vld [vmem:[%s1777 + $0x108] sm:$0xfe]
      %v2493 = vld [vmem:[%s1777 + $0x110] sm:$0xfe]
      %v2494 = vld [vmem:[%s1777 + $0x118] sm:$0xfe]
      %v2495 = vld [vmem:[%s1777 + $0x120] sm:$0x1]
      %v2496 = vld [vmem:[%s1777 + $0x128] sm:$0x1]
      %v2497 = vld [vmem:[%s1777 + $0x130] sm:$0x1]
      %v2498 = vld [vmem:[%s1777 + $0x138] sm:$0x1]
      %v2499 = vld [vmem:[%s1777 + $0x140] sm:$0xfe]
      %v2500 = vld [vmem:[%s1777 + $0x148] sm:$0xfe]
      %v2501 = vld [vmem:[%s1777 + $0x150] sm:$0xfe]
      %v2502 = vld [vmem:[%s1777 + $0x158] sm:$0xfe]
      %v2503 = vld [vmem:[%s1777 + $0x160] sm:$0x1]
      %v2504 = vld [vmem:[%s1777 + $0x168] sm:$0x1]
      %v2505 = vld [vmem:[%s1777 + $0x170] sm:$0x1]
      %v2506 = vld [vmem:[%s1777 + $0x178] sm:$0x1]
      %v2507 = vld [vmem:[%s1777 + $0x180] sm:$0xfe]
      %v2508 = vld [vmem:[%s1777 + $0x188] sm:$0xfe]
      %v2509 = vld [vmem:[%s1777 + $0x190] sm:$0xfe]
      %v2510 = vld [vmem:[%s1777 + $0x198] sm:$0xfe]
      %v2511 = vld [vmem:[%s1777 + $0x1a0] sm:$0x1]
      %v2512 = vld [vmem:[%s1777 + $0x1a8] sm:$0x1]
      %v2513 = vld [vmem:[%s1777 + $0x1b0] sm:$0x1]
      %v2514 = vld [vmem:[%s1777 + $0x1b8] sm:$0x1]
      %v2515 = vld [vmem:[%s1777 + $0x1c0] sm:$0xfe]
      %v2516 = vld [vmem:[%s1777 + $0x1c8] sm:$0xfe]
      %v2517 = vld [vmem:[%s1777 + $0x1d0] sm:$0xfe]
      %v2518 = vld [vmem:[%s1777 + $0x1d8] sm:$0xfe]
      %v2519 = vld [vmem:[%s1777 + $0x1e0] sm:$0x1]
      %v2520 = vld [vmem:[%s1777 + $0x1e8] sm:$0x1]
      %v2521 = vld [vmem:[%s1777 + $0x1f0] sm:$0x1]
      %v2522 = vld [vmem:[%s1777 + $0x1f8] sm:$0x1]
      %v2587 = vrot.slane %v2459, 1
      %v2588 = vrot.slane %v2463, 1
      %v2589 = vsel %vm463, %v2587, %v2588
      %v2590 = vrot.slane %v2460, 1
      %v2591 = vrot.slane %v2464, 1
      %v2592 = vsel %vm463, %v2590, %v2591
      %v2593 = vrot.slane %v2461, 1
      %v2594 = vrot.slane %v2465, 1
      %v2595 = vsel %vm463, %v2593, %v2594
      %v2596 = vrot.slane %v2462, 1
      %v2597 = vrot.slane %v2466, 1
      %v2598 = vsel %vm463, %v2596, %v2597
      %v2599 = vrot.slane %v2467, 1
      %v2600 = vrot.slane %v2471, 1
      %v2601 = vsel %vm463, %v2599, %v2600
      %v2602 = vrot.slane %v2468, 1
      %v2603 = vrot.slane %v2472, 1
      %v2604 = vsel %vm463, %v2602, %v2603
      %v2605 = vrot.slane %v2469, 1
      %v2606 = vrot.slane %v2473, 1
      %v2607 = vsel %vm463, %v2605, %v2606
      %v2608 = vrot.slane %v2470, 1
      %v2609 = vrot.slane %v2474, 1
      %v2610 = vsel %vm463, %v2608, %v2609
      %v2611 = vrot.slane %v2475, 1
      %v2612 = vrot.slane %v2479, 1
      %v2613 = vsel %vm463, %v2611, %v2612
      %v2614 = vrot.slane %v2476, 1
      %v2615 = vrot.slane %v2480, 1
      %v2616 = vsel %vm463, %v2614, %v2615
      %v2617 = vrot.slane %v2477, 1
      %v2618 = vrot.slane %v2481, 1
      %v2619 = vsel %vm463, %v2617, %v2618
      %v2620 = vrot.slane %v2478, 1
      %v2621 = vrot.slane %v2482, 1
      %v2622 = vsel %vm463, %v2620, %v2621
      %v2623 = vrot.slane %v2483, 1
      %v2624 = vrot.slane %v2487, 1
      %v2625 = vsel %vm463, %v2623, %v2624
      %v2626 = vrot.slane %v2484, 1
      %v2627 = vrot.slane %v2488, 1
      %v2628 = vsel %vm463, %v2626, %v2627
      %v2629 = vrot.slane %v2485, 1
      %v2630 = vrot.slane %v2489, 1
      %v2631 = vsel %vm463, %v2629, %v2630
      %v2632 = vrot.slane %v2486, 1
      %v2633 = vrot.slane %v2490, 1
      %v2634 = vsel %vm463, %v2632, %v2633
      %v2635 = vrot.slane %v2491, 1
      %v2636 = vrot.slane %v2495, 1
      %v2637 = vsel %vm463, %v2635, %v2636
      %v2638 = vrot.slane %v2492, 1
      %v2639 = vrot.slane %v2496, 1
      %v2640 = vsel %vm463, %v2638, %v2639
      %v2641 = vrot.slane %v2493, 1
      %v2642 = vrot.slane %v2497, 1
      %v2643 = vsel %vm463, %v2641, %v2642
      %v2644 = vrot.slane %v2494, 1
      %v2645 = vrot.slane %v2498, 1
      %v2646 = vsel %vm463, %v2644, %v2645
      %v2647 = vrot.slane %v2499, 1
      %v2648 = vrot.slane %v2503, 1
      %v2649 = vsel %vm463, %v2647, %v2648
      %v2650 = vrot.slane %v2500, 1
      %v2651 = vrot.slane %v2504, 1
      %v2652 = vsel %vm463, %v2650, %v2651
      %v2653 = vrot.slane %v2501, 1
      %v2654 = vrot.slane %v2505, 1
      %v2655 = vsel %vm463, %v2653, %v2654
      %v2656 = vrot.slane %v2502, 1
      %v2657 = vrot.slane %v2506, 1
      %v2658 = vsel %vm463, %v2656, %v2657
      %v2659 = vrot.slane %v2507, 1
      %v2660 = vrot.slane %v2511, 1
      %v2661 = vsel %vm463, %v2659, %v2660
      %v2662 = vrot.slane %v2508, 1
      %v2663 = vrot.slane %v2512, 1
      %v2664 = vsel %vm463, %v2662, %v2663
      %v2665 = vrot.slane %v2509, 1
      %v2666 = vrot.slane %v2513, 1
      %v2667 = vsel %vm463, %v2665, %v2666
      %v2668 = vrot.slane %v2510, 1
      %v2669 = vrot.slane %v2514, 1
      %v2670 = vsel %vm463, %v2668, %v2669
      %v2671 = vrot.slane %v2515, 1
      %v2672 = vrot.slane %v2519, 1
      %v2673 = vsel %vm463, %v2671, %v2672
      %v2674 = vrot.slane %v2516, 1
      %v2675 = vrot.slane %v2520, 1
      %v2676 = vsel %vm463, %v2674, %v2675
      %v2677 = vrot.slane %v2517, 1
      %v2678 = vrot.slane %v2521, 1
      %v2679 = vsel %vm463, %v2677, %v2678
      %v2680 = vrot.slane %v2518, 1
      %v2681 = vrot.slane %v2522, 1
      %v2682 = vsel %vm463, %v2680, %v2681
      %v2715 = vpack.c.bf16 %v2601, %v2589
      %v2716 = vpack.c.bf16 %v2604, %v2592
      %v2717 = vpack.c.bf16 %v2607, %v2595
      %v2718 = vpack.c.bf16 %v2610, %v2598
      %v2719 = vpack.c.bf16 %v2625, %v2613
      %v2720 = vpack.c.bf16 %v2628, %v2616
      %v2721 = vpack.c.bf16 %v2631, %v2619
      %v2722 = vpack.c.bf16 %v2634, %v2622
      %v2723 = vpack.c.bf16 %v2649, %v2637
      %v2724 = vpack.c.bf16 %v2652, %v2640
      %v2725 = vpack.c.bf16 %v2655, %v2643
      %v2726 = vpack.c.bf16 %v2658, %v2646
      %v2727 = vpack.c.bf16 %v2673, %v2661
      %v2728 = vpack.c.bf16 %v2676, %v2664
      %v2729 = vpack.c.bf16 %v2679, %v2667
      %v2730 = vpack.c.bf16 %v2682, %v2670
      %s2731 = scalar_lea.vmem %s1, 1536
      %v2732 = vld [vmem:[%s2731] sm:$0xff]
      %v2733 = vld [vmem:[%s2731 + $0x8] sm:$0xff]
      %v2734 = vld [vmem:[%s2731 + $0x10] sm:$0xff]
      %v2735 = vld [vmem:[%s2731 + $0x18] sm:$0xff]
      %v2736 = vld [vmem:[%s2731 + $0x20] sm:$0xff]
      %v2737 = vld [vmem:[%s2731 + $0x28] sm:$0xff]
      %v2738 = vld [vmem:[%s2731 + $0x30] sm:$0xff]
      %v2739 = vld [vmem:[%s2731 + $0x38] sm:$0xff]
      %v2740 = vld [vmem:[%s2731 + $0x40] sm:$0xff]
      %v2741 = vld [vmem:[%s2731 + $0x48] sm:$0xff]
      %v2742 = vld [vmem:[%s2731 + $0x50] sm:$0xff]
      %v2743 = vld [vmem:[%s2731 + $0x58] sm:$0xff]
      %v2744 = vld [vmem:[%s2731 + $0x60] sm:$0xff]
      %v2745 = vld [vmem:[%s2731 + $0x68] sm:$0xff]
      %v2746 = vld [vmem:[%s2731 + $0x70] sm:$0xff]
      %v2747 = vld [vmem:[%s2731 + $0x78] sm:$0xff]
      %v2748 = vld [vmem:[%s2731 + $0x80] sm:$0xff]
      %v2749 = vld [vmem:[%s2731 + $0x88] sm:$0xff]
      %v2750 = vld [vmem:[%s2731 + $0x90] sm:$0xff]
      %v2751 = vld [vmem:[%s2731 + $0x98] sm:$0xff]
      %v2752 = vld [vmem:[%s2731 + $0xa0] sm:$0xff]
      %v2753 = vld [vmem:[%s2731 + $0xa8] sm:$0xff]
      %v2754 = vld [vmem:[%s2731 + $0xb0] sm:$0xff]
      %v2755 = vld [vmem:[%s2731 + $0xb8] sm:$0xff]
      %v2756 = vld [vmem:[%s2731 + $0xc0] sm:$0xff]
      %v2757 = vld [vmem:[%s2731 + $0xc8] sm:$0xff]
      %v2758 = vld [vmem:[%s2731 + $0xd0] sm:$0xff]
      %v2759 = vld [vmem:[%s2731 + $0xd8] sm:$0xff]
      %v2760 = vld [vmem:[%s2731 + $0xe0] sm:$0xff]
      %v2761 = vld [vmem:[%s2731 + $0xe8] sm:$0xff]
      %v2762 = vld [vmem:[%s2731 + $0xf0] sm:$0xff]
      %v2763 = vld [vmem:[%s2731 + $0xf8] sm:$0xff]
      %v2764 = vld [vmem:[%s2731 + $0x100] sm:$0xff]
      %v2765 = vld [vmem:[%s2731 + $0x108] sm:$0xff]
      %v2766 = vld [vmem:[%s2731 + $0x110] sm:$0xff]
      %v2767 = vld [vmem:[%s2731 + $0x118] sm:$0xff]
      %v2768 = vld [vmem:[%s2731 + $0x120] sm:$0xff]
      %v2769 = vld [vmem:[%s2731 + $0x128] sm:$0xff]
      %v2770 = vld [vmem:[%s2731 + $0x130] sm:$0xff]
      %v2771 = vld [vmem:[%s2731 + $0x138] sm:$0xff]
      %v2772 = vld [vmem:[%s2731 + $0x140] sm:$0xff]
      %v2773 = vld [vmem:[%s2731 + $0x148] sm:$0xff]
      %v2774 = vld [vmem:[%s2731 + $0x150] sm:$0xff]
      %v2775 = vld [vmem:[%s2731 + $0x158] sm:$0xff]
      %v2776 = vld [vmem:[%s2731 + $0x160] sm:$0xff]
      %v2777 = vld [vmem:[%s2731 + $0x168] sm:$0xff]
      %v2778 = vld [vmem:[%s2731 + $0x170] sm:$0xff]
      %v2779 = vld [vmem:[%s2731 + $0x178] sm:$0xff]
      %v2780 = vld [vmem:[%s2731 + $0x180] sm:$0xff]
      %v2781 = vld [vmem:[%s2731 + $0x188] sm:$0xff]
      %v2782 = vld [vmem:[%s2731 + $0x190] sm:$0xff]
      %v2783 = vld [vmem:[%s2731 + $0x198] sm:$0xff]
      %v2784 = vld [vmem:[%s2731 + $0x1a0] sm:$0xff]
      %v2785 = vld [vmem:[%s2731 + $0x1a8] sm:$0xff]
      %v2786 = vld [vmem:[%s2731 + $0x1b0] sm:$0xff]
      %v2787 = vld [vmem:[%s2731 + $0x1b8] sm:$0xff]
      %v2788 = vld [vmem:[%s2731 + $0x1c0] sm:$0xff]
      %v2789 = vld [vmem:[%s2731 + $0x1c8] sm:$0xff]
      %v2790 = vld [vmem:[%s2731 + $0x1d0] sm:$0xff]
      %v2791 = vld [vmem:[%s2731 + $0x1d8] sm:$0xff]
      %v2792 = vld [vmem:[%s2731 + $0x1e0] sm:$0xff]
      %v2793 = vld [vmem:[%s2731 + $0x1e8] sm:$0xff]
      %v2794 = vld [vmem:[%s2731 + $0x1f0] sm:$0xff]
      %v2795 = vld [vmem:[%s2731 + $0x1f8] sm:$0xff]
      %v2860 = vunpack.c.l.b16 %v2732
      %v2861 = vunpack.c.h.b16 %v2732
      %v2862 = vunpack.c.l.b16 %v2733
      %v2863 = vunpack.c.h.b16 %v2733
      %v2864 = vunpack.c.l.b16 %v2734
      %v2865 = vunpack.c.h.b16 %v2734
      %v2866 = vunpack.c.l.b16 %v2735
      %v2867 = vunpack.c.h.b16 %v2735
      %v2868 = vunpack.c.l.b16 %v2736
      %v2869 = vunpack.c.h.b16 %v2736
      %v2870 = vunpack.c.l.b16 %v2737
      %v2871 = vunpack.c.h.b16 %v2737
      %v2872 = vunpack.c.l.b16 %v2738
      %v2873 = vunpack.c.h.b16 %v2738
      %v2874 = vunpack.c.l.b16 %v2739
      %v2875 = vunpack.c.h.b16 %v2739
      %v2876 = vunpack.c.l.b16 %v2740
      %v2877 = vunpack.c.h.b16 %v2740
      %v2878 = vunpack.c.l.b16 %v2741
      %v2879 = vunpack.c.h.b16 %v2741
      %v2880 = vunpack.c.l.b16 %v2742
      %v2881 = vunpack.c.h.b16 %v2742
      %v2882 = vunpack.c.l.b16 %v2743
      %v2883 = vunpack.c.h.b16 %v2743
      %v2884 = vunpack.c.l.b16 %v2744
      %v2885 = vunpack.c.h.b16 %v2744
      %v2886 = vunpack.c.l.b16 %v2745
      %v2887 = vunpack.c.h.b16 %v2745
      %v2888 = vunpack.c.l.b16 %v2746
      %v2889 = vunpack.c.h.b16 %v2746
      %v2890 = vunpack.c.l.b16 %v2747
      %v2891 = vunpack.c.h.b16 %v2747
      %v2892 = vunpack.c.l.b16 %v2748
      %v2893 = vunpack.c.h.b16 %v2748
      %v2894 = vunpack.c.l.b16 %v2749
      %v2895 = vunpack.c.h.b16 %v2749
      %v2896 = vunpack.c.l.b16 %v2750
      %v2897 = vunpack.c.h.b16 %v2750
      %v2898 = vunpack.c.l.b16 %v2751
      %v2899 = vunpack.c.h.b16 %v2751
      %v2900 = vunpack.c.l.b16 %v2752
      %v2901 = vunpack.c.h.b16 %v2752
      %v2902 = vunpack.c.l.b16 %v2753
      %v2903 = vunpack.c.h.b16 %v2753
      %v2904 = vunpack.c.l.b16 %v2754
      %v2905 = vunpack.c.h.b16 %v2754
      %v2906 = vunpack.c.l.b16 %v2755
      %v2907 = vunpack.c.h.b16 %v2755
      %v2908 = vunpack.c.l.b16 %v2756
      %v2909 = vunpack.c.h.b16 %v2756
      %v2910 = vunpack.c.l.b16 %v2757
      %v2911 = vunpack.c.h.b16 %v2757
      %v2912 = vunpack.c.l.b16 %v2758
      %v2913 = vunpack.c.h.b16 %v2758
      %v2914 = vunpack.c.l.b16 %v2759
      %v2915 = vunpack.c.h.b16 %v2759
      %v2916 = vunpack.c.l.b16 %v2760
      %v2917 = vunpack.c.h.b16 %v2760
      %v2918 = vunpack.c.l.b16 %v2761
      %v2919 = vunpack.c.h.b16 %v2761
      %v2920 = vunpack.c.l.b16 %v2762
      %v2921 = vunpack.c.h.b16 %v2762
      %v2922 = vunpack.c.l.b16 %v2763
      %v2923 = vunpack.c.h.b16 %v2763
      %v2924 = vunpack.c.l.b16 %v2764
      %v2925 = vunpack.c.h.b16 %v2764
      %v2926 = vunpack.c.l.b16 %v2765
      %v2927 = vunpack.c.h.b16 %v2765
      %v2928 = vunpack.c.l.b16 %v2766
      %v2929 = vunpack.c.h.b16 %v2766
      %v2930 = vunpack.c.l.b16 %v2767
      %v2931 = vunpack.c.h.b16 %v2767
      %v2932 = vunpack.c.l.b16 %v2768
      %v2933 = vunpack.c.h.b16 %v2768
      %v2934 = vunpack.c.l.b16 %v2769
      %v2935 = vunpack.c.h.b16 %v2769
      %v2936 = vunpack.c.l.b16 %v2770
      %v2937 = vunpack.c.h.b16 %v2770
      %v2938 = vunpack.c.l.b16 %v2771
      %v2939 = vunpack.c.h.b16 %v2771
      %v2940 = vunpack.c.l.b16 %v2772
      %v2941 = vunpack.c.h.b16 %v2772
      %v2942 = vunpack.c.l.b16 %v2773
      %v2943 = vunpack.c.h.b16 %v2773
      %v2944 = vunpack.c.l.b16 %v2774
      %v2945 = vunpack.c.h.b16 %v2774
      %v2946 = vunpack.c.l.b16 %v2775
      %v2947 = vunpack.c.h.b16 %v2775
      %v2948 = vunpack.c.l.b16 %v2776
      %v2949 = vunpack.c.h.b16 %v2776
      %v2950 = vunpack.c.l.b16 %v2777
      %v2951 = vunpack.c.h.b16 %v2777
      %v2952 = vunpack.c.l.b16 %v2778
      %v2953 = vunpack.c.h.b16 %v2778
      %v2954 = vunpack.c.l.b16 %v2779
      %v2955 = vunpack.c.h.b16 %v2779
      %v2956 = vunpack.c.l.b16 %v2780
      %v2957 = vunpack.c.h.b16 %v2780
      %v2958 = vunpack.c.l.b16 %v2781
      %v2959 = vunpack.c.h.b16 %v2781
      %v2960 = vunpack.c.l.b16 %v2782
      %v2961 = vunpack.c.h.b16 %v2782
      %v2962 = vunpack.c.l.b16 %v2783
      %v2963 = vunpack.c.h.b16 %v2783
      %v2964 = vunpack.c.l.b16 %v2784
      %v2965 = vunpack.c.h.b16 %v2784
      %v2966 = vunpack.c.l.b16 %v2785
      %v2967 = vunpack.c.h.b16 %v2785
      %v2968 = vunpack.c.l.b16 %v2786
      %v2969 = vunpack.c.h.b16 %v2786
      %v2970 = vunpack.c.l.b16 %v2787
      %v2971 = vunpack.c.h.b16 %v2787
      %v2972 = vunpack.c.l.b16 %v2788
      %v2973 = vunpack.c.h.b16 %v2788
      %v2974 = vunpack.c.l.b16 %v2789
      %v2975 = vunpack.c.h.b16 %v2789
      %v2976 = vunpack.c.l.b16 %v2790
      %v2977 = vunpack.c.h.b16 %v2790
      %v2978 = vunpack.c.l.b16 %v2791
      %v2979 = vunpack.c.h.b16 %v2791
      %v2980 = vunpack.c.l.b16 %v2792
      %v2981 = vunpack.c.h.b16 %v2792
      %v2982 = vunpack.c.l.b16 %v2793
      %v2983 = vunpack.c.h.b16 %v2793
      %v2984 = vunpack.c.l.b16 %v2794
      %v2985 = vunpack.c.h.b16 %v2794
      %v2986 = vunpack.c.l.b16 %v2795
      %v2987 = vunpack.c.h.b16 %v2795
      %v2988 = vpack.c.b16 %v2862, %v2860
      %v2989 = vpack.c.b16 %v2863, %v2861
      %v2990 = vpack.c.b16 %v2866, %v2864
      %v2991 = vpack.c.b16 %v2867, %v2865
      %v2992 = vpack.c.b16 %v2870, %v2868
      %v2993 = vpack.c.b16 %v2871, %v2869
      %v2994 = vpack.c.b16 %v2874, %v2872
      %v2995 = vpack.c.b16 %v2875, %v2873
      %v2996 = vpack.c.b16 %v2878, %v2876
      %v2997 = vpack.c.b16 %v2879, %v2877
      %v2998 = vpack.c.b16 %v2882, %v2880
      %v2999 = vpack.c.b16 %v2883, %v2881
      %v3000 = vpack.c.b16 %v2886, %v2884
      %v3001 = vpack.c.b16 %v2887, %v2885
      %v3002 = vpack.c.b16 %v2890, %v2888
      %v3003 = vpack.c.b16 %v2891, %v2889
      %v3004 = vpack.c.b16 %v2894, %v2892
      %v3005 = vpack.c.b16 %v2895, %v2893
      %v3006 = vpack.c.b16 %v2898, %v2896
      %v3007 = vpack.c.b16 %v2899, %v2897
      %v3008 = vpack.c.b16 %v2902, %v2900
      %v3009 = vpack.c.b16 %v2903, %v2901
      %v3010 = vpack.c.b16 %v2906, %v2904
      %v3011 = vpack.c.b16 %v2907, %v2905
      %v3012 = vpack.c.b16 %v2910, %v2908
      %v3013 = vpack.c.b16 %v2911, %v2909
      %v3014 = vpack.c.b16 %v2914, %v2912
      %v3015 = vpack.c.b16 %v2915, %v2913
      %v3016 = vpack.c.b16 %v2918, %v2916
      %v3017 = vpack.c.b16 %v2919, %v2917
      %v3018 = vpack.c.b16 %v2922, %v2920
      %v3019 = vpack.c.b16 %v2923, %v2921
      %v3020 = vpack.c.b16 %v2926, %v2924
      %v3021 = vpack.c.b16 %v2927, %v2925
      %v3022 = vpack.c.b16 %v2930, %v2928
      %v3023 = vpack.c.b16 %v2931, %v2929
      %v3024 = vpack.c.b16 %v2934, %v2932
      %v3025 = vpack.c.b16 %v2935, %v2933
      %v3026 = vpack.c.b16 %v2938, %v2936
      %v3027 = vpack.c.b16 %v2939, %v2937
      %v3028 = vpack.c.b16 %v2942, %v2940
      %v3029 = vpack.c.b16 %v2943, %v2941
      %v3030 = vpack.c.b16 %v2946, %v2944
      %v3031 = vpack.c.b16 %v2947, %v2945
      %v3032 = vpack.c.b16 %v2950, %v2948
      %v3033 = vpack.c.b16 %v2951, %v2949
      %v3034 = vpack.c.b16 %v2954, %v2952
      %v3035 = vpack.c.b16 %v2955, %v2953
      %v3036 = vpack.c.b16 %v2958, %v2956
      %v3037 = vpack.c.b16 %v2959, %v2957
      %v3038 = vpack.c.b16 %v2962, %v2960
      %v3039 = vpack.c.b16 %v2963, %v2961
      %v3040 = vpack.c.b16 %v2966, %v2964
      %v3041 = vpack.c.b16 %v2967, %v2965
      %v3042 = vpack.c.b16 %v2970, %v2968
      %v3043 = vpack.c.b16 %v2971, %v2969
      %v3044 = vpack.c.b16 %v2974, %v2972
      %v3045 = vpack.c.b16 %v2975, %v2973
      %v3046 = vpack.c.b16 %v2978, %v2976
      %v3047 = vpack.c.b16 %v2979, %v2977
      %v3048 = vpack.c.b16 %v2982, %v2980
      %v3049 = vpack.c.b16 %v2983, %v2981
      %v3050 = vpack.c.b16 %v2986, %v2984
      %v3051 = vpack.c.b16 %v2987, %v2985
      %3116 = vmatpush.bf16.msra.mxu0 %v3002
      %3117 = vmatpush.bf16.msra.mxu0 %v3000
      %3118 = vmatpush.bf16.msra.mxu0 %v2998
      %3119 = vmatpush.bf16.msra.mxu0 %v2996
      %3120 = vmatpush.bf16.msra.mxu0 %v2994
      %3121 = vmatpush.bf16.msra.mxu0 %v2992
      %3122 = vmatpush.bf16.msra.mxu0 %v2990
      %3123 = vmatpush.bf16.msra.mxu0 %v2988
      %3124 = vmatmul.bf16.gmra.mxu0 %v2715
      %v3125 = vpop.f32.mrf.mxu0
      %v3126 = vadd.f32 0.0, %v3125
      %v3127 = vpop.f32.mrf.mxu0
      %v3128 = vadd.f32 0.0, %v3127
      %3129 = vmatmul.bf16.gmra.mxu0 %v2719
      %v3130 = vpop.f32.mrf.mxu0
      %v3131 = vadd.f32 0.0, %v3130
      %v3132 = vpop.f32.mrf.mxu0
      %v3133 = vadd.f32 0.0, %v3132
      %3134 = vmatmul.bf16.gmra.mxu0 %v2723
      %v3135 = vpop.f32.mrf.mxu0
      %v3136 = vadd.f32 0.0, %v3135
      %v3137 = vpop.f32.mrf.mxu0
      %v3138 = vadd.f32 0.0, %v3137
      %3139 = vmatmul.bf16.gmra.mxu0 %v2727
      %v3140 = vpop.f32.mrf.mxu0
      %v3141 = vadd.f32 0.0, %v3140
      %v3142 = vpop.f32.mrf.mxu0
      %v3143 = vadd.f32 0.0, %v3142
      %3144 = vdwg.mxu0
      %3145 = vmatpush.bf16.msra.mxu0 %v3018
      %3146 = vmatpush.bf16.msra.mxu0 %v3016
      %3147 = vmatpush.bf16.msra.mxu0 %v3014
      %3148 = vmatpush.bf16.msra.mxu0 %v3012
      %3149 = vmatpush.bf16.msra.mxu0 %v3010
      %3150 = vmatpush.bf16.msra.mxu0 %v3008
      %3151 = vmatpush.bf16.msra.mxu0 %v3006
      %3152 = vmatpush.bf16.msra.mxu0 %v3004
      %3153 = vmatmul.bf16.gmra.mxu0 %v2716
      %v3154 = vpop.f32.mrf.mxu0
      %v3155 = vadd.f32 %v3126, %v3154
      %v3156 = vpop.f32.mrf.mxu0
      %v3157 = vadd.f32 %v3128, %v3156
      %3158 = vmatmul.bf16.gmra.mxu0 %v2720
      %v3159 = vpop.f32.mrf.mxu0
      %v3160 = vadd.f32 %v3131, %v3159
      %v3161 = vpop.f32.mrf.mxu0
      %v3162 = vadd.f32 %v3133, %v3161
      %3163 = vmatmul.bf16.gmra.mxu0 %v2724
      %v3164 = vpop.f32.mrf.mxu0
      %v3165 = vadd.f32 %v3136, %v3164
      %v3166 = vpop.f32.mrf.mxu0
      %v3167 = vadd.f32 %v3138, %v3166
      %3168 = vmatmul.bf16.gmra.mxu0 %v2728
      %v3169 = vpop.f32.mrf.mxu0
      %v3170 = vadd.f32 %v3141, %v3169
      %v3171 = vpop.f32.mrf.mxu0
      %v3172 = vadd.f32 %v3143, %v3171
      %3173 = vdwg.mxu0
      %3174 = vmatpush.bf16.msra.mxu0 %v3034
      %3175 = vmatpush.bf16.msra.mxu0 %v3032
      %3176 = vmatpush.bf16.msra.mxu0 %v3030
      %3177 = vmatpush.bf16.msra.mxu0 %v3028
      %3178 = vmatpush.bf16.msra.mxu0 %v3026
      %3179 = vmatpush.bf16.msra.mxu0 %v3024
      %3180 = vmatpush.bf16.msra.mxu0 %v3022
      %3181 = vmatpush.bf16.msra.mxu0 %v3020
      %3182 = vmatmul.bf16.gmra.mxu0 %v2717
      %v3183 = vpop.f32.mrf.mxu0
      %v3184 = vadd.f32 %v3155, %v3183
      %v3185 = vpop.f32.mrf.mxu0
      %v3186 = vadd.f32 %v3157, %v3185
      %3187 = vmatmul.bf16.gmra.mxu0 %v2721
      %v3188 = vpop.f32.mrf.mxu0
      %v3189 = vadd.f32 %v3160, %v3188
      %v3190 = vpop.f32.mrf.mxu0
      %v3191 = vadd.f32 %v3162, %v3190
      %3192 = vmatmul.bf16.gmra.mxu0 %v2725
      %v3193 = vpop.f32.mrf.mxu0
      %v3194 = vadd.f32 %v3165, %v3193
      %v3195 = vpop.f32.mrf.mxu0
      %v3196 = vadd.f32 %v3167, %v3195
      %3197 = vmatmul.bf16.gmra.mxu0 %v2729
      %v3198 = vpop.f32.mrf.mxu0
      %v3199 = vadd.f32 %v3170, %v3198
      %v3200 = vpop.f32.mrf.mxu0
      %v3201 = vadd.f32 %v3172, %v3200
      %3202 = vdwg.mxu0
      %3203 = vmatpush.bf16.msra.mxu0 %v3050
      %3204 = vmatpush.bf16.msra.mxu0 %v3048
      %3205 = vmatpush.bf16.msra.mxu0 %v3046
      %3206 = vmatpush.bf16.msra.mxu0 %v3044
      %3207 = vmatpush.bf16.msra.mxu0 %v3042
      %3208 = vmatpush.bf16.msra.mxu0 %v3040
      %3209 = vmatpush.bf16.msra.mxu0 %v3038
      %3210 = vmatpush.bf16.msra.mxu0 %v3036
      %3211 = vmatmul.bf16.gmra.mxu0 %v2718
      %v3212 = vpop.f32.mrf.mxu0
      %v3213 = vadd.f32 %v3184, %v3212
      %v3214 = vpop.f32.mrf.mxu0
      %v3215 = vadd.f32 %v3186, %v3214
      %3216 = vmatmul.bf16.gmra.mxu0 %v2722
      %v3217 = vpop.f32.mrf.mxu0
      %v3218 = vadd.f32 %v3189, %v3217
      %v3219 = vpop.f32.mrf.mxu0
      %v3220 = vadd.f32 %v3191, %v3219
      %3221 = vmatmul.bf16.gmra.mxu0 %v2726
      %v3222 = vpop.f32.mrf.mxu0
      %v3223 = vadd.f32 %v3194, %v3222
      %v3224 = vpop.f32.mrf.mxu0
      %v3225 = vadd.f32 %v3196, %v3224
      %3226 = vmatmul.bf16.gmra.mxu0 %v2730
      %v3227 = vpop.f32.mrf.mxu0
      %v3228 = vadd.f32 %v3199, %v3227
      %v3229 = vpop.f32.mrf.mxu0
      %v3230 = vadd.f32 %v3201, %v3229
      %3231 = vdwg.mxu0
      %3232 = vmatpush.bf16.msra.mxu0 %v3003
      %3233 = vmatpush.bf16.msra.mxu0 %v3001
      %3234 = vmatpush.bf16.msra.mxu0 %v2999
      %3235 = vmatpush.bf16.msra.mxu0 %v2997
      %3236 = vmatpush.bf16.msra.mxu0 %v2995
      %3237 = vmatpush.bf16.msra.mxu0 %v2993
      %3238 = vmatpush.bf16.msra.mxu0 %v2991
      %3239 = vmatpush.bf16.msra.mxu0 %v2989
      %3240 = vmatmul.bf16.gmra.mxu0 %v2715
      %v3241 = vpop.f32.mrf.mxu0
      %v3242 = vadd.f32 0.0, %v3241
      %v3243 = vpop.f32.mrf.mxu0
      %v3244 = vadd.f32 0.0, %v3243
      %3245 = vmatmul.bf16.gmra.mxu0 %v2719
      %v3246 = vpop.f32.mrf.mxu0
      %v3247 = vadd.f32 0.0, %v3246
      %v3248 = vpop.f32.mrf.mxu0
      %v3249 = vadd.f32 0.0, %v3248
      %3250 = vmatmul.bf16.gmra.mxu0 %v2723
      %v3251 = vpop.f32.mrf.mxu0
      %v3252 = vadd.f32 0.0, %v3251
      %v3253 = vpop.f32.mrf.mxu0
      %v3254 = vadd.f32 0.0, %v3253
      %3255 = vmatmul.bf16.gmra.mxu0 %v2727
      %v3256 = vpop.f32.mrf.mxu0
      %v3257 = vadd.f32 0.0, %v3256
      %v3258 = vpop.f32.mrf.mxu0
      %v3259 = vadd.f32 0.0, %v3258
      %3260 = vdwg.mxu0
      %3261 = vmatpush.bf16.msra.mxu0 %v3019
      %3262 = vmatpush.bf16.msra.mxu0 %v3017
      %3263 = vmatpush.bf16.msra.mxu0 %v3015
      %3264 = vmatpush.bf16.msra.mxu0 %v3013
      %3265 = vmatpush.bf16.msra.mxu0 %v3011
      %3266 = vmatpush.bf16.msra.mxu0 %v3009
      %3267 = vmatpush.bf16.msra.mxu0 %v3007
      %3268 = vmatpush.bf16.msra.mxu0 %v3005
      %3269 = vmatmul.bf16.gmra.mxu0 %v2716
      %v3270 = vpop.f32.mrf.mxu0
      %v3271 = vadd.f32 %v3242, %v3270
      %v3272 = vpop.f32.mrf.mxu0
      %v3273 = vadd.f32 %v3244, %v3272
      %3274 = vmatmul.bf16.gmra.mxu0 %v2720
      %v3275 = vpop.f32.mrf.mxu0
      %v3276 = vadd.f32 %v3247, %v3275
      %v3277 = vpop.f32.mrf.mxu0
      %v3278 = vadd.f32 %v3249, %v3277
      %3279 = vmatmul.bf16.gmra.mxu0 %v2724
      %v3280 = vpop.f32.mrf.mxu0
      %v3281 = vadd.f32 %v3252, %v3280
      %v3282 = vpop.f32.mrf.mxu0
      %v3283 = vadd.f32 %v3254, %v3282
      %3284 = vmatmul.bf16.gmra.mxu0 %v2728
      %v3285 = vpop.f32.mrf.mxu0
      %v3286 = vadd.f32 %v3257, %v3285
      %v3287 = vpop.f32.mrf.mxu0
      %v3288 = vadd.f32 %v3259, %v3287
      %3289 = vdwg.mxu0
      %3290 = vmatpush.bf16.msra.mxu0 %v3035
      %3291 = vmatpush.bf16.msra.mxu0 %v3033
      %3292 = vmatpush.bf16.msra.mxu0 %v3031
      %3293 = vmatpush.bf16.msra.mxu0 %v3029
      %3294 = vmatpush.bf16.msra.mxu0 %v3027
      %3295 = vmatpush.bf16.msra.mxu0 %v3025
      %3296 = vmatpush.bf16.msra.mxu0 %v3023
      %3297 = vmatpush.bf16.msra.mxu0 %v3021
      %3298 = vmatmul.bf16.gmra.mxu0 %v2717
      %v3299 = vpop.f32.mrf.mxu0
      %v3300 = vadd.f32 %v3271, %v3299
      %v3301 = vpop.f32.mrf.mxu0
      %v3302 = vadd.f32 %v3273, %v3301
      %3303 = vmatmul.bf16.gmra.mxu0 %v2721
      %v3304 = vpop.f32.mrf.mxu0
      %v3305 = vadd.f32 %v3276, %v3304
      %v3306 = vpop.f32.mrf.mxu0
      %v3307 = vadd.f32 %v3278, %v3306
      %3308 = vmatmul.bf16.gmra.mxu0 %v2725
      %v3309 = vpop.f32.mrf.mxu0
      %v3310 = vadd.f32 %v3281, %v3309
      %v3311 = vpop.f32.mrf.mxu0
      %v3312 = vadd.f32 %v3283, %v3311
      %3313 = vmatmul.bf16.gmra.mxu0 %v2729
      %v3314 = vpop.f32.mrf.mxu0
      %v3315 = vadd.f32 %v3286, %v3314
      %v3316 = vpop.f32.mrf.mxu0
      %v3317 = vadd.f32 %v3288, %v3316
      %3318 = vdwg.mxu0
      %3319 = vmatpush.bf16.msra.mxu0 %v3051
      %3320 = vmatpush.bf16.msra.mxu0 %v3049
      %3321 = vmatpush.bf16.msra.mxu0 %v3047
      %3322 = vmatpush.bf16.msra.mxu0 %v3045
      %3323 = vmatpush.bf16.msra.mxu0 %v3043
      %3324 = vmatpush.bf16.msra.mxu0 %v3041
      %3325 = vmatpush.bf16.msra.mxu0 %v3039
      %3326 = vmatpush.bf16.msra.mxu0 %v3037
      %3327 = vmatmul.bf16.gmra.mxu0 %v2718
      %v3328 = vpop.f32.mrf.mxu0
      %v3329 = vadd.f32 %v3300, %v3328
      %v3330 = vpop.f32.mrf.mxu0
      %v3331 = vadd.f32 %v3302, %v3330
      %3332 = vmatmul.bf16.gmra.mxu0 %v2722
      %v3333 = vpop.f32.mrf.mxu0
      %v3334 = vadd.f32 %v3305, %v3333
      %v3335 = vpop.f32.mrf.mxu0
      %v3336 = vadd.f32 %v3307, %v3335
      %3337 = vmatmul.bf16.gmra.mxu0 %v2726
      %v3338 = vpop.f32.mrf.mxu0
      %v3339 = vadd.f32 %v3310, %v3338
      %v3340 = vpop.f32.mrf.mxu0
      %v3341 = vadd.f32 %v3312, %v3340
      %3342 = vmatmul.bf16.gmra.mxu0 %v2730
      %v3343 = vpop.f32.mrf.mxu0
      %v3344 = vadd.f32 %v3315, %v3343
      %v3345 = vpop.f32.mrf.mxu0
      %v3346 = vadd.f32 %v3317, %v3345
      %3347 = vdwg.mxu0
      %v3348 = vadd.f32 %v2443, %v3213
      %v3349 = vadd.f32 %v2444, %v3329
      %v3350 = vadd.f32 %v2445, %v3215
      %v3351 = vadd.f32 %v2446, %v3331
      %v3352 = vadd.f32 %v2447, %v3218
      %v3353 = vadd.f32 %v2448, %v3334
      %v3354 = vadd.f32 %v2449, %v3220
      %v3355 = vadd.f32 %v2450, %v3336
      %v3356 = vadd.f32 %v2451, %v3223
      %v3357 = vadd.f32 %v2452, %v3339
      %v3358 = vadd.f32 %v2453, %v3225
      %v3359 = vadd.f32 %v2454, %v3341
      %v3360 = vadd.f32 %v2455, %v3228
      %v3361 = vadd.f32 %v2456, %v3344
      %v3362 = vadd.f32 %v2457, %v3230
      %v3363 = vadd.f32 %v2458, %v3346
      %v3364 = vld [vmem:[%s2] sm:$0x3]
      %v3366 = vperm.slane %v3364, 0
      %v3367 = vperm.slane %v3364, 1
      %v3370 = vadd.f32 %v3348, %v3366
      %v3371 = vadd.f32 %v3349, %v3367
      %v3372 = vadd.f32 %v3350, %v3366
      %v3373 = vadd.f32 %v3351, %v3367
      %v3374 = vadd.f32 %v3352, %v3366
      %v3375 = vadd.f32 %v3353, %v3367
      %v3376 = vadd.f32 %v3354, %v3366
      %v3377 = vadd.f32 %v3355, %v3367
      %v3378 = vadd.f32 %v3356, %v3366
      %v3379 = vadd.f32 %v3357, %v3367
      %v3380 = vadd.f32 %v3358, %v3366
      %v3381 = vadd.f32 %v3359, %v3367
      %v3382 = vadd.f32 %v3360, %v3366
      %v3383 = vadd.f32 %v3361, %v3367
      %v3384 = vadd.f32 %v3362, %v3366
      %v3385 = vadd.f32 %v3363, %v3367
      %vm3386 = vcmp.ge.f32.partialorder %v3370, 0.0
      %vm3387 = vcmp.ge.f32.partialorder %v3371, 0.0
      %vm3388 = vcmp.ge.f32.partialorder %v3372, 0.0
      %vm3389 = vcmp.ge.f32.partialorder %v3373, 0.0
      %vm3390 = vcmp.ge.f32.partialorder %v3374, 0.0
      %vm3391 = vcmp.ge.f32.partialorder %v3375, 0.0
      %vm3392 = vcmp.ge.f32.partialorder %v3376, 0.0
      %vm3393 = vcmp.ge.f32.partialorder %v3377, 0.0
      %vm3394 = vcmp.ge.f32.partialorder %v3378, 0.0
      %vm3395 = vcmp.ge.f32.partialorder %v3379, 0.0
      %vm3396 = vcmp.ge.f32.partialorder %v3380, 0.0
      %vm3397 = vcmp.ge.f32.partialorder %v3381, 0.0
      %vm3398 = vcmp.ge.f32.partialorder %v3382, 0.0
      %vm3399 = vcmp.ge.f32.partialorder %v3383, 0.0
      %vm3400 = vcmp.ge.f32.partialorder %v3384, 0.0
      %vm3401 = vcmp.ge.f32.partialorder %v3385, 0.0
      %v3402 = vmul.f32 %v3370, 0.2
      %v3403 = vmul.f32 %v3371, 0.2
      %v3404 = vmul.f32 %v3372, 0.2
      %v3405 = vmul.f32 %v3373, 0.2
      %v3406 = vmul.f32 %v3374, 0.2
      %v3407 = vmul.f32 %v3375, 0.2
      %v3408 = vmul.f32 %v3376, 0.2
      %v3409 = vmul.f32 %v3377, 0.2
      %v3410 = vmul.f32 %v3378, 0.2
      %v3411 = vmul.f32 %v3379, 0.2
      %v3412 = vmul.f32 %v3380, 0.2
      %v3413 = vmul.f32 %v3381, 0.2
      %v3414 = vmul.f32 %v3382, 0.2
      %v3415 = vmul.f32 %v3383, 0.2
      %v3416 = vmul.f32 %v3384, 0.2
      %v3417 = vmul.f32 %v3385, 0.2
      %v3418 = vsel %vm3386, %v3370, %v3402
      %v3419 = vsel %vm3387, %v3371, %v3403
      %v3420 = vsel %vm3388, %v3372, %v3404
      %v3421 = vsel %vm3389, %v3373, %v3405
      %v3422 = vsel %vm3390, %v3374, %v3406
      %v3423 = vsel %vm3391, %v3375, %v3407
      %v3424 = vsel %vm3392, %v3376, %v3408
      %v3425 = vsel %vm3393, %v3377, %v3409
      %v3426 = vsel %vm3394, %v3378, %v3410
      %v3427 = vsel %vm3395, %v3379, %v3411
      %v3428 = vsel %vm3396, %v3380, %v3412
      %v3429 = vsel %vm3397, %v3381, %v3413
      %v3430 = vsel %vm3398, %v3382, %v3414
      %v3431 = vsel %vm3399, %v3383, %v3415
      %v3432 = vsel %vm3400, %v3384, %v3416
      %v3433 = vsel %vm3401, %v3385, %v3417
      %v3434 = vld [vmem:[%s3] sm:$0xff]
      %v3435 = vld [vmem:[%s3 + $0x8] sm:$0xff]
      %v3436 = vld [vmem:[%s3 + $0x10] sm:$0xff]
      %v3437 = vld [vmem:[%s3 + $0x18] sm:$0xff]
      %v3438 = vld [vmem:[%s3 + $0x20] sm:$0xff]
      %v3439 = vld [vmem:[%s3 + $0x28] sm:$0xff]
      %v3440 = vld [vmem:[%s3 + $0x30] sm:$0xff]
      %v3441 = vld [vmem:[%s3 + $0x38] sm:$0xff]
      %v3442 = vld [vmem:[%s3 + $0x40] sm:$0xff]
      %v3443 = vld [vmem:[%s3 + $0x48] sm:$0xff]
      %v3444 = vld [vmem:[%s3 + $0x50] sm:$0xff]
      %v3445 = vld [vmem:[%s3 + $0x58] sm:$0xff]
      %v3446 = vld [vmem:[%s3 + $0x60] sm:$0xff]
      %v3447 = vld [vmem:[%s3 + $0x68] sm:$0xff]
      %v3448 = vld [vmem:[%s3 + $0x70] sm:$0xff]
      %v3449 = vld [vmem:[%s3 + $0x78] sm:$0xff]
      %v3450 = vmul.f32 %v3418, %v3434
      %v3451 = vmul.f32 %v3419, %v3435
      %v3452 = vmul.f32 %v3420, %v3436
      %v3453 = vmul.f32 %v3421, %v3437
      %v3454 = vmul.f32 %v3422, %v3438
      %v3455 = vmul.f32 %v3423, %v3439
      %v3456 = vmul.f32 %v3424, %v3440
      %v3457 = vmul.f32 %v3425, %v3441
      %v3458 = vmul.f32 %v3426, %v3442
      %v3459 = vmul.f32 %v3427, %v3443
      %v3460 = vmul.f32 %v3428, %v3444
      %v3461 = vmul.f32 %v3429, %v3445
      %v3462 = vmul.f32 %v3430, %v3446
      %v3463 = vmul.f32 %v3431, %v3447
      %v3464 = vmul.f32 %v3432, %v3448
      %v3465 = vmul.f32 %v3433, %v3449
      %v3466 = vadd.f32 %v3450, %v3451
      %3467 = vadd.xlane.f32.xlu0 %v3466
      %v3468 = vpop.xlane.xlu0 %3467
      %v3469 = vadd.f32 %v3452, %v3453
      %3470 = vadd.xlane.f32.xlu0 %v3469
      %v3471 = vpop.xlane.xlu0 %3470
      %v3472 = vadd.f32 %v3454, %v3455
      %3473 = vadd.xlane.f32.xlu0 %v3472
      %v3474 = vpop.xlane.xlu0 %3473
      %v3475 = vadd.f32 %v3456, %v3457
      %3476 = vadd.xlane.f32.xlu0 %v3475
      %v3477 = vpop.xlane.xlu0 %3476
      %v3478 = vadd.f32 %v3458, %v3459
      %3479 = vadd.xlane.f32.xlu0 %v3478
      %v3480 = vpop.xlane.xlu0 %3479
      %v3481 = vadd.f32 %v3460, %v3461
      %3482 = vadd.xlane.f32.xlu0 %v3481
      %v3483 = vpop.xlane.xlu0 %3482
      %v3484 = vadd.f32 %v3462, %v3463
      %3485 = vadd.xlane.f32.xlu0 %v3484
      %v3486 = vpop.xlane.xlu0 %3485
      %v3487 = vadd.f32 %v3464, %v3465
      %3488 = vadd.xlane.f32.xlu0 %v3487
      %v3489 = vpop.xlane.xlu0 %3488
      %v3490 = vadd.f32 %v3468, %v3471
      %v3491 = vadd.f32 %v3490, %v3474
      %v3492 = vadd.f32 %v3491, %v3477
      %v3493 = vadd.f32 %v3492, %v3480
      %v3494 = vadd.f32 %v3493, %v3483
      %v3495 = vadd.f32 %v3494, %v3486
      %v3496 = vadd.f32 %v3495, %v3489
      %v3497 = vrot.slane %v3496, 4
      %v3498 = vadd.f32 %v3496, %v3497
      %v3499 = vrot.slane %v3498, 2
      %v3500 = vadd.f32 %v3498, %v3499
      %v3501 = vrot.slane %v3500, 1
      %v3502 = vadd.f32 %v3500, %v3501
      %v3503 = vld [vmem:[#allocation2] sm:$0x1]
      %v3504 = vadd.f32 %v3502, %v3503
      %v3505 = vsub.f32 0.0, %v3504
      %v3506 = vmul.f32 %v3505, 1.442695
      %v3507 = vpow.pop %v3506
      %v3508 = vadd.f32 %v3507, 1.0
      %v3509 = vrcp.pop %v3508
      %vm3510 = vcmask 0
      %3511 = vst.msk [vmem:[%s222] sm:$0x1] %vm3510, %v3509
      %p3512 = scmp.lt.s32.totalorder %s18, 1
      %s3513 = scalar_select %p3512, %s18, 1
      %s3514 = scalar_lea.vmem %s5, %s3513
      // Predicated region
      $region41: #{discriminator_forward.5} parent=39 // pred_check
        %p3515 = pneg %p146
      $region42: #{discriminator_forward.5} parent=39 // pred_check_branch
        %3517 = sbr.rel (%p3515) target = $region44
      $region43: #{discriminator_forward.5} parent=39 // pred_region
        _
      $region44: #{discriminator_forward.5} parent=39 // pred_fallthru
        _
    $region40: #{discriminator_forward.5} parent=5 // pred_fallthru
      _
    %p3518 = scmp.le.s32.totalorder 2, %s13
    // Predicated region
    $region45: #{discriminator_forward.5} parent=5 // pred_check
      %p3519 = pneg %p3518
    $region46: #{discriminator_forward.5} parent=5 // pred_check_branch
      %3521 = sbr.rel (%p3519) target = $region48
    $region47: #{discriminator_forward.5} parent=5 // pred_region
      %s3522 = ssub.s32 %s13, 2
      // Predicated region
      $region49: #{discriminator_forward.5} parent=47 // pred_check
        %p3523 = pneg %p152
      $region50: #{discriminator_forward.5} parent=47 // pred_check_branch
        %3525 = sbr.rel (%p3523) target = $region52
      $region51: #{discriminator_forward.5} parent=47 // pred_region
        %p3526 = scmp.lt.s32.totalorder %s19, 1
        %s3527 = scalar_select %p3526, %s19, 1
        %s3528 = scalar_lea.vmem %s5, %s3527
      $region52: #{discriminator_forward.5} parent=47 // pred_fallthru
        _
    $region48: #{discriminator_forward.5} parent=5 // pred_fallthru
      _
  $region6: #{discriminator_forward.5} parent=0 // loop_footer
    %s17 = sadd.s32 1, %s13
  $region7: #{discriminator_forward.5} parent=0 // loop_footer_branch
    %12 = sbr.rel target = $region3
  $region8: #{discriminator_forward.5} parent=0 // loop_exit
    _

</llo_original>
